<compile_context>
chip_gen: v5e
topology: v5e:2x2
jax: 0.10.0
libtpu: 0.0.40
codegen_flags: <defaults>
</compile_context>

<pallas_src>
import math

import jax
import jax.numpy as jnp
from jax.experimental import pallas as pl
from jax.experimental.pallas import tpu as pltpu

# ---- model hyperparameters (from the PyTorch module) ------------------------
d_k = d_v = 64
d_model = 512
n_heads = 8
d_ff = 2048
LN_EPS = 1e-5            # nn.LayerNorm default
N_FF_CHUNKS = 4          # d_ff streamed in 4 x 512 chunks
NEG_INF = -1e9


def _layernorm(x):
    mean = jnp.mean(x, axis=-1, keepdims=True)
    var = jnp.mean((x - mean) ** 2, axis=-1, keepdims=True)
    return (x - mean) * jax.lax.rsqrt(var + LN_EPS)


# ---- fused encoder-layer kernel ----------------------------------------------
def encoder_layer_kernel(x_ref, bias_ref, wqkv_ref, wo_ref,
                         w1_ref, s1_ref, w2_ref, s2_ref,
                         out_ref, attn_ref, y1_ref, acc_ref):
    """Grid axis 0 = d_ff chunk.  Attention + first LayerNorm at chunk 0,
    FFN partial sums every chunk, second LayerNorm at the last chunk.

    x_ref:    [N, D]        f32   (N = B*L packed tokens)
    bias_ref: [H*N, H*N]    f32   additive attention bias (0 / -1e9)
    wqkv_ref: [D, 3*H*d_k]  bf16  (Wq/sqrt(d_k) | Wk | Wv)
    wo_ref:   [H*d_v, D]    bf16
    w1_ref:   [D, CHUNK]    int8  (per-output-channel quantized)
    s1_ref:   [1, CHUNK]    f32
    w2_ref:   [CHUNK, D]    int8
    s2_ref:   [1, D]        f32
    out_ref:  [N, D]        f32
    attn_ref: [H*N, H*N]    f32
    y1_ref, acc_ref: [N, D] f32 VMEM scratch (post-attn LN, FFN accumulator)
    """
    c = pl.program_id(0)

    @pl.when(c == 0)
    def _attention():
        x = x_ref[...]                                            # [N, D] f32
        n_tok = x.shape[0]
        x_bf = x.astype(jnp.bfloat16)

        # --- fused QKV projection: one lane-dense matmul -----------------
        qkv = jnp.dot(x_bf, wqkv_ref[...],
                      preferred_element_type=jnp.float32)         # [N, 3*H*d_k]
        hd = n_heads * d_k
        q2 = qkv[:, :hd]
        k2 = qkv[:, hd:2 * hd]
        v2 = qkv[:, 2 * hd:]

        def heads_to_rows(t):   # [N, H*d_k] -> [H*N, d_k] (head-major rows)
            return jnp.concatenate(
                [t[:, h * d_k:(h + 1) * d_k] for h in range(n_heads)], axis=0)

        qp = heads_to_rows(q2).astype(jnp.bfloat16)               # [HN, d_k]
        kp = heads_to_rows(k2).astype(jnp.bfloat16)               # [HN, d_k]
        vp = heads_to_rows(v2).astype(jnp.bfloat16)               # [HN, d_v]

        # --- head-packed scaled-dot-product attention (one 128x128 matmul) ---
        scores = jax.lax.dot_general(
            qp, kp, (((1,), (1,)), ((), ())),
            preferred_element_type=jnp.float32) + bias_ref[...]   # [HN, HN] f32
        m = jnp.max(scores, axis=-1, keepdims=True)
        e = jnp.exp(scores - m)                                   # masked -> exact 0
        attn = e * pl.reciprocal(jnp.sum(e, axis=-1, keepdims=True), approx=True)
        attn_ref[...] = attn                                      # lane-dense store

        ctx = jnp.dot(attn.astype(jnp.bfloat16), vp,
                      preferred_element_type=jnp.float32)         # [HN, d_v]
        # re-pack heads into lanes -> [N, H*d_v], single folded output projection
        ctx_cat = jnp.concatenate(
            [ctx[h * n_tok:(h + 1) * n_tok, :] for h in range(n_heads)], axis=1)
        attn_out = jnp.dot(ctx_cat.astype(jnp.bfloat16), wo_ref[...],
                           preferred_element_type=jnp.float32)    # [N, D]

        y1_ref[...] = _layernorm(attn_out + x)                    # residual = input_Q
        acc_ref[...] = jnp.zeros_like(acc_ref)

    # --- position-wise FFN, one d_ff chunk per grid step (int8 weights) -------
    y1 = y1_ref[...]
    w1c = w1_ref[...].astype(jnp.float32).astype(jnp.bfloat16)    # int8 -> bf16
    h = jnp.dot(y1.astype(jnp.bfloat16), w1c,
                preferred_element_type=jnp.float32)               # [N, CHUNK]
    h = jnp.maximum(h * s1_ref[...], 0.0)                         # dequant + ReLU
    w2c = w2_ref[...].astype(jnp.float32).astype(jnp.bfloat16)
    acc_ref[...] += jnp.dot(h.astype(jnp.bfloat16), w2c,
                            preferred_element_type=jnp.float32)   # [N, D] partial

    @pl.when(c == pl.num_programs(0) - 1)
    def _finalize():
        y2 = acc_ref[...] * s2_ref[...]                           # dequant W2 scale
        out_ref[...] = _layernorm(y2 + y1_ref[...])


# ---- weight packing / quantization --------------------------------------------
def _quantize_per_col(w):
    """Symmetric int8 quantization with per-output-channel scales."""
    amax = jnp.max(jnp.abs(w), axis=0, keepdims=True)             # [1, out]
    scale = jnp.maximum(amax, 1e-8) / 127.0
    q = jnp.clip(jnp.round(w / scale), -127, 127).astype(jnp.int8)
    return q, scale.astype(jnp.float32)


def pack_params(p):
    """Pre-pack f32 [in, out] Linear weights into kernel layouts."""
    inv_sqrt_dk = 1.0 / math.sqrt(d_k)
    wqkv = jnp.concatenate([p["wq"] * inv_sqrt_dk, p["wk"], p["wv"]],
                           axis=1).astype(jnp.bfloat16)           # [512, 1536]
    w1q, s1 = _quantize_per_col(p["w1"])                          # [512,2048] i8
    w2q, s2 = _quantize_per_col(p["w2"])                          # [2048,512] i8
    return {"wqkv": wqkv, "wo": p["wo"].astype(jnp.bfloat16),
            "w1q": w1q, "s1": s1, "w2q": w2q, "s2": s2}


# ---- wrapper -------------------------------------------------------------------
def encoder_layer(x, attn_mask, packed):
    """x: [B, L, d_model] f32; attn_mask: [B, L, L] (>0 => masked key)."""
    B, L, D = x.shape
    N = B * L
    HN = n_heads * N
    x2d = x.reshape(N, D)

    # Additive bias for the head- and batch-packed [HN, HN] score matrix:
    # 0 where (same head, same batch, key not padded), -1e9 everywhere else.
    bidx = jnp.arange(B)
    allow = jnp.zeros((B, L, B, L), dtype=bool).at[bidx, :, bidx, :].set(
        attn_mask <= 0.0)
    bias_nn = jnp.where(allow.reshape(N, N), 0.0, NEG_INF).astype(jnp.float32)
    hidx = jnp.arange(n_heads)
    bias_hn = (jnp.full((n_heads, N, n_heads, N), NEG_INF, jnp.float32)
               .at[hidx, :, hidx, :].set(bias_nn)
               .reshape(HN, HN))

    chunk = d_ff // N_FF_CHUNKS

    grid_spec = pltpu.PrefetchScalarGridSpec(
        num_scalar_prefetch=0,
        grid=(N_FF_CHUNKS,),
        in_specs=[
            pl.BlockSpec((N, D), lambda c: (0, 0)),                 # x
            pl.BlockSpec((HN, HN), lambda c: (0, 0)),               # bias
            pl.BlockSpec((D, 3 * n_heads * d_k), lambda c: (0, 0)), # wqkv
            pl.BlockSpec((n_heads * d_v, D), lambda c: (0, 0)),     # wo
            pl.BlockSpec((D, chunk), lambda c: (0, c)),             # w1 int8 chunk
            pl.BlockSpec((1, chunk), lambda c: (0, c)),             # s1 chunk
            pl.BlockSpec((chunk, D), lambda c: (c, 0)),             # w2 int8 chunk
            pl.BlockSpec((1, D), lambda c: (0, 0)),                 # s2
        ],
        out_specs=[
            pl.BlockSpec((N, D), lambda c: (0, 0)),                 # enc_out
            pl.BlockSpec((HN, HN), lambda c: (0, 0)),               # attn (packed)
        ],
        scratch_shapes=[
            pltpu.VMEM((N, D), jnp.float32),                        # y1
            pltpu.VMEM((N, D), jnp.float32),                        # y2 accumulator
        ],
    )

    out2d, attn_pk = pl.pallas_call(
        encoder_layer_kernel,
        out_shape=(jax.ShapeDtypeStruct((N, D), jnp.float32),
                   jax.ShapeDtypeStruct((HN, HN), jnp.float32)),
        grid_spec=grid_spec,
        compiler_params=pltpu.CompilerParams(
            dimension_semantics=("arbitrary",),
            vmem_limit_bytes=32 * 1024 * 1024),
    )(x2d, bias_hn, packed["wqkv"], packed["wo"],
      packed["w1q"], packed["s1"], packed["w2q"], packed["s2"])

    enc_out = out2d.reshape(B, L, D)
    # Slice the head-diagonal, then batch-diagonal blocks -> [B, H, L, L].
    attn_h = attn_pk.reshape(n_heads, N, n_heads, N)[hidx, :, hidx, :]  # [H,N,N]
    attn5 = attn_h.reshape(n_heads, B, L, B, L)
    attn = attn5[:, bidx, :, bidx, :]            # advanced dims lead -> [B,H,L,L]
    return enc_out, attn


# ---- pure-JAX f32 reference (for correctness check) ----------------------------
def encoder_layer_ref(x, attn_mask, p):
    def ln(v):
        mu = jnp.mean(v, axis=-1, keepdims=True)
        var = jnp.mean((v - mu) ** 2, axis=-1, keepdims=True)
        return (v - mu) / jnp.sqrt(var + LN_EPS)

    B, L, D = x.shape
    Q = (x @ p["wq"]).reshape(B, L, n_heads, d_k).transpose(0, 2, 1, 3)
    K = (x @ p["wk"]).reshape(B, L, n_heads, d_k).transpose(0, 2, 1, 3)
    V = (x @ p["wv"]).reshape(B, L, n_heads, d_v).transpose(0, 2, 1, 3)
    scores = jnp.einsum("bhqd,bhkd->bhqk", Q, K) / math.sqrt(d_k)
    scores = jnp.where(attn_mask[:, None] > 0.0, NEG_INF, scores)
    attn = jax.nn.softmax(scores, axis=-1)
    ctx = jnp.einsum("bhqk,bhkd->bhqd", attn, V)
    ctx = ctx.transpose(0, 2, 1, 3).reshape(B, L, n_heads * d_v)
    y1 = ln(ctx @ p["wo"] + x)
    y2 = ln(jax.nn.relu(y1 @ p["w1"]) @ p["w2"] + y1)
    return y2, attn


if __name__ == "__main__":
    key = jax.random.PRNGKey(0)
    B, L = 2, 8
    ks = jax.random.split(key, 8)
    scale = 0.02
    params = {
        "wq": scale * jax.random.normal(ks[0], (d_model, n_heads * d_k), jnp.float32),
        "wk": scale * jax.random.normal(ks[1], (d_model, n_heads * d_k), jnp.float32),
        "wv": scale * jax.random.normal(ks[2], (d_model, n_heads * d_v), jnp.float32),
        "wo": scale * jax.random.normal(ks[3], (n_heads * d_v, d_model), jnp.float32),
        "w1": scale * jax.random.normal(ks[4], (d_model, d_ff), jnp.float32),
        "w2": scale * jax.random.normal(ks[5], (d_ff, d_model), jnp.float32),
    }
    packed = pack_params(params)

    # enc_inputs: already-embedded activations; pad-style self-attention mask.
    x = jax.random.normal(ks[6], (B, L, d_model), jnp.float32)
    pad = jnp.array([[0, 0, 0, 0, 0, 0, 1, 1],
                     [0, 0, 0, 0, 0, 0, 0, 1]], dtype=jnp.float32)  # 1 => PAD key
    attn_mask = jnp.broadcast_to(pad[:, None, :], (B, L, L))

    fwd = jax.jit(encoder_layer)
    enc_out, attn = fwd(x, attn_mask, packed)
    jax.block_until_ready(enc_out)
    jax.block_until_ready(attn)

    assert enc_out.shape == (B, L, d_model)
    assert attn.shape == (B, n_heads, L, L)
    assert bool(jnp.all(jnp.isfinite(enc_out)))
    assert bool(jnp.all(jnp.isfinite(attn)))

    # Compare against the f32 reference (kernel uses bf16 matmuls + int8 FFN
    # weights -> loose tolerances).
    ref_out, ref_attn = encoder_layer_ref(x, attn_mask, params)
    assert bool(jnp.allclose(enc_out, ref_out, rtol=0.1, atol=0.1))
    assert bool(jnp.allclose(attn, ref_attn, rtol=0.1, atol=0.05))
    # Attention rows are proper distributions; padded keys get ~zero weight.
    assert bool(jnp.allclose(jnp.sum(attn, axis=-1), 1.0, atol=1e-2))
    assert bool(jnp.all(attn[0, :, :, 6:] < 1e-6)) and bool(jnp.all(attn[1, :, :, 7:] < 1e-6))

    print("KERNEL_OK")
</pallas_src>

<mosaic_0001>
module attributes {stable_mosaic.version = 11 : i64} {
  func.func @encoder_layer_kernel(%arg0: i32, %arg1: memref<16x512xf32, #tpu.memory_space<vmem>>, %arg2: memref<128x128xf32, #tpu.memory_space<vmem>>, %arg3: memref<512x1536xbf16, #tpu.memory_space<vmem>>, %arg4: memref<512x512xbf16, #tpu.memory_space<vmem>>, %arg5: memref<512x512xi8, #tpu.memory_space<vmem>>, %arg6: memref<1x512xf32, #tpu.memory_space<vmem>>, %arg7: memref<512x512xi8, #tpu.memory_space<vmem>>, %arg8: memref<1x512xf32, #tpu.memory_space<vmem>>, %arg9: memref<16x512xf32, #tpu.memory_space<vmem>>, %arg10: memref<128x128xf32, #tpu.memory_space<vmem>>, %arg11: memref<16x512xf32, #tpu.memory_space<vmem>>, %arg12: memref<16x512xf32, #tpu.memory_space<vmem>>) attributes {dimension_semantics = [#tpu.dimension_semantics<arbitrary>], iteration_bounds = array<i64: 4>, scalar_prefetch = 0 : i64, scratch_operands = 2 : i64, tpu.core_type = #tpu.core_type<tc>, window_params = [{pipeline_mode = #tpu.pipeline_mode<synchronous>, transform_indices = @transform_0, window_bounds = array<i64: 16, 512>}, {pipeline_mode = #tpu.pipeline_mode<synchronous>, transform_indices = @transform_1, window_bounds = array<i64: 128, 128>}, {pipeline_mode = #tpu.pipeline_mode<synchronous>, transform_indices = @transform_2, window_bounds = array<i64: 512, 1536>}, {pipeline_mode = #tpu.pipeline_mode<synchronous>, transform_indices = @transform_3, window_bounds = array<i64: 512, 512>}, {transform_indices = @transform_4, window_bounds = array<i64: 512, 512>}, {transform_indices = @transform_5, window_bounds = array<i64: 1, 512>}, {transform_indices = @transform_6, window_bounds = array<i64: 512, 512>}, {pipeline_mode = #tpu.pipeline_mode<synchronous>, transform_indices = @transform_7, window_bounds = array<i64: 1, 512>}, {pipeline_mode = #tpu.pipeline_mode<synchronous>, transform_indices = @transform_8, window_bounds = array<i64: 16, 512>}, {pipeline_mode = #tpu.pipeline_mode<synchronous>, transform_indices = @transform_9, window_bounds = array<i64: 128, 128>}]} {
    %c0_i32 = arith.constant 0 : i32
    %0 = arith.cmpi eq, %arg0, %c0_i32 : i32
    %1 = arith.extui %0 : i1 to i32
    %c0_i32_0 = arith.constant 0 : i32
    %2 = arith.cmpi ne, %1, %c0_i32_0 : i32
    scf.if %2 {
      %c0_15 = arith.constant 0 : index
      %c0_16 = arith.constant 0 : index
      %25 = vector.load %arg1[%c0_15, %c0_16] : memref<16x512xf32, #tpu.memory_space<vmem>>, vector<16x512xf32>
      %26 = arith.truncf %25 : vector<16x512xf32> to vector<16x512xbf16>
      %c0_17 = arith.constant 0 : index
      %c0_18 = arith.constant 0 : index
      %27 = vector.load %arg3[%c0_17, %c0_18] : memref<512x1536xbf16, #tpu.memory_space<vmem>>, vector<512x1536xbf16>
      %cst_19 = arith.constant dense<0.000000e+00> : vector<16x1536xf32>
      %28 = tpu.matmul %26, %27, %cst_19 {dimension_numbers = #tpu.dot_dimension_numbers<[1], [0], [0], [1], [0, 0, 1, 1], [], []>} : vector<16x512xbf16>, vector<512x1536xbf16>, vector<16x1536xf32> -> vector<16x1536xf32>
      %29 = vector.extract_strided_slice %28 {offsets = [0, 0], sizes = [16, 512], strides = [1, 1]} : vector<16x1536xf32> to vector<16x512xf32>
      %30 = vector.extract_strided_slice %28 {offsets = [0, 512], sizes = [16, 512], strides = [1, 1]} : vector<16x1536xf32> to vector<16x512xf32>
      %31 = vector.extract_strided_slice %28 {offsets = [0, 1024], sizes = [16, 512], strides = [1, 1]} : vector<16x1536xf32> to vector<16x512xf32>
      %32 = vector.extract_strided_slice %29 {offsets = [0, 0], sizes = [16, 64], strides = [1, 1]} : vector<16x512xf32> to vector<16x64xf32>
      %33 = vector.extract_strided_slice %29 {offsets = [0, 64], sizes = [16, 64], strides = [1, 1]} : vector<16x512xf32> to vector<16x64xf32>
      %34 = vector.extract_strided_slice %29 {offsets = [0, 128], sizes = [16, 64], strides = [1, 1]} : vector<16x512xf32> to vector<16x64xf32>
      %35 = vector.extract_strided_slice %29 {offsets = [0, 192], sizes = [16, 64], strides = [1, 1]} : vector<16x512xf32> to vector<16x64xf32>
      %36 = vector.extract_strided_slice %29 {offsets = [0, 256], sizes = [16, 64], strides = [1, 1]} : vector<16x512xf32> to vector<16x64xf32>
      %37 = vector.extract_strided_slice %29 {offsets = [0, 320], sizes = [16, 64], strides = [1, 1]} : vector<16x512xf32> to vector<16x64xf32>
      %38 = vector.extract_strided_slice %29 {offsets = [0, 384], sizes = [16, 64], strides = [1, 1]} : vector<16x512xf32> to vector<16x64xf32>
      %39 = vector.extract_strided_slice %29 {offsets = [0, 448], sizes = [16, 64], strides = [1, 1]} : vector<16x512xf32> to vector<16x64xf32>
      %40 = tpu.concatenate %32, %33, %34, %35, %36, %37, %38, %39 in 0 : vector<16x64xf32>, vector<16x64xf32>, vector<16x64xf32>, vector<16x64xf32>, vector<16x64xf32>, vector<16x64xf32>, vector<16x64xf32>, vector<16x64xf32> -> vector<128x64xf32>
      %41 = arith.truncf %40 : vector<128x64xf32> to vector<128x64xbf16>
      %42 = vector.extract_strided_slice %30 {offsets = [0, 0], sizes = [16, 64], strides = [1, 1]} : vector<16x512xf32> to vector<16x64xf32>
      %43 = vector.extract_strided_slice %30 {offsets = [0, 64], sizes = [16, 64], strides = [1, 1]} : vector<16x512xf32> to vector<16x64xf32>
      %44 = vector.extract_strided_slice %30 {offsets = [0, 128], sizes = [16, 64], strides = [1, 1]} : vector<16x512xf32> to vector<16x64xf32>
      %45 = vector.extract_strided_slice %30 {offsets = [0, 192], sizes = [16, 64], strides = [1, 1]} : vector<16x512xf32> to vector<16x64xf32>
      %46 = vector.extract_strided_slice %30 {offsets = [0, 256], sizes = [16, 64], strides = [1, 1]} : vector<16x512xf32> to vector<16x64xf32>
      %47 = vector.extract_strided_slice %30 {offsets = [0, 320], sizes = [16, 64], strides = [1, 1]} : vector<16x512xf32> to vector<16x64xf32>
      %48 = vector.extract_strided_slice %30 {offsets = [0, 384], sizes = [16, 64], strides = [1, 1]} : vector<16x512xf32> to vector<16x64xf32>
      %49 = vector.extract_strided_slice %30 {offsets = [0, 448], sizes = [16, 64], strides = [1, 1]} : vector<16x512xf32> to vector<16x64xf32>
      %50 = tpu.concatenate %42, %43, %44, %45, %46, %47, %48, %49 in 0 : vector<16x64xf32>, vector<16x64xf32>, vector<16x64xf32>, vector<16x64xf32>, vector<16x64xf32>, vector<16x64xf32>, vector<16x64xf32>, vector<16x64xf32> -> vector<128x64xf32>
      %51 = arith.truncf %50 : vector<128x64xf32> to vector<128x64xbf16>
      %52 = vector.extract_strided_slice %31 {offsets = [0, 0], sizes = [16, 64], strides = [1, 1]} : vector<16x512xf32> to vector<16x64xf32>
      %53 = vector.extract_strided_slice %31 {offsets = [0, 64], sizes = [16, 64], strides = [1, 1]} : vector<16x512xf32> to vector<16x64xf32>
      %54 = vector.extract_strided_slice %31 {offsets = [0, 128], sizes = [16, 64], strides = [1, 1]} : vector<16x512xf32> to vector<16x64xf32>
      %55 = vector.extract_strided_slice %31 {offsets = [0, 192], sizes = [16, 64], strides = [1, 1]} : vector<16x512xf32> to vector<16x64xf32>
      %56 = vector.extract_strided_slice %31 {offsets = [0, 256], sizes = [16, 64], strides = [1, 1]} : vector<16x512xf32> to vector<16x64xf32>
      %57 = vector.extract_strided_slice %31 {offsets = [0, 320], sizes = [16, 64], strides = [1, 1]} : vector<16x512xf32> to vector<16x64xf32>
      %58 = vector.extract_strided_slice %31 {offsets = [0, 384], sizes = [16, 64], strides = [1, 1]} : vector<16x512xf32> to vector<16x64xf32>
      %59 = vector.extract_strided_slice %31 {offsets = [0, 448], sizes = [16, 64], strides = [1, 1]} : vector<16x512xf32> to vector<16x64xf32>
      %60 = tpu.concatenate %52, %53, %54, %55, %56, %57, %58, %59 in 0 : vector<16x64xf32>, vector<16x64xf32>, vector<16x64xf32>, vector<16x64xf32>, vector<16x64xf32>, vector<16x64xf32>, vector<16x64xf32>, vector<16x64xf32> -> vector<128x64xf32>
      %61 = arith.truncf %60 : vector<128x64xf32> to vector<128x64xbf16>
      %cst_20 = arith.constant dense<0.000000e+00> : vector<128x128xf32>
      %62 = tpu.matmul %41, %51, %cst_20 {dimension_numbers = #tpu.dot_dimension_numbers<[1], [1], [0], [0], [0, 0, 1, 0], [], []>} : vector<128x64xbf16>, vector<128x64xbf16>, vector<128x128xf32> -> vector<128x128xf32>
      %c0_21 = arith.constant 0 : index
      %c0_22 = arith.constant 0 : index
      %63 = vector.load %arg2[%c0_21, %c0_22] : memref<128x128xf32, #tpu.memory_space<vmem>>, vector<128x128xf32>
      %64 = arith.addf %62, %63 : vector<128x128xf32>
      %cst_23 = arith.constant dense<0xFF800000> : vector<128xf32>
      %65 = vector.multi_reduction <maximumf>, %64, %cst_23 [1] : vector<128x128xf32> to vector<128xf32>
      %66 = vector.shape_cast %65 : vector<128xf32> to vector<128x1xf32>
      %67 = vector.broadcast %66 : vector<128x1xf32> to vector<128x128xf32>
      %68 = arith.subf %64, %67 : vector<128x128xf32>
      %69 = math.exp %68 : vector<128x128xf32>
      %cst_24 = arith.constant dense<0.000000e+00> : vector<128xf32>
      %70 = vector.multi_reduction <add>, %69, %cst_24 [1] : vector<128x128xf32> to vector<128xf32>
      %71 = vector.shape_cast %70 : vector<128xf32> to vector<128x1xf32>
      %72 = tpu.reciprocal %71 {approx = true} : vector<128x1xf32> -> vector<128x1xf32>
      %73 = vector.broadcast %72 : vector<128x1xf32> to vector<128x128xf32>
      %74 = arith.mulf %69, %73 : vector<128x128xf32>
      %c0_25 = arith.constant 0 : index
      %c0_26 = arith.constant 0 : index
      %75 = vector.load %arg10[%c0_25, %c0_26] : memref<128x128xf32, #tpu.memory_space<vmem>>, vector<128x128xf32>
      tpu.vector_store %arg10[%c0_25, %c0_26], %74 {strides = array<i32>} : memref<128x128xf32, #tpu.memory_space<vmem>>, vector<128x128xf32>,
      %76 = arith.truncf %74 : vector<128x128xf32> to vector<128x128xbf16>
      %cst_27 = arith.constant dense<0.000000e+00> : vector<128x64xf32>
      %77 = tpu.matmul %76, %61, %cst_27 {dimension_numbers = #tpu.dot_dimension_numbers<[1], [0], [0], [1], [0, 0, 1, 1], [], []>} : vector<128x128xbf16>, vector<128x64xbf16>, vector<128x64xf32> -> vector<128x64xf32>
      %78 = vector.extract_strided_slice %77 {offsets = [0, 0], sizes = [16, 64], strides = [1, 1]} : vector<128x64xf32> to vector<16x64xf32>
      %79 = vector.extract_strided_slice %77 {offsets = [16, 0], sizes = [16, 64], strides = [1, 1]} : vector<128x64xf32> to vector<16x64xf32>
      %80 = vector.extract_strided_slice %77 {offsets = [32, 0], sizes = [16, 64], strides = [1, 1]} : vector<128x64xf32> to vector<16x64xf32>
      %81 = vector.extract_strided_slice %77 {offsets = [48, 0], sizes = [16, 64], strides = [1, 1]} : vector<128x64xf32> to vector<16x64xf32>
      %82 = vector.extract_strided_slice %77 {offsets = [64, 0], sizes = [16, 64], strides = [1, 1]} : vector<128x64xf32> to vector<16x64xf32>
      %83 = vector.extract_strided_slice %77 {offsets = [80, 0], sizes = [16, 64], strides = [1, 1]} : vector<128x64xf32> to vector<16x64xf32>
      %84 = vector.extract_strided_slice %77 {offsets = [96, 0], sizes = [16, 64], strides = [1, 1]} : vector<128x64xf32> to vector<16x64xf32>
      %85 = vector.extract_strided_slice %77 {offsets = [112, 0], sizes = [16, 64], strides = [1, 1]} : vector<128x64xf32> to vector<16x64xf32>
      %86 = tpu.concatenate %78, %79, %80, %81, %82, %83, %84, %85 in 1 : vector<16x64xf32>, vector<16x64xf32>, vector<16x64xf32>, vector<16x64xf32>, vector<16x64xf32>, vector<16x64xf32>, vector<16x64xf32>, vector<16x64xf32> -> vector<16x512xf32>
      %87 = arith.truncf %86 : vector<16x512xf32> to vector<16x512xbf16>
      %c0_28 = arith.constant 0 : index
      %c0_29 = arith.constant 0 : index
      %88 = vector.load %arg4[%c0_28, %c0_29] : memref<512x512xbf16, #tpu.memory_space<vmem>>, vector<512x512xbf16>
      %cst_30 = arith.constant dense<0.000000e+00> : vector<16x512xf32>
      %89 = tpu.matmul %87, %88, %cst_30 {dimension_numbers = #tpu.dot_dimension_numbers<[1], [0], [0], [1], [0, 0, 1, 1], [], []>} : vector<16x512xbf16>, vector<512x512xbf16>, vector<16x512xf32> -> vector<16x512xf32>
      %90 = arith.addf %89, %25 : vector<16x512xf32>
      %cst_31 = arith.constant dense<0.000000e+00> : vector<16xf32>
      %91 = vector.multi_reduction <add>, %90, %cst_31 [1] : vector<16x512xf32> to vector<16xf32>
      %92 = vector.shape_cast %91 : vector<16xf32> to vector<16x1xf32>
      %cst_32 = arith.constant 5.120000e+02 : f32
      %93 = vector.broadcast %cst_32 : f32 to vector<16x1xf32>
      %94 = arith.divf %92, %93 : vector<16x1xf32>
      %95 = vector.broadcast %94 : vector<16x1xf32> to vector<16x512xf32>
      %96 = arith.subf %90, %95 : vector<16x512xf32>
      %97 = arith.mulf %96, %96 : vector<16x512xf32>
      %cst_33 = arith.constant dense<0.000000e+00> : vector<16xf32>
      %98 = vector.multi_reduction <add>, %97, %cst_33 [1] : vector<16x512xf32> to vector<16xf32>
      %99 = vector.shape_cast %98 : vector<16xf32> to vector<16x1xf32>
      %cst_34 = arith.constant 5.120000e+02 : f32
      %100 = vector.broadcast %cst_34 : f32 to vector<16x1xf32>
      %101 = arith.divf %99, %100 : vector<16x1xf32>
      %102 = vector.broadcast %94 : vector<16x1xf32> to vector<16x512xf32>
      %103 = arith.subf %90, %102 : vector<16x512xf32>
      %cst_35 = arith.constant 9.99999974E-6 : f32
      %104 = vector.broadcast %cst_35 : f32 to vector<16x1xf32>
      %105 = arith.addf %101, %104 : vector<16x1xf32>
      %106 = math.rsqrt %105 : vector<16x1xf32>
      %107 = vector.broadcast %106 : vector<16x1xf32> to vector<16x512xf32>
      %108 = arith.mulf %103, %107 : vector<16x512xf32>
      %c0_36 = arith.constant 0 : index
      %c0_37 = arith.constant 0 : index
      %109 = vector.load %arg11[%c0_36, %c0_37] : memref<16x512xf32, #tpu.memory_space<vmem>>, vector<16x512xf32>
      tpu.vector_store %arg11[%c0_36, %c0_37], %108 {strides = array<i32>} : memref<16x512xf32, #tpu.memory_space<vmem>>, vector<16x512xf32>,
      %cst_38 = arith.constant 0.000000e+00 : f32
      %110 = vector.broadcast %cst_38 : f32 to vector<16x512xf32>
      %c0_39 = arith.constant 0 : index
      %c0_40 = arith.constant 0 : index
      %111 = vector.load %arg12[%c0_39, %c0_40] : memref<16x512xf32, #tpu.memory_space<vmem>>, vector<16x512xf32>
      tpu.vector_store %arg12[%c0_39, %c0_40], %110 {strides = array<i32>} : memref<16x512xf32, #tpu.memory_space<vmem>>, vector<16x512xf32>,
    } else {
    }
    %c0 = arith.constant 0 : index
    %c0_1 = arith.constant 0 : index
    %3 = vector.load %arg11[%c0, %c0_1] : memref<16x512xf32, #tpu.memory_space<vmem>>, vector<16x512xf32>
    %c0_2 = arith.constant 0 : index
    %c0_3 = arith.constant 0 : index
    %4 = vector.load %arg5[%c0_2, %c0_3] : memref<512x512xi8, #tpu.memory_space<vmem>>, vector<512x512xi8>
    %5 = arith.sitofp %4 : vector<512x512xi8> to vector<512x512xf32>
    %6 = arith.truncf %5 : vector<512x512xf32> to vector<512x512xbf16>
    %7 = arith.truncf %3 : vector<16x512xf32> to vector<16x512xbf16>
    %cst = arith.constant dense<0.000000e+00> : vector<16x512xf32>
    %8 = tpu.matmul %7, %6, %cst {dimension_numbers = #tpu.dot_dimension_numbers<[1], [0], [0], [1], [0, 0, 1, 1], [], []>} : vector<16x512xbf16>, vector<512x512xbf16>, vector<16x512xf32> -> vector<16x512xf32>
    %c0_4 = arith.constant 0 : index
    %c0_5 = arith.constant 0 : index
    %9 = vector.load %arg6[%c0_4, %c0_5] : memref<1x512xf32, #tpu.memory_space<vmem>>, vector<1x512xf32>
    %10 = vector.broadcast %9 : vector<1x512xf32> to vector<16x512xf32>
    %11 = arith.mulf %8, %10 : vector<16x512xf32>
    %cst_6 = arith.constant 0.000000e+00 : f32
    %12 = vector.broadcast %cst_6 : f32 to vector<16x512xf32>
    %13 = arith.maximumf %11, %12 : vector<16x512xf32>
    %c0_7 = arith.constant 0 : index
    %c0_8 = arith.constant 0 : index
    %14 = vector.load %arg7[%c0_7, %c0_8] : memref<512x512xi8, #tpu.memory_space<vmem>>, vector<512x512xi8>
    %15 = arith.sitofp %14 : vector<512x512xi8> to vector<512x512xf32>
    %16 = arith.truncf %15 : vector<512x512xf32> to vector<512x512xbf16>
    %c0_9 = arith.constant 0 : index
    %c0_10 = arith.constant 0 : index
    %17 = vector.load %arg12[%c0_9, %c0_10] : memref<16x512xf32, #tpu.memory_space<vmem>>, vector<16x512xf32>
    %18 = arith.truncf %13 : vector<16x512xf32> to vector<16x512xbf16>
    %cst_11 = arith.constant dense<0.000000e+00> : vector<16x512xf32>
    %19 = tpu.matmul %18, %16, %cst_11 {dimension_numbers = #tpu.dot_dimension_numbers<[1], [0], [0], [1], [0, 0, 1, 1], [], []>} : vector<16x512xbf16>, vector<512x512xbf16>, vector<16x512xf32> -> vector<16x512xf32>
    %20 = arith.addf %17, %19 : vector<16x512xf32>
    %c0_12 = arith.constant 0 : index
    %c0_13 = arith.constant 0 : index
    %21 = vector.load %arg12[%c0_12, %c0_13] : memref<16x512xf32, #tpu.memory_space<vmem>>, vector<16x512xf32>
    tpu.vector_store %arg12[%c0_12, %c0_13], %20 {strides = array<i32>} : memref<16x512xf32, #tpu.memory_space<vmem>>, vector<16x512xf32>,
    %c3_i32 = arith.constant 3 : i32
    %22 = arith.cmpi eq, %arg0, %c3_i32 : i32
    %23 = arith.extui %22 : i1 to i32
    %c0_i32_14 = arith.constant 0 : i32
    %24 = arith.cmpi ne, %23, %c0_i32_14 : i32
    scf.if %24 {
      %c0_15 = arith.constant 0 : index
      %c0_16 = arith.constant 0 : index
      %25 = vector.load %arg12[%c0_15, %c0_16] : memref<16x512xf32, #tpu.memory_space<vmem>>, vector<16x512xf32>
      %c0_17 = arith.constant 0 : index
      %c0_18 = arith.constant 0 : index
      %26 = vector.load %arg8[%c0_17, %c0_18] : memref<1x512xf32, #tpu.memory_space<vmem>>, vector<1x512xf32>
      %27 = vector.broadcast %26 : vector<1x512xf32> to vector<16x512xf32>
      %28 = arith.mulf %25, %27 : vector<16x512xf32>
      %c0_19 = arith.constant 0 : index
      %c0_20 = arith.constant 0 : index
      %29 = vector.load %arg11[%c0_19, %c0_20] : memref<16x512xf32, #tpu.memory_space<vmem>>, vector<16x512xf32>
      %30 = arith.addf %28, %29 : vector<16x512xf32>
      %cst_21 = arith.constant dense<0.000000e+00> : vector<16xf32>
      %31 = vector.multi_reduction <add>, %30, %cst_21 [1] : vector<16x512xf32> to vector<16xf32>
      %32 = vector.shape_cast %31 : vector<16xf32> to vector<16x1xf32>
      %cst_22 = arith.constant 5.120000e+02 : f32
      %33 = vector.broadcast %cst_22 : f32 to vector<16x1xf32>
      %34 = arith.divf %32, %33 : vector<16x1xf32>
      %35 = vector.broadcast %34 : vector<16x1xf32> to vector<16x512xf32>
      %36 = arith.subf %30, %35 : vector<16x512xf32>
      %37 = arith.mulf %36, %36 : vector<16x512xf32>
      %cst_23 = arith.constant dense<0.000000e+00> : vector<16xf32>
      %38 = vector.multi_reduction <add>, %37, %cst_23 [1] : vector<16x512xf32> to vector<16xf32>
      %39 = vector.shape_cast %38 : vector<16xf32> to vector<16x1xf32>
      %cst_24 = arith.constant 5.120000e+02 : f32
      %40 = vector.broadcast %cst_24 : f32 to vector<16x1xf32>
      %41 = arith.divf %39, %40 : vector<16x1xf32>
      %42 = vector.broadcast %34 : vector<16x1xf32> to vector<16x512xf32>
      %43 = arith.subf %30, %42 : vector<16x512xf32>
      %cst_25 = arith.constant 9.99999974E-6 : f32
      %44 = vector.broadcast %cst_25 : f32 to vector<16x1xf32>
      %45 = arith.addf %41, %44 : vector<16x1xf32>
      %46 = math.rsqrt %45 : vector<16x1xf32>
      %47 = vector.broadcast %46 : vector<16x1xf32> to vector<16x512xf32>
      %48 = arith.mulf %43, %47 : vector<16x512xf32>
      %c0_26 = arith.constant 0 : index
      %c0_27 = arith.constant 0 : index
      %49 = vector.load %arg9[%c0_26, %c0_27] : memref<16x512xf32, #tpu.memory_space<vmem>>, vector<16x512xf32>
      tpu.vector_store %arg9[%c0_26, %c0_27], %48 {strides = array<i32>} : memref<16x512xf32, #tpu.memory_space<vmem>>, vector<16x512xf32>,
    } else {
    }
    return
  }
  func.func @transform_0(%arg0: i32) -> (i32, i32) {
    %c0_i32 = arith.constant 0 : i32
    %c0_i32_0 = arith.constant 0 : i32
    %c0_i32_1 = arith.constant 0 : i32
    return %c0_i32, %c0_i32_0 : i32, i32
  }
  func.func @transform_1(%arg0: i32) -> (i32, i32) {
    %c0_i32 = arith.constant 0 : i32
    %c0_i32_0 = arith.constant 0 : i32
    %c0_i32_1 = arith.constant 0 : i32
    return %c0_i32, %c0_i32_0 : i32, i32
  }
  func.func @transform_2(%arg0: i32) -> (i32, i32) {
    %c0_i32 = arith.constant 0 : i32
    %c0_i32_0 = arith.constant 0 : i32
    %c0_i32_1 = arith.constant 0 : i32
    return %c0_i32, %c0_i32_0 : i32, i32
  }
  func.func @transform_3(%arg0: i32) -> (i32, i32) {
    %c0_i32 = arith.constant 0 : i32
    %c0_i32_0 = arith.constant 0 : i32
    %c0_i32_1 = arith.constant 0 : i32
    return %c0_i32, %c0_i32_0 : i32, i32
  }
  func.func @transform_4(%arg0: i32) -> (i32, i32) {
    %c0_i32 = arith.constant 0 : i32
    %c0_i32_0 = arith.constant 0 : i32
    return %c0_i32, %arg0 : i32, i32
  }
  func.func @transform_5(%arg0: i32) -> (i32, i32) {
    %c0_i32 = arith.constant 0 : i32
    %c0_i32_0 = arith.constant 0 : i32
    return %c0_i32, %arg0 : i32, i32
  }
  func.func @transform_6(%arg0: i32) -> (i32, i32) {
    %c0_i32 = arith.constant 0 : i32
    %c0_i32_0 = arith.constant 0 : i32
    return %arg0, %c0_i32 : i32, i32
  }
  func.func @transform_7(%arg0: i32) -> (i32, i32) {
    %c0_i32 = arith.constant 0 : i32
    %c0_i32_0 = arith.constant 0 : i32
    %c0_i32_1 = arith.constant 0 : i32
    return %c0_i32, %c0_i32_0 : i32, i32
  }
  func.func @transform_8(%arg0: i32) -> (i32, i32) {
    %c0_i32 = arith.constant 0 : i32
    %c0_i32_0 = arith.constant 0 : i32
    %c0_i32_1 = arith.constant 0 : i32
    return %c0_i32, %c0_i32_0 : i32, i32
  }
  func.func @transform_9(%arg0: i32) -> (i32, i32) {
    %c0_i32 = arith.constant 0 : i32
    %c0_i32_0 = arith.constant 0 : i32
    %c0_i32_1 = arith.constant 0 : i32
    return %c0_i32, %c0_i32_0 : i32, i32
  }
}

</mosaic_0001>

<llo_original>
// kernel: encoder_layer.1
$region0: #{encoder_layer.1}
  #allocation0 [shape = 'u32[]', space=smem, size = 0x4, offset = 0x4, fixed_abs, tag = 'smem constant byte address 0x4 - core index']
  #allocation1 [shape = 'u32[72,128]{1,0:T(1,128)}', space=vmem, size = 0x9000, scoped, tag = 'internal scratch']
  #allocation2 [shape = 'f32[16,512]{1,0:T(8,128)}', space=vmem, size = 0x8000, scoped, tag = 'scratch operand']
  #allocation3 [shape = 'f32[16,512]{1,0:T(8,128)}', space=vmem, size = 0x8000, scoped, tag = 'scratch operand']
  %s0 = inlined_call_operand.vmem [shape: f32[16,512], index: 0, kind: input, shape index: {}]
  %s1 = inlined_call_operand.vmem [shape: f32[128,128], index: 1, kind: input, shape index: {}]
  %s2 = inlined_call_operand.vmem [shape: bf16[512,1536], index: 2, kind: input, shape index: {}]
  %s3 = inlined_call_operand.vmem [shape: bf16[512,512], index: 3, kind: input, shape index: {}]
  %s4 = inlined_call_operand.hbm [shape: s8[512,2048], index: 4, kind: input, shape index: {}]
  %s5 = inlined_call_operand.vmem [shape: f32[1,2048], index: 5, kind: input, shape index: {}]
  %s6 = inlined_call_operand.hbm [shape: s8[2048,512], index: 6, kind: input, shape index: {}]
  %s7 = inlined_call_operand.vmem [shape: f32[1,512], index: 7, kind: input, shape index: {}]
  %s8 = inlined_call_operand.hbm [shape: f32[16,512], index: 8, kind: output, shape index: {0}]
  %s9 = inlined_call_operand.vmem [shape: f32[128,128], index: 9, kind: output, shape index: {1}]
  %10 = xla_tuple %s8, %s9
  %s11 = sld [smem:[#allocation0]]
  $region89: #{encoder_layer.1} parent=0
    _
  %s13 = ssub.s32 1, %s11
  %s14 = scalar_select 0, %s13, %s11
  $region1: #{encoder_layer.1} parent=0
    #allocation4 [shape = 'u8[524288]{0}', space=vmem, size = 0x80000, scoped, tag = 'input window, operand 4']
    #allocation5 [shape = 's32[2]{0}', space=sflag, size = 0x8, scoped, tag = 'scoped memory for encoder_layer.1']
    #allocation6 [shape = 's32[2]{0}', space=sflag, size = 0x8, scoped, tag = 'scoped memory for encoder_layer.1']
    #allocation7 [shape = 'u8[524288]{0}', space=vmem, size = 0x80000, scoped, tag = 'input window, operand 6']
    #allocation8 [shape = 's32[2]{0}', space=sflag, size = 0x8, scoped, tag = 'scoped memory for encoder_layer.1']
    #allocation9 [shape = 'u8[32768]{0}', space=vmem, size = 0x8000, scoped, tag = 'output window, operand 0, single buffered']
    %15 = vsyncpa [#allocation5], 0
    %s16 = scalar_lea.sflag [#allocation5], 1
    %17 = vsyncpa %s16, 0
    %18 = vsyncpa [#allocation8], 0
    %s19 = scalar_lea.sflag [#allocation8], 1
    %20 = vsyncpa %s19, 0
    %21 = vsyncpa [#allocation6], 0
    loop: start=0, step=1, limit=6
    $region2: #{encoder_layer.1} parent=1 // loop_pre_header
      _
    $region3: #{encoder_layer.1} parent=1 // loop_header
      %s23 = sphi 0, %s27
      %p24 = scmp.ge.s32.totalorder %s23, 6
      %s31 = sphi 0, %s31
      %s33 = sphi 0, %s31
      %s34 = sphi 0, %s33
      %s48 = sphi 0, %s34
      %s52 = sphi 0, %s52
      %s54 = sphi 0, %s52
      %s55 = sphi 0, %s54
      %s69 = sphi 0, %s55
      %s73 = sphi 0, %s73
      %s75 = sphi 0, %s73
      %s76 = sphi 0, %s75
      %s90 = sphi 0, %s76
      %s94 = sphi 0, %s94
      %s96 = sphi 0, %s94
      %s97 = sphi 0, %s96
      %s111 = sphi 0, %s97
      %s117 = sphi 0, %s119
      %s120 = sphi 0, %s117
      %s121 = sphi 0, %s120
      %s137 = sphi 0, %s121
      %s143 = sphi 0, %s145
      %s146 = sphi 0, %s143
      %s147 = sphi 0, %s146
      %s163 = sphi 0, %s147
      %s169 = sphi 0, %s171
      %s172 = sphi 0, %s169
      %s173 = sphi 0, %s172
      %s189 = sphi 0, %s173
      %s193 = sphi 0, %s193
      %s195 = sphi 0, %s193
      %s196 = sphi 0, %s195
      %s210 = sphi 0, %s196
      %s214 = sphi 0, %s214
      %s216 = sphi 0, %s214
      %s217 = sphi 0, %s216
      %s231 = sphi 0, %s217
      %s235 = sphi 0, %s235
      %s237 = sphi 0, %s235
      %s238 = sphi 0, %s237
      %s252 = sphi 0, %s238
    $region4: #{encoder_layer.1} parent=1 // loop_header_branch
      %26 = sbr.rel (%p24) target = $region8
    $region5: #{encoder_layer.1} parent=1 // loop_body
      %s28 = ssub.s32 %s23, 1
      %s29 = ssub.s32 %s23, 2
      %s30 = sadd.s32 %s23, 1
      %s32 = sadd.s32 %s31, 1
      %p35 = scmp.eq.s32.totalorder %s23, 3
      %p36 = scmp.ne.s32.totalorder %s31, %s33
      %p37 = scmp.eq.s32.totalorder %s23, 0
      %p38 = por %p36, %p37
      %p39 = scmp.ne.s32.totalorder %s31, %s33
      %p40 = scmp.eq.s32.totalorder %s28, 3
      %p41 = por %p39, %p40
      %p42 = scmp.ne.s32.totalorder %s33, %s34
      %p43 = scmp.eq.s32.totalorder %s28, 0
      %p44 = por %p42, %p43
      %p45 = scmp.ne.s32.totalorder %s33, %s34
      %p46 = scmp.eq.s32.totalorder %s29, 3
      %p47 = por %p45, %p46
      %p49 = scmp.ne.s32.totalorder %s34, %s48
      %p50 = scmp.eq.s32.totalorder %s29, 0
      %p51 = por %p49, %p50
      %s53 = sadd.s32 %s52, 1
      %p56 = scmp.eq.s32.totalorder %s23, 3
      %p57 = scmp.ne.s32.totalorder %s52, %s54
      %p58 = scmp.eq.s32.totalorder %s23, 0
      %p59 = por %p57, %p58
      %p60 = scmp.ne.s32.totalorder %s52, %s54
      %p61 = scmp.eq.s32.totalorder %s28, 3
      %p62 = por %p60, %p61
      %p63 = scmp.ne.s32.totalorder %s54, %s55
      %p64 = scmp.eq.s32.totalorder %s28, 0
      %p65 = por %p63, %p64
      %p66 = scmp.ne.s32.totalorder %s54, %s55
      %p67 = scmp.eq.s32.totalorder %s29, 3
      %p68 = por %p66, %p67
      %p70 = scmp.ne.s32.totalorder %s55, %s69
      %p71 = scmp.eq.s32.totalorder %s29, 0
      %p72 = por %p70, %p71
      %s74 = sadd.s32 %s73, 1
      %p77 = scmp.eq.s32.totalorder %s23, 3
      %p78 = scmp.ne.s32.totalorder %s73, %s75
      %p79 = scmp.eq.s32.totalorder %s23, 0
      %p80 = por %p78, %p79
      %p81 = scmp.ne.s32.totalorder %s73, %s75
      %p82 = scmp.eq.s32.totalorder %s28, 3
      %p83 = por %p81, %p82
      %p84 = scmp.ne.s32.totalorder %s75, %s76
      %p85 = scmp.eq.s32.totalorder %s28, 0
      %p86 = por %p84, %p85
      %p87 = scmp.ne.s32.totalorder %s75, %s76
      %p88 = scmp.eq.s32.totalorder %s29, 3
      %p89 = por %p87, %p88
      %p91 = scmp.ne.s32.totalorder %s76, %s90
      %p92 = scmp.eq.s32.totalorder %s29, 0
      %p93 = por %p91, %p92
      %s95 = sadd.s32 %s94, 1
      %p98 = scmp.eq.s32.totalorder %s23, 3
      %p99 = scmp.ne.s32.totalorder %s94, %s96
      %p100 = scmp.eq.s32.totalorder %s23, 0
      %p101 = por %p99, %p100
      %p102 = scmp.ne.s32.totalorder %s94, %s96
      %p103 = scmp.eq.s32.totalorder %s28, 3
      %p104 = por %p102, %p103
      %p105 = scmp.ne.s32.totalorder %s96, %s97
      %p106 = scmp.eq.s32.totalorder %s28, 0
      %p107 = por %p105, %p106
      %p108 = scmp.ne.s32.totalorder %s96, %s97
      %p109 = scmp.eq.s32.totalorder %s29, 3
      %p110 = por %p108, %p109
      %p112 = scmp.ne.s32.totalorder %s97, %s111
      %p113 = scmp.eq.s32.totalorder %s29, 0
      %p114 = por %p112, %p113
      %s115 = ssub.s32 %s23, %s30
      %p116 = scmp.eq.s32.totalorder %s115, 0
      %s118 = sadd.s32 %s117, 1
      %s119 = scalar_select %p116, %s117, %s118
      %p122 = pneg %p116
      %p123 = scmp.eq.s32.totalorder %s23, 3
      %p124 = por %p122, %p123
      %p125 = scmp.ne.s32.totalorder %s117, %s120
      %p126 = scmp.eq.s32.totalorder %s23, 0
      %p127 = por %p125, %p126
      %p128 = scmp.ne.s32.totalorder %s117, %s120
      %p129 = scmp.eq.s32.totalorder %s28, 3
      %p130 = por %p128, %p129
      %p131 = scmp.ne.s32.totalorder %s120, %s121
      %p132 = scmp.eq.s32.totalorder %s28, 0
      %p133 = por %p131, %p132
      %p134 = scmp.ne.s32.totalorder %s120, %s121
      %p135 = scmp.eq.s32.totalorder %s29, 3
      %p136 = por %p134, %p135
      %p138 = scmp.ne.s32.totalorder %s121, %s137
      %p139 = scmp.eq.s32.totalorder %s29, 0
      %p140 = por %p138, %p139
      %s141 = ssub.s32 %s23, %s30
      %p142 = scmp.eq.s32.totalorder %s141, 0
      %s144 = sadd.s32 %s143, 1
      %s145 = scalar_select %p142, %s143, %s144
      %p148 = pneg %p142
      %p149 = scmp.eq.s32.totalorder %s23, 3
      %p150 = por %p148, %p149
      %p151 = scmp.ne.s32.totalorder %s143, %s146
      %p152 = scmp.eq.s32.totalorder %s23, 0
      %p153 = por %p151, %p152
      %p154 = scmp.ne.s32.totalorder %s143, %s146
      %p155 = scmp.eq.s32.totalorder %s28, 3
      %p156 = por %p154, %p155
      %p157 = scmp.ne.s32.totalorder %s146, %s147
      %p158 = scmp.eq.s32.totalorder %s28, 0
      %p159 = por %p157, %p158
      %p160 = scmp.ne.s32.totalorder %s146, %s147
      %p161 = scmp.eq.s32.totalorder %s29, 3
      %p162 = por %p160, %p161
      %p164 = scmp.ne.s32.totalorder %s147, %s163
      %p165 = scmp.eq.s32.totalorder %s29, 0
      %p166 = por %p164, %p165
      %s167 = ssub.s32 %s23, %s30
      %p168 = scmp.eq.s32.totalorder %s167, 0
      %s170 = sadd.s32 %s169, 1
      %s171 = scalar_select %p168, %s169, %s170
      %p174 = pneg %p168
      %p175 = scmp.eq.s32.totalorder %s23, 3
      %p176 = por %p174, %p175
      %p177 = scmp.ne.s32.totalorder %s169, %s172
      %p178 = scmp.eq.s32.totalorder %s23, 0
      %p179 = por %p177, %p178
      %p180 = scmp.ne.s32.totalorder %s169, %s172
      %p181 = scmp.eq.s32.totalorder %s28, 3
      %p182 = por %p180, %p181
      %p183 = scmp.ne.s32.totalorder %s172, %s173
      %p184 = scmp.eq.s32.totalorder %s28, 0
      %p185 = por %p183, %p184
      %p186 = scmp.ne.s32.totalorder %s172, %s173
      %p187 = scmp.eq.s32.totalorder %s29, 3
      %p188 = por %p186, %p187
      %p190 = scmp.ne.s32.totalorder %s173, %s189
      %p191 = scmp.eq.s32.totalorder %s29, 0
      %p192 = por %p190, %p191
      %s194 = sadd.s32 %s193, 1
      %p197 = scmp.eq.s32.totalorder %s23, 3
      %p198 = scmp.ne.s32.totalorder %s193, %s195
      %p199 = scmp.eq.s32.totalorder %s23, 0
      %p200 = por %p198, %p199
      %p201 = scmp.ne.s32.totalorder %s193, %s195
      %p202 = scmp.eq.s32.totalorder %s28, 3
      %p203 = por %p201, %p202
      %p204 = scmp.ne.s32.totalorder %s195, %s196
      %p205 = scmp.eq.s32.totalorder %s28, 0
      %p206 = por %p204, %p205
      %p207 = scmp.ne.s32.totalorder %s195, %s196
      %p208 = scmp.eq.s32.totalorder %s29, 3
      %p209 = por %p207, %p208
      %p211 = scmp.ne.s32.totalorder %s196, %s210
      %p212 = scmp.eq.s32.totalorder %s29, 0
      %p213 = por %p211, %p212
      %s215 = sadd.s32 %s214, 1
      %p218 = scmp.eq.s32.totalorder %s23, 3
      %p219 = scmp.ne.s32.totalorder %s214, %s216
      %p220 = scmp.eq.s32.totalorder %s23, 0
      %p221 = por %p219, %p220
      %p222 = scmp.ne.s32.totalorder %s214, %s216
      %p223 = scmp.eq.s32.totalorder %s28, 3
      %p224 = por %p222, %p223
      %p225 = scmp.ne.s32.totalorder %s216, %s217
      %p226 = scmp.eq.s32.totalorder %s28, 0
      %p227 = por %p225, %p226
      %p228 = scmp.ne.s32.totalorder %s216, %s217
      %p229 = scmp.eq.s32.totalorder %s29, 3
      %p230 = por %p228, %p229
      %p232 = scmp.ne.s32.totalorder %s217, %s231
      %p233 = scmp.eq.s32.totalorder %s29, 0
      %p234 = por %p232, %p233
      %s236 = sadd.s32 %s235, 1
      %p239 = scmp.eq.s32.totalorder %s23, 3
      %p240 = scmp.ne.s32.totalorder %s235, %s237
      %p241 = scmp.eq.s32.totalorder %s23, 0
      %p242 = por %p240, %p241
      %p243 = scmp.ne.s32.totalorder %s235, %s237
      %p244 = scmp.eq.s32.totalorder %s28, 3
      %p245 = por %p243, %p244
      %p246 = scmp.ne.s32.totalorder %s237, %s238
      %p247 = scmp.eq.s32.totalorder %s28, 0
      %p248 = por %p246, %p247
      %p249 = scmp.ne.s32.totalorder %s237, %s238
      %p250 = scmp.eq.s32.totalorder %s29, 3
      %p251 = por %p249, %p250
      %p253 = scmp.ne.s32.totalorder %s238, %s252
      %p254 = scmp.eq.s32.totalorder %s29, 0
      %p255 = por %p253, %p254
      %p256 = scmp.le.s32.totalorder 1, %s23
      %p257 = scmp.lt.s32.totalorder %s23, 5
      %p258 = pnand %p256, %p257
      %p259 = pneg %p258
      // Predicated region
      $region9: #{encoder_layer.1} parent=5 // pred_check
        _
      $region10: #{encoder_layer.1} parent=5 // pred_check_branch
        %261 = sbr.rel (%p258) target = $region12
      $region11: #{encoder_layer.1} parent=5 // pred_region
        %s262 = ssub.s32 %s23, 1
        // Predicated region
        $region13: #{encoder_layer.1} parent=11 // pred_check
          %p263 = pneg %p44
        $region14: #{encoder_layer.1} parent=11 // pred_check_branch
          %265 = sbr.rel (%p263) target = $region16
        $region15: #{encoder_layer.1} parent=11 // pred_region
          _
        $region16: #{encoder_layer.1} parent=11 // pred_fallthru
          _
        // Predicated region
        $region17: #{encoder_layer.1} parent=11 // pred_check
          %p266 = pneg %p65
        $region18: #{encoder_layer.1} parent=11 // pred_check_branch
          %268 = sbr.rel (%p266) target = $region20
        $region19: #{encoder_layer.1} parent=11 // pred_region
          _
        $region20: #{encoder_layer.1} parent=11 // pred_fallthru
          _
        // Predicated region
        $region21: #{encoder_layer.1} parent=11 // pred_check
          %p269 = pneg %p86
        $region22: #{encoder_layer.1} parent=11 // pred_check_branch
          %271 = sbr.rel (%p269) target = $region24
        $region23: #{encoder_layer.1} parent=11 // pred_region
          _
        $region24: #{encoder_layer.1} parent=11 // pred_fallthru
          _
        // Predicated region
        $region25: #{encoder_layer.1} parent=11 // pred_check
          %p272 = pneg %p107
        $region26: #{encoder_layer.1} parent=11 // pred_check_branch
          %274 = sbr.rel (%p272) target = $region28
        $region27: #{encoder_layer.1} parent=11 // pred_region
          _
        $region28: #{encoder_layer.1} parent=11 // pred_fallthru
          _
        // Predicated region
        $region29: #{encoder_layer.1} parent=11 // pred_check
          %p275 = pneg %p206
        $region30: #{encoder_layer.1} parent=11 // pred_check_branch
          %277 = sbr.rel (%p275) target = $region32
        $region31: #{encoder_layer.1} parent=11 // pred_region
          _
        $region32: #{encoder_layer.1} parent=11 // pred_fallthru
          _
      $region12: #{encoder_layer.1} parent=5 // pred_fallthru
        _
      %p278 = scmp.lt.s32.totalorder %s23, 4
      // Predicated region
      $region33: #{encoder_layer.1} parent=5 // pred_check
        %p279 = pneg %p278
      $region34: #{encoder_layer.1} parent=5 // pred_check_branch
        %281 = sbr.rel (%p279) target = $region36
      $region35: #{encoder_layer.1} parent=5 // pred_region
        // Predicated region
        $region37: #{encoder_layer.1} parent=35 // pred_check
          %p282 = pneg %p127
        $region38: #{encoder_layer.1} parent=35 // pred_check_branch
          %284 = sbr.rel (%p282) target = $region40
        $region39: #{encoder_layer.1} parent=35 // pred_region
          %s285 = sand.u32 %s117, 1
          %s286 = scalar_lea.sflag [#allocation5], %s285
          %s287 = sand.u32 %s117, 1
          %s288 = smul.addr %s287, 512
          %s289 = scalar_lea.vmem [#allocation4], %s288
          %s290 = smul.u32 4, %s23
          %292 = vsyncadd %s286, 0
          %s293 = smul.addr %s290, 8
          %s294 = scalar_lea.hbm %s4, %s293
          %s295 = sshll.u32 %s294, 4
          %s296 = int_to_ptr.hbm [resolvable:$true] %s295
          %s297 = sshll.u32 %s289, 4
          %s298 = int_to_ptr.vmem [resolvable:$true] %s297
          %303 = dma.hbm_to_vmem [thread:$0]  %s296, 8192, %s298, %s286, 2048, 512, 32
        $region40: #{encoder_layer.1} parent=35 // pred_fallthru
          _
        // Predicated region
        $region41: #{encoder_layer.1} parent=35 // pred_check
          %p304 = pneg %p153
        $region42: #{encoder_layer.1} parent=35 // pred_check_branch
          %306 = sbr.rel (%p304) target = $region44
        $region43: #{encoder_layer.1} parent=35 // pred_region
          %s307 = smul.u32 4, %s23
          %p308 = scmp.lt.s32.totalorder %s307, 15
          %s309 = scalar_select %p308, %s307, 15
          %s310 = scalar_lea.vmem %s5, %s309
          %s311 = smul.u32 4, %s23
        $region44: #{encoder_layer.1} parent=35 // pred_fallthru
          _
        // Predicated region
        $region45: #{encoder_layer.1} parent=35 // pred_check
          %p312 = pneg %p179
        $region46: #{encoder_layer.1} parent=35 // pred_check_branch
          %314 = sbr.rel (%p312) target = $region48
        $region47: #{encoder_layer.1} parent=35 // pred_region
          %s315 = sand.u32 %s169, 1
          %s316 = scalar_lea.sflag [#allocation8], %s315
          %s317 = sand.u32 %s169, 1
          %s318 = smul.addr %s317, 512
          %s319 = scalar_lea.vmem [#allocation7], %s318
          %s320 = smul.u32 16, %s23
          %322 = vsyncadd %s316, 0
          %s323 = smul.addr %s320, 4
          %s324 = smul.addr %s323, 8
          %s325 = scalar_lea.hbm %s6, %s324
          %s326 = sshll.u32 %s325, 4
          %s327 = int_to_ptr.hbm [resolvable:$true] %s326
          %s328 = sshll.u32 %s319, 4
          %s329 = int_to_ptr.vmem [resolvable:$true] %s328
          %334 = dma.hbm_to_vmem [thread:$0]  %s327, 8192, %s329, %s316, 512, 512, 32
        $region48: #{encoder_layer.1} parent=35 // pred_fallthru
          _
      $region36: #{encoder_layer.1} parent=5 // pred_fallthru
        _
      %p335 = scmp.le.s32.totalorder 1, %s23
      %p336 = scmp.lt.s32.totalorder %s23, 5
      %p337 = pnand %p335, %p336
      %p338 = pneg %p337
      // Predicated region
      $region49: #{encoder_layer.1} parent=5 // pred_check
        _
      $region50: #{encoder_layer.1} parent=5 // pred_check_branch
        %340 = sbr.rel (%p337) target = $region52
      $region51: #{encoder_layer.1} parent=5 // pred_region
        %s341 = ssub.s32 %s23, 1
        %s342 = sand.u32 %s120, 1
        %s343 = scalar_lea.sflag [#allocation5], %s342
        %s344 = sand.u32 %s120, 1
        %s345 = smul.addr %s344, 512
        %s346 = scalar_lea.vmem [#allocation4], %s345
        // Predicated region
        $region53: #{encoder_layer.1} parent=51 // pred_check
          %p347 = pneg %p133
        $region54: #{encoder_layer.1} parent=51 // pred_check_branch
          %349 = sbr.rel (%p347) target = $region56
        $region55: #{encoder_layer.1} parent=51 // pred_region
          %351 = dma.done %s343, 8192
        $region56: #{encoder_layer.1} parent=51 // pred_fallthru
          _
        %s352 = sand.u32 %s172, 1
        %s353 = scalar_lea.sflag [#allocation8], %s352
        %s354 = sand.u32 %s172, 1
        %s355 = smul.addr %s354, 512
        %s356 = scalar_lea.vmem [#allocation7], %s355
        // Predicated region
        $region57: #{encoder_layer.1} parent=51 // pred_check
          %p357 = pneg %p185
        $region58: #{encoder_layer.1} parent=51 // pred_check_branch
          %359 = sbr.rel (%p357) target = $region60
        $region59: #{encoder_layer.1} parent=51 // pred_region
          %361 = dma.done %s353, 8192
        $region60: #{encoder_layer.1} parent=51 // pred_fallthru
          _
        %p362 = pneg %p44
        %p363 = pneg %p41
        %p364 = pneg %p65
        %p365 = pneg %p62
        %p366 = pneg %p86
        %p367 = pneg %p83
        %p368 = pneg %p107
        %p369 = pneg %p104
        %s370 = sand.u32 %s120, 1
        %s371 = scalar_lea.sflag [#allocation5], %s370
        %s372 = sand.u32 %s120, 1
        %s373 = smul.addr %s372, 512
        %s374 = scalar_lea.vmem [#allocation4], %s373
        %p375 = pneg %p133
        %p376 = pneg %p130
        %s377 = smul.u32 4, %s28
        %p378 = scmp.lt.s32.totalorder %s377, 15
        %s379 = scalar_select %p378, %s377, 15
        %s380 = scalar_lea.vmem %s5, %s379
        %p381 = pneg %p159
        %p382 = pneg %p156
        %s383 = sand.u32 %s172, 1
        %s384 = scalar_lea.sflag [#allocation8], %s383
        %s385 = sand.u32 %s172, 1
        %s386 = smul.addr %s385, 512
        %s387 = scalar_lea.vmem [#allocation7], %s386
        %p388 = pneg %p185
        %p389 = pneg %p182
        %p390 = pneg %p206
        %p391 = pneg %p203
        %p392 = pneg %p227
        %p393 = pneg %p224
        %p394 = pneg %p248
        %p395 = pneg %p245
        %s396 = smul.u32 4, %s28
        %s397 = smul.u32 4, %s28
        %p398 = scmp.lt.s32.totalorder %s397, 15
        %s399 = scalar_select %p398, %s397, 15
        %s400 = scalar_lea.vmem %s5, %s399
        %s401 = smul.u32 4, %s28
        %s402 = smul.u32 16, %s28
        %p403 = scmp.eq.s32.totalorder %s28, 0
        // Predicated region
        $region61: #{encoder_layer.1} parent=51 // pred_check
          %p404 = pneg %p403
        $region62: #{encoder_layer.1} parent=51 // pred_check_branch
          %406 = sbr.rel (%p404) target = $region64
        $region63: #{encoder_layer.1} parent=51 // pred_region
          %v407 = vld [vmem:[%s0] sm:$0xff]
          %v408 = vld [vmem:[%s0 + $0x8] sm:$0xff]
          %v409 = vld [vmem:[%s0 + $0x10] sm:$0xff]
          %v410 = vld [vmem:[%s0 + $0x18] sm:$0xff]
          %v411 = vld [vmem:[%s0 + $0x20] sm:$0xff]
          %v412 = vld [vmem:[%s0 + $0x28] sm:$0xff]
          %v413 = vld [vmem:[%s0 + $0x30] sm:$0xff]
          %v414 = vld [vmem:[%s0 + $0x38] sm:$0xff]
          %v415 = vpack.c.bf16 %v411, %v407
          %v416 = vpack.c.bf16 %v412, %v408
          %v417 = vpack.c.bf16 %v413, %v409
          %v418 = vpack.c.bf16 %v414, %v410
          %v419 = vld [vmem:[%s2] sm:$0xff]
          %v420 = vld [vmem:[%s2 + $0x8] sm:$0xff]
          %v421 = vld [vmem:[%s2 + $0x10] sm:$0xff]
          %v422 = vld [vmem:[%s2 + $0x18] sm:$0xff]
          %v423 = vld [vmem:[%s2 + $0x20] sm:$0xff]
          %v424 = vld [vmem:[%s2 + $0x28] sm:$0xff]
          %v425 = vld [vmem:[%s2 + $0x30] sm:$0xff]
          %v426 = vld [vmem:[%s2 + $0x38] sm:$0xff]
          %v427 = vld [vmem:[%s2 + $0x40] sm:$0xff]
          %v428 = vld [vmem:[%s2 + $0x48] sm:$0xff]
          %v429 = vld [vmem:[%s2 + $0x50] sm:$0xff]
          %v430 = vld [vmem:[%s2 + $0x58] sm:$0xff]
          %v431 = vld [vmem:[%s2 + $0x60] sm:$0xff]
          %v432 = vld [vmem:[%s2 + $0x68] sm:$0xff]
          %v433 = vld [vmem:[%s2 + $0x70] sm:$0xff]
          %v434 = vld [vmem:[%s2 + $0x78] sm:$0xff]
          %v435 = vld [vmem:[%s2 + $0x80] sm:$0xff]
          %v436 = vld [vmem:[%s2 + $0x88] sm:$0xff]
          %v437 = vld [vmem:[%s2 + $0x90] sm:$0xff]
          %v438 = vld [vmem:[%s2 + $0x98] sm:$0xff]
          %v439 = vld [vmem:[%s2 + $0xa0] sm:$0xff]
          %v440 = vld [vmem:[%s2 + $0xa8] sm:$0xff]
          %v441 = vld [vmem:[%s2 + $0xb0] sm:$0xff]
          %v442 = vld [vmem:[%s2 + $0xb8] sm:$0xff]
          %v443 = vld [vmem:[%s2 + $0xc0] sm:$0xff]
          %v444 = vld [vmem:[%s2 + $0xc8] sm:$0xff]
          %v445 = vld [vmem:[%s2 + $0xd0] sm:$0xff]
          %v446 = vld [vmem:[%s2 + $0xd8] sm:$0xff]
          %v447 = vld [vmem:[%s2 + $0xe0] sm:$0xff]
          %v448 = vld [vmem:[%s2 + $0xe8] sm:$0xff]
          %v449 = vld [vmem:[%s2 + $0xf0] sm:$0xff]
          %v450 = vld [vmem:[%s2 + $0xf8] sm:$0xff]
          %v451 = vld [vmem:[%s2 + $0x100] sm:$0xff]
          %v452 = vld [vmem:[%s2 + $0x108] sm:$0xff]
          %v453 = vld [vmem:[%s2 + $0x110] sm:$0xff]
          %v454 = vld [vmem:[%s2 + $0x118] sm:$0xff]
          %v455 = vld [vmem:[%s2 + $0x120] sm:$0xff]
          %v456 = vld [vmem:[%s2 + $0x128] sm:$0xff]
          %v457 = vld [vmem:[%s2 + $0x130] sm:$0xff]
          %v458 = vld [vmem:[%s2 + $0x138] sm:$0xff]
          %v459 = vld [vmem:[%s2 + $0x140] sm:$0xff]
          %v460 = vld [vmem:[%s2 + $0x148] sm:$0xff]
          %v461 = vld [vmem:[%s2 + $0x150] sm:$0xff]
          %v462 = vld [vmem:[%s2 + $0x158] sm:$0xff]
          %v463 = vld [vmem:[%s2 + $0x160] sm:$0xff]
          %v464 = vld [vmem:[%s2 + $0x168] sm:$0xff]
          %v465 = vld [vmem:[%s2 + $0x170] sm:$0xff]
          %v466 = vld [vmem:[%s2 + $0x178] sm:$0xff]
          %v467 = vld [vmem:[%s2 + $0x180] sm:$0xff]
          %v468 = vld [vmem:[%s2 + $0x188] sm:$0xff]
          %v469 = vld [vmem:[%s2 + $0x190] sm:$0xff]
          %v470 = vld [vmem:[%s2 + $0x198] sm:$0xff]
          %v471 = vld [vmem:[%s2 + $0x1a0] sm:$0xff]
          %v472 = vld [vmem:[%s2 + $0x1a8] sm:$0xff]
          %v473 = vld [vmem:[%s2 + $0x1b0] sm:$0xff]
          %v474 = vld [vmem:[%s2 + $0x1b8] sm:$0xff]
          %v475 = vld [vmem:[%s2 + $0x1c0] sm:$0xff]
          %v476 = vld [vmem:[%s2 + $0x1c8] sm:$0xff]
          %v477 = vld [vmem:[%s2 + $0x1d0] sm:$0xff]
          %v478 = vld [vmem:[%s2 + $0x1d8] sm:$0xff]
          %v479 = vld [vmem:[%s2 + $0x1e0] sm:$0xff]
          %v480 = vld [vmem:[%s2 + $0x1e8] sm:$0xff]
          %v481 = vld [vmem:[%s2 + $0x1f0] sm:$0xff]
          %v482 = vld [vmem:[%s2 + $0x1f8] sm:$0xff]
          %v483 = vld [vmem:[%s2 + $0x200] sm:$0xff]
          %v484 = vld [vmem:[%s2 + $0x208] sm:$0xff]
          %v485 = vld [vmem:[%s2 + $0x210] sm:$0xff]
          %v486 = vld [vmem:[%s2 + $0x218] sm:$0xff]
          %v487 = vld [vmem:[%s2 + $0x220] sm:$0xff]
          %v488 = vld [vmem:[%s2 + $0x228] sm:$0xff]
          %v489 = vld [vmem:[%s2 + $0x230] sm:$0xff]
          %v490 = vld [vmem:[%s2 + $0x238] sm:$0xff]
          %v491 = vld [vmem:[%s2 + $0x240] sm:$0xff]
          %v492 = vld [vmem:[%s2 + $0x248] sm:$0xff]
          %v493 = vld [vmem:[%s2 + $0x250] sm:$0xff]
          %v494 = vld [vmem:[%s2 + $0x258] sm:$0xff]
          %v495 = vld [vmem:[%s2 + $0x260] sm:$0xff]
          %v496 = vld [vmem:[%s2 + $0x268] sm:$0xff]
          %v497 = vld [vmem:[%s2 + $0x270] sm:$0xff]
          %v498 = vld [vmem:[%s2 + $0x278] sm:$0xff]
          %v499 = vld [vmem:[%s2 + $0x280] sm:$0xff]
          %v500 = vld [vmem:[%s2 + $0x288] sm:$0xff]
          %v501 = vld [vmem:[%s2 + $0x290] sm:$0xff]
          %v502 = vld [vmem:[%s2 + $0x298] sm:$0xff]
          %v503 = vld [vmem:[%s2 + $0x2a0] sm:$0xff]
          %v504 = vld [vmem:[%s2 + $0x2a8] sm:$0xff]
          %v505 = vld [vmem:[%s2 + $0x2b0] sm:$0xff]
          %v506 = vld [vmem:[%s2 + $0x2b8] sm:$0xff]
          %v507 = vld [vmem:[%s2 + $0x2c0] sm:$0xff]
          %v508 = vld [vmem:[%s2 + $0x2c8] sm:$0xff]
          %v509 = vld [vmem:[%s2 + $0x2d0] sm:$0xff]
          %v510 = vld [vmem:[%s2 + $0x2d8] sm:$0xff]
          %v511 = vld [vmem:[%s2 + $0x2e0] sm:$0xff]
          %v512 = vld [vmem:[%s2 + $0x2e8] sm:$0xff]
          %v513 = vld [vmem:[%s2 + $0x2f0] sm:$0xff]
          %v514 = vld [vmem:[%s2 + $0x2f8] sm:$0xff]
          %v515 = vld [vmem:[%s2 + $0x300] sm:$0xff]
          %v516 = vld [vmem:[%s2 + $0x308] sm:$0xff]
          %v517 = vld [vmem:[%s2 + $0x310] sm:$0xff]
          %v518 = vld [vmem:[%s2 + $0x318] sm:$0xff]
          %v519 = vld [vmem:[%s2 + $0x320] sm:$0xff]
          %v520 = vld [vmem:[%s2 + $0x328] sm:$0xff]
          %v521 = vld [vmem:[%s2 + $0x330] sm:$0xff]
          %v522 = vld [vmem:[%s2 + $0x338] sm:$0xff]
          %v523 = vld [vmem:[%s2 + $0x340] sm:$0xff]
          %v524 = vld [vmem:[%s2 + $0x348] sm:$0xff]
          %v525 = vld [vmem:[%s2 + $0x350] sm:$0xff]
          %v526 = vld [vmem:[%s2 + $0x358] sm:$0xff]
          %v527 = vld [vmem:[%s2 + $0x360] sm:$0xff]
          %v528 = vld [vmem:[%s2 + $0x368] sm:$0xff]
          %v529 = vld [vmem:[%s2 + $0x370] sm:$0xff]
          %v530 = vld [vmem:[%s2 + $0x378] sm:$0xff]
          %v531 = vld [vmem:[%s2 + $0x380] sm:$0xff]
          %v532 = vld [vmem:[%s2 + $0x388] sm:$0xff]
          %v533 = vld [vmem:[%s2 + $0x390] sm:$0xff]
          %v534 = vld [vmem:[%s2 + $0x398] sm:$0xff]
          %v535 = vld [vmem:[%s2 + $0x3a0] sm:$0xff]
          %v536 = vld [vmem:[%s2 + $0x3a8] sm:$0xff]
          %v537 = vld [vmem:[%s2 + $0x3b0] sm:$0xff]
          %v538 = vld [vmem:[%s2 + $0x3b8] sm:$0xff]
          %v539 = vld [vmem:[%s2 + $0x3c0] sm:$0xff]
          %v540 = vld [vmem:[%s2 + $0x3c8] sm:$0xff]
          %v541 = vld [vmem:[%s2 + $0x3d0] sm:$0xff]
          %v542 = vld [vmem:[%s2 + $0x3d8] sm:$0xff]
          %v543 = vld [vmem:[%s2 + $0x3e0] sm:$0xff]
          %v544 = vld [vmem:[%s2 + $0x3e8] sm:$0xff]
          %v545 = vld [vmem:[%s2 + $0x3f0] sm:$0xff]
          %v546 = vld [vmem:[%s2 + $0x3f8] sm:$0xff]
          %v547 = vld [vmem:[%s2 + $0x400] sm:$0xff]
          %v548 = vld [vmem:[%s2 + $0x408] sm:$0xff]
          %v549 = vld [vmem:[%s2 + $0x410] sm:$0xff]
          %v550 = vld [vmem:[%s2 + $0x418] sm:$0xff]
          %v551 = vld [vmem:[%s2 + $0x420] sm:$0xff]
          %v552 = vld [vmem:[%s2 + $0x428] sm:$0xff]
          %v553 = vld [vmem:[%s2 + $0x430] sm:$0xff]
          %v554 = vld [vmem:[%s2 + $0x438] sm:$0xff]
          %v555 = vld [vmem:[%s2 + $0x440] sm:$0xff]
          %v556 = vld [vmem:[%s2 + $0x448] sm:$0xff]
          %v557 = vld [vmem:[%s2 + $0x450] sm:$0xff]
          %v558 = vld [vmem:[%s2 + $0x458] sm:$0xff]
          %v559 = vld [vmem:[%s2 + $0x460] sm:$0xff]
          %v560 = vld [vmem:[%s2 + $0x468] sm:$0xff]
          %v561 = vld [vmem:[%s2 + $0x470] sm:$0xff]
          %v562 = vld [vmem:[%s2 + $0x478] sm:$0xff]
          %v563 = vld [vmem:[%s2 + $0x480] sm:$0xff]
          %v564 = vld [vmem:[%s2 + $0x488] sm:$0xff]
          %v565 = vld [vmem:[%s2 + $0x490] sm:$0xff]
          %v566 = vld [vmem:[%s2 + $0x498] sm:$0xff]
          %v567 = vld [vmem:[%s2 + $0x4a0] sm:$0xff]
          %v568 = vld [vmem:[%s2 + $0x4a8] sm:$0xff]
          %v569 = vld [vmem:[%s2 + $0x4b0] sm:$0xff]
          %v570 = vld [vmem:[%s2 + $0x4b8] sm:$0xff]
          %v571 = vld [vmem:[%s2 + $0x4c0] sm:$0xff]
          %v572 = vld [vmem:[%s2 + $0x4c8] sm:$0xff]
          %v573 = vld [vmem:[%s2 + $0x4d0] sm:$0xff]
          %v574 = vld [vmem:[%s2 + $0x4d8] sm:$0xff]
          %v575 = vld [vmem:[%s2 + $0x4e0] sm:$0xff]
          %v576 = vld [vmem:[%s2 + $0x4e8] sm:$0xff]
          %v577 = vld [vmem:[%s2 + $0x4f0] sm:$0xff]
          %v578 = vld [vmem:[%s2 + $0x4f8] sm:$0xff]
          %v579 = vld [vmem:[%s2 + $0x500] sm:$0xff]
          %v580 = vld [vmem:[%s2 + $0x508] sm:$0xff]
          %v581 = vld [vmem:[%s2 + $0x510] sm:$0xff]
          %v582 = vld [vmem:[%s2 + $0x518] sm:$0xff]
          %v583 = vld [vmem:[%s2 + $0x520] sm:$0xff]
          %v584 = vld [vmem:[%s2 + $0x528] sm:$0xff]
          %v585 = vld [vmem:[%s2 + $0x530] sm:$0xff]
          %v586 = vld [vmem:[%s2 + $0x538] sm:$0xff]
          %v587 = vld [vmem:[%s2 + $0x540] sm:$0xff]
          %v588 = vld [vmem:[%s2 + $0x548] sm:$0xff]
          %v589 = vld [vmem:[%s2 + $0x550] sm:$0xff]
          %v590 = vld [vmem:[%s2 + $0x558] sm:$0xff]
          %v591 = vld [vmem:[%s2 + $0x560] sm:$0xff]
          %v592 = vld [vmem:[%s2 + $0x568] sm:$0xff]
          %v593 = vld [vmem:[%s2 + $0x570] sm:$0xff]
          %v594 = vld [vmem:[%s2 + $0x578] sm:$0xff]
          %v595 = vld [vmem:[%s2 + $0x580] sm:$0xff]
          %v596 = vld [vmem:[%s2 + $0x588] sm:$0xff]
          %v597 = vld [vmem:[%s2 + $0x590] sm:$0xff]
          %v598 = vld [vmem:[%s2 + $0x598] sm:$0xff]
          %v599 = vld [vmem:[%s2 + $0x5a0] sm:$0xff]
          %v600 = vld [vmem:[%s2 + $0x5a8] sm:$0xff]
          %v601 = vld [vmem:[%s2 + $0x5b0] sm:$0xff]
          %v602 = vld [vmem:[%s2 + $0x5b8] sm:$0xff]
          %v603 = vld [vmem:[%s2 + $0x5c0] sm:$0xff]
          %v604 = vld [vmem:[%s2 + $0x5c8] sm:$0xff]
          %v605 = vld [vmem:[%s2 + $0x5d0] sm:$0xff]
          %v606 = vld [vmem:[%s2 + $0x5d8] sm:$0xff]
          %v607 = vld [vmem:[%s2 + $0x5e0] sm:$0xff]
          %v608 = vld [vmem:[%s2 + $0x5e8] sm:$0xff]
          %v609 = vld [vmem:[%s2 + $0x5f0] sm:$0xff]
          %v610 = vld [vmem:[%s2 + $0x5f8] sm:$0xff]
          %v611 = vld [vmem:[%s2 + $0x600] sm:$0xff]
          %v612 = vld [vmem:[%s2 + $0x608] sm:$0xff]
          %v613 = vld [vmem:[%s2 + $0x610] sm:$0xff]
          %v614 = vld [vmem:[%s2 + $0x618] sm:$0xff]
          %v615 = vld [vmem:[%s2 + $0x620] sm:$0xff]
          %v616 = vld [vmem:[%s2 + $0x628] sm:$0xff]
          %v617 = vld [vmem:[%s2 + $0x630] sm:$0xff]
          %v618 = vld [vmem:[%s2 + $0x638] sm:$0xff]
          %v619 = vld [vmem:[%s2 + $0x640] sm:$0xff]
          %v620 = vld [vmem:[%s2 + $0x648] sm:$0xff]
          %v621 = vld [vmem:[%s2 + $0x650] sm:$0xff]
          %v622 = vld [vmem:[%s2 + $0x658] sm:$0xff]
          %v623 = vld [vmem:[%s2 + $0x660] sm:$0xff]
          %v624 = vld [vmem:[%s2 + $0x668] sm:$0xff]
          %v625 = vld [vmem:[%s2 + $0x670] sm:$0xff]
          %v626 = vld [vmem:[%s2 + $0x678] sm:$0xff]
          %v627 = vld [vmem:[%s2 + $0x680] sm:$0xff]
          %v628 = vld [vmem:[%s2 + $0x688] sm:$0xff]
          %v629 = vld [vmem:[%s2 + $0x690] sm:$0xff]
          %v630 = vld [vmem:[%s2 + $0x698] sm:$0xff]
          %v631 = vld [vmem:[%s2 + $0x6a0] sm:$0xff]
          %v632 = vld [vmem:[%s2 + $0x6a8] sm:$0xff]
          %v633 = vld [vmem:[%s2 + $0x6b0] sm:$0xff]
          %v634 = vld [vmem:[%s2 + $0x6b8] sm:$0xff]
          %v635 = vld [vmem:[%s2 + $0x6c0] sm:$0xff]
          %v636 = vld [vmem:[%s2 + $0x6c8] sm:$0xff]
          %v637 = vld [vmem:[%s2 + $0x6d0] sm:$0xff]
          %v638 = vld [vmem:[%s2 + $0x6d8] sm:$0xff]
          %v639 = vld [vmem:[%s2 + $0x6e0] sm:$0xff]
          %v640 = vld [vmem:[%s2 + $0x6e8] sm:$0xff]
          %v641 = vld [vmem:[%s2 + $0x6f0] sm:$0xff]
          %v642 = vld [vmem:[%s2 + $0x6f8] sm:$0xff]
          %v643 = vld [vmem:[%s2 + $0x700] sm:$0xff]
          %v644 = vld [vmem:[%s2 + $0x708] sm:$0xff]
          %v645 = vld [vmem:[%s2 + $0x710] sm:$0xff]
          %v646 = vld [vmem:[%s2 + $0x718] sm:$0xff]
          %v647 = vld [vmem:[%s2 + $0x720] sm:$0xff]
          %v648 = vld [vmem:[%s2 + $0x728] sm:$0xff]
          %v649 = vld [vmem:[%s2 + $0x730] sm:$0xff]
          %v650 = vld [vmem:[%s2 + $0x738] sm:$0xff]
          %v651 = vld [vmem:[%s2 + $0x740] sm:$0xff]
          %v652 = vld [vmem:[%s2 + $0x748] sm:$0xff]
          %v653 = vld [vmem:[%s2 + $0x750] sm:$0xff]
          %v654 = vld [vmem:[%s2 + $0x758] sm:$0xff]
          %v655 = vld [vmem:[%s2 + $0x760] sm:$0xff]
          %v656 = vld [vmem:[%s2 + $0x768] sm:$0xff]
          %v657 = vld [vmem:[%s2 + $0x770] sm:$0xff]
          %v658 = vld [vmem:[%s2 + $0x778] sm:$0xff]
          %v659 = vld [vmem:[%s2 + $0x780] sm:$0xff]
          %v660 = vld [vmem:[%s2 + $0x788] sm:$0xff]
          %v661 = vld [vmem:[%s2 + $0x790] sm:$0xff]
          %v662 = vld [vmem:[%s2 + $0x798] sm:$0xff]
          %v663 = vld [vmem:[%s2 + $0x7a0] sm:$0xff]
          %v664 = vld [vmem:[%s2 + $0x7a8] sm:$0xff]
          %v665 = vld [vmem:[%s2 + $0x7b0] sm:$0xff]
          %v666 = vld [vmem:[%s2 + $0x7b8] sm:$0xff]
          %v667 = vld [vmem:[%s2 + $0x7c0] sm:$0xff]
          %v668 = vld [vmem:[%s2 + $0x7c8] sm:$0xff]
          %v669 = vld [vmem:[%s2 + $0x7d0] sm:$0xff]
          %v670 = vld [vmem:[%s2 + $0x7d8] sm:$0xff]
          %v671 = vld [vmem:[%s2 + $0x7e0] sm:$0xff]
          %v672 = vld [vmem:[%s2 + $0x7e8] sm:$0xff]
          %v673 = vld [vmem:[%s2 + $0x7f0] sm:$0xff]
          %v674 = vld [vmem:[%s2 + $0x7f8] sm:$0xff]
          %v675 = vld [vmem:[%s2 + $0x800] sm:$0xff]
          %v676 = vld [vmem:[%s2 + $0x808] sm:$0xff]
          %v677 = vld [vmem:[%s2 + $0x810] sm:$0xff]
          %v678 = vld [vmem:[%s2 + $0x818] sm:$0xff]
          %v679 = vld [vmem:[%s2 + $0x820] sm:$0xff]
          %v680 = vld [vmem:[%s2 + $0x828] sm:$0xff]
          %v681 = vld [vmem:[%s2 + $0x830] sm:$0xff]
          %v682 = vld [vmem:[%s2 + $0x838] sm:$0xff]
          %v683 = vld [vmem:[%s2 + $0x840] sm:$0xff]
          %v684 = vld [vmem:[%s2 + $0x848] sm:$0xff]
          %v685 = vld [vmem:[%s2 + $0x850] sm:$0xff]
          %v686 = vld [vmem:[%s2 + $0x858] sm:$0xff]
          %v687 = vld [vmem:[%s2 + $0x860] sm:$0xff]
          %v688 = vld [vmem:[%s2 + $0x868] sm:$0xff]
          %v689 = vld [vmem:[%s2 + $0x870] sm:$0xff]
          %v690 = vld [vmem:[%s2 + $0x878] sm:$0xff]
          %v691 = vld [vmem:[%s2 + $0x880] sm:$0xff]
          %v692 = vld [vmem:[%s2 + $0x888] sm:$0xff]
          %v693 = vld [vmem:[%s2 + $0x890] sm:$0xff]
          %v694 = vld [vmem:[%s2 + $0x898] sm:$0xff]
          %v695 = vld [vmem:[%s2 + $0x8a0] sm:$0xff]
          %v696 = vld [vmem:[%s2 + $0x8a8] sm:$0xff]
          %v697 = vld [vmem:[%s2 + $0x8b0] sm:$0xff]
          %v698 = vld [vmem:[%s2 + $0x8b8] sm:$0xff]
          %v699 = vld [vmem:[%s2 + $0x8c0] sm:$0xff]
          %v700 = vld [vmem:[%s2 + $0x8c8] sm:$0xff]
          %v701 = vld [vmem:[%s2 + $0x8d0] sm:$0xff]
          %v702 = vld [vmem:[%s2 + $0x8d8] sm:$0xff]
          %v703 = vld [vmem:[%s2 + $0x8e0] sm:$0xff]
          %v704 = vld [vmem:[%s2 + $0x8e8] sm:$0xff]
          %v705 = vld [vmem:[%s2 + $0x8f0] sm:$0xff]
          %v706 = vld [vmem:[%s2 + $0x8f8] sm:$0xff]
          %v707 = vld [vmem:[%s2 + $0x900] sm:$0xff]
          %v708 = vld [vmem:[%s2 + $0x908] sm:$0xff]
          %v709 = vld [vmem:[%s2 + $0x910] sm:$0xff]
          %v710 = vld [vmem:[%s2 + $0x918] sm:$0xff]
          %v711 = vld [vmem:[%s2 + $0x920] sm:$0xff]
          %v712 = vld [vmem:[%s2 + $0x928] sm:$0xff]
          %v713 = vld [vmem:[%s2 + $0x930] sm:$0xff]
          %v714 = vld [vmem:[%s2 + $0x938] sm:$0xff]
          %v715 = vld [vmem:[%s2 + $0x940] sm:$0xff]
          %v716 = vld [vmem:[%s2 + $0x948] sm:$0xff]
          %v717 = vld [vmem:[%s2 + $0x950] sm:$0xff]
          %v718 = vld [vmem:[%s2 + $0x958] sm:$0xff]
          %v719 = vld [vmem:[%s2 + $0x960] sm:$0xff]
          %v720 = vld [vmem:[%s2 + $0x968] sm:$0xff]
          %v721 = vld [vmem:[%s2 + $0x970] sm:$0xff]
          %v722 = vld [vmem:[%s2 + $0x978] sm:$0xff]
          %v723 = vld [vmem:[%s2 + $0x980] sm:$0xff]
          %v724 = vld [vmem:[%s2 + $0x988] sm:$0xff]
          %v725 = vld [vmem:[%s2 + $0x990] sm:$0xff]
          %v726 = vld [vmem:[%s2 + $0x998] sm:$0xff]
          %v727 = vld [vmem:[%s2 + $0x9a0] sm:$0xff]
          %v728 = vld [vmem:[%s2 + $0x9a8] sm:$0xff]
          %v729 = vld [vmem:[%s2 + $0x9b0] sm:$0xff]
          %v730 = vld [vmem:[%s2 + $0x9b8] sm:$0xff]
          %v731 = vld [vmem:[%s2 + $0x9c0] sm:$0xff]
          %v732 = vld [vmem:[%s2 + $0x9c8] sm:$0xff]
          %v733 = vld [vmem:[%s2 + $0x9d0] sm:$0xff]
          %v734 = vld [vmem:[%s2 + $0x9d8] sm:$0xff]
          %v735 = vld [vmem:[%s2 + $0x9e0] sm:$0xff]
          %v736 = vld [vmem:[%s2 + $0x9e8] sm:$0xff]
          %v737 = vld [vmem:[%s2 + $0x9f0] sm:$0xff]
          %v738 = vld [vmem:[%s2 + $0x9f8] sm:$0xff]
          %v739 = vld [vmem:[%s2 + $0xa00] sm:$0xff]
          %v740 = vld [vmem:[%s2 + $0xa08] sm:$0xff]
          %v741 = vld [vmem:[%s2 + $0xa10] sm:$0xff]
          %v742 = vld [vmem:[%s2 + $0xa18] sm:$0xff]
          %v743 = vld [vmem:[%s2 + $0xa20] sm:$0xff]
          %v744 = vld [vmem:[%s2 + $0xa28] sm:$0xff]
          %v745 = vld [vmem:[%s2 + $0xa30] sm:$0xff]
          %v746 = vld [vmem:[%s2 + $0xa38] sm:$0xff]
          %v747 = vld [vmem:[%s2 + $0xa40] sm:$0xff]
          %v748 = vld [vmem:[%s2 + $0xa48] sm:$0xff]
          %v749 = vld [vmem:[%s2 + $0xa50] sm:$0xff]
          %v750 = vld [vmem:[%s2 + $0xa58] sm:$0xff]
          %v751 = vld [vmem:[%s2 + $0xa60] sm:$0xff]
          %v752 = vld [vmem:[%s2 + $0xa68] sm:$0xff]
          %v753 = vld [vmem:[%s2 + $0xa70] sm:$0xff]
          %v754 = vld [vmem:[%s2 + $0xa78] sm:$0xff]
          %v755 = vld [vmem:[%s2 + $0xa80] sm:$0xff]
          %v756 = vld [vmem:[%s2 + $0xa88] sm:$0xff]
          %v757 = vld [vmem:[%s2 + $0xa90] sm:$0xff]
          %v758 = vld [vmem:[%s2 + $0xa98] sm:$0xff]
          %v759 = vld [vmem:[%s2 + $0xaa0] sm:$0xff]
          %v760 = vld [vmem:[%s2 + $0xaa8] sm:$0xff]
          %v761 = vld [vmem:[%s2 + $0xab0] sm:$0xff]
          %v762 = vld [vmem:[%s2 + $0xab8] sm:$0xff]
          %v763 = vld [vmem:[%s2 + $0xac0] sm:$0xff]
          %v764 = vld [vmem:[%s2 + $0xac8] sm:$0xff]
          %v765 = vld [vmem:[%s2 + $0xad0] sm:$0xff]
          %v766 = vld [vmem:[%s2 + $0xad8] sm:$0xff]
          %v767 = vld [vmem:[%s2 + $0xae0] sm:$0xff]
          %v768 = vld [vmem:[%s2 + $0xae8] sm:$0xff]
          %v769 = vld [vmem:[%s2 + $0xaf0] sm:$0xff]
          %v770 = vld [vmem:[%s2 + $0xaf8] sm:$0xff]
          %v771 = vld [vmem:[%s2 + $0xb00] sm:$0xff]
          %v772 = vld [vmem:[%s2 + $0xb08] sm:$0xff]
          %v773 = vld [vmem:[%s2 + $0xb10] sm:$0xff]
          %v774 = vld [vmem:[%s2 + $0xb18] sm:$0xff]
          %v775 = vld [vmem:[%s2 + $0xb20] sm:$0xff]
          %v776 = vld [vmem:[%s2 + $0xb28] sm:$0xff]
          %v777 = vld [vmem:[%s2 + $0xb30] sm:$0xff]
          %v778 = vld [vmem:[%s2 + $0xb38] sm:$0xff]
          %v779 = vld [vmem:[%s2 + $0xb40] sm:$0xff]
          %v780 = vld [vmem:[%s2 + $0xb48] sm:$0xff]
          %v781 = vld [vmem:[%s2 + $0xb50] sm:$0xff]
          %v782 = vld [vmem:[%s2 + $0xb58] sm:$0xff]
          %v783 = vld [vmem:[%s2 + $0xb60] sm:$0xff]
          %v784 = vld [vmem:[%s2 + $0xb68] sm:$0xff]
          %v785 = vld [vmem:[%s2 + $0xb70] sm:$0xff]
          %v786 = vld [vmem:[%s2 + $0xb78] sm:$0xff]
          %v787 = vld [vmem:[%s2 + $0xb80] sm:$0xff]
          %v788 = vld [vmem:[%s2 + $0xb88] sm:$0xff]
          %v789 = vld [vmem:[%s2 + $0xb90] sm:$0xff]
          %v790 = vld [vmem:[%s2 + $0xb98] sm:$0xff]
          %v791 = vld [vmem:[%s2 + $0xba0] sm:$0xff]
          %v792 = vld [vmem:[%s2 + $0xba8] sm:$0xff]
          %v793 = vld [vmem:[%s2 + $0xbb0] sm:$0xff]
          %v794 = vld [vmem:[%s2 + $0xbb8] sm:$0xff]
          %v795 = vld [vmem:[%s2 + $0xbc0] sm:$0xff]
          %v796 = vld [vmem:[%s2 + $0xbc8] sm:$0xff]
          %v797 = vld [vmem:[%s2 + $0xbd0] sm:$0xff]
          %v798 = vld [vmem:[%s2 + $0xbd8] sm:$0xff]
          %v799 = vld [vmem:[%s2 + $0xbe0] sm:$0xff]
          %v800 = vld [vmem:[%s2 + $0xbe8] sm:$0xff]
          %v801 = vld [vmem:[%s2 + $0xbf0] sm:$0xff]
          %v802 = vld [vmem:[%s2 + $0xbf8] sm:$0xff]
          %v1187 = vunpack.c.l.b16 %v419
          %v1188 = vunpack.c.h.b16 %v419
          %v1189 = vunpack.c.l.b16 %v420
          %v1190 = vunpack.c.h.b16 %v420
          %v1191 = vunpack.c.l.b16 %v421
          %v1192 = vunpack.c.h.b16 %v421
          %v1193 = vunpack.c.l.b16 %v422
          %v1194 = vunpack.c.h.b16 %v422
          %v1195 = vunpack.c.l.b16 %v423
          %v1196 = vunpack.c.h.b16 %v423
          %v1197 = vunpack.c.l.b16 %v424
          %v1198 = vunpack.c.h.b16 %v424
          %v1199 = vunpack.c.l.b16 %v425
          %v1200 = vunpack.c.h.b16 %v425
          %v1201 = vunpack.c.l.b16 %v426
          %v1202 = vunpack.c.h.b16 %v426
          %v1203 = vunpack.c.l.b16 %v427
          %v1204 = vunpack.c.h.b16 %v427
          %v1205 = vunpack.c.l.b16 %v428
          %v1206 = vunpack.c.h.b16 %v428
          %v1207 = vunpack.c.l.b16 %v429
          %v1208 = vunpack.c.h.b16 %v429
          %v1209 = vunpack.c.l.b16 %v430
          %v1210 = vunpack.c.h.b16 %v430
          %v1211 = vunpack.c.l.b16 %v431
          %v1212 = vunpack.c.h.b16 %v431
          %v1213 = vunpack.c.l.b16 %v432
          %v1214 = vunpack.c.h.b16 %v432
          %v1215 = vunpack.c.l.b16 %v433
          %v1216 = vunpack.c.h.b16 %v433
          %v1217 = vunpack.c.l.b16 %v434
          %v1218 = vunpack.c.h.b16 %v434
          %v1219 = vunpack.c.l.b16 %v435
          %v1220 = vunpack.c.h.b16 %v435
          %v1221 = vunpack.c.l.b16 %v436
          %v1222 = vunpack.c.h.b16 %v436
          %v1223 = vunpack.c.l.b16 %v437
          %v1224 = vunpack.c.h.b16 %v437
          %v1225 = vunpack.c.l.b16 %v438
          %v1226 = vunpack.c.h.b16 %v438
          %v1227 = vunpack.c.l.b16 %v439
          %v1228 = vunpack.c.h.b16 %v439
          %v1229 = vunpack.c.l.b16 %v440
          %v1230 = vunpack.c.h.b16 %v440
          %v1231 = vunpack.c.l.b16 %v441
          %v1232 = vunpack.c.h.b16 %v441
          %v1233 = vunpack.c.l.b16 %v442
          %v1234 = vunpack.c.h.b16 %v442
          %v1235 = vunpack.c.l.b16 %v443
          %v1236 = vunpack.c.h.b16 %v443
          %v1237 = vunpack.c.l.b16 %v444
          %v1238 = vunpack.c.h.b16 %v444
          %v1239 = vunpack.c.l.b16 %v445
          %v1240 = vunpack.c.h.b16 %v445
          %v1241 = vunpack.c.l.b16 %v446
          %v1242 = vunpack.c.h.b16 %v446
          %v1243 = vunpack.c.l.b16 %v447
          %v1244 = vunpack.c.h.b16 %v447
          %v1245 = vunpack.c.l.b16 %v448
          %v1246 = vunpack.c.h.b16 %v448
          %v1247 = vunpack.c.l.b16 %v449
          %v1248 = vunpack.c.h.b16 %v449
          %v1249 = vunpack.c.l.b16 %v450
          %v1250 = vunpack.c.h.b16 %v450
          %v1251 = vunpack.c.l.b16 %v451
          %v1252 = vunpack.c.h.b16 %v451
          %v1253 = vunpack.c.l.b16 %v452
          %v1254 = vunpack.c.h.b16 %v452
          %v1255 = vunpack.c.l.b16 %v453
          %v1256 = vunpack.c.h.b16 %v453
          %v1257 = vunpack.c.l.b16 %v454
          %v1258 = vunpack.c.h.b16 %v454
          %v1259 = vunpack.c.l.b16 %v455
          %v1260 = vunpack.c.h.b16 %v455
          %v1261 = vunpack.c.l.b16 %v456
          %v1262 = vunpack.c.h.b16 %v456
          %v1263 = vunpack.c.l.b16 %v457
          %v1264 = vunpack.c.h.b16 %v457
          %v1265 = vunpack.c.l.b16 %v458
          %v1266 = vunpack.c.h.b16 %v458
          %v1267 = vunpack.c.l.b16 %v459
          %v1268 = vunpack.c.h.b16 %v459
          %v1269 = vunpack.c.l.b16 %v460
          %v1270 = vunpack.c.h.b16 %v460
          %v1271 = vunpack.c.l.b16 %v461
          %v1272 = vunpack.c.h.b16 %v461
          %v1273 = vunpack.c.l.b16 %v462
          %v1274 = vunpack.c.h.b16 %v462
          %v1275 = vunpack.c.l.b16 %v463
          %v1276 = vunpack.c.h.b16 %v463
          %v1277 = vunpack.c.l.b16 %v464
          %v1278 = vunpack.c.h.b16 %v464
          %v1279 = vunpack.c.l.b16 %v465
          %v1280 = vunpack.c.h.b16 %v465
          %v1281 = vunpack.c.l.b16 %v466
          %v1282 = vunpack.c.h.b16 %v466
          %v1283 = vunpack.c.l.b16 %v467
          %v1284 = vunpack.c.h.b16 %v467
          %v1285 = vunpack.c.l.b16 %v468
          %v1286 = vunpack.c.h.b16 %v468
          %v1287 = vunpack.c.l.b16 %v469
          %v1288 = vunpack.c.h.b16 %v469
          %v1289 = vunpack.c.l.b16 %v470
          %v1290 = vunpack.c.h.b16 %v470
          %v1291 = vunpack.c.l.b16 %v471
          %v1292 = vunpack.c.h.b16 %v471
          %v1293 = vunpack.c.l.b16 %v472
          %v1294 = vunpack.c.h.b16 %v472
          %v1295 = vunpack.c.l.b16 %v473
          %v1296 = vunpack.c.h.b16 %v473
          %v1297 = vunpack.c.l.b16 %v474
          %v1298 = vunpack.c.h.b16 %v474
          %v1299 = vunpack.c.l.b16 %v475
          %v1300 = vunpack.c.h.b16 %v475
          %v1301 = vunpack.c.l.b16 %v476
          %v1302 = vunpack.c.h.b16 %v476
          %v1303 = vunpack.c.l.b16 %v477
          %v1304 = vunpack.c.h.b16 %v477
          %v1305 = vunpack.c.l.b16 %v478
          %v1306 = vunpack.c.h.b16 %v478
          %v1307 = vunpack.c.l.b16 %v479
          %v1308 = vunpack.c.h.b16 %v479
          %v1309 = vunpack.c.l.b16 %v480
          %v1310 = vunpack.c.h.b16 %v480
          %v1311 = vunpack.c.l.b16 %v481
          %v1312 = vunpack.c.h.b16 %v481
          %v1313 = vunpack.c.l.b16 %v482
          %v1314 = vunpack.c.h.b16 %v482
          %v1315 = vunpack.c.l.b16 %v483
          %v1316 = vunpack.c.h.b16 %v483
          %v1317 = vunpack.c.l.b16 %v484
          %v1318 = vunpack.c.h.b16 %v484
          %v1319 = vunpack.c.l.b16 %v485
          %v1320 = vunpack.c.h.b16 %v485
          %v1321 = vunpack.c.l.b16 %v486
          %v1322 = vunpack.c.h.b16 %v486
          %v1323 = vunpack.c.l.b16 %v487
          %v1324 = vunpack.c.h.b16 %v487
          %v1325 = vunpack.c.l.b16 %v488
          %v1326 = vunpack.c.h.b16 %v488
          %v1327 = vunpack.c.l.b16 %v489
          %v1328 = vunpack.c.h.b16 %v489
          %v1329 = vunpack.c.l.b16 %v490
          %v1330 = vunpack.c.h.b16 %v490
          %v1331 = vunpack.c.l.b16 %v491
          %v1332 = vunpack.c.h.b16 %v491
          %v1333 = vunpack.c.l.b16 %v492
          %v1334 = vunpack.c.h.b16 %v492
          %v1335 = vunpack.c.l.b16 %v493
          %v1336 = vunpack.c.h.b16 %v493
          %v1337 = vunpack.c.l.b16 %v494
          %v1338 = vunpack.c.h.b16 %v494
          %v1339 = vunpack.c.l.b16 %v495
          %v1340 = vunpack.c.h.b16 %v495
          %v1341 = vunpack.c.l.b16 %v496
          %v1342 = vunpack.c.h.b16 %v496
          %v1343 = vunpack.c.l.b16 %v497
          %v1344 = vunpack.c.h.b16 %v497
          %v1345 = vunpack.c.l.b16 %v498
          %v1346 = vunpack.c.h.b16 %v498
          %v1347 = vunpack.c.l.b16 %v499
          %v1348 = vunpack.c.h.b16 %v499
          %v1349 = vunpack.c.l.b16 %v500
          %v1350 = vunpack.c.h.b16 %v500
          %v1351 = vunpack.c.l.b16 %v501
          %v1352 = vunpack.c.h.b16 %v501
          %v1353 = vunpack.c.l.b16 %v502
          %v1354 = vunpack.c.h.b16 %v502
          %v1355 = vunpack.c.l.b16 %v503
          %v1356 = vunpack.c.h.b16 %v503
          %v1357 = vunpack.c.l.b16 %v504
          %v1358 = vunpack.c.h.b16 %v504
          %v1359 = vunpack.c.l.b16 %v505
          %v1360 = vunpack.c.h.b16 %v505
          %v1361 = vunpack.c.l.b16 %v506
          %v1362 = vunpack.c.h.b16 %v506
          %v1363 = vunpack.c.l.b16 %v507
          %v1364 = vunpack.c.h.b16 %v507
          %v1365 = vunpack.c.l.b16 %v508
          %v1366 = vunpack.c.h.b16 %v508
          %v1367 = vunpack.c.l.b16 %v509
          %v1368 = vunpack.c.h.b16 %v509
          %v1369 = vunpack.c.l.b16 %v510
          %v1370 = vunpack.c.h.b16 %v510
          %v1371 = vunpack.c.l.b16 %v511
          %v1372 = vunpack.c.h.b16 %v511
          %v1373 = vunpack.c.l.b16 %v512
          %v1374 = vunpack.c.h.b16 %v512
          %v1375 = vunpack.c.l.b16 %v513
          %v1376 = vunpack.c.h.b16 %v513
          %v1377 = vunpack.c.l.b16 %v514
          %v1378 = vunpack.c.h.b16 %v514
          %v1379 = vunpack.c.l.b16 %v515
          %v1380 = vunpack.c.h.b16 %v515
          %v1381 = vunpack.c.l.b16 %v516
          %v1382 = vunpack.c.h.b16 %v516
          %v1383 = vunpack.c.l.b16 %v517
          %v1384 = vunpack.c.h.b16 %v517
          %v1385 = vunpack.c.l.b16 %v518
          %v1386 = vunpack.c.h.b16 %v518
          %v1387 = vunpack.c.l.b16 %v519
          %v1388 = vunpack.c.h.b16 %v519
          %v1389 = vunpack.c.l.b16 %v520
          %v1390 = vunpack.c.h.b16 %v520
          %v1391 = vunpack.c.l.b16 %v521
          %v1392 = vunpack.c.h.b16 %v521
          %v1393 = vunpack.c.l.b16 %v522
          %v1394 = vunpack.c.h.b16 %v522
          %v1395 = vunpack.c.l.b16 %v523
          %v1396 = vunpack.c.h.b16 %v523
          %v1397 = vunpack.c.l.b16 %v524
          %v1398 = vunpack.c.h.b16 %v524
          %v1399 = vunpack.c.l.b16 %v525
          %v1400 = vunpack.c.h.b16 %v525
          %v1401 = vunpack.c.l.b16 %v526
          %v1402 = vunpack.c.h.b16 %v526
          %v1403 = vunpack.c.l.b16 %v527
          %v1404 = vunpack.c.h.b16 %v527
          %v1405 = vunpack.c.l.b16 %v528
          %v1406 = vunpack.c.h.b16 %v528
          %v1407 = vunpack.c.l.b16 %v529
          %v1408 = vunpack.c.h.b16 %v529
          %v1409 = vunpack.c.l.b16 %v530
          %v1410 = vunpack.c.h.b16 %v530
          %v1411 = vunpack.c.l.b16 %v531
          %v1412 = vunpack.c.h.b16 %v531
          %v1413 = vunpack.c.l.b16 %v532
          %v1414 = vunpack.c.h.b16 %v532
          %v1415 = vunpack.c.l.b16 %v533
          %v1416 = vunpack.c.h.b16 %v533
          %v1417 = vunpack.c.l.b16 %v534
          %v1418 = vunpack.c.h.b16 %v534
          %v1419 = vunpack.c.l.b16 %v535
          %v1420 = vunpack.c.h.b16 %v535
          %v1421 = vunpack.c.l.b16 %v536
          %v1422 = vunpack.c.h.b16 %v536
          %v1423 = vunpack.c.l.b16 %v537
          %v1424 = vunpack.c.h.b16 %v537
          %v1425 = vunpack.c.l.b16 %v538
          %v1426 = vunpack.c.h.b16 %v538
          %v1427 = vunpack.c.l.b16 %v539
          %v1428 = vunpack.c.h.b16 %v539
          %v1429 = vunpack.c.l.b16 %v540
          %v1430 = vunpack.c.h.b16 %v540
          %v1431 = vunpack.c.l.b16 %v541
          %v1432 = vunpack.c.h.b16 %v541
          %v1433 = vunpack.c.l.b16 %v542
          %v1434 = vunpack.c.h.b16 %v542
          %v1435 = vunpack.c.l.b16 %v543
          %v1436 = vunpack.c.h.b16 %v543
          %v1437 = vunpack.c.l.b16 %v544
          %v1438 = vunpack.c.h.b16 %v544
          %v1439 = vunpack.c.l.b16 %v545
          %v1440 = vunpack.c.h.b16 %v545
          %v1441 = vunpack.c.l.b16 %v546
          %v1442 = vunpack.c.h.b16 %v546
          %v1443 = vunpack.c.l.b16 %v547
          %v1444 = vunpack.c.h.b16 %v547
          %v1445 = vunpack.c.l.b16 %v548
          %v1446 = vunpack.c.h.b16 %v548
          %v1447 = vunpack.c.l.b16 %v549
          %v1448 = vunpack.c.h.b16 %v549
          %v1449 = vunpack.c.l.b16 %v550
          %v1450 = vunpack.c.h.b16 %v550
          %v1451 = vunpack.c.l.b16 %v551
          %v1452 = vunpack.c.h.b16 %v551
          %v1453 = vunpack.c.l.b16 %v552
          %v1454 = vunpack.c.h.b16 %v552
          %v1455 = vunpack.c.l.b16 %v553
          %v1456 = vunpack.c.h.b16 %v553
          %v1457 = vunpack.c.l.b16 %v554
          %v1458 = vunpack.c.h.b16 %v554
          %v1459 = vunpack.c.l.b16 %v555
          %v1460 = vunpack.c.h.b16 %v555
          %v1461 = vunpack.c.l.b16 %v556
          %v1462 = vunpack.c.h.b16 %v556
          %v1463 = vunpack.c.l.b16 %v557
          %v1464 = vunpack.c.h.b16 %v557
          %v1465 = vunpack.c.l.b16 %v558
          %v1466 = vunpack.c.h.b16 %v558
          %v1467 = vunpack.c.l.b16 %v559
          %v1468 = vunpack.c.h.b16 %v559
          %v1469 = vunpack.c.l.b16 %v560
          %v1470 = vunpack.c.h.b16 %v560
          %v1471 = vunpack.c.l.b16 %v561
          %v1472 = vunpack.c.h.b16 %v561
          %v1473 = vunpack.c.l.b16 %v562
          %v1474 = vunpack.c.h.b16 %v562
          %v1475 = vunpack.c.l.b16 %v563
          %v1476 = vunpack.c.h.b16 %v563
          %v1477 = vunpack.c.l.b16 %v564
          %v1478 = vunpack.c.h.b16 %v564
          %v1479 = vunpack.c.l.b16 %v565
          %v1480 = vunpack.c.h.b16 %v565
          %v1481 = vunpack.c.l.b16 %v566
          %v1482 = vunpack.c.h.b16 %v566
          %v1483 = vunpack.c.l.b16 %v567
          %v1484 = vunpack.c.h.b16 %v567
          %v1485 = vunpack.c.l.b16 %v568
          %v1486 = vunpack.c.h.b16 %v568
          %v1487 = vunpack.c.l.b16 %v569
          %v1488 = vunpack.c.h.b16 %v569
          %v1489 = vunpack.c.l.b16 %v570
          %v1490 = vunpack.c.h.b16 %v570
          %v1491 = vunpack.c.l.b16 %v571
          %v1492 = vunpack.c.h.b16 %v571
          %v1493 = vunpack.c.l.b16 %v572
          %v1494 = vunpack.c.h.b16 %v572
          %v1495 = vunpack.c.l.b16 %v573
          %v1496 = vunpack.c.h.b16 %v573
          %v1497 = vunpack.c.l.b16 %v574
          %v1498 = vunpack.c.h.b16 %v574
          %v1499 = vunpack.c.l.b16 %v575
          %v1500 = vunpack.c.h.b16 %v575
          %v1501 = vunpack.c.l.b16 %v576
          %v1502 = vunpack.c.h.b16 %v576
          %v1503 = vunpack.c.l.b16 %v577
          %v1504 = vunpack.c.h.b16 %v577
          %v1505 = vunpack.c.l.b16 %v578
          %v1506 = vunpack.c.h.b16 %v578
          %v1507 = vunpack.c.l.b16 %v579
          %v1508 = vunpack.c.h.b16 %v579
          %v1509 = vunpack.c.l.b16 %v580
          %v1510 = vunpack.c.h.b16 %v580
          %v1511 = vunpack.c.l.b16 %v581
          %v1512 = vunpack.c.h.b16 %v581
          %v1513 = vunpack.c.l.b16 %v582
          %v1514 = vunpack.c.h.b16 %v582
          %v1515 = vunpack.c.l.b16 %v583
          %v1516 = vunpack.c.h.b16 %v583
          %v1517 = vunpack.c.l.b16 %v584
          %v1518 = vunpack.c.h.b16 %v584
          %v1519 = vunpack.c.l.b16 %v585
          %v1520 = vunpack.c.h.b16 %v585
          %v1521 = vunpack.c.l.b16 %v586
          %v1522 = vunpack.c.h.b16 %v586
          %v1523 = vunpack.c.l.b16 %v587
          %v1524 = vunpack.c.h.b16 %v587
          %v1525 = vunpack.c.l.b16 %v588
          %v1526 = vunpack.c.h.b16 %v588
          %v1527 = vunpack.c.l.b16 %v589
          %v1528 = vunpack.c.h.b16 %v589
          %v1529 = vunpack.c.l.b16 %v590
          %v1530 = vunpack.c.h.b16 %v590
          %v1531 = vunpack.c.l.b16 %v591
          %v1532 = vunpack.c.h.b16 %v591
          %v1533 = vunpack.c.l.b16 %v592
          %v1534 = vunpack.c.h.b16 %v592
          %v1535 = vunpack.c.l.b16 %v593
          %v1536 = vunpack.c.h.b16 %v593
          %v1537 = vunpack.c.l.b16 %v594
          %v1538 = vunpack.c.h.b16 %v594
          %v1539 = vunpack.c.l.b16 %v595
          %v1540 = vunpack.c.h.b16 %v595
          %v1541 = vunpack.c.l.b16 %v596
          %v1542 = vunpack.c.h.b16 %v596
          %v1543 = vunpack.c.l.b16 %v597
          %v1544 = vunpack.c.h.b16 %v597
          %v1545 = vunpack.c.l.b16 %v598
          %v1546 = vunpack.c.h.b16 %v598
          %v1547 = vunpack.c.l.b16 %v599
          %v1548 = vunpack.c.h.b16 %v599
          %v1549 = vunpack.c.l.b16 %v600
          %v1550 = vunpack.c.h.b16 %v600
          %v1551 = vunpack.c.l.b16 %v601
          %v1552 = vunpack.c.h.b16 %v601
          %v1553 = vunpack.c.l.b16 %v602
          %v1554 = vunpack.c.h.b16 %v602
          %v1555 = vunpack.c.l.b16 %v603
          %v1556 = vunpack.c.h.b16 %v603
          %v1557 = vunpack.c.l.b16 %v604
          %v1558 = vunpack.c.h.b16 %v604
          %v1559 = vunpack.c.l.b16 %v605
          %v1560 = vunpack.c.h.b16 %v605
          %v1561 = vunpack.c.l.b16 %v606
          %v1562 = vunpack.c.h.b16 %v606
          %v1563 = vunpack.c.l.b16 %v607
          %v1564 = vunpack.c.h.b16 %v607
          %v1565 = vunpack.c.l.b16 %v608
          %v1566 = vunpack.c.h.b16 %v608
          %v1567 = vunpack.c.l.b16 %v609
          %v1568 = vunpack.c.h.b16 %v609
          %v1569 = vunpack.c.l.b16 %v610
          %v1570 = vunpack.c.h.b16 %v610
          %v1571 = vunpack.c.l.b16 %v611
          %v1572 = vunpack.c.h.b16 %v611
          %v1573 = vunpack.c.l.b16 %v612
          %v1574 = vunpack.c.h.b16 %v612
          %v1575 = vunpack.c.l.b16 %v613
          %v1576 = vunpack.c.h.b16 %v613
          %v1577 = vunpack.c.l.b16 %v614
          %v1578 = vunpack.c.h.b16 %v614
          %v1579 = vunpack.c.l.b16 %v615
          %v1580 = vunpack.c.h.b16 %v615
          %v1581 = vunpack.c.l.b16 %v616
          %v1582 = vunpack.c.h.b16 %v616
          %v1583 = vunpack.c.l.b16 %v617
          %v1584 = vunpack.c.h.b16 %v617
          %v1585 = vunpack.c.l.b16 %v618
          %v1586 = vunpack.c.h.b16 %v618
          %v1587 = vunpack.c.l.b16 %v619
          %v1588 = vunpack.c.h.b16 %v619
          %v1589 = vunpack.c.l.b16 %v620
          %v1590 = vunpack.c.h.b16 %v620
          %v1591 = vunpack.c.l.b16 %v621
          %v1592 = vunpack.c.h.b16 %v621
          %v1593 = vunpack.c.l.b16 %v622
          %v1594 = vunpack.c.h.b16 %v622
          %v1595 = vunpack.c.l.b16 %v623
          %v1596 = vunpack.c.h.b16 %v623
          %v1597 = vunpack.c.l.b16 %v624
          %v1598 = vunpack.c.h.b16 %v624
          %v1599 = vunpack.c.l.b16 %v625
          %v1600 = vunpack.c.h.b16 %v625
          %v1601 = vunpack.c.l.b16 %v626
          %v1602 = vunpack.c.h.b16 %v626
          %v1603 = vunpack.c.l.b16 %v627
          %v1604 = vunpack.c.h.b16 %v627
          %v1605 = vunpack.c.l.b16 %v628
          %v1606 = vunpack.c.h.b16 %v628
          %v1607 = vunpack.c.l.b16 %v629
          %v1608 = vunpack.c.h.b16 %v629
          %v1609 = vunpack.c.l.b16 %v630
          %v1610 = vunpack.c.h.b16 %v630
          %v1611 = vunpack.c.l.b16 %v631
          %v1612 = vunpack.c.h.b16 %v631
          %v1613 = vunpack.c.l.b16 %v632
          %v1614 = vunpack.c.h.b16 %v632
          %v1615 = vunpack.c.l.b16 %v633
          %v1616 = vunpack.c.h.b16 %v633
          %v1617 = vunpack.c.l.b16 %v634
          %v1618 = vunpack.c.h.b16 %v634
          %v1619 = vunpack.c.l.b16 %v635
          %v1620 = vunpack.c.h.b16 %v635
          %v1621 = vunpack.c.l.b16 %v636
          %v1622 = vunpack.c.h.b16 %v636
          %v1623 = vunpack.c.l.b16 %v637
          %v1624 = vunpack.c.h.b16 %v637
          %v1625 = vunpack.c.l.b16 %v638
          %v1626 = vunpack.c.h.b16 %v638
          %v1627 = vunpack.c.l.b16 %v639
          %v1628 = vunpack.c.h.b16 %v639
          %v1629 = vunpack.c.l.b16 %v640
          %v1630 = vunpack.c.h.b16 %v640
          %v1631 = vunpack.c.l.b16 %v641
          %v1632 = vunpack.c.h.b16 %v641
          %v1633 = vunpack.c.l.b16 %v642
          %v1634 = vunpack.c.h.b16 %v642
          %v1635 = vunpack.c.l.b16 %v643
          %v1636 = vunpack.c.h.b16 %v643
          %v1637 = vunpack.c.l.b16 %v644
          %v1638 = vunpack.c.h.b16 %v644
          %v1639 = vunpack.c.l.b16 %v645
          %v1640 = vunpack.c.h.b16 %v645
          %v1641 = vunpack.c.l.b16 %v646
          %v1642 = vunpack.c.h.b16 %v646
          %v1643 = vunpack.c.l.b16 %v647
          %v1644 = vunpack.c.h.b16 %v647
          %v1645 = vunpack.c.l.b16 %v648
          %v1646 = vunpack.c.h.b16 %v648
          %v1647 = vunpack.c.l.b16 %v649
          %v1648 = vunpack.c.h.b16 %v649
          %v1649 = vunpack.c.l.b16 %v650
          %v1650 = vunpack.c.h.b16 %v650
          %v1651 = vunpack.c.l.b16 %v651
          %v1652 = vunpack.c.h.b16 %v651
          %v1653 = vunpack.c.l.b16 %v652
          %v1654 = vunpack.c.h.b16 %v652
          %v1655 = vunpack.c.l.b16 %v653
          %v1656 = vunpack.c.h.b16 %v653
          %v1657 = vunpack.c.l.b16 %v654
          %v1658 = vunpack.c.h.b16 %v654
          %v1659 = vunpack.c.l.b16 %v655
          %v1660 = vunpack.c.h.b16 %v655
          %v1661 = vunpack.c.l.b16 %v656
          %v1662 = vunpack.c.h.b16 %v656
          %v1663 = vunpack.c.l.b16 %v657
          %v1664 = vunpack.c.h.b16 %v657
          %v1665 = vunpack.c.l.b16 %v658
          %v1666 = vunpack.c.h.b16 %v658
          %v1667 = vunpack.c.l.b16 %v659
          %v1668 = vunpack.c.h.b16 %v659
          %v1669 = vunpack.c.l.b16 %v660
          %v1670 = vunpack.c.h.b16 %v660
          %v1671 = vunpack.c.l.b16 %v661
          %v1672 = vunpack.c.h.b16 %v661
          %v1673 = vunpack.c.l.b16 %v662
          %v1674 = vunpack.c.h.b16 %v662
          %v1675 = vunpack.c.l.b16 %v663
          %v1676 = vunpack.c.h.b16 %v663
          %v1677 = vunpack.c.l.b16 %v664
          %v1678 = vunpack.c.h.b16 %v664
          %v1679 = vunpack.c.l.b16 %v665
          %v1680 = vunpack.c.h.b16 %v665
          %v1681 = vunpack.c.l.b16 %v666
          %v1682 = vunpack.c.h.b16 %v666
          %v1683 = vunpack.c.l.b16 %v667
          %v1684 = vunpack.c.h.b16 %v667
          %v1685 = vunpack.c.l.b16 %v668
          %v1686 = vunpack.c.h.b16 %v668
          %v1687 = vunpack.c.l.b16 %v669
          %v1688 = vunpack.c.h.b16 %v669
          %v1689 = vunpack.c.l.b16 %v670
          %v1690 = vunpack.c.h.b16 %v670
          %v1691 = vunpack.c.l.b16 %v671
          %v1692 = vunpack.c.h.b16 %v671
          %v1693 = vunpack.c.l.b16 %v672
          %v1694 = vunpack.c.h.b16 %v672
          %v1695 = vunpack.c.l.b16 %v673
          %v1696 = vunpack.c.h.b16 %v673
          %v1697 = vunpack.c.l.b16 %v674
          %v1698 = vunpack.c.h.b16 %v674
          %v1699 = vunpack.c.l.b16 %v675
          %v1700 = vunpack.c.h.b16 %v675
          %v1701 = vunpack.c.l.b16 %v676
          %v1702 = vunpack.c.h.b16 %v676
          %v1703 = vunpack.c.l.b16 %v677
          %v1704 = vunpack.c.h.b16 %v677
          %v1705 = vunpack.c.l.b16 %v678
          %v1706 = vunpack.c.h.b16 %v678
          %v1707 = vunpack.c.l.b16 %v679
          %v1708 = vunpack.c.h.b16 %v679
          %v1709 = vunpack.c.l.b16 %v680
          %v1710 = vunpack.c.h.b16 %v680
          %v1711 = vunpack.c.l.b16 %v681
          %v1712 = vunpack.c.h.b16 %v681
          %v1713 = vunpack.c.l.b16 %v682
          %v1714 = vunpack.c.h.b16 %v682
          %v1715 = vunpack.c.l.b16 %v683
          %v1716 = vunpack.c.h.b16 %v683
          %v1717 = vunpack.c.l.b16 %v684
          %v1718 = vunpack.c.h.b16 %v684
          %v1719 = vunpack.c.l.b16 %v685
          %v1720 = vunpack.c.h.b16 %v685
          %v1721 = vunpack.c.l.b16 %v686
          %v1722 = vunpack.c.h.b16 %v686
          %v1723 = vunpack.c.l.b16 %v687
          %v1724 = vunpack.c.h.b16 %v687
          %v1725 = vunpack.c.l.b16 %v688
          %v1726 = vunpack.c.h.b16 %v688
          %v1727 = vunpack.c.l.b16 %v689
          %v1728 = vunpack.c.h.b16 %v689
          %v1729 = vunpack.c.l.b16 %v690
          %v1730 = vunpack.c.h.b16 %v690
          %v1731 = vunpack.c.l.b16 %v691
          %v1732 = vunpack.c.h.b16 %v691
          %v1733 = vunpack.c.l.b16 %v692
          %v1734 = vunpack.c.h.b16 %v692
          %v1735 = vunpack.c.l.b16 %v693
          %v1736 = vunpack.c.h.b16 %v693
          %v1737 = vunpack.c.l.b16 %v694
          %v1738 = vunpack.c.h.b16 %v694
          %v1739 = vunpack.c.l.b16 %v695
          %v1740 = vunpack.c.h.b16 %v695
          %v1741 = vunpack.c.l.b16 %v696
          %v1742 = vunpack.c.h.b16 %v696
          %v1743 = vunpack.c.l.b16 %v697
          %v1744 = vunpack.c.h.b16 %v697
          %v1745 = vunpack.c.l.b16 %v698
          %v1746 = vunpack.c.h.b16 %v698
          %v1747 = vunpack.c.l.b16 %v699
          %v1748 = vunpack.c.h.b16 %v699
          %v1749 = vunpack.c.l.b16 %v700
          %v1750 = vunpack.c.h.b16 %v700
          %v1751 = vunpack.c.l.b16 %v701
          %v1752 = vunpack.c.h.b16 %v701
          %v1753 = vunpack.c.l.b16 %v702
          %v1754 = vunpack.c.h.b16 %v702
          %v1755 = vunpack.c.l.b16 %v703
          %v1756 = vunpack.c.h.b16 %v703
          %v1757 = vunpack.c.l.b16 %v704
          %v1758 = vunpack.c.h.b16 %v704
          %v1759 = vunpack.c.l.b16 %v705
          %v1760 = vunpack.c.h.b16 %v705
          %v1761 = vunpack.c.l.b16 %v706
          %v1762 = vunpack.c.h.b16 %v706
          %v1763 = vunpack.c.l.b16 %v707
          %v1764 = vunpack.c.h.b16 %v707
          %v1765 = vunpack.c.l.b16 %v708
          %v1766 = vunpack.c.h.b16 %v708
          %v1767 = vunpack.c.l.b16 %v709
          %v1768 = vunpack.c.h.b16 %v709
          %v1769 = vunpack.c.l.b16 %v710
          %v1770 = vunpack.c.h.b16 %v710
          %v1771 = vunpack.c.l.b16 %v711
          %v1772 = vunpack.c.h.b16 %v711
          %v1773 = vunpack.c.l.b16 %v712
          %v1774 = vunpack.c.h.b16 %v712
          %v1775 = vunpack.c.l.b16 %v713
          %v1776 = vunpack.c.h.b16 %v713
          %v1777 = vunpack.c.l.b16 %v714
          %v1778 = vunpack.c.h.b16 %v714
          %v1779 = vunpack.c.l.b16 %v715
          %v1780 = vunpack.c.h.b16 %v715
          %v1781 = vunpack.c.l.b16 %v716
          %v1782 = vunpack.c.h.b16 %v716
          %v1783 = vunpack.c.l.b16 %v717
          %v1784 = vunpack.c.h.b16 %v717
          %v1785 = vunpack.c.l.b16 %v718
          %v1786 = vunpack.c.h.b16 %v718
          %v1787 = vunpack.c.l.b16 %v719
          %v1788 = vunpack.c.h.b16 %v719
          %v1789 = vunpack.c.l.b16 %v720
          %v1790 = vunpack.c.h.b16 %v720
          %v1791 = vunpack.c.l.b16 %v721
          %v1792 = vunpack.c.h.b16 %v721
          %v1793 = vunpack.c.l.b16 %v722
          %v1794 = vunpack.c.h.b16 %v722
          %v1795 = vunpack.c.l.b16 %v723
          %v1796 = vunpack.c.h.b16 %v723
          %v1797 = vunpack.c.l.b16 %v724
          %v1798 = vunpack.c.h.b16 %v724
          %v1799 = vunpack.c.l.b16 %v725
          %v1800 = vunpack.c.h.b16 %v725
          %v1801 = vunpack.c.l.b16 %v726
          %v1802 = vunpack.c.h.b16 %v726
          %v1803 = vunpack.c.l.b16 %v727
          %v1804 = vunpack.c.h.b16 %v727
          %v1805 = vunpack.c.l.b16 %v728
          %v1806 = vunpack.c.h.b16 %v728
          %v1807 = vunpack.c.l.b16 %v729
          %v1808 = vunpack.c.h.b16 %v729
          %v1809 = vunpack.c.l.b16 %v730
          %v1810 = vunpack.c.h.b16 %v730
          %v1811 = vunpack.c.l.b16 %v731
          %v1812 = vunpack.c.h.b16 %v731
          %v1813 = vunpack.c.l.b16 %v732
          %v1814 = vunpack.c.h.b16 %v732
          %v1815 = vunpack.c.l.b16 %v733
          %v1816 = vunpack.c.h.b16 %v733
          %v1817 = vunpack.c.l.b16 %v734
          %v1818 = vunpack.c.h.b16 %v734
          %v1819 = vunpack.c.l.b16 %v735
          %v1820 = vunpack.c.h.b16 %v735
          %v1821 = vunpack.c.l.b16 %v736
          %v1822 = vunpack.c.h.b16 %v736
          %v1823 = vunpack.c.l.b16 %v737
          %v1824 = vunpack.c.h.b16 %v737
          %v1825 = vunpack.c.l.b16 %v738
          %v1826 = vunpack.c.h.b16 %v738
          %v1827 = vunpack.c.l.b16 %v739
          %v1828 = vunpack.c.h.b16 %v739
          %v1829 = vunpack.c.l.b16 %v740
          %v1830 = vunpack.c.h.b16 %v740
          %v1831 = vunpack.c.l.b16 %v741
          %v1832 = vunpack.c.h.b16 %v741
          %v1833 = vunpack.c.l.b16 %v742
          %v1834 = vunpack.c.h.b16 %v742
          %v1835 = vunpack.c.l.b16 %v743
          %v1836 = vunpack.c.h.b16 %v743
          %v1837 = vunpack.c.l.b16 %v744
          %v1838 = vunpack.c.h.b16 %v744
          %v1839 = vunpack.c.l.b16 %v745
          %v1840 = vunpack.c.h.b16 %v745
          %v1841 = vunpack.c.l.b16 %v746
          %v1842 = vunpack.c.h.b16 %v746
          %v1843 = vunpack.c.l.b16 %v747
          %v1844 = vunpack.c.h.b16 %v747
          %v1845 = vunpack.c.l.b16 %v748
          %v1846 = vunpack.c.h.b16 %v748
          %v1847 = vunpack.c.l.b16 %v749
          %v1848 = vunpack.c.h.b16 %v749
          %v1849 = vunpack.c.l.b16 %v750
          %v1850 = vunpack.c.h.b16 %v750
          %v1851 = vunpack.c.l.b16 %v751
          %v1852 = vunpack.c.h.b16 %v751
          %v1853 = vunpack.c.l.b16 %v752
          %v1854 = vunpack.c.h.b16 %v752
          %v1855 = vunpack.c.l.b16 %v753
          %v1856 = vunpack.c.h.b16 %v753
          %v1857 = vunpack.c.l.b16 %v754
          %v1858 = vunpack.c.h.b16 %v754
          %v1859 = vunpack.c.l.b16 %v755
          %v1860 = vunpack.c.h.b16 %v755
          %v1861 = vunpack.c.l.b16 %v756
          %v1862 = vunpack.c.h.b16 %v756
          %v1863 = vunpack.c.l.b16 %v757
          %v1864 = vunpack.c.h.b16 %v757
          %v1865 = vunpack.c.l.b16 %v758
          %v1866 = vunpack.c.h.b16 %v758
          %v1867 = vunpack.c.l.b16 %v759
          %v1868 = vunpack.c.h.b16 %v759
          %v1869 = vunpack.c.l.b16 %v760
          %v1870 = vunpack.c.h.b16 %v760
          %v1871 = vunpack.c.l.b16 %v761
          %v1872 = vunpack.c.h.b16 %v761
          %v1873 = vunpack.c.l.b16 %v762
          %v1874 = vunpack.c.h.b16 %v762
          %v1875 = vunpack.c.l.b16 %v763
          %v1876 = vunpack.c.h.b16 %v763
          %v1877 = vunpack.c.l.b16 %v764
          %v1878 = vunpack.c.h.b16 %v764
          %v1879 = vunpack.c.l.b16 %v765
          %v1880 = vunpack.c.h.b16 %v765
          %v1881 = vunpack.c.l.b16 %v766
          %v1882 = vunpack.c.h.b16 %v766
          %v1883 = vunpack.c.l.b16 %v767
          %v1884 = vunpack.c.h.b16 %v767
          %v1885 = vunpack.c.l.b16 %v768
          %v1886 = vunpack.c.h.b16 %v768
          %v1887 = vunpack.c.l.b16 %v769
          %v1888 = vunpack.c.h.b16 %v769
          %v1889 = vunpack.c.l.b16 %v770
          %v1890 = vunpack.c.h.b16 %v770
          %v1891 = vunpack.c.l.b16 %v771
          %v1892 = vunpack.c.h.b16 %v771
          %v1893 = vunpack.c.l.b16 %v772
          %v1894 = vunpack.c.h.b16 %v772
          %v1895 = vunpack.c.l.b16 %v773
          %v1896 = vunpack.c.h.b16 %v773
          %v1897 = vunpack.c.l.b16 %v774
          %v1898 = vunpack.c.h.b16 %v774
          %v1899 = vunpack.c.l.b16 %v775
          %v1900 = vunpack.c.h.b16 %v775
          %v1901 = vunpack.c.l.b16 %v776
          %v1902 = vunpack.c.h.b16 %v776
          %v1903 = vunpack.c.l.b16 %v777
          %v1904 = vunpack.c.h.b16 %v777
          %v1905 = vunpack.c.l.b16 %v778
          %v1906 = vunpack.c.h.b16 %v778
          %v1907 = vunpack.c.l.b16 %v779
          %v1908 = vunpack.c.h.b16 %v779
          %v1909 = vunpack.c.l.b16 %v780
          %v1910 = vunpack.c.h.b16 %v780
          %v1911 = vunpack.c.l.b16 %v781
          %v1912 = vunpack.c.h.b16 %v781
          %v1913 = vunpack.c.l.b16 %v782
          %v1914 = vunpack.c.h.b16 %v782
          %v1915 = vunpack.c.l.b16 %v783
          %v1916 = vunpack.c.h.b16 %v783
          %v1917 = vunpack.c.l.b16 %v784
          %v1918 = vunpack.c.h.b16 %v784
          %v1919 = vunpack.c.l.b16 %v785
          %v1920 = vunpack.c.h.b16 %v785
          %v1921 = vunpack.c.l.b16 %v786
          %v1922 = vunpack.c.h.b16 %v786
          %v1923 = vunpack.c.l.b16 %v787
          %v1924 = vunpack.c.h.b16 %v787
          %v1925 = vunpack.c.l.b16 %v788
          %v1926 = vunpack.c.h.b16 %v788
          %v1927 = vunpack.c.l.b16 %v789
          %v1928 = vunpack.c.h.b16 %v789
          %v1929 = vunpack.c.l.b16 %v790
          %v1930 = vunpack.c.h.b16 %v790
          %v1931 = vunpack.c.l.b16 %v791
          %v1932 = vunpack.c.h.b16 %v791
          %v1933 = vunpack.c.l.b16 %v792
          %v1934 = vunpack.c.h.b16 %v792
          %v1935 = vunpack.c.l.b16 %v793
          %v1936 = vunpack.c.h.b16 %v793
          %v1937 = vunpack.c.l.b16 %v794
          %v1938 = vunpack.c.h.b16 %v794
          %v1939 = vunpack.c.l.b16 %v795
          %v1940 = vunpack.c.h.b16 %v795
          %v1941 = vunpack.c.l.b16 %v796
          %v1942 = vunpack.c.h.b16 %v796
          %v1943 = vunpack.c.l.b16 %v797
          %v1944 = vunpack.c.h.b16 %v797
          %v1945 = vunpack.c.l.b16 %v798
          %v1946 = vunpack.c.h.b16 %v798
          %v1947 = vunpack.c.l.b16 %v799
          %v1948 = vunpack.c.h.b16 %v799
          %v1949 = vunpack.c.l.b16 %v800
          %v1950 = vunpack.c.h.b16 %v800
          %v1951 = vunpack.c.l.b16 %v801
          %v1952 = vunpack.c.h.b16 %v801
          %v1953 = vunpack.c.l.b16 %v802
          %v1954 = vunpack.c.h.b16 %v802
          %v1955 = vpack.c.b16 %v1199, %v1187
          %v1956 = vpack.c.b16 %v1200, %v1188
          %v1957 = vpack.c.b16 %v1201, %v1189
          %v1958 = vpack.c.b16 %v1202, %v1190
          %v1959 = vpack.c.b16 %v1203, %v1191
          %v1960 = vpack.c.b16 %v1204, %v1192
          %v1961 = vpack.c.b16 %v1205, %v1193
          %v1962 = vpack.c.b16 %v1206, %v1194
          %v1963 = vpack.c.b16 %v1207, %v1195
          %v1964 = vpack.c.b16 %v1208, %v1196
          %v1965 = vpack.c.b16 %v1209, %v1197
          %v1966 = vpack.c.b16 %v1210, %v1198
          %v1967 = vpack.c.b16 %v1223, %v1211
          %v1968 = vpack.c.b16 %v1224, %v1212
          %v1969 = vpack.c.b16 %v1225, %v1213
          %v1970 = vpack.c.b16 %v1226, %v1214
          %v1971 = vpack.c.b16 %v1227, %v1215
          %v1972 = vpack.c.b16 %v1228, %v1216
          %v1973 = vpack.c.b16 %v1229, %v1217
          %v1974 = vpack.c.b16 %v1230, %v1218
          %v1975 = vpack.c.b16 %v1231, %v1219
          %v1976 = vpack.c.b16 %v1232, %v1220
          %v1977 = vpack.c.b16 %v1233, %v1221
          %v1978 = vpack.c.b16 %v1234, %v1222
          %v1979 = vpack.c.b16 %v1247, %v1235
          %v1980 = vpack.c.b16 %v1248, %v1236
          %v1981 = vpack.c.b16 %v1249, %v1237
          %v1982 = vpack.c.b16 %v1250, %v1238
          %v1983 = vpack.c.b16 %v1251, %v1239
          %v1984 = vpack.c.b16 %v1252, %v1240
          %v1985 = vpack.c.b16 %v1253, %v1241
          %v1986 = vpack.c.b16 %v1254, %v1242
          %v1987 = vpack.c.b16 %v1255, %v1243
          %v1988 = vpack.c.b16 %v1256, %v1244
          %v1989 = vpack.c.b16 %v1257, %v1245
          %v1990 = vpack.c.b16 %v1258, %v1246
          %v1991 = vpack.c.b16 %v1271, %v1259
          %v1992 = vpack.c.b16 %v1272, %v1260
          %v1993 = vpack.c.b16 %v1273, %v1261
          %v1994 = vpack.c.b16 %v1274, %v1262
          %v1995 = vpack.c.b16 %v1275, %v1263
          %v1996 = vpack.c.b16 %v1276, %v1264
          %v1997 = vpack.c.b16 %v1277, %v1265
          %v1998 = vpack.c.b16 %v1278, %v1266
          %v1999 = vpack.c.b16 %v1279, %v1267
          %v2000 = vpack.c.b16 %v1280, %v1268
          %v2001 = vpack.c.b16 %v1281, %v1269
          %v2002 = vpack.c.b16 %v1282, %v1270
          %v2003 = vpack.c.b16 %v1295, %v1283
          %v2004 = vpack.c.b16 %v1296, %v1284
          %v2005 = vpack.c.b16 %v1297, %v1285
          %v2006 = vpack.c.b16 %v1298, %v1286
          %v2007 = vpack.c.b16 %v1299, %v1287
          %v2008 = vpack.c.b16 %v1300, %v1288
          %v2009 = vpack.c.b16 %v1301, %v1289
          %v2010 = vpack.c.b16 %v1302, %v1290
          %v2011 = vpack.c.b16 %v1303, %v1291
          %v2012 = vpack.c.b16 %v1304, %v1292
          %v2013 = vpack.c.b16 %v1305, %v1293
          %v2014 = vpack.c.b16 %v1306, %v1294
          %v2015 = vpack.c.b16 %v1319, %v1307
          %v2016 = vpack.c.b16 %v1320, %v1308
          %v2017 = vpack.c.b16 %v1321, %v1309
          %v2018 = vpack.c.b16 %v1322, %v1310
          %v2019 = vpack.c.b16 %v1323, %v1311
          %v2020 = vpack.c.b16 %v1324, %v1312
          %v2021 = vpack.c.b16 %v1325, %v1313
          %v2022 = vpack.c.b16 %v1326, %v1314
          %v2023 = vpack.c.b16 %v1327, %v1315
          %v2024 = vpack.c.b16 %v1328, %v1316
          %v2025 = vpack.c.b16 %v1329, %v1317
          %v2026 = vpack.c.b16 %v1330, %v1318
          %v2027 = vpack.c.b16 %v1343, %v1331
          %v2028 = vpack.c.b16 %v1344, %v1332
          %v2029 = vpack.c.b16 %v1345, %v1333
          %v2030 = vpack.c.b16 %v1346, %v1334
          %v2031 = vpack.c.b16 %v1347, %v1335
          %v2032 = vpack.c.b16 %v1348, %v1336
          %v2033 = vpack.c.b16 %v1349, %v1337
          %v2034 = vpack.c.b16 %v1350, %v1338
          %v2035 = vpack.c.b16 %v1351, %v1339
          %v2036 = vpack.c.b16 %v1352, %v1340
          %v2037 = vpack.c.b16 %v1353, %v1341
          %v2038 = vpack.c.b16 %v1354, %v1342
          %v2039 = vpack.c.b16 %v1367, %v1355
          %v2040 = vpack.c.b16 %v1368, %v1356
          %v2041 = vpack.c.b16 %v1369, %v1357
          %v2042 = vpack.c.b16 %v1370, %v1358
          %v2043 = vpack.c.b16 %v1371, %v1359
          %v2044 = vpack.c.b16 %v1372, %v1360
          %v2045 = vpack.c.b16 %v1373, %v1361
          %v2046 = vpack.c.b16 %v1374, %v1362
          %v2047 = vpack.c.b16 %v1375, %v1363
          %v2048 = vpack.c.b16 %v1376, %v1364
          %v2049 = vpack.c.b16 %v1377, %v1365
          %v2050 = vpack.c.b16 %v1378, %v1366
          %v2051 = vpack.c.b16 %v1391, %v1379
          %v2052 = vpack.c.b16 %v1392, %v1380
          %v2053 = vpack.c.b16 %v1393, %v1381
          %v2054 = vpack.c.b16 %v1394, %v1382
          %v2055 = vpack.c.b16 %v1395, %v1383
          %v2056 = vpack.c.b16 %v1396, %v1384
          %v2057 = vpack.c.b16 %v1397, %v1385
          %v2058 = vpack.c.b16 %v1398, %v1386
          %v2059 = vpack.c.b16 %v1399, %v1387
          %v2060 = vpack.c.b16 %v1400, %v1388
          %v2061 = vpack.c.b16 %v1401, %v1389
          %v2062 = vpack.c.b16 %v1402, %v1390
          %v2063 = vpack.c.b16 %v1415, %v1403
          %v2064 = vpack.c.b16 %v1416, %v1404
          %v2065 = vpack.c.b16 %v1417, %v1405
          %v2066 = vpack.c.b16 %v1418, %v1406
          %v2067 = vpack.c.b16 %v1419, %v1407
          %v2068 = vpack.c.b16 %v1420, %v1408
          %v2069 = vpack.c.b16 %v1421, %v1409
          %v2070 = vpack.c.b16 %v1422, %v1410
          %v2071 = vpack.c.b16 %v1423, %v1411
          %v2072 = vpack.c.b16 %v1424, %v1412
          %v2073 = vpack.c.b16 %v1425, %v1413
          %v2074 = vpack.c.b16 %v1426, %v1414
          %v2075 = vpack.c.b16 %v1439, %v1427
          %v2076 = vpack.c.b16 %v1440, %v1428
          %v2077 = vpack.c.b16 %v1441, %v1429
          %v2078 = vpack.c.b16 %v1442, %v1430
          %v2079 = vpack.c.b16 %v1443, %v1431
          %v2080 = vpack.c.b16 %v1444, %v1432
          %v2081 = vpack.c.b16 %v1445, %v1433
          %v2082 = vpack.c.b16 %v1446, %v1434
          %v2083 = vpack.c.b16 %v1447, %v1435
          %v2084 = vpack.c.b16 %v1448, %v1436
          %v2085 = vpack.c.b16 %v1449, %v1437
          %v2086 = vpack.c.b16 %v1450, %v1438
          %v2087 = vpack.c.b16 %v1463, %v1451
          %v2088 = vpack.c.b16 %v1464, %v1452
          %v2089 = vpack.c.b16 %v1465, %v1453
          %v2090 = vpack.c.b16 %v1466, %v1454
          %v2091 = vpack.c.b16 %v1467, %v1455
          %v2092 = vpack.c.b16 %v1468, %v1456
          %v2093 = vpack.c.b16 %v1469, %v1457
          %v2094 = vpack.c.b16 %v1470, %v1458
          %v2095 = vpack.c.b16 %v1471, %v1459
          %v2096 = vpack.c.b16 %v1472, %v1460
          %v2097 = vpack.c.b16 %v1473, %v1461
          %v2098 = vpack.c.b16 %v1474, %v1462
          %v2099 = vpack.c.b16 %v1487, %v1475
          %v2100 = vpack.c.b16 %v1488, %v1476
          %v2101 = vpack.c.b16 %v1489, %v1477
          %v2102 = vpack.c.b16 %v1490, %v1478
          %v2103 = vpack.c.b16 %v1491, %v1479
          %v2104 = vpack.c.b16 %v1492, %v1480
          %v2105 = vpack.c.b16 %v1493, %v1481
          %v2106 = vpack.c.b16 %v1494, %v1482
          %v2107 = vpack.c.b16 %v1495, %v1483
          %v2108 = vpack.c.b16 %v1496, %v1484
          %v2109 = vpack.c.b16 %v1497, %v1485
          %v2110 = vpack.c.b16 %v1498, %v1486
          %v2111 = vpack.c.b16 %v1511, %v1499
          %v2112 = vpack.c.b16 %v1512, %v1500
          %v2113 = vpack.c.b16 %v1513, %v1501
          %v2114 = vpack.c.b16 %v1514, %v1502
          %v2115 = vpack.c.b16 %v1515, %v1503
          %v2116 = vpack.c.b16 %v1516, %v1504
          %v2117 = vpack.c.b16 %v1517, %v1505
          %v2118 = vpack.c.b16 %v1518, %v1506
          %v2119 = vpack.c.b16 %v1519, %v1507
          %v2120 = vpack.c.b16 %v1520, %v1508
          %v2121 = vpack.c.b16 %v1521, %v1509
          %v2122 = vpack.c.b16 %v1522, %v1510
          %v2123 = vpack.c.b16 %v1535, %v1523
          %v2124 = vpack.c.b16 %v1536, %v1524
          %v2125 = vpack.c.b16 %v1537, %v1525
          %v2126 = vpack.c.b16 %v1538, %v1526
          %v2127 = vpack.c.b16 %v1539, %v1527
          %v2128 = vpack.c.b16 %v1540, %v1528
          %v2129 = vpack.c.b16 %v1541, %v1529
          %v2130 = vpack.c.b16 %v1542, %v1530
          %v2131 = vpack.c.b16 %v1543, %v1531
          %v2132 = vpack.c.b16 %v1544, %v1532
          %v2133 = vpack.c.b16 %v1545, %v1533
          %v2134 = vpack.c.b16 %v1546, %v1534
          %v2135 = vpack.c.b16 %v1559, %v1547
          %v2136 = vpack.c.b16 %v1560, %v1548
          %v2137 = vpack.c.b16 %v1561, %v1549
          %v2138 = vpack.c.b16 %v1562, %v1550
          %v2139 = vpack.c.b16 %v1563, %v1551
          %v2140 = vpack.c.b16 %v1564, %v1552
          %v2141 = vpack.c.b16 %v1565, %v1553
          %v2142 = vpack.c.b16 %v1566, %v1554
          %v2143 = vpack.c.b16 %v1567, %v1555
          %v2144 = vpack.c.b16 %v1568, %v1556
          %v2145 = vpack.c.b16 %v1569, %v1557
          %v2146 = vpack.c.b16 %v1570, %v1558
          %v2147 = vpack.c.b16 %v1583, %v1571
          %v2148 = vpack.c.b16 %v1584, %v1572
          %v2149 = vpack.c.b16 %v1585, %v1573
          %v2150 = vpack.c.b16 %v1586, %v1574
          %v2151 = vpack.c.b16 %v1587, %v1575
          %v2152 = vpack.c.b16 %v1588, %v1576
          %v2153 = vpack.c.b16 %v1589, %v1577
          %v2154 = vpack.c.b16 %v1590, %v1578
          %v2155 = vpack.c.b16 %v1591, %v1579
          %v2156 = vpack.c.b16 %v1592, %v1580
          %v2157 = vpack.c.b16 %v1593, %v1581
          %v2158 = vpack.c.b16 %v1594, %v1582
          %v2159 = vpack.c.b16 %v1607, %v1595
          %v2160 = vpack.c.b16 %v1608, %v1596
          %v2161 = vpack.c.b16 %v1609, %v1597
          %v2162 = vpack.c.b16 %v1610, %v1598
          %v2163 = vpack.c.b16 %v1611, %v1599
          %v2164 = vpack.c.b16 %v1612, %v1600
          %v2165 = vpack.c.b16 %v1613, %v1601
          %v2166 = vpack.c.b16 %v1614, %v1602
          %v2167 = vpack.c.b16 %v1615, %v1603
          %v2168 = vpack.c.b16 %v1616, %v1604
          %v2169 = vpack.c.b16 %v1617, %v1605
          %v2170 = vpack.c.b16 %v1618, %v1606
          %v2171 = vpack.c.b16 %v1631, %v1619
          %v2172 = vpack.c.b16 %v1632, %v1620
          %v2173 = vpack.c.b16 %v1633, %v1621
          %v2174 = vpack.c.b16 %v1634, %v1622
          %v2175 = vpack.c.b16 %v1635, %v1623
          %v2176 = vpack.c.b16 %v1636, %v1624
          %v2177 = vpack.c.b16 %v1637, %v1625
          %v2178 = vpack.c.b16 %v1638, %v1626
          %v2179 = vpack.c.b16 %v1639, %v1627
          %v2180 = vpack.c.b16 %v1640, %v1628
          %v2181 = vpack.c.b16 %v1641, %v1629
          %v2182 = vpack.c.b16 %v1642, %v1630
          %v2183 = vpack.c.b16 %v1655, %v1643
          %v2184 = vpack.c.b16 %v1656, %v1644
          %v2185 = vpack.c.b16 %v1657, %v1645
          %v2186 = vpack.c.b16 %v1658, %v1646
          %v2187 = vpack.c.b16 %v1659, %v1647
          %v2188 = vpack.c.b16 %v1660, %v1648
          %v2189 = vpack.c.b16 %v1661, %v1649
          %v2190 = vpack.c.b16 %v1662, %v1650
          %v2191 = vpack.c.b16 %v1663, %v1651
          %v2192 = vpack.c.b16 %v1664, %v1652
          %v2193 = vpack.c.b16 %v1665, %v1653
          %v2194 = vpack.c.b16 %v1666, %v1654
          %v2195 = vpack.c.b16 %v1679, %v1667
          %v2196 = vpack.c.b16 %v1680, %v1668
          %v2197 = vpack.c.b16 %v1681, %v1669
          %v2198 = vpack.c.b16 %v1682, %v1670
          %v2199 = vpack.c.b16 %v1683, %v1671
          %v2200 = vpack.c.b16 %v1684, %v1672
          %v2201 = vpack.c.b16 %v1685, %v1673
          %v2202 = vpack.c.b16 %v1686, %v1674
          %v2203 = vpack.c.b16 %v1687, %v1675
          %v2204 = vpack.c.b16 %v1688, %v1676
          %v2205 = vpack.c.b16 %v1689, %v1677
          %v2206 = vpack.c.b16 %v1690, %v1678
          %v2207 = vpack.c.b16 %v1703, %v1691
          %v2208 = vpack.c.b16 %v1704, %v1692
          %v2209 = vpack.c.b16 %v1705, %v1693
          %v2210 = vpack.c.b16 %v1706, %v1694
          %v2211 = vpack.c.b16 %v1707, %v1695
          %v2212 = vpack.c.b16 %v1708, %v1696
          %v2213 = vpack.c.b16 %v1709, %v1697
          %v2214 = vpack.c.b16 %v1710, %v1698
          %v2215 = vpack.c.b16 %v1711, %v1699
          %v2216 = vpack.c.b16 %v1712, %v1700
          %v2217 = vpack.c.b16 %v1713, %v1701
          %v2218 = vpack.c.b16 %v1714, %v1702
          %v2219 = vpack.c.b16 %v1727, %v1715
          %v2220 = vpack.c.b16 %v1728, %v1716
          %v2221 = vpack.c.b16 %v1729, %v1717
          %v2222 = vpack.c.b16 %v1730, %v1718
          %v2223 = vpack.c.b16 %v1731, %v1719
          %v2224 = vpack.c.b16 %v1732, %v1720
          %v2225 = vpack.c.b16 %v1733, %v1721
          %v2226 = vpack.c.b16 %v1734, %v1722
          %v2227 = vpack.c.b16 %v1735, %v1723
          %v2228 = vpack.c.b16 %v1736, %v1724
          %v2229 = vpack.c.b16 %v1737, %v1725
          %v2230 = vpack.c.b16 %v1738, %v1726
          %v2231 = vpack.c.b16 %v1751, %v1739
          %v2232 = vpack.c.b16 %v1752, %v1740
          %v2233 = vpack.c.b16 %v1753, %v1741
          %v2234 = vpack.c.b16 %v1754, %v1742
          %v2235 = vpack.c.b16 %v1755, %v1743
          %v2236 = vpack.c.b16 %v1756, %v1744
          %v2237 = vpack.c.b16 %v1757, %v1745
          %v2238 = vpack.c.b16 %v1758, %v1746
          %v2239 = vpack.c.b16 %v1759, %v1747
          %v2240 = vpack.c.b16 %v1760, %v1748
          %v2241 = vpack.c.b16 %v1761, %v1749
          %v2242 = vpack.c.b16 %v1762, %v1750
          %v2243 = vpack.c.b16 %v1775, %v1763
          %v2244 = vpack.c.b16 %v1776, %v1764
          %v2245 = vpack.c.b16 %v1777, %v1765
          %v2246 = vpack.c.b16 %v1778, %v1766
          %v2247 = vpack.c.b16 %v1779, %v1767
          %v2248 = vpack.c.b16 %v1780, %v1768
          %v2249 = vpack.c.b16 %v1781, %v1769
          %v2250 = vpack.c.b16 %v1782, %v1770
          %v2251 = vpack.c.b16 %v1783, %v1771
          %v2252 = vpack.c.b16 %v1784, %v1772
          %v2253 = vpack.c.b16 %v1785, %v1773
          %v2254 = vpack.c.b16 %v1786, %v1774
          %v2255 = vpack.c.b16 %v1799, %v1787
          %v2256 = vpack.c.b16 %v1800, %v1788
          %v2257 = vpack.c.b16 %v1801, %v1789
          %v2258 = vpack.c.b16 %v1802, %v1790
          %v2259 = vpack.c.b16 %v1803, %v1791
          %v2260 = vpack.c.b16 %v1804, %v1792
          %v2261 = vpack.c.b16 %v1805, %v1793
          %v2262 = vpack.c.b16 %v1806, %v1794
          %v2263 = vpack.c.b16 %v1807, %v1795
          %v2264 = vpack.c.b16 %v1808, %v1796
          %v2265 = vpack.c.b16 %v1809, %v1797
          %v2266 = vpack.c.b16 %v1810, %v1798
          %v2267 = vpack.c.b16 %v1823, %v1811
          %v2268 = vpack.c.b16 %v1824, %v1812
          %v2269 = vpack.c.b16 %v1825, %v1813
          %v2270 = vpack.c.b16 %v1826, %v1814
          %v2271 = vpack.c.b16 %v1827, %v1815
          %v2272 = vpack.c.b16 %v1828, %v1816
          %v2273 = vpack.c.b16 %v1829, %v1817
          %v2274 = vpack.c.b16 %v1830, %v1818
          %v2275 = vpack.c.b16 %v1831, %v1819
          %v2276 = vpack.c.b16 %v1832, %v1820
          %v2277 = vpack.c.b16 %v1833, %v1821
          %v2278 = vpack.c.b16 %v1834, %v1822
          %v2279 = vpack.c.b16 %v1847, %v1835
          %v2280 = vpack.c.b16 %v1848, %v1836
          %v2281 = vpack.c.b16 %v1849, %v1837
          %v2282 = vpack.c.b16 %v1850, %v1838
          %v2283 = vpack.c.b16 %v1851, %v1839
          %v2284 = vpack.c.b16 %v1852, %v1840
          %v2285 = vpack.c.b16 %v1853, %v1841
          %v2286 = vpack.c.b16 %v1854, %v1842
          %v2287 = vpack.c.b16 %v1855, %v1843
          %v2288 = vpack.c.b16 %v1856, %v1844
          %v2289 = vpack.c.b16 %v1857, %v1845
          %v2290 = vpack.c.b16 %v1858, %v1846
          %v2291 = vpack.c.b16 %v1871, %v1859
          %v2292 = vpack.c.b16 %v1872, %v1860
          %v2293 = vpack.c.b16 %v1873, %v1861
          %v2294 = vpack.c.b16 %v1874, %v1862
          %v2295 = vpack.c.b16 %v1875, %v1863
          %v2296 = vpack.c.b16 %v1876, %v1864
          %v2297 = vpack.c.b16 %v1877, %v1865
          %v2298 = vpack.c.b16 %v1878, %v1866
          %v2299 = vpack.c.b16 %v1879, %v1867
          %v2300 = vpack.c.b16 %v1880, %v1868
          %v2301 = vpack.c.b16 %v1881, %v1869
          %v2302 = vpack.c.b16 %v1882, %v1870
          %v2303 = vpack.c.b16 %v1895, %v1883
          %v2304 = vpack.c.b16 %v1896, %v1884
          %v2305 = vpack.c.b16 %v1897, %v1885
          %v2306 = vpack.c.b16 %v1898, %v1886
          %v2307 = vpack.c.b16 %v1899, %v1887
          %v2308 = vpack.c.b16 %v1900, %v1888
          %v2309 = vpack.c.b16 %v1901, %v1889
          %v2310 = vpack.c.b16 %v1902, %v1890
          %v2311 = vpack.c.b16 %v1903, %v1891
          %v2312 = vpack.c.b16 %v1904, %v1892
          %v2313 = vpack.c.b16 %v1905, %v1893
          %v2314 = vpack.c.b16 %v1906, %v1894
          %v2315 = vpack.c.b16 %v1919, %v1907
          %v2316 = vpack.c.b16 %v1920, %v1908
          %v2317 = vpack.c.b16 %v1921, %v1909
          %v2318 = vpack.c.b16 %v1922, %v1910
          %v2319 = vpack.c.b16 %v1923, %v1911
          %v2320 = vpack.c.b16 %v1924, %v1912
          %v2321 = vpack.c.b16 %v1925, %v1913
          %v2322 = vpack.c.b16 %v1926, %v1914
          %v2323 = vpack.c.b16 %v1927, %v1915
          %v2324 = vpack.c.b16 %v1928, %v1916
          %v2325 = vpack.c.b16 %v1929, %v1917
          %v2326 = vpack.c.b16 %v1930, %v1918
          %v2327 = vpack.c.b16 %v1943, %v1931
          %v2328 = vpack.c.b16 %v1944, %v1932
          %v2329 = vpack.c.b16 %v1945, %v1933
          %v2330 = vpack.c.b16 %v1946, %v1934
          %v2331 = vpack.c.b16 %v1947, %v1935
          %v2332 = vpack.c.b16 %v1948, %v1936
          %v2333 = vpack.c.b16 %v1949, %v1937
          %v2334 = vpack.c.b16 %v1950, %v1938
          %v2335 = vpack.c.b16 %v1951, %v1939
          %v2336 = vpack.c.b16 %v1952, %v1940
          %v2337 = vpack.c.b16 %v1953, %v1941
          %v2338 = vpack.c.b16 %v1954, %v1942
          %2723 = vmatpush.bf16.msra.mxu0 %v2039
          %2724 = vmatpush.bf16.msra.mxu0 %v2027
          %2725 = vmatpush.bf16.msra.mxu0 %v2015
          %2726 = vmatpush.bf16.msra.mxu0 %v2003
          %2727 = vmatpush.bf16.msra.mxu0 %v1991
          %2728 = vmatpush.bf16.msra.mxu0 %v1979
          %2729 = vmatpush.bf16.msra.mxu0 %v1967
          %2730 = vmatpush.bf16.msra.mxu0 %v1955
          %2731 = vmatmul.bf16.gmra.mxu0 %v415
          %v2732 = vpop.f32.mrf.mxu0
          %v2733 = vadd.f32 0.0, %v2732
          %v2734 = vpop.f32.mrf.mxu0
          %v2735 = vadd.f32 0.0, %v2734
          %2736 = vdwg.mxu0
          %2737 = vmatpush.bf16.msra.mxu0 %v2135
          %2738 = vmatpush.bf16.msra.mxu0 %v2123
          %2739 = vmatpush.bf16.msra.mxu0 %v2111
          %2740 = vmatpush.bf16.msra.mxu0 %v2099
          %2741 = vmatpush.bf16.msra.mxu0 %v2087
          %2742 = vmatpush.bf16.msra.mxu0 %v2075
          %2743 = vmatpush.bf16.msra.mxu0 %v2063
          %2744 = vmatpush.bf16.msra.mxu0 %v2051
          %2745 = vmatmul.bf16.gmra.mxu0 %v416
          %v2746 = vpop.f32.mrf.mxu0
          %v2747 = vadd.f32 %v2733, %v2746
          %v2748 = vpop.f32.mrf.mxu0
          %v2749 = vadd.f32 %v2735, %v2748
          %2750 = vdwg.mxu0
          %2751 = vmatpush.bf16.msra.mxu0 %v2231
          %2752 = vmatpush.bf16.msra.mxu0 %v2219
          %2753 = vmatpush.bf16.msra.mxu0 %v2207
          %2754 = vmatpush.bf16.msra.mxu0 %v2195
          %2755 = vmatpush.bf16.msra.mxu0 %v2183
          %2756 = vmatpush.bf16.msra.mxu0 %v2171
          %2757 = vmatpush.bf16.msra.mxu0 %v2159
          %2758 = vmatpush.bf16.msra.mxu0 %v2147
          %2759 = vmatmul.bf16.gmra.mxu0 %v417
          %v2760 = vpop.f32.mrf.mxu0
          %v2761 = vadd.f32 %v2747, %v2760
          %v2762 = vpop.f32.mrf.mxu0
          %v2763 = vadd.f32 %v2749, %v2762
          %2764 = vdwg.mxu0
          %2765 = vmatpush.bf16.msra.mxu0 %v2327
          %2766 = vmatpush.bf16.msra.mxu0 %v2315
          %2767 = vmatpush.bf16.msra.mxu0 %v2303
          %2768 = vmatpush.bf16.msra.mxu0 %v2291
          %2769 = vmatpush.bf16.msra.mxu0 %v2279
          %2770 = vmatpush.bf16.msra.mxu0 %v2267
          %2771 = vmatpush.bf16.msra.mxu0 %v2255
          %2772 = vmatpush.bf16.msra.mxu0 %v2243
          %2773 = vmatmul.bf16.gmra.mxu0 %v418
          %v2774 = vpop.f32.mrf.mxu0
          %v2775 = vadd.f32 %v2761, %v2774
          %v2776 = vpop.f32.mrf.mxu0
          %v2777 = vadd.f32 %v2763, %v2776
          %2778 = vdwg.mxu0
          %2779 = vmatpush.bf16.msra.mxu0 %v2040
          %2780 = vmatpush.bf16.msra.mxu0 %v2028
          %2781 = vmatpush.bf16.msra.mxu0 %v2016
          %2782 = vmatpush.bf16.msra.mxu0 %v2004
          %2783 = vmatpush.bf16.msra.mxu0 %v1992
          %2784 = vmatpush.bf16.msra.mxu0 %v1980
          %2785 = vmatpush.bf16.msra.mxu0 %v1968
          %2786 = vmatpush.bf16.msra.mxu0 %v1956
          %2787 = vmatmul.bf16.gmra.mxu0 %v415
          %v2788 = vpop.f32.mrf.mxu0
          %v2789 = vadd.f32 0.0, %v2788
          %v2790 = vpop.f32.mrf.mxu0
          %v2791 = vadd.f32 0.0, %v2790
          %2792 = vdwg.mxu0
          %2793 = vmatpush.bf16.msra.mxu0 %v2136
          %2794 = vmatpush.bf16.msra.mxu0 %v2124
          %2795 = vmatpush.bf16.msra.mxu0 %v2112
          %2796 = vmatpush.bf16.msra.mxu0 %v2100
          %2797 = vmatpush.bf16.msra.mxu0 %v2088
          %2798 = vmatpush.bf16.msra.mxu0 %v2076
          %2799 = vmatpush.bf16.msra.mxu0 %v2064
          %2800 = vmatpush.bf16.msra.mxu0 %v2052
          %2801 = vmatmul.bf16.gmra.mxu0 %v416
          %v2802 = vpop.f32.mrf.mxu0
          %v2803 = vadd.f32 %v2789, %v2802
          %v2804 = vpop.f32.mrf.mxu0
          %v2805 = vadd.f32 %v2791, %v2804
          %2806 = vdwg.mxu0
          %2807 = vmatpush.bf16.msra.mxu0 %v2232
          %2808 = vmatpush.bf16.msra.mxu0 %v2220
          %2809 = vmatpush.bf16.msra.mxu0 %v2208
          %2810 = vmatpush.bf16.msra.mxu0 %v2196
          %2811 = vmatpush.bf16.msra.mxu0 %v2184
          %2812 = vmatpush.bf16.msra.mxu0 %v2172
          %2813 = vmatpush.bf16.msra.mxu0 %v2160
          %2814 = vmatpush.bf16.msra.mxu0 %v2148
          %2815 = vmatmul.bf16.gmra.mxu0 %v417
          %v2816 = vpop.f32.mrf.mxu0
          %v2817 = vadd.f32 %v2803, %v2816
          %v2818 = vpop.f32.mrf.mxu0
          %v2819 = vadd.f32 %v2805, %v2818
          %2820 = vdwg.mxu0
          %2821 = vmatpush.bf16.msra.mxu0 %v2328
          %2822 = vmatpush.bf16.msra.mxu0 %v2316
          %2823 = vmatpush.bf16.msra.mxu0 %v2304
          %2824 = vmatpush.bf16.msra.mxu0 %v2292
          %2825 = vmatpush.bf16.msra.mxu0 %v2280
          %2826 = vmatpush.bf16.msra.mxu0 %v2268
          %2827 = vmatpush.bf16.msra.mxu0 %v2256
          %2828 = vmatpush.bf16.msra.mxu0 %v2244
          %2829 = vmatmul.bf16.gmra.mxu0 %v418
          %v2830 = vpop.f32.mrf.mxu0
          %v2831 = vadd.f32 %v2817, %v2830
          %v2832 = vpop.f32.mrf.mxu0
          %v2833 = vadd.f32 %v2819, %v2832
          %2834 = vdwg.mxu0
          %2835 = vmatpush.bf16.msra.mxu0 %v2041
          %2836 = vmatpush.bf16.msra.mxu0 %v2029
          %2837 = vmatpush.bf16.msra.mxu0 %v2017
          %2838 = vmatpush.bf16.msra.mxu0 %v2005
          %2839 = vmatpush.bf16.msra.mxu0 %v1993
          %2840 = vmatpush.bf16.msra.mxu0 %v1981
          %2841 = vmatpush.bf16.msra.mxu0 %v1969
          %2842 = vmatpush.bf16.msra.mxu0 %v1957
          %2843 = vmatmul.bf16.gmra.mxu0 %v415
          %v2844 = vpop.f32.mrf.mxu0
          %v2845 = vadd.f32 0.0, %v2844
          %v2846 = vpop.f32.mrf.mxu0
          %v2847 = vadd.f32 0.0, %v2846
          %2848 = vdwg.mxu0
          %2849 = vmatpush.bf16.msra.mxu0 %v2137
          %2850 = vmatpush.bf16.msra.mxu0 %v2125
          %2851 = vmatpush.bf16.msra.mxu0 %v2113
          %2852 = vmatpush.bf16.msra.mxu0 %v2101
          %2853 = vmatpush.bf16.msra.mxu0 %v2089
          %2854 = vmatpush.bf16.msra.mxu0 %v2077
          %2855 = vmatpush.bf16.msra.mxu0 %v2065
          %2856 = vmatpush.bf16.msra.mxu0 %v2053
          %2857 = vmatmul.bf16.gmra.mxu0 %v416
          %v2858 = vpop.f32.mrf.mxu0
          %v2859 = vadd.f32 %v2845, %v2858
          %v2860 = vpop.f32.mrf.mxu0
          %v2861 = vadd.f32 %v2847, %v2860
          %2862 = vdwg.mxu0
          %2863 = vmatpush.bf16.msra.mxu0 %v2233
          %2864 = vmatpush.bf16.msra.mxu0 %v2221
          %2865 = vmatpush.bf16.msra.mxu0 %v2209
          %2866 = vmatpush.bf16.msra.mxu0 %v2197
          %2867 = vmatpush.bf16.msra.mxu0 %v2185
          %2868 = vmatpush.bf16.msra.mxu0 %v2173
          %2869 = vmatpush.bf16.msra.mxu0 %v2161
          %2870 = vmatpush.bf16.msra.mxu0 %v2149
          %2871 = vmatmul.bf16.gmra.mxu0 %v417
          %v2872 = vpop.f32.mrf.mxu0
          %v2873 = vadd.f32 %v2859, %v2872
          %v2874 = vpop.f32.mrf.mxu0
          %v2875 = vadd.f32 %v2861, %v2874
          %2876 = vdwg.mxu0
          %2877 = vmatpush.bf16.msra.mxu0 %v2329
          %2878 = vmatpush.bf16.msra.mxu0 %v2317
          %2879 = vmatpush.bf16.msra.mxu0 %v2305
          %2880 = vmatpush.bf16.msra.mxu0 %v2293
          %2881 = vmatpush.bf16.msra.mxu0 %v2281
          %2882 = vmatpush.bf16.msra.mxu0 %v2269
          %2883 = vmatpush.bf16.msra.mxu0 %v2257
          %2884 = vmatpush.bf16.msra.mxu0 %v2245
          %2885 = vmatmul.bf16.gmra.mxu0 %v418
          %v2886 = vpop.f32.mrf.mxu0
          %v2887 = vadd.f32 %v2873, %v2886
          %v2888 = vpop.f32.mrf.mxu0
          %v2889 = vadd.f32 %v2875, %v2888
          %2890 = vdwg.mxu0
          %2891 = vmatpush.bf16.msra.mxu0 %v2042
          %2892 = vmatpush.bf16.msra.mxu0 %v2030
          %2893 = vmatpush.bf16.msra.mxu0 %v2018
          %2894 = vmatpush.bf16.msra.mxu0 %v2006
          %2895 = vmatpush.bf16.msra.mxu0 %v1994
          %2896 = vmatpush.bf16.msra.mxu0 %v1982
          %2897 = vmatpush.bf16.msra.mxu0 %v1970
          %2898 = vmatpush.bf16.msra.mxu0 %v1958
          %2899 = vmatmul.bf16.gmra.mxu0 %v415
          %v2900 = vpop.f32.mrf.mxu0
          %v2901 = vadd.f32 0.0, %v2900
          %v2902 = vpop.f32.mrf.mxu0
          %v2903 = vadd.f32 0.0, %v2902
          %2904 = vdwg.mxu0
          %2905 = vmatpush.bf16.msra.mxu0 %v2138
          %2906 = vmatpush.bf16.msra.mxu0 %v2126
          %2907 = vmatpush.bf16.msra.mxu0 %v2114
          %2908 = vmatpush.bf16.msra.mxu0 %v2102
          %2909 = vmatpush.bf16.msra.mxu0 %v2090
          %2910 = vmatpush.bf16.msra.mxu0 %v2078
          %2911 = vmatpush.bf16.msra.mxu0 %v2066
          %2912 = vmatpush.bf16.msra.mxu0 %v2054
          %2913 = vmatmul.bf16.gmra.mxu0 %v416
          %v2914 = vpop.f32.mrf.mxu0
          %v2915 = vadd.f32 %v2901, %v2914
          %v2916 = vpop.f32.mrf.mxu0
          %v2917 = vadd.f32 %v2903, %v2916
          %2918 = vdwg.mxu0
          %2919 = vmatpush.bf16.msra.mxu0 %v2234
          %2920 = vmatpush.bf16.msra.mxu0 %v2222
          %2921 = vmatpush.bf16.msra.mxu0 %v2210
          %2922 = vmatpush.bf16.msra.mxu0 %v2198
          %2923 = vmatpush.bf16.msra.mxu0 %v2186
          %2924 = vmatpush.bf16.msra.mxu0 %v2174
          %2925 = vmatpush.bf16.msra.mxu0 %v2162
          %2926 = vmatpush.bf16.msra.mxu0 %v2150
          %2927 = vmatmul.bf16.gmra.mxu0 %v417
          %v2928 = vpop.f32.mrf.mxu0
          %v2929 = vadd.f32 %v2915, %v2928
          %v2930 = vpop.f32.mrf.mxu0
          %v2931 = vadd.f32 %v2917, %v2930
          %2932 = vdwg.mxu0
          %2933 = vmatpush.bf16.msra.mxu0 %v2330
          %2934 = vmatpush.bf16.msra.mxu0 %v2318
          %2935 = vmatpush.bf16.msra.mxu0 %v2306
          %2936 = vmatpush.bf16.msra.mxu0 %v2294
          %2937 = vmatpush.bf16.msra.mxu0 %v2282
          %2938 = vmatpush.bf16.msra.mxu0 %v2270
          %2939 = vmatpush.bf16.msra.mxu0 %v2258
          %2940 = vmatpush.bf16.msra.mxu0 %v2246
          %2941 = vmatmul.bf16.gmra.mxu0 %v418
          %v2942 = vpop.f32.mrf.mxu0
          %v2943 = vadd.f32 %v2929, %v2942
          %v2944 = vpop.f32.mrf.mxu0
          %v2945 = vadd.f32 %v2931, %v2944
          %2946 = vdwg.mxu0
          %2947 = vmatpush.bf16.msra.mxu0 %v2043
          %2948 = vmatpush.bf16.msra.mxu0 %v2031
          %2949 = vmatpush.bf16.msra.mxu0 %v2019
          %2950 = vmatpush.bf16.msra.mxu0 %v2007
          %2951 = vmatpush.bf16.msra.mxu0 %v1995
          %2952 = vmatpush.bf16.msra.mxu0 %v1983
          %2953 = vmatpush.bf16.msra.mxu0 %v1971
          %2954 = vmatpush.bf16.msra.mxu0 %v1959
          %2955 = vmatmul.bf16.gmra.mxu0 %v415
          %v2956 = vpop.f32.mrf.mxu0
          %v2957 = vadd.f32 0.0, %v2956
          %v2958 = vpop.f32.mrf.mxu0
          %v2959 = vadd.f32 0.0, %v2958
          %2960 = vdwg.mxu0
          %2961 = vmatpush.bf16.msra.mxu0 %v2139
          %2962 = vmatpush.bf16.msra.mxu0 %v2127
          %2963 = vmatpush.bf16.msra.mxu0 %v2115
          %2964 = vmatpush.bf16.msra.mxu0 %v2103
          %2965 = vmatpush.bf16.msra.mxu0 %v2091
          %2966 = vmatpush.bf16.msra.mxu0 %v2079
          %2967 = vmatpush.bf16.msra.mxu0 %v2067
          %2968 = vmatpush.bf16.msra.mxu0 %v2055
          %2969 = vmatmul.bf16.gmra.mxu0 %v416
          %v2970 = vpop.f32.mrf.mxu0
          %v2971 = vadd.f32 %v2957, %v2970
          %v2972 = vpop.f32.mrf.mxu0
          %v2973 = vadd.f32 %v2959, %v2972
          %2974 = vdwg.mxu0
          %2975 = vmatpush.bf16.msra.mxu0 %v2235
          %2976 = vmatpush.bf16.msra.mxu0 %v2223
          %2977 = vmatpush.bf16.msra.mxu0 %v2211
          %2978 = vmatpush.bf16.msra.mxu0 %v2199
          %2979 = vmatpush.bf16.msra.mxu0 %v2187
          %2980 = vmatpush.bf16.msra.mxu0 %v2175
          %2981 = vmatpush.bf16.msra.mxu0 %v2163
          %2982 = vmatpush.bf16.msra.mxu0 %v2151
          %2983 = vmatmul.bf16.gmra.mxu0 %v417
          %v2984 = vpop.f32.mrf.mxu0
          %v2985 = vadd.f32 %v2971, %v2984
          %v2986 = vpop.f32.mrf.mxu0
          %v2987 = vadd.f32 %v2973, %v2986
          %2988 = vdwg.mxu0
          %2989 = vmatpush.bf16.msra.mxu0 %v2331
          %2990 = vmatpush.bf16.msra.mxu0 %v2319
          %2991 = vmatpush.bf16.msra.mxu0 %v2307
          %2992 = vmatpush.bf16.msra.mxu0 %v2295
          %2993 = vmatpush.bf16.msra.mxu0 %v2283
          %2994 = vmatpush.bf16.msra.mxu0 %v2271
          %2995 = vmatpush.bf16.msra.mxu0 %v2259
          %2996 = vmatpush.bf16.msra.mxu0 %v2247
          %2997 = vmatmul.bf16.gmra.mxu0 %v418
          %v2998 = vpop.f32.mrf.mxu0
          %v2999 = vadd.f32 %v2985, %v2998
          %v3000 = vpop.f32.mrf.mxu0
          %v3001 = vadd.f32 %v2987, %v3000
          %3002 = vdwg.mxu0
          %3003 = vmatpush.bf16.msra.mxu0 %v2044
          %3004 = vmatpush.bf16.msra.mxu0 %v2032
          %3005 = vmatpush.bf16.msra.mxu0 %v2020
          %3006 = vmatpush.bf16.msra.mxu0 %v2008
          %3007 = vmatpush.bf16.msra.mxu0 %v1996
          %3008 = vmatpush.bf16.msra.mxu0 %v1984
          %3009 = vmatpush.bf16.msra.mxu0 %v1972
          %3010 = vmatpush.bf16.msra.mxu0 %v1960
          %3011 = vmatmul.bf16.gmra.mxu0 %v415
          %v3012 = vpop.f32.mrf.mxu0
          %v3013 = vadd.f32 0.0, %v3012
          %v3014 = vpop.f32.mrf.mxu0
          %v3015 = vadd.f32 0.0, %v3014
          %3016 = vdwg.mxu0
          %3017 = vmatpush.bf16.msra.mxu0 %v2140
          %3018 = vmatpush.bf16.msra.mxu0 %v2128
          %3019 = vmatpush.bf16.msra.mxu0 %v2116
          %3020 = vmatpush.bf16.msra.mxu0 %v2104
          %3021 = vmatpush.bf16.msra.mxu0 %v2092
          %3022 = vmatpush.bf16.msra.mxu0 %v2080
          %3023 = vmatpush.bf16.msra.mxu0 %v2068
          %3024 = vmatpush.bf16.msra.mxu0 %v2056
          %3025 = vmatmul.bf16.gmra.mxu0 %v416
          %v3026 = vpop.f32.mrf.mxu0
          %v3027 = vadd.f32 %v3013, %v3026
          %v3028 = vpop.f32.mrf.mxu0
          %v3029 = vadd.f32 %v3015, %v3028
          %3030 = vdwg.mxu0
          %3031 = vmatpush.bf16.msra.mxu0 %v2236
          %3032 = vmatpush.bf16.msra.mxu0 %v2224
          %3033 = vmatpush.bf16.msra.mxu0 %v2212
          %3034 = vmatpush.bf16.msra.mxu0 %v2200
          %3035 = vmatpush.bf16.msra.mxu0 %v2188
          %3036 = vmatpush.bf16.msra.mxu0 %v2176
          %3037 = vmatpush.bf16.msra.mxu0 %v2164
          %3038 = vmatpush.bf16.msra.mxu0 %v2152
          %3039 = vmatmul.bf16.gmra.mxu0 %v417
          %v3040 = vpop.f32.mrf.mxu0
          %v3041 = vadd.f32 %v3027, %v3040
          %v3042 = vpop.f32.mrf.mxu0
          %v3043 = vadd.f32 %v3029, %v3042
          %3044 = vdwg.mxu0
          %3045 = vmatpush.bf16.msra.mxu0 %v2332
          %3046 = vmatpush.bf16.msra.mxu0 %v2320
          %3047 = vmatpush.bf16.msra.mxu0 %v2308
          %3048 = vmatpush.bf16.msra.mxu0 %v2296
          %3049 = vmatpush.bf16.msra.mxu0 %v2284
          %3050 = vmatpush.bf16.msra.mxu0 %v2272
          %3051 = vmatpush.bf16.msra.mxu0 %v2260
          %3052 = vmatpush.bf16.msra.mxu0 %v2248
          %3053 = vmatmul.bf16.gmra.mxu0 %v418
          %v3054 = vpop.f32.mrf.mxu0
          %v3055 = vadd.f32 %v3041, %v3054
          %v3056 = vpop.f32.mrf.mxu0
          %v3057 = vadd.f32 %v3043, %v3056
          %3058 = vdwg.mxu0
          %3059 = vmatpush.bf16.msra.mxu0 %v2045
          %3060 = vmatpush.bf16.msra.mxu0 %v2033
          %3061 = vmatpush.bf16.msra.mxu0 %v2021
          %3062 = vmatpush.bf16.msra.mxu0 %v2009
          %3063 = vmatpush.bf16.msra.mxu0 %v1997
          %3064 = vmatpush.bf16.msra.mxu0 %v1985
          %3065 = vmatpush.bf16.msra.mxu0 %v1973
          %3066 = vmatpush.bf16.msra.mxu0 %v1961
          %3067 = vmatmul.bf16.gmra.mxu0 %v415
          %v3068 = vpop.f32.mrf.mxu0
          %v3069 = vadd.f32 0.0, %v3068
          %v3070 = vpop.f32.mrf.mxu0
          %v3071 = vadd.f32 0.0, %v3070
          %3072 = vdwg.mxu0
          %3073 = vmatpush.bf16.msra.mxu0 %v2141
          %3074 = vmatpush.bf16.msra.mxu0 %v2129
          %3075 = vmatpush.bf16.msra.mxu0 %v2117
          %3076 = vmatpush.bf16.msra.mxu0 %v2105
          %3077 = vmatpush.bf16.msra.mxu0 %v2093
          %3078 = vmatpush.bf16.msra.mxu0 %v2081
          %3079 = vmatpush.bf16.msra.mxu0 %v2069
          %3080 = vmatpush.bf16.msra.mxu0 %v2057
          %3081 = vmatmul.bf16.gmra.mxu0 %v416
          %v3082 = vpop.f32.mrf.mxu0
          %v3083 = vadd.f32 %v3069, %v3082
          %v3084 = vpop.f32.mrf.mxu0
          %v3085 = vadd.f32 %v3071, %v3084
          %3086 = vdwg.mxu0
          %3087 = vmatpush.bf16.msra.mxu0 %v2237
          %3088 = vmatpush.bf16.msra.mxu0 %v2225
          %3089 = vmatpush.bf16.msra.mxu0 %v2213
          %3090 = vmatpush.bf16.msra.mxu0 %v2201
          %3091 = vmatpush.bf16.msra.mxu0 %v2189
          %3092 = vmatpush.bf16.msra.mxu0 %v2177
          %3093 = vmatpush.bf16.msra.mxu0 %v2165
          %3094 = vmatpush.bf16.msra.mxu0 %v2153
          %3095 = vmatmul.bf16.gmra.mxu0 %v417
          %v3096 = vpop.f32.mrf.mxu0
          %v3097 = vadd.f32 %v3083, %v3096
          %v3098 = vpop.f32.mrf.mxu0
          %v3099 = vadd.f32 %v3085, %v3098
          %3100 = vdwg.mxu0
          %3101 = vmatpush.bf16.msra.mxu0 %v2333
          %3102 = vmatpush.bf16.msra.mxu0 %v2321
          %3103 = vmatpush.bf16.msra.mxu0 %v2309
          %3104 = vmatpush.bf16.msra.mxu0 %v2297
          %3105 = vmatpush.bf16.msra.mxu0 %v2285
          %3106 = vmatpush.bf16.msra.mxu0 %v2273
          %3107 = vmatpush.bf16.msra.mxu0 %v2261
          %3108 = vmatpush.bf16.msra.mxu0 %v2249
          %3109 = vmatmul.bf16.gmra.mxu0 %v418
          %v3110 = vpop.f32.mrf.mxu0
          %v3111 = vadd.f32 %v3097, %v3110
          %v3112 = vpop.f32.mrf.mxu0
          %v3113 = vadd.f32 %v3099, %v3112
          %3114 = vdwg.mxu0
          %3115 = vmatpush.bf16.msra.mxu0 %v2046
          %3116 = vmatpush.bf16.msra.mxu0 %v2034
          %3117 = vmatpush.bf16.msra.mxu0 %v2022
          %3118 = vmatpush.bf16.msra.mxu0 %v2010
          %3119 = vmatpush.bf16.msra.mxu0 %v1998
          %3120 = vmatpush.bf16.msra.mxu0 %v1986
          %3121 = vmatpush.bf16.msra.mxu0 %v1974
          %3122 = vmatpush.bf16.msra.mxu0 %v1962
          %3123 = vmatmul.bf16.gmra.mxu0 %v415
          %v3124 = vpop.f32.mrf.mxu0
          %v3125 = vadd.f32 0.0, %v3124
          %v3126 = vpop.f32.mrf.mxu0
          %v3127 = vadd.f32 0.0, %v3126
          %3128 = vdwg.mxu0
          %3129 = vmatpush.bf16.msra.mxu0 %v2142
          %3130 = vmatpush.bf16.msra.mxu0 %v2130
          %3131 = vmatpush.bf16.msra.mxu0 %v2118
          %3132 = vmatpush.bf16.msra.mxu0 %v2106
          %3133 = vmatpush.bf16.msra.mxu0 %v2094
          %3134 = vmatpush.bf16.msra.mxu0 %v2082
          %3135 = vmatpush.bf16.msra.mxu0 %v2070
          %3136 = vmatpush.bf16.msra.mxu0 %v2058
          %3137 = vmatmul.bf16.gmra.mxu0 %v416
          %v3138 = vpop.f32.mrf.mxu0
          %v3139 = vadd.f32 %v3125, %v3138
          %v3140 = vpop.f32.mrf.mxu0
          %v3141 = vadd.f32 %v3127, %v3140
          %3142 = vdwg.mxu0
          %3143 = vmatpush.bf16.msra.mxu0 %v2238
          %3144 = vmatpush.bf16.msra.mxu0 %v2226
          %3145 = vmatpush.bf16.msra.mxu0 %v2214
          %3146 = vmatpush.bf16.msra.mxu0 %v2202
          %3147 = vmatpush.bf16.msra.mxu0 %v2190
          %3148 = vmatpush.bf16.msra.mxu0 %v2178
          %3149 = vmatpush.bf16.msra.mxu0 %v2166
          %3150 = vmatpush.bf16.msra.mxu0 %v2154
          %3151 = vmatmul.bf16.gmra.mxu0 %v417
          %v3152 = vpop.f32.mrf.mxu0
          %v3153 = vadd.f32 %v3139, %v3152
          %v3154 = vpop.f32.mrf.mxu0
          %v3155 = vadd.f32 %v3141, %v3154
          %3156 = vdwg.mxu0
          %3157 = vmatpush.bf16.msra.mxu0 %v2334
          %3158 = vmatpush.bf16.msra.mxu0 %v2322
          %3159 = vmatpush.bf16.msra.mxu0 %v2310
          %3160 = vmatpush.bf16.msra.mxu0 %v2298
          %3161 = vmatpush.bf16.msra.mxu0 %v2286
          %3162 = vmatpush.bf16.msra.mxu0 %v2274
          %3163 = vmatpush.bf16.msra.mxu0 %v2262
          %3164 = vmatpush.bf16.msra.mxu0 %v2250
          %3165 = vmatmul.bf16.gmra.mxu0 %v418
          %v3166 = vpop.f32.mrf.mxu0
          %v3167 = vadd.f32 %v3153, %v3166
          %v3168 = vpop.f32.mrf.mxu0
          %v3169 = vadd.f32 %v3155, %v3168
          %3170 = vdwg.mxu0
          %3171 = vmatpush.bf16.msra.mxu0 %v2047
          %3172 = vmatpush.bf16.msra.mxu0 %v2035
          %3173 = vmatpush.bf16.msra.mxu0 %v2023
          %3174 = vmatpush.bf16.msra.mxu0 %v2011
          %3175 = vmatpush.bf16.msra.mxu0 %v1999
          %3176 = vmatpush.bf16.msra.mxu0 %v1987
          %3177 = vmatpush.bf16.msra.mxu0 %v1975
          %3178 = vmatpush.bf16.msra.mxu0 %v1963
          %3179 = vmatmul.bf16.gmra.mxu0 %v415
          %v3180 = vpop.f32.mrf.mxu0
          %v3181 = vadd.f32 0.0, %v3180
          %v3182 = vpop.f32.mrf.mxu0
          %v3183 = vadd.f32 0.0, %v3182
          %3184 = vdwg.mxu0
          %3185 = vmatpush.bf16.msra.mxu0 %v2143
          %3186 = vmatpush.bf16.msra.mxu0 %v2131
          %3187 = vmatpush.bf16.msra.mxu0 %v2119
          %3188 = vmatpush.bf16.msra.mxu0 %v2107
          %3189 = vmatpush.bf16.msra.mxu0 %v2095
          %3190 = vmatpush.bf16.msra.mxu0 %v2083
          %3191 = vmatpush.bf16.msra.mxu0 %v2071
          %3192 = vmatpush.bf16.msra.mxu0 %v2059
          %3193 = vmatmul.bf16.gmra.mxu0 %v416
          %v3194 = vpop.f32.mrf.mxu0
          %v3195 = vadd.f32 %v3181, %v3194
          %v3196 = vpop.f32.mrf.mxu0
          %v3197 = vadd.f32 %v3183, %v3196
          %3198 = vdwg.mxu0
          %3199 = vmatpush.bf16.msra.mxu0 %v2239
          %3200 = vmatpush.bf16.msra.mxu0 %v2227
          %3201 = vmatpush.bf16.msra.mxu0 %v2215
          %3202 = vmatpush.bf16.msra.mxu0 %v2203
          %3203 = vmatpush.bf16.msra.mxu0 %v2191
          %3204 = vmatpush.bf16.msra.mxu0 %v2179
          %3205 = vmatpush.bf16.msra.mxu0 %v2167
          %3206 = vmatpush.bf16.msra.mxu0 %v2155
          %3207 = vmatmul.bf16.gmra.mxu0 %v417
          %v3208 = vpop.f32.mrf.mxu0
          %v3209 = vadd.f32 %v3195, %v3208
          %v3210 = vpop.f32.mrf.mxu0
          %v3211 = vadd.f32 %v3197, %v3210
          %3212 = vdwg.mxu0
          %3213 = vmatpush.bf16.msra.mxu0 %v2335
          %3214 = vmatpush.bf16.msra.mxu0 %v2323
          %3215 = vmatpush.bf16.msra.mxu0 %v2311
          %3216 = vmatpush.bf16.msra.mxu0 %v2299
          %3217 = vmatpush.bf16.msra.mxu0 %v2287
          %3218 = vmatpush.bf16.msra.mxu0 %v2275
          %3219 = vmatpush.bf16.msra.mxu0 %v2263
          %3220 = vmatpush.bf16.msra.mxu0 %v2251
          %3221 = vmatmul.bf16.gmra.mxu0 %v418
          %v3222 = vpop.f32.mrf.mxu0
          %v3223 = vadd.f32 %v3209, %v3222
          %v3224 = vpop.f32.mrf.mxu0
          %v3225 = vadd.f32 %v3211, %v3224
          %3226 = vdwg.mxu0
          %3227 = vmatpush.bf16.msra.mxu0 %v2048
          %3228 = vmatpush.bf16.msra.mxu0 %v2036
          %3229 = vmatpush.bf16.msra.mxu0 %v2024
          %3230 = vmatpush.bf16.msra.mxu0 %v2012
          %3231 = vmatpush.bf16.msra.mxu0 %v2000
          %3232 = vmatpush.bf16.msra.mxu0 %v1988
          %3233 = vmatpush.bf16.msra.mxu0 %v1976
          %3234 = vmatpush.bf16.msra.mxu0 %v1964
          %3235 = vmatmul.bf16.gmra.mxu0 %v415
          %v3236 = vpop.f32.mrf.mxu0
          %v3237 = vadd.f32 0.0, %v3236
          %v3238 = vpop.f32.mrf.mxu0
          %v3239 = vadd.f32 0.0, %v3238
          %3240 = vdwg.mxu0
          %3241 = vmatpush.bf16.msra.mxu0 %v2144
          %3242 = vmatpush.bf16.msra.mxu0 %v2132
          %3243 = vmatpush.bf16.msra.mxu0 %v2120
          %3244 = vmatpush.bf16.msra.mxu0 %v2108
          %3245 = vmatpush.bf16.msra.mxu0 %v2096
          %3246 = vmatpush.bf16.msra.mxu0 %v2084
          %3247 = vmatpush.bf16.msra.mxu0 %v2072
          %3248 = vmatpush.bf16.msra.mxu0 %v2060
          %3249 = vmatmul.bf16.gmra.mxu0 %v416
          %v3250 = vpop.f32.mrf.mxu0
          %v3251 = vadd.f32 %v3237, %v3250
          %v3252 = vpop.f32.mrf.mxu0
          %v3253 = vadd.f32 %v3239, %v3252
          %3254 = vdwg.mxu0
          %3255 = vmatpush.bf16.msra.mxu0 %v2240
          %3256 = vmatpush.bf16.msra.mxu0 %v2228
          %3257 = vmatpush.bf16.msra.mxu0 %v2216
          %3258 = vmatpush.bf16.msra.mxu0 %v2204
          %3259 = vmatpush.bf16.msra.mxu0 %v2192
          %3260 = vmatpush.bf16.msra.mxu0 %v2180
          %3261 = vmatpush.bf16.msra.mxu0 %v2168
          %3262 = vmatpush.bf16.msra.mxu0 %v2156
          %3263 = vmatmul.bf16.gmra.mxu0 %v417
          %v3264 = vpop.f32.mrf.mxu0
          %v3265 = vadd.f32 %v3251, %v3264
          %v3266 = vpop.f32.mrf.mxu0
          %v3267 = vadd.f32 %v3253, %v3266
          %3268 = vdwg.mxu0
          %3269 = vmatpush.bf16.msra.mxu0 %v2336
          %3270 = vmatpush.bf16.msra.mxu0 %v2324
          %3271 = vmatpush.bf16.msra.mxu0 %v2312
          %3272 = vmatpush.bf16.msra.mxu0 %v2300
          %3273 = vmatpush.bf16.msra.mxu0 %v2288
          %3274 = vmatpush.bf16.msra.mxu0 %v2276
          %3275 = vmatpush.bf16.msra.mxu0 %v2264
          %3276 = vmatpush.bf16.msra.mxu0 %v2252
          %3277 = vmatmul.bf16.gmra.mxu0 %v418
          %v3278 = vpop.f32.mrf.mxu0
          %v3279 = vadd.f32 %v3265, %v3278
          %v3280 = vpop.f32.mrf.mxu0
          %v3281 = vadd.f32 %v3267, %v3280
          %3282 = vdwg.mxu0
          %3283 = vmatpush.bf16.msra.mxu0 %v2049
          %3284 = vmatpush.bf16.msra.mxu0 %v2037
          %3285 = vmatpush.bf16.msra.mxu0 %v2025
          %3286 = vmatpush.bf16.msra.mxu0 %v2013
          %3287 = vmatpush.bf16.msra.mxu0 %v2001
          %3288 = vmatpush.bf16.msra.mxu0 %v1989
          %3289 = vmatpush.bf16.msra.mxu0 %v1977
          %3290 = vmatpush.bf16.msra.mxu0 %v1965
          %3291 = vmatmul.bf16.gmra.mxu0 %v415
          %v3292 = vpop.f32.mrf.mxu0
          %v3293 = vadd.f32 0.0, %v3292
          %v3294 = vpop.f32.mrf.mxu0
          %v3295 = vadd.f32 0.0, %v3294
          %3296 = vdwg.mxu0
          %3297 = vmatpush.bf16.msra.mxu0 %v2145
          %3298 = vmatpush.bf16.msra.mxu0 %v2133
          %3299 = vmatpush.bf16.msra.mxu0 %v2121
          %3300 = vmatpush.bf16.msra.mxu0 %v2109
          %3301 = vmatpush.bf16.msra.mxu0 %v2097
          %3302 = vmatpush.bf16.msra.mxu0 %v2085
          %3303 = vmatpush.bf16.msra.mxu0 %v2073
          %3304 = vmatpush.bf16.msra.mxu0 %v2061
          %3305 = vmatmul.bf16.gmra.mxu0 %v416
          %v3306 = vpop.f32.mrf.mxu0
          %v3307 = vadd.f32 %v3293, %v3306
          %v3308 = vpop.f32.mrf.mxu0
          %v3309 = vadd.f32 %v3295, %v3308
          %3310 = vdwg.mxu0
          %3311 = vmatpush.bf16.msra.mxu0 %v2241
          %3312 = vmatpush.bf16.msra.mxu0 %v2229
          %3313 = vmatpush.bf16.msra.mxu0 %v2217
          %3314 = vmatpush.bf16.msra.mxu0 %v2205
          %3315 = vmatpush.bf16.msra.mxu0 %v2193
          %3316 = vmatpush.bf16.msra.mxu0 %v2181
          %3317 = vmatpush.bf16.msra.mxu0 %v2169
          %3318 = vmatpush.bf16.msra.mxu0 %v2157
          %3319 = vmatmul.bf16.gmra.mxu0 %v417
          %v3320 = vpop.f32.mrf.mxu0
          %v3321 = vadd.f32 %v3307, %v3320
          %v3322 = vpop.f32.mrf.mxu0
          %v3323 = vadd.f32 %v3309, %v3322
          %3324 = vdwg.mxu0
          %3325 = vmatpush.bf16.msra.mxu0 %v2337
          %3326 = vmatpush.bf16.msra.mxu0 %v2325
          %3327 = vmatpush.bf16.msra.mxu0 %v2313
          %3328 = vmatpush.bf16.msra.mxu0 %v2301
          %3329 = vmatpush.bf16.msra.mxu0 %v2289
          %3330 = vmatpush.bf16.msra.mxu0 %v2277
          %3331 = vmatpush.bf16.msra.mxu0 %v2265
          %3332 = vmatpush.bf16.msra.mxu0 %v2253
          %3333 = vmatmul.bf16.gmra.mxu0 %v418
          %v3334 = vpop.f32.mrf.mxu0
          %v3335 = vadd.f32 %v3321, %v3334
          %v3336 = vpop.f32.mrf.mxu0
          %v3337 = vadd.f32 %v3323, %v3336
          %3338 = vdwg.mxu0
          %3339 = vmatpush.bf16.msra.mxu0 %v2050
          %3340 = vmatpush.bf16.msra.mxu0 %v2038
          %3341 = vmatpush.bf16.msra.mxu0 %v2026
          %3342 = vmatpush.bf16.msra.mxu0 %v2014
          %3343 = vmatpush.bf16.msra.mxu0 %v2002
          %3344 = vmatpush.bf16.msra.mxu0 %v1990
          %3345 = vmatpush.bf16.msra.mxu0 %v1978
          %3346 = vmatpush.bf16.msra.mxu0 %v1966
          %3347 = vmatmul.bf16.gmra.mxu0 %v415
          %v3348 = vpop.f32.mrf.mxu0
          %v3349 = vadd.f32 0.0, %v3348
          %v3350 = vpop.f32.mrf.mxu0
          %v3351 = vadd.f32 0.0, %v3350
          %3352 = vdwg.mxu0
          %3353 = vmatpush.bf16.msra.mxu0 %v2146
          %3354 = vmatpush.bf16.msra.mxu0 %v2134
          %3355 = vmatpush.bf16.msra.mxu0 %v2122
          %3356 = vmatpush.bf16.msra.mxu0 %v2110
          %3357 = vmatpush.bf16.msra.mxu0 %v2098
          %3358 = vmatpush.bf16.msra.mxu0 %v2086
          %3359 = vmatpush.bf16.msra.mxu0 %v2074
          %3360 = vmatpush.bf16.msra.mxu0 %v2062
          %3361 = vmatmul.bf16.gmra.mxu0 %v416
          %v3362 = vpop.f32.mrf.mxu0
          %v3363 = vadd.f32 %v3349, %v3362
          %v3364 = vpop.f32.mrf.mxu0
          %v3365 = vadd.f32 %v3351, %v3364
          %3366 = vdwg.mxu0
          %3367 = vmatpush.bf16.msra.mxu0 %v2242
          %3368 = vmatpush.bf16.msra.mxu0 %v2230
          %3369 = vmatpush.bf16.msra.mxu0 %v2218
          %3370 = vmatpush.bf16.msra.mxu0 %v2206
          %3371 = vmatpush.bf16.msra.mxu0 %v2194
          %3372 = vmatpush.bf16.msra.mxu0 %v2182
          %3373 = vmatpush.bf16.msra.mxu0 %v2170
          %3374 = vmatpush.bf16.msra.mxu0 %v2158
          %3375 = vmatmul.bf16.gmra.mxu0 %v417
          %v3376 = vpop.f32.mrf.mxu0
          %v3377 = vadd.f32 %v3363, %v3376
          %v3378 = vpop.f32.mrf.mxu0
          %v3379 = vadd.f32 %v3365, %v3378
          %3380 = vdwg.mxu0
          %3381 = vmatpush.bf16.msra.mxu0 %v2338
          %3382 = vmatpush.bf16.msra.mxu0 %v2326
          %3383 = vmatpush.bf16.msra.mxu0 %v2314
          %3384 = vmatpush.bf16.msra.mxu0 %v2302
          %3385 = vmatpush.bf16.msra.mxu0 %v2290
          %3386 = vmatpush.bf16.msra.mxu0 %v2278
          %3387 = vmatpush.bf16.msra.mxu0 %v2266
          %3388 = vmatpush.bf16.msra.mxu0 %v2254
          %3389 = vmatmul.bf16.gmra.mxu0 %v418
          %v3390 = vpop.f32.mrf.mxu0
          %v3391 = vadd.f32 %v3377, %v3390
          %v3392 = vpop.f32.mrf.mxu0
          %v3393 = vadd.f32 %v3379, %v3392
          %3394 = vdwg.mxu0
          %3397 = vrot.lane.b32.xlu0 %v2775, 64
          %v3398 = vpop.permute.xlu0 %3397
          %3399 = vrot.lane.b32.xlu0 %v2777, 64
          %v3400 = vpop.permute.xlu0 %3399
          %3405 = vrot.lane.b32.xlu0 %v2831, 64
          %v3406 = vpop.permute.xlu0 %3405
          %3407 = vrot.lane.b32.xlu0 %v2833, 64
          %v3408 = vpop.permute.xlu0 %3407
          %3413 = vrot.lane.b32.xlu0 %v2887, 64
          %v3414 = vpop.permute.xlu0 %3413
          %3415 = vrot.lane.b32.xlu0 %v2889, 64
          %v3416 = vpop.permute.xlu0 %3415
          %3421 = vrot.lane.b32.xlu0 %v2943, 64
          %v3422 = vpop.permute.xlu0 %3421
          %3423 = vrot.lane.b32.xlu0 %v2945, 64
          %v3424 = vpop.permute.xlu0 %3423
          %v3427 = vpack.c.bf16 %v2777, %v2775
          %v3428 = vpack.c.bf16 %v3400, %v3398
          %v3429 = vpack.c.bf16 %v2833, %v2831
          %v3430 = vpack.c.bf16 %v3408, %v3406
          %v3431 = vpack.c.bf16 %v2889, %v2887
          %v3432 = vpack.c.bf16 %v3416, %v3414
          %v3433 = vpack.c.bf16 %v2945, %v2943
          %v3434 = vpack.c.bf16 %v3424, %v3422
          %3437 = vrot.lane.b32.xlu0 %v2999, 64
          %v3438 = vpop.permute.xlu0 %3437
          %3439 = vrot.lane.b32.xlu0 %v3001, 64
          %v3440 = vpop.permute.xlu0 %3439
          %3445 = vrot.lane.b32.xlu0 %v3055, 64
          %v3446 = vpop.permute.xlu0 %3445
          %3447 = vrot.lane.b32.xlu0 %v3057, 64
          %v3448 = vpop.permute.xlu0 %3447
          %3453 = vrot.lane.b32.xlu0 %v3111, 64
          %v3454 = vpop.permute.xlu0 %3453
          %3455 = vrot.lane.b32.xlu0 %v3113, 64
          %v3456 = vpop.permute.xlu0 %3455
          %3461 = vrot.lane.b32.xlu0 %v3167, 64
          %v3462 = vpop.permute.xlu0 %3461
          %3463 = vrot.lane.b32.xlu0 %v3169, 64
          %v3464 = vpop.permute.xlu0 %3463
          %v3467 = vpack.c.bf16 %v3001, %v2999
          %v3468 = vpack.c.bf16 %v3440, %v3438
          %v3469 = vpack.c.bf16 %v3057, %v3055
          %v3470 = vpack.c.bf16 %v3448, %v3446
          %v3471 = vpack.c.bf16 %v3113, %v3111
          %v3472 = vpack.c.bf16 %v3456, %v3454
          %v3473 = vpack.c.bf16 %v3169, %v3167
          %v3474 = vpack.c.bf16 %v3464, %v3462
          %3477 = vrot.lane.b32.xlu0 %v3223, 64
          %v3478 = vpop.permute.xlu0 %3477
          %3479 = vrot.lane.b32.xlu0 %v3225, 64
          %v3480 = vpop.permute.xlu0 %3479
          %3485 = vrot.lane.b32.xlu0 %v3279, 64
          %v3486 = vpop.permute.xlu0 %3485
          %3487 = vrot.lane.b32.xlu0 %v3281, 64
          %v3488 = vpop.permute.xlu0 %3487
          %3493 = vrot.lane.b32.xlu0 %v3335, 64
          %v3494 = vpop.permute.xlu0 %3493
          %3495 = vrot.lane.b32.xlu0 %v3337, 64
          %v3496 = vpop.permute.xlu0 %3495
          %3501 = vrot.lane.b32.xlu0 %v3391, 64
          %v3502 = vpop.permute.xlu0 %3501
          %3503 = vrot.lane.b32.xlu0 %v3393, 64
          %v3504 = vpop.permute.xlu0 %3503
          %v3507 = vpack.c.bf16 %v3225, %v3223
          %v3508 = vpack.c.bf16 %v3480, %v3478
          %v3509 = vpack.c.bf16 %v3281, %v3279
          %v3510 = vpack.c.bf16 %v3488, %v3486
          %v3511 = vpack.c.bf16 %v3337, %v3335
          %v3512 = vpack.c.bf16 %v3496, %v3494
          %v3513 = vpack.c.bf16 %v3393, %v3391
          %v3514 = vpack.c.bf16 %v3504, %v3502
          %v3515 = vld [vmem:[%s1] sm:$0xff]
          %v3516 = vld [vmem:[%s1 + $0x8] sm:$0xff]
          %v3517 = vld [vmem:[%s1 + $0x10] sm:$0xff]
          %v3518 = vld [vmem:[%s1 + $0x18] sm:$0xff]
          %v3519 = vld [vmem:[%s1 + $0x20] sm:$0xff]
          %v3520 = vld [vmem:[%s1 + $0x28] sm:$0xff]
          %v3521 = vld [vmem:[%s1 + $0x30] sm:$0xff]
          %v3522 = vld [vmem:[%s1 + $0x38] sm:$0xff]
          %v3523 = vld [vmem:[%s1 + $0x40] sm:$0xff]
          %v3524 = vld [vmem:[%s1 + $0x48] sm:$0xff]
          %v3525 = vld [vmem:[%s1 + $0x50] sm:$0xff]
          %v3526 = vld [vmem:[%s1 + $0x58] sm:$0xff]
          %v3527 = vld [vmem:[%s1 + $0x60] sm:$0xff]
          %v3528 = vld [vmem:[%s1 + $0x68] sm:$0xff]
          %v3529 = vld [vmem:[%s1 + $0x70] sm:$0xff]
          %v3530 = vld [vmem:[%s1 + $0x78] sm:$0xff]
          %vm3531 = vcmask 523264
          %v3533 = vsel %vm3531, %v3427, 0
          %v3536 = vsel %vm3531, %v3428, 0
          %v3539 = vsel %vm3531, %v3429, 0
          %v3542 = vsel %vm3531, %v3430, 0
          %v3545 = vsel %vm3531, %v3431, 0
          %v3548 = vsel %vm3531, %v3432, 0
          %v3551 = vsel %vm3531, %v3433, 0
          %v3554 = vsel %vm3531, %v3434, 0
          %v3557 = vsel %vm3531, %v3467, 0
          %v3560 = vsel %vm3531, %v3468, 0
          %v3563 = vsel %vm3531, %v3469, 0
          %v3566 = vsel %vm3531, %v3470, 0
          %v3569 = vsel %vm3531, %v3471, 0
          %v3572 = vsel %vm3531, %v3472, 0
          %v3575 = vsel %vm3531, %v3473, 0
          %v3578 = vsel %vm3531, %v3474, 0
          %3580 = vmatpush.bf16.xpose.msra.mxu0 %v3578
          %3581 = vmatpush.bf16.xpose.msra.mxu0 %v3575
          %3582 = vmatpush.bf16.xpose.msra.mxu0 %v3572
          %3583 = vmatpush.bf16.xpose.msra.mxu0 %v3569
          %3584 = vmatpush.bf16.xpose.msra.mxu0 %v3566
          %3585 = vmatpush.bf16.xpose.msra.mxu0 %v3563
          %3586 = vmatpush.bf16.xpose.msra.mxu0 %v3560
          %3587 = vmatpush.bf16.xpose.msra.mxu0 %v3557
          %3588 = vmatmul.bf16.gmra.mxu0 %v3533
          %v3589 = vpop.f32.mrf.mxu0
          %v3590 = vadd.f32 %v3515, %v3589
          %v3591 = vpop.f32.mrf.mxu0
          %v3592 = vadd.f32 %v3516, %v3591
          %3593 = vmatmul.bf16.gmra.mxu0 %v3536
          %v3594 = vpop.f32.mrf.mxu0
          %v3595 = vadd.f32 %v3517, %v3594
          %v3596 = vpop.f32.mrf.mxu0
          %v3597 = vadd.f32 %v3518, %v3596
          %3598 = vmatmul.bf16.gmra.mxu0 %v3539
          %v3599 = vpop.f32.mrf.mxu0
          %v3600 = vadd.f32 %v3519, %v3599
          %v3601 = vpop.f32.mrf.mxu0
          %v3602 = vadd.f32 %v3520, %v3601
          %3603 = vmatmul.bf16.gmra.mxu0 %v3542
          %v3604 = vpop.f32.mrf.mxu0
          %v3605 = vadd.f32 %v3521, %v3604
          %v3606 = vpop.f32.mrf.mxu0
          %v3607 = vadd.f32 %v3522, %v3606
          %3608 = vmatmul.bf16.gmra.mxu0 %v3545
          %v3609 = vpop.f32.mrf.mxu0
          %v3610 = vadd.f32 %v3523, %v3609
          %v3611 = vpop.f32.mrf.mxu0
          %v3612 = vadd.f32 %v3524, %v3611
          %3613 = vmatmul.bf16.gmra.mxu0 %v3548
          %v3614 = vpop.f32.mrf.mxu0
          %v3615 = vadd.f32 %v3525, %v3614
          %v3616 = vpop.f32.mrf.mxu0
          %v3617 = vadd.f32 %v3526, %v3616
          %3618 = vmatmul.bf16.gmra.mxu0 %v3551
          %v3619 = vpop.f32.mrf.mxu0
          %v3620 = vadd.f32 %v3527, %v3619
          %v3621 = vpop.f32.mrf.mxu0
          %v3622 = vadd.f32 %v3528, %v3621
          %3623 = vmatmul.bf16.gmra.mxu0 %v3554
          %v3624 = vpop.f32.mrf.mxu0
          %v3625 = vadd.f32 %v3529, %v3624
          %v3626 = vpop.f32.mrf.mxu0
          %v3627 = vadd.f32 %v3530, %v3626
          %3628 = vdwg.mxu0
          %3629 = vmax.xlane.f32.xlu0 %v3590
          %v3630 = vpop.xlane.xlu0 %3629
          %3631 = vmax.xlane.f32.xlu0 %v3592
          %v3632 = vpop.xlane.xlu0 %3631
          %3633 = vmax.xlane.f32.xlu0 %v3595
          %v3634 = vpop.xlane.xlu0 %3633
          %3635 = vmax.xlane.f32.xlu0 %v3597
          %v3636 = vpop.xlane.xlu0 %3635
          %3637 = vmax.xlane.f32.xlu0 %v3600
          %v3638 = vpop.xlane.xlu0 %3637
          %3639 = vmax.xlane.f32.xlu0 %v3602
          %v3640 = vpop.xlane.xlu0 %3639
          %3641 = vmax.xlane.f32.xlu0 %v3605
          %v3642 = vpop.xlane.xlu0 %3641
          %3643 = vmax.xlane.f32.xlu0 %v3607
          %v3644 = vpop.xlane.xlu0 %3643
          %3645 = vmax.xlane.f32.xlu0 %v3610
          %v3646 = vpop.xlane.xlu0 %3645
          %3647 = vmax.xlane.f32.xlu0 %v3612
          %v3648 = vpop.xlane.xlu0 %3647
          %3649 = vmax.xlane.f32.xlu0 %v3615
          %v3650 = vpop.xlane.xlu0 %3649
          %3651 = vmax.xlane.f32.xlu0 %v3617
          %v3652 = vpop.xlane.xlu0 %3651
          %3653 = vmax.xlane.f32.xlu0 %v3620
          %v3654 = vpop.xlane.xlu0 %3653
          %3655 = vmax.xlane.f32.xlu0 %v3622
          %v3656 = vpop.xlane.xlu0 %3655
          %3657 = vmax.xlane.f32.xlu0 %v3625
          %v3658 = vpop.xlane.xlu0 %3657
          %3659 = vmax.xlane.f32.xlu0 %v3627
          %v3660 = vpop.xlane.xlu0 %3659
          %v3661 = vsub.f32 %v3590, %v3630
          %v3662 = vsub.f32 %v3592, %v3632
          %v3663 = vsub.f32 %v3595, %v3634
          %v3664 = vsub.f32 %v3597, %v3636
          %v3665 = vsub.f32 %v3600, %v3638
          %v3666 = vsub.f32 %v3602, %v3640
          %v3667 = vsub.f32 %v3605, %v3642
          %v3668 = vsub.f32 %v3607, %v3644
          %v3669 = vsub.f32 %v3610, %v3646
          %v3670 = vsub.f32 %v3612, %v3648
          %v3671 = vsub.f32 %v3615, %v3650
          %v3672 = vsub.f32 %v3617, %v3652
          %v3673 = vsub.f32 %v3620, %v3654
          %v3674 = vsub.f32 %v3622, %v3656
          %v3675 = vsub.f32 %v3625, %v3658
          %v3676 = vsub.f32 %v3627, %v3660
          %v3677 = vmul.f32 %v3661, 1.442695
          %v3678 = vpow.pop %v3677
          %v3679 = vmul.f32 %v3662, 1.442695
          %v3680 = vpow.pop %v3679
          %v3681 = vmul.f32 %v3663, 1.442695
          %v3682 = vpow.pop %v3681
          %v3683 = vmul.f32 %v3664, 1.442695
          %v3684 = vpow.pop %v3683
          %v3685 = vmul.f32 %v3665, 1.442695
          %v3686 = vpow.pop %v3685
          %v3687 = vmul.f32 %v3666, 1.442695
          %v3688 = vpow.pop %v3687
          %v3689 = vmul.f32 %v3667, 1.442695
          %v3690 = vpow.pop %v3689
          %v3691 = vmul.f32 %v3668, 1.442695
          %v3692 = vpow.pop %v3691
          %v3693 = vmul.f32 %v3669, 1.442695
          %v3694 = vpow.pop %v3693
          %v3695 = vmul.f32 %v3670, 1.442695
          %v3696 = vpow.pop %v3695
          %v3697 = vmul.f32 %v3671, 1.442695
          %v3698 = vpow.pop %v3697
          %v3699 = vmul.f32 %v3672, 1.442695
          %v3700 = vpow.pop %v3699
          %v3701 = vmul.f32 %v3673, 1.442695
          %v3702 = vpow.pop %v3701
          %v3703 = vmul.f32 %v3674, 1.442695
          %v3704 = vpow.pop %v3703
          %v3705 = vmul.f32 %v3675, 1.442695
          %v3706 = vpow.pop %v3705
          %v3707 = vmul.f32 %v3676, 1.442695
          %v3708 = vpow.pop %v3707
          %3709 = vadd.xlane.f32.xlu0 %v3678
          %v3710 = vpop.xlane.xlu0 %3709
          %3711 = vadd.xlane.f32.xlu0 %v3680
          %v3712 = vpop.xlane.xlu0 %3711
          %3713 = vadd.xlane.f32.xlu0 %v3682
          %v3714 = vpop.xlane.xlu0 %3713
          %3715 = vadd.xlane.f32.xlu0 %v3684
          %v3716 = vpop.xlane.xlu0 %3715
          %3717 = vadd.xlane.f32.xlu0 %v3686
          %v3718 = vpop.xlane.xlu0 %3717
          %3719 = vadd.xlane.f32.xlu0 %v3688
          %v3720 = vpop.xlane.xlu0 %3719
          %3721 = vadd.xlane.f32.xlu0 %v3690
          %v3722 = vpop.xlane.xlu0 %3721
          %3723 = vadd.xlane.f32.xlu0 %v3692
          %v3724 = vpop.xlane.xlu0 %3723
          %3725 = vadd.xlane.f32.xlu0 %v3694
          %v3726 = vpop.xlane.xlu0 %3725
          %3727 = vadd.xlane.f32.xlu0 %v3696
          %v3728 = vpop.xlane.xlu0 %3727
          %3729 = vadd.xlane.f32.xlu0 %v3698
          %v3730 = vpop.xlane.xlu0 %3729
          %3731 = vadd.xlane.f32.xlu0 %v3700
          %v3732 = vpop.xlane.xlu0 %3731
          %3733 = vadd.xlane.f32.xlu0 %v3702
          %v3734 = vpop.xlane.xlu0 %3733
          %3735 = vadd.xlane.f32.xlu0 %v3704
          %v3736 = vpop.xlane.xlu0 %3735
          %3737 = vadd.xlane.f32.xlu0 %v3706
          %v3738 = vpop.xlane.xlu0 %3737
          %3739 = vadd.xlane.f32.xlu0 %v3708
          %v3740 = vpop.xlane.xlu0 %3739
          %v3741 = vrcp.pop %v3710
          %v3742 = vrcp.pop %v3712
          %v3743 = vrcp.pop %v3714
          %v3744 = vrcp.pop %v3716
          %v3745 = vrcp.pop %v3718
          %v3746 = vrcp.pop %v3720
          %v3747 = vrcp.pop %v3722
          %v3748 = vrcp.pop %v3724
          %v3749 = vrcp.pop %v3726
          %v3750 = vrcp.pop %v3728
          %v3751 = vrcp.pop %v3730
          %v3752 = vrcp.pop %v3732
          %v3753 = vrcp.pop %v3734
          %v3754 = vrcp.pop %v3736
          %v3755 = vrcp.pop %v3738
          %v3756 = vrcp.pop %v3740
          %v3757 = vmul.f32 %v3678, %v3741
          %v3758 = vmul.f32 %v3680, %v3742
          %v3759 = vmul.f32 %v3682, %v3743
          %v3760 = vmul.f32 %v3684, %v3744
          %v3761 = vmul.f32 %v3686, %v3745
          %v3762 = vmul.f32 %v3688, %v3746
          %v3763 = vmul.f32 %v3690, %v3747
          %v3764 = vmul.f32 %v3692, %v3748
          %v3765 = vmul.f32 %v3694, %v3749
          %v3766 = vmul.f32 %v3696, %v3750
          %v3767 = vmul.f32 %v3698, %v3751
          %v3768 = vmul.f32 %v3700, %v3752
          %v3769 = vmul.f32 %v3702, %v3753
          %v3770 = vmul.f32 %v3704, %v3754
          %v3771 = vmul.f32 %v3706, %v3755
          %v3772 = vmul.f32 %v3708, %v3756
          %3773 = vst [vmem:[%s9] sm:$0xff] %v3757
          %3774 = vst [vmem:[%s9 + $0x8] sm:$0xff] %v3758
          %3775 = vst [vmem:[%s9 + $0x10] sm:$0xff] %v3759
          %3776 = vst [vmem:[%s9 + $0x18] sm:$0xff] %v3760
          %3777 = vst [vmem:[%s9 + $0x20] sm:$0xff] %v3761
          %3778 = vst [vmem:[%s9 + $0x28] sm:$0xff] %v3762
          %3779 = vst [vmem:[%s9 + $0x30] sm:$0xff] %v3763
          %3780 = vst [vmem:[%s9 + $0x38] sm:$0xff] %v3764
          %3781 = vst [vmem:[%s9 + $0x40] sm:$0xff] %v3765
          %3782 = vst [vmem:[%s9 + $0x48] sm:$0xff] %v3766
          %3783 = vst [vmem:[%s9 + $0x50] sm:$0xff] %v3767
          %3784 = vst [vmem:[%s9 + $0x58] sm:$0xff] %v3768
          %3785 = vst [vmem:[%s9 + $0x60] sm:$0xff] %v3769
          %3786 = vst [vmem:[%s9 + $0x68] sm:$0xff] %v3770
          %3787 = vst [vmem:[%s9 + $0x70] sm:$0xff] %v3771
          %3788 = vst [vmem:[%s9 + $0x78] sm:$0xff] %v3772
          %v3789 = vpack.c.bf16 %v3758, %v3757
          %v3790 = vpack.c.bf16 %v3760, %v3759
          %v3791 = vpack.c.bf16 %v3762, %v3761
          %v3792 = vpack.c.bf16 %v3764, %v3763
          %v3793 = vpack.c.bf16 %v3766, %v3765
          %v3794 = vpack.c.bf16 %v3768, %v3767
          %v3795 = vpack.c.bf16 %v3770, %v3769
          %v3796 = vpack.c.bf16 %v3772, %v3771
          %3797 = vmatpush.bf16.msra.mxu0 %v3514
          %3798 = vmatpush.bf16.msra.mxu0 %v3513
          %3799 = vmatpush.bf16.msra.mxu0 %v3512
          %3800 = vmatpush.bf16.msra.mxu0 %v3511
          %3801 = vmatpush.bf16.msra.mxu0 %v3510
          %3802 = vmatpush.bf16.msra.mxu0 %v3509
          %3803 = vmatpush.bf16.msra.mxu0 %v3508
          %3804 = vmatpush.bf16.msra.mxu0 %v3507
          %3805 = vmatmul.bf16.gmra.mxu0 %v3789
          %v3806 = vpop.f32.mrf.mxu0
          %v3807 = vadd.f32 0.0, %v3806
          %v3808 = vpop.f32.mrf.mxu0
          %v3809 = vadd.f32 0.0, %v3808
          %3810 = vmatmul.bf16.gmra.mxu0 %v3790
          %v3811 = vpop.f32.mrf.mxu0
          %v3812 = vadd.f32 0.0, %v3811
          %v3813 = vpop.f32.mrf.mxu0
          %v3814 = vadd.f32 0.0, %v3813
          %3815 = vmatmul.bf16.gmra.mxu0 %v3791
          %v3816 = vpop.f32.mrf.mxu0
          %v3817 = vadd.f32 0.0, %v3816
          %v3818 = vpop.f32.mrf.mxu0
          %v3819 = vadd.f32 0.0, %v3818
          %3820 = vmatmul.bf16.gmra.mxu0 %v3792
          %v3821 = vpop.f32.mrf.mxu0
          %v3822 = vadd.f32 0.0, %v3821
          %v3823 = vpop.f32.mrf.mxu0
          %v3824 = vadd.f32 0.0, %v3823
          %3825 = vmatmul.bf16.gmra.mxu0 %v3793
          %v3826 = vpop.f32.mrf.mxu0
          %v3827 = vadd.f32 0.0, %v3826
          %v3828 = vpop.f32.mrf.mxu0
          %v3829 = vadd.f32 0.0, %v3828
          %3830 = vmatmul.bf16.gmra.mxu0 %v3794
          %v3831 = vpop.f32.mrf.mxu0
          %v3832 = vadd.f32 0.0, %v3831
          %v3833 = vpop.f32.mrf.mxu0
          %v3834 = vadd.f32 0.0, %v3833
          %3835 = vmatmul.bf16.gmra.mxu0 %v3795
          %v3836 = vpop.f32.mrf.mxu0
          %v3837 = vadd.f32 0.0, %v3836
          %v3838 = vpop.f32.mrf.mxu0
          %v3839 = vadd.f32 0.0, %v3838
          %3840 = vmatmul.bf16.gmra.mxu0 %v3796
          %v3841 = vpop.f32.mrf.mxu0
          %v3842 = vadd.f32 0.0, %v3841
          %v3843 = vpop.f32.mrf.mxu0
          %v3844 = vadd.f32 0.0, %v3843
          %3845 = vdwg.mxu0
          %3848 = vrot.lane.b32.xlu0 %v3812, 64
          %v3849 = vpop.permute.xlu0 %3848
          %3850 = vrot.lane.b32.xlu0 %v3814, 64
          %v3851 = vpop.permute.xlu0 %3850
          %3856 = vrot.lane.b32.xlu0 %v3822, 64
          %v3857 = vpop.permute.xlu0 %3856
          %3858 = vrot.lane.b32.xlu0 %v3824, 64
          %v3859 = vpop.permute.xlu0 %3858
          %3864 = vrot.lane.b32.xlu0 %v3832, 64
          %v3865 = vpop.permute.xlu0 %3864
          %3866 = vrot.lane.b32.xlu0 %v3834, 64
          %v3867 = vpop.permute.xlu0 %3866
          %3872 = vrot.lane.b32.xlu0 %v3842, 64
          %v3873 = vpop.permute.xlu0 %3872
          %3874 = vrot.lane.b32.xlu0 %v3844, 64
          %v3875 = vpop.permute.xlu0 %3874
          %v3878 = vsel %vm3531, %v3807, %v3849
          %v3879 = vsel %vm3531, %v3809, %v3851
          %v3880 = vsel %vm3531, %v3817, %v3857
          %v3881 = vsel %vm3531, %v3819, %v3859
          %v3882 = vsel %vm3531, %v3827, %v3865
          %v3883 = vsel %vm3531, %v3829, %v3867
          %v3884 = vsel %vm3531, %v3837, %v3873
          %v3885 = vsel %vm3531, %v3839, %v3875
          %v3886 = vpack.c.bf16 %v3879, %v3878
          %v3887 = vpack.c.bf16 %v3881, %v3880
          %v3888 = vpack.c.bf16 %v3883, %v3882
          %v3889 = vpack.c.bf16 %v3885, %v3884
          %v3890 = vld [vmem:[%s3] sm:$0xff]
          %v3891 = vld [vmem:[%s3 + $0x8] sm:$0xff]
          %v3892 = vld [vmem:[%s3 + $0x10] sm:$0xff]
          %v3893 = vld [vmem:[%s3 + $0x18] sm:$0xff]
          %v3894 = vld [vmem:[%s3 + $0x20] sm:$0xff]
          %v3895 = vld [vmem:[%s3 + $0x28] sm:$0xff]
          %v3896 = vld [vmem:[%s3 + $0x30] sm:$0xff]
          %v3897 = vld [vmem:[%s3 + $0x38] sm:$0xff]
          %v3898 = vld [vmem:[%s3 + $0x40] sm:$0xff]
          %v3899 = vld [vmem:[%s3 + $0x48] sm:$0xff]
          %v3900 = vld [vmem:[%s3 + $0x50] sm:$0xff]
          %v3901 = vld [vmem:[%s3 + $0x58] sm:$0xff]
          %v3902 = vld [vmem:[%s3 + $0x60] sm:$0xff]
          %v3903 = vld [vmem:[%s3 + $0x68] sm:$0xff]
          %v3904 = vld [vmem:[%s3 + $0x70] sm:$0xff]
          %v3905 = vld [vmem:[%s3 + $0x78] sm:$0xff]
          %v3906 = vld [vmem:[%s3 + $0x80] sm:$0xff]
          %v3907 = vld [vmem:[%s3 + $0x88] sm:$0xff]
          %v3908 = vld [vmem:[%s3 + $0x90] sm:$0xff]
          %v3909 = vld [vmem:[%s3 + $0x98] sm:$0xff]
          %v3910 = vld [vmem:[%s3 + $0xa0] sm:$0xff]
          %v3911 = vld [vmem:[%s3 + $0xa8] sm:$0xff]
          %v3912 = vld [vmem:[%s3 + $0xb0] sm:$0xff]
          %v3913 = vld [vmem:[%s3 + $0xb8] sm:$0xff]
          %v3914 = vld [vmem:[%s3 + $0xc0] sm:$0xff]
          %v3915 = vld [vmem:[%s3 + $0xc8] sm:$0xff]
          %v3916 = vld [vmem:[%s3 + $0xd0] sm:$0xff]
          %v3917 = vld [vmem:[%s3 + $0xd8] sm:$0xff]
          %v3918 = vld [vmem:[%s3 + $0xe0] sm:$0xff]
          %v3919 = vld [vmem:[%s3 + $0xe8] sm:$0xff]
          %v3920 = vld [vmem:[%s3 + $0xf0] sm:$0xff]
          %v3921 = vld [vmem:[%s3 + $0xf8] sm:$0xff]
          %v3922 = vld [vmem:[%s3 + $0x100] sm:$0xff]
          %v3923 = vld [vmem:[%s3 + $0x108] sm:$0xff]
          %v3924 = vld [vmem:[%s3 + $0x110] sm:$0xff]
          %v3925 = vld [vmem:[%s3 + $0x118] sm:$0xff]
          %v3926 = vld [vmem:[%s3 + $0x120] sm:$0xff]
          %v3927 = vld [vmem:[%s3 + $0x128] sm:$0xff]
          %v3928 = vld [vmem:[%s3 + $0x130] sm:$0xff]
          %v3929 = vld [vmem:[%s3 + $0x138] sm:$0xff]
          %v3930 = vld [vmem:[%s3 + $0x140] sm:$0xff]
          %v3931 = vld [vmem:[%s3 + $0x148] sm:$0xff]
          %v3932 = vld [vmem:[%s3 + $0x150] sm:$0xff]
          %v3933 = vld [vmem:[%s3 + $0x158] sm:$0xff]
          %v3934 = vld [vmem:[%s3 + $0x160] sm:$0xff]
          %v3935 = vld [vmem:[%s3 + $0x168] sm:$0xff]
          %v3936 = vld [vmem:[%s3 + $0x170] sm:$0xff]
          %v3937 = vld [vmem:[%s3 + $0x178] sm:$0xff]
          %v3938 = vld [vmem:[%s3 + $0x180] sm:$0xff]
          %v3939 = vld [vmem:[%s3 + $0x188] sm:$0xff]
          %v3940 = vld [vmem:[%s3 + $0x190] sm:$0xff]
          %v3941 = vld [vmem:[%s3 + $0x198] sm:$0xff]
          %v3942 = vld [vmem:[%s3 + $0x1a0] sm:$0xff]
          %v3943 = vld [vmem:[%s3 + $0x1a8] sm:$0xff]
          %v3944 = vld [vmem:[%s3 + $0x1b0] sm:$0xff]
          %v3945 = vld [vmem:[%s3 + $0x1b8] sm:$0xff]
          %v3946 = vld [vmem:[%s3 + $0x1c0] sm:$0xff]
          %v3947 = vld [vmem:[%s3 + $0x1c8] sm:$0xff]
          %v3948 = vld [vmem:[%s3 + $0x1d0] sm:$0xff]
          %v3949 = vld [vmem:[%s3 + $0x1d8] sm:$0xff]
          %v3950 = vld [vmem:[%s3 + $0x1e0] sm:$0xff]
          %v3951 = vld [vmem:[%s3 + $0x1e8] sm:$0xff]
          %v3952 = vld [vmem:[%s3 + $0x1f0] sm:$0xff]
          %v3953 = vld [vmem:[%s3 + $0x1f8] sm:$0xff]
          %v3954 = vld [vmem:[%s3 + $0x200] sm:$0xff]
          %v3955 = vld [vmem:[%s3 + $0x208] sm:$0xff]
          %v3956 = vld [vmem:[%s3 + $0x210] sm:$0xff]
          %v3957 = vld [vmem:[%s3 + $0x218] sm:$0xff]
          %v3958 = vld [vmem:[%s3 + $0x220] sm:$0xff]
          %v3959 = vld [vmem:[%s3 + $0x228] sm:$0xff]
          %v3960 = vld [vmem:[%s3 + $0x230] sm:$0xff]
          %v3961 = vld [vmem:[%s3 + $0x238] sm:$0xff]
          %v3962 = vld [vmem:[%s3 + $0x240] sm:$0xff]
          %v3963 = vld [vmem:[%s3 + $0x248] sm:$0xff]
          %v3964 = vld [vmem:[%s3 + $0x250] sm:$0xff]
          %v3965 = vld [vmem:[%s3 + $0x258] sm:$0xff]
          %v3966 = vld [vmem:[%s3 + $0x260] sm:$0xff]
          %v3967 = vld [vmem:[%s3 + $0x268] sm:$0xff]
          %v3968 = vld [vmem:[%s3 + $0x270] sm:$0xff]
          %v3969 = vld [vmem:[%s3 + $0x278] sm:$0xff]
          %v3970 = vld [vmem:[%s3 + $0x280] sm:$0xff]
          %v3971 = vld [vmem:[%s3 + $0x288] sm:$0xff]
          %v3972 = vld [vmem:[%s3 + $0x290] sm:$0xff]
          %v3973 = vld [vmem:[%s3 + $0x298] sm:$0xff]
          %v3974 = vld [vmem:[%s3 + $0x2a0] sm:$0xff]
          %v3975 = vld [vmem:[%s3 + $0x2a8] sm:$0xff]
          %v3976 = vld [vmem:[%s3 + $0x2b0] sm:$0xff]
          %v3977 = vld [vmem:[%s3 + $0x2b8] sm:$0xff]
          %v3978 = vld [vmem:[%s3 + $0x2c0] sm:$0xff]
          %v3979 = vld [vmem:[%s3 + $0x2c8] sm:$0xff]
          %v3980 = vld [vmem:[%s3 + $0x2d0] sm:$0xff]
          %v3981 = vld [vmem:[%s3 + $0x2d8] sm:$0xff]
          %v3982 = vld [vmem:[%s3 + $0x2e0] sm:$0xff]
          %v3983 = vld [vmem:[%s3 + $0x2e8] sm:$0xff]
          %v3984 = vld [vmem:[%s3 + $0x2f0] sm:$0xff]
          %v3985 = vld [vmem:[%s3 + $0x2f8] sm:$0xff]
          %v3986 = vld [vmem:[%s3 + $0x300] sm:$0xff]
          %v3987 = vld [vmem:[%s3 + $0x308] sm:$0xff]
          %v3988 = vld [vmem:[%s3 + $0x310] sm:$0xff]
          %v3989 = vld [vmem:[%s3 + $0x318] sm:$0xff]
          %v3990 = vld [vmem:[%s3 + $0x320] sm:$0xff]
          %v3991 = vld [vmem:[%s3 + $0x328] sm:$0xff]
          %v3992 = vld [vmem:[%s3 + $0x330] sm:$0xff]
          %v3993 = vld [vmem:[%s3 + $0x338] sm:$0xff]
          %v3994 = vld [vmem:[%s3 + $0x340] sm:$0xff]
          %v3995 = vld [vmem:[%s3 + $0x348] sm:$0xff]
          %v3996 = vld [vmem:[%s3 + $0x350] sm:$0xff]
          %v3997 = vld [vmem:[%s3 + $0x358] sm:$0xff]
          %v3998 = vld [vmem:[%s3 + $0x360] sm:$0xff]
          %v3999 = vld [vmem:[%s3 + $0x368] sm:$0xff]
          %v4000 = vld [vmem:[%s3 + $0x370] sm:$0xff]
          %v4001 = vld [vmem:[%s3 + $0x378] sm:$0xff]
          %v4002 = vld [vmem:[%s3 + $0x380] sm:$0xff]
          %v4003 = vld [vmem:[%s3 + $0x388] sm:$0xff]
          %v4004 = vld [vmem:[%s3 + $0x390] sm:$0xff]
          %v4005 = vld [vmem:[%s3 + $0x398] sm:$0xff]
          %v4006 = vld [vmem:[%s3 + $0x3a0] sm:$0xff]
          %v4007 = vld [vmem:[%s3 + $0x3a8] sm:$0xff]
          %v4008 = vld [vmem:[%s3 + $0x3b0] sm:$0xff]
          %v4009 = vld [vmem:[%s3 + $0x3b8] sm:$0xff]
          %v4010 = vld [vmem:[%s3 + $0x3c0] sm:$0xff]
          %v4011 = vld [vmem:[%s3 + $0x3c8] sm:$0xff]
          %v4012 = vld [vmem:[%s3 + $0x3d0] sm:$0xff]
          %v4013 = vld [vmem:[%s3 + $0x3d8] sm:$0xff]
          %v4014 = vld [vmem:[%s3 + $0x3e0] sm:$0xff]
          %v4015 = vld [vmem:[%s3 + $0x3e8] sm:$0xff]
          %v4016 = vld [vmem:[%s3 + $0x3f0] sm:$0xff]
          %v4017 = vld [vmem:[%s3 + $0x3f8] sm:$0xff]
          %v4146 = vunpack.c.l.b16 %v3890
          %v4147 = vunpack.c.h.b16 %v3890
          %v4148 = vunpack.c.l.b16 %v3891
          %v4149 = vunpack.c.h.b16 %v3891
          %v4150 = vunpack.c.l.b16 %v3892
          %v4151 = vunpack.c.h.b16 %v3892
          %v4152 = vunpack.c.l.b16 %v3893
          %v4153 = vunpack.c.h.b16 %v3893
          %v4154 = vunpack.c.l.b16 %v3894
          %v4155 = vunpack.c.h.b16 %v3894
          %v4156 = vunpack.c.l.b16 %v3895
          %v4157 = vunpack.c.h.b16 %v3895
          %v4158 = vunpack.c.l.b16 %v3896
          %v4159 = vunpack.c.h.b16 %v3896
          %v4160 = vunpack.c.l.b16 %v3897
          %v4161 = vunpack.c.h.b16 %v3897
          %v4162 = vunpack.c.l.b16 %v3898
          %v4163 = vunpack.c.h.b16 %v3898
          %v4164 = vunpack.c.l.b16 %v3899
          %v4165 = vunpack.c.h.b16 %v3899
          %v4166 = vunpack.c.l.b16 %v3900
          %v4167 = vunpack.c.h.b16 %v3900
          %v4168 = vunpack.c.l.b16 %v3901
          %v4169 = vunpack.c.h.b16 %v3901
          %v4170 = vunpack.c.l.b16 %v3902
          %v4171 = vunpack.c.h.b16 %v3902
          %v4172 = vunpack.c.l.b16 %v3903
          %v4173 = vunpack.c.h.b16 %v3903
          %v4174 = vunpack.c.l.b16 %v3904
          %v4175 = vunpack.c.h.b16 %v3904
          %v4176 = vunpack.c.l.b16 %v3905
          %v4177 = vunpack.c.h.b16 %v3905
          %v4178 = vunpack.c.l.b16 %v3906
          %v4179 = vunpack.c.h.b16 %v3906
          %v4180 = vunpack.c.l.b16 %v3907
          %v4181 = vunpack.c.h.b16 %v3907
          %v4182 = vunpack.c.l.b16 %v3908
          %v4183 = vunpack.c.h.b16 %v3908
          %v4184 = vunpack.c.l.b16 %v3909
          %v4185 = vunpack.c.h.b16 %v3909
          %v4186 = vunpack.c.l.b16 %v3910
          %v4187 = vunpack.c.h.b16 %v3910
          %v4188 = vunpack.c.l.b16 %v3911
          %v4189 = vunpack.c.h.b16 %v3911
          %v4190 = vunpack.c.l.b16 %v3912
          %v4191 = vunpack.c.h.b16 %v3912
          %v4192 = vunpack.c.l.b16 %v3913
          %v4193 = vunpack.c.h.b16 %v3913
          %v4194 = vunpack.c.l.b16 %v3914
          %v4195 = vunpack.c.h.b16 %v3914
          %v4196 = vunpack.c.l.b16 %v3915
          %v4197 = vunpack.c.h.b16 %v3915
          %v4198 = vunpack.c.l.b16 %v3916
          %v4199 = vunpack.c.h.b16 %v3916
          %v4200 = vunpack.c.l.b16 %v3917
          %v4201 = vunpack.c.h.b16 %v3917
          %v4202 = vunpack.c.l.b16 %v3918
          %v4203 = vunpack.c.h.b16 %v3918
          %v4204 = vunpack.c.l.b16 %v3919
          %v4205 = vunpack.c.h.b16 %v3919
          %v4206 = vunpack.c.l.b16 %v3920
          %v4207 = vunpack.c.h.b16 %v3920
          %v4208 = vunpack.c.l.b16 %v3921
          %v4209 = vunpack.c.h.b16 %v3921
          %v4210 = vunpack.c.l.b16 %v3922
          %v4211 = vunpack.c.h.b16 %v3922
          %v4212 = vunpack.c.l.b16 %v3923
          %v4213 = vunpack.c.h.b16 %v3923
          %v4214 = vunpack.c.l.b16 %v3924
          %v4215 = vunpack.c.h.b16 %v3924
          %v4216 = vunpack.c.l.b16 %v3925
          %v4217 = vunpack.c.h.b16 %v3925
          %v4218 = vunpack.c.l.b16 %v3926
          %v4219 = vunpack.c.h.b16 %v3926
          %v4220 = vunpack.c.l.b16 %v3927
          %v4221 = vunpack.c.h.b16 %v3927
          %v4222 = vunpack.c.l.b16 %v3928
          %v4223 = vunpack.c.h.b16 %v3928
          %v4224 = vunpack.c.l.b16 %v3929
          %v4225 = vunpack.c.h.b16 %v3929
          %v4226 = vunpack.c.l.b16 %v3930
          %v4227 = vunpack.c.h.b16 %v3930
          %v4228 = vunpack.c.l.b16 %v3931
          %v4229 = vunpack.c.h.b16 %v3931
          %v4230 = vunpack.c.l.b16 %v3932
          %v4231 = vunpack.c.h.b16 %v3932
          %v4232 = vunpack.c.l.b16 %v3933
          %v4233 = vunpack.c.h.b16 %v3933
          %v4234 = vunpack.c.l.b16 %v3934
          %v4235 = vunpack.c.h.b16 %v3934
          %v4236 = vunpack.c.l.b16 %v3935
          %v4237 = vunpack.c.h.b16 %v3935
          %v4238 = vunpack.c.l.b16 %v3936
          %v4239 = vunpack.c.h.b16 %v3936
          %v4240 = vunpack.c.l.b16 %v3937
          %v4241 = vunpack.c.h.b16 %v3937
          %v4242 = vunpack.c.l.b16 %v3938
          %v4243 = vunpack.c.h.b16 %v3938
          %v4244 = vunpack.c.l.b16 %v3939
          %v4245 = vunpack.c.h.b16 %v3939
          %v4246 = vunpack.c.l.b16 %v3940
          %v4247 = vunpack.c.h.b16 %v3940
          %v4248 = vunpack.c.l.b16 %v3941
          %v4249 = vunpack.c.h.b16 %v3941
          %v4250 = vunpack.c.l.b16 %v3942
          %v4251 = vunpack.c.h.b16 %v3942
          %v4252 = vunpack.c.l.b16 %v3943
          %v4253 = vunpack.c.h.b16 %v3943
          %v4254 = vunpack.c.l.b16 %v3944
          %v4255 = vunpack.c.h.b16 %v3944
          %v4256 = vunpack.c.l.b16 %v3945
          %v4257 = vunpack.c.h.b16 %v3945
          %v4258 = vunpack.c.l.b16 %v3946
          %v4259 = vunpack.c.h.b16 %v3946
          %v4260 = vunpack.c.l.b16 %v3947
          %v4261 = vunpack.c.h.b16 %v3947
          %v4262 = vunpack.c.l.b16 %v3948
          %v4263 = vunpack.c.h.b16 %v3948
          %v4264 = vunpack.c.l.b16 %v3949
          %v4265 = vunpack.c.h.b16 %v3949
          %v4266 = vunpack.c.l.b16 %v3950
          %v4267 = vunpack.c.h.b16 %v3950
          %v4268 = vunpack.c.l.b16 %v3951
          %v4269 = vunpack.c.h.b16 %v3951
          %v4270 = vunpack.c.l.b16 %v3952
          %v4271 = vunpack.c.h.b16 %v3952
          %v4272 = vunpack.c.l.b16 %v3953
          %v4273 = vunpack.c.h.b16 %v3953
          %v4274 = vunpack.c.l.b16 %v3954
          %v4275 = vunpack.c.h.b16 %v3954
          %v4276 = vunpack.c.l.b16 %v3955
          %v4277 = vunpack.c.h.b16 %v3955
          %v4278 = vunpack.c.l.b16 %v3956
          %v4279 = vunpack.c.h.b16 %v3956
          %v4280 = vunpack.c.l.b16 %v3957
          %v4281 = vunpack.c.h.b16 %v3957
          %v4282 = vunpack.c.l.b16 %v3958
          %v4283 = vunpack.c.h.b16 %v3958
          %v4284 = vunpack.c.l.b16 %v3959
          %v4285 = vunpack.c.h.b16 %v3959
          %v4286 = vunpack.c.l.b16 %v3960
          %v4287 = vunpack.c.h.b16 %v3960
          %v4288 = vunpack.c.l.b16 %v3961
          %v4289 = vunpack.c.h.b16 %v3961
          %v4290 = vunpack.c.l.b16 %v3962
          %v4291 = vunpack.c.h.b16 %v3962
          %v4292 = vunpack.c.l.b16 %v3963
          %v4293 = vunpack.c.h.b16 %v3963
          %v4294 = vunpack.c.l.b16 %v3964
          %v4295 = vunpack.c.h.b16 %v3964
          %v4296 = vunpack.c.l.b16 %v3965
          %v4297 = vunpack.c.h.b16 %v3965
          %v4298 = vunpack.c.l.b16 %v3966
          %v4299 = vunpack.c.h.b16 %v3966
          %v4300 = vunpack.c.l.b16 %v3967
          %v4301 = vunpack.c.h.b16 %v3967
          %v4302 = vunpack.c.l.b16 %v3968
          %v4303 = vunpack.c.h.b16 %v3968
          %v4304 = vunpack.c.l.b16 %v3969
          %v4305 = vunpack.c.h.b16 %v3969
          %v4306 = vunpack.c.l.b16 %v3970
          %v4307 = vunpack.c.h.b16 %v3970
          %v4308 = vunpack.c.l.b16 %v3971
          %v4309 = vunpack.c.h.b16 %v3971
          %v4310 = vunpack.c.l.b16 %v3972
          %v4311 = vunpack.c.h.b16 %v3972
          %v4312 = vunpack.c.l.b16 %v3973
          %v4313 = vunpack.c.h.b16 %v3973
          %v4314 = vunpack.c.l.b16 %v3974
          %v4315 = vunpack.c.h.b16 %v3974
          %v4316 = vunpack.c.l.b16 %v3975
          %v4317 = vunpack.c.h.b16 %v3975
          %v4318 = vunpack.c.l.b16 %v3976
          %v4319 = vunpack.c.h.b16 %v3976
          %v4320 = vunpack.c.l.b16 %v3977
          %v4321 = vunpack.c.h.b16 %v3977
          %v4322 = vunpack.c.l.b16 %v3978
          %v4323 = vunpack.c.h.b16 %v3978
          %v4324 = vunpack.c.l.b16 %v3979
          %v4325 = vunpack.c.h.b16 %v3979
          %v4326 = vunpack.c.l.b16 %v3980
          %v4327 = vunpack.c.h.b16 %v3980
          %v4328 = vunpack.c.l.b16 %v3981
          %v4329 = vunpack.c.h.b16 %v3981
          %v4330 = vunpack.c.l.b16 %v3982
          %v4331 = vunpack.c.h.b16 %v3982
          %v4332 = vunpack.c.l.b16 %v3983
          %v4333 = vunpack.c.h.b16 %v3983
          %v4334 = vunpack.c.l.b16 %v3984
          %v4335 = vunpack.c.h.b16 %v3984
          %v4336 = vunpack.c.l.b16 %v3985
          %v4337 = vunpack.c.h.b16 %v3985
          %v4338 = vunpack.c.l.b16 %v3986
          %v4339 = vunpack.c.h.b16 %v3986
          %v4340 = vunpack.c.l.b16 %v3987
          %v4341 = vunpack.c.h.b16 %v3987
          %v4342 = vunpack.c.l.b16 %v3988
          %v4343 = vunpack.c.h.b16 %v3988
          %v4344 = vunpack.c.l.b16 %v3989
          %v4345 = vunpack.c.h.b16 %v3989
          %v4346 = vunpack.c.l.b16 %v3990
          %v4347 = vunpack.c.h.b16 %v3990
          %v4348 = vunpack.c.l.b16 %v3991
          %v4349 = vunpack.c.h.b16 %v3991
          %v4350 = vunpack.c.l.b16 %v3992
          %v4351 = vunpack.c.h.b16 %v3992
          %v4352 = vunpack.c.l.b16 %v3993
          %v4353 = vunpack.c.h.b16 %v3993
          %v4354 = vunpack.c.l.b16 %v3994
          %v4355 = vunpack.c.h.b16 %v3994
          %v4356 = vunpack.c.l.b16 %v3995
          %v4357 = vunpack.c.h.b16 %v3995
          %v4358 = vunpack.c.l.b16 %v3996
          %v4359 = vunpack.c.h.b16 %v3996
          %v4360 = vunpack.c.l.b16 %v3997
          %v4361 = vunpack.c.h.b16 %v3997
          %v4362 = vunpack.c.l.b16 %v3998
          %v4363 = vunpack.c.h.b16 %v3998
          %v4364 = vunpack.c.l.b16 %v3999
          %v4365 = vunpack.c.h.b16 %v3999
          %v4366 = vunpack.c.l.b16 %v4000
          %v4367 = vunpack.c.h.b16 %v4000
          %v4368 = vunpack.c.l.b16 %v4001
          %v4369 = vunpack.c.h.b16 %v4001
          %v4370 = vunpack.c.l.b16 %v4002
          %v4371 = vunpack.c.h.b16 %v4002
          %v4372 = vunpack.c.l.b16 %v4003
          %v4373 = vunpack.c.h.b16 %v4003
          %v4374 = vunpack.c.l.b16 %v4004
          %v4375 = vunpack.c.h.b16 %v4004
          %v4376 = vunpack.c.l.b16 %v4005
          %v4377 = vunpack.c.h.b16 %v4005
          %v4378 = vunpack.c.l.b16 %v4006
          %v4379 = vunpack.c.h.b16 %v4006
          %v4380 = vunpack.c.l.b16 %v4007
          %v4381 = vunpack.c.h.b16 %v4007
          %v4382 = vunpack.c.l.b16 %v4008
          %v4383 = vunpack.c.h.b16 %v4008
          %v4384 = vunpack.c.l.b16 %v4009
          %v4385 = vunpack.c.h.b16 %v4009
          %v4386 = vunpack.c.l.b16 %v4010
          %v4387 = vunpack.c.h.b16 %v4010
          %v4388 = vunpack.c.l.b16 %v4011
          %v4389 = vunpack.c.h.b16 %v4011
          %v4390 = vunpack.c.l.b16 %v4012
          %v4391 = vunpack.c.h.b16 %v4012
          %v4392 = vunpack.c.l.b16 %v4013
          %v4393 = vunpack.c.h.b16 %v4013
          %v4394 = vunpack.c.l.b16 %v4014
          %v4395 = vunpack.c.h.b16 %v4014
          %v4396 = vunpack.c.l.b16 %v4015
          %v4397 = vunpack.c.h.b16 %v4015
          %v4398 = vunpack.c.l.b16 %v4016
          %v4399 = vunpack.c.h.b16 %v4016
          %v4400 = vunpack.c.l.b16 %v4017
          %v4401 = vunpack.c.h.b16 %v4017
          %v4402 = vpack.c.b16 %v4150, %v4146
          %v4403 = vpack.c.b16 %v4151, %v4147
          %v4404 = vpack.c.b16 %v4152, %v4148
          %v4405 = vpack.c.b16 %v4153, %v4149
          %v4406 = vpack.c.b16 %v4158, %v4154
          %v4407 = vpack.c.b16 %v4159, %v4155
          %v4408 = vpack.c.b16 %v4160, %v4156
          %v4409 = vpack.c.b16 %v4161, %v4157
          %v4410 = vpack.c.b16 %v4166, %v4162
          %v4411 = vpack.c.b16 %v4167, %v4163
          %v4412 = vpack.c.b16 %v4168, %v4164
          %v4413 = vpack.c.b16 %v4169, %v4165
          %v4414 = vpack.c.b16 %v4174, %v4170
          %v4415 = vpack.c.b16 %v4175, %v4171
          %v4416 = vpack.c.b16 %v4176, %v4172
          %v4417 = vpack.c.b16 %v4177, %v4173
          %v4418 = vpack.c.b16 %v4182, %v4178
          %v4419 = vpack.c.b16 %v4183, %v4179
          %v4420 = vpack.c.b16 %v4184, %v4180
          %v4421 = vpack.c.b16 %v4185, %v4181
          %v4422 = vpack.c.b16 %v4190, %v4186
          %v4423 = vpack.c.b16 %v4191, %v4187
          %v4424 = vpack.c.b16 %v4192, %v4188
          %v4425 = vpack.c.b16 %v4193, %v4189
          %v4426 = vpack.c.b16 %v4198, %v4194
          %v4427 = vpack.c.b16 %v4199, %v4195
          %v4428 = vpack.c.b16 %v4200, %v4196
          %v4429 = vpack.c.b16 %v4201, %v4197
          %v4430 = vpack.c.b16 %v4206, %v4202
          %v4431 = vpack.c.b16 %v4207, %v4203
          %v4432 = vpack.c.b16 %v4208, %v4204
          %v4433 = vpack.c.b16 %v4209, %v4205
          %v4434 = vpack.c.b16 %v4214, %v4210
          %v4435 = vpack.c.b16 %v4215, %v4211
          %v4436 = vpack.c.b16 %v4216, %v4212
          %v4437 = vpack.c.b16 %v4217, %v4213
          %v4438 = vpack.c.b16 %v4222, %v4218
          %v4439 = vpack.c.b16 %v4223, %v4219
          %v4440 = vpack.c.b16 %v4224, %v4220
          %v4441 = vpack.c.b16 %v4225, %v4221
          %v4442 = vpack.c.b16 %v4230, %v4226
          %v4443 = vpack.c.b16 %v4231, %v4227
          %v4444 = vpack.c.b16 %v4232, %v4228
          %v4445 = vpack.c.b16 %v4233, %v4229
          %v4446 = vpack.c.b16 %v4238, %v4234
          %v4447 = vpack.c.b16 %v4239, %v4235
          %v4448 = vpack.c.b16 %v4240, %v4236
          %v4449 = vpack.c.b16 %v4241, %v4237
          %v4450 = vpack.c.b16 %v4246, %v4242
          %v4451 = vpack.c.b16 %v4247, %v4243
          %v4452 = vpack.c.b16 %v4248, %v4244
          %v4453 = vpack.c.b16 %v4249, %v4245
          %v4454 = vpack.c.b16 %v4254, %v4250
          %v4455 = vpack.c.b16 %v4255, %v4251
          %v4456 = vpack.c.b16 %v4256, %v4252
          %v4457 = vpack.c.b16 %v4257, %v4253
          %v4458 = vpack.c.b16 %v4262, %v4258
          %v4459 = vpack.c.b16 %v4263, %v4259
          %v4460 = vpack.c.b16 %v4264, %v4260
          %v4461 = vpack.c.b16 %v4265, %v4261
          %v4462 = vpack.c.b16 %v4270, %v4266
          %v4463 = vpack.c.b16 %v4271, %v4267
          %v4464 = vpack.c.b16 %v4272, %v4268
          %v4465 = vpack.c.b16 %v4273, %v4269
          %v4466 = vpack.c.b16 %v4278, %v4274
          %v4467 = vpack.c.b16 %v4279, %v4275
          %v4468 = vpack.c.b16 %v4280, %v4276
          %v4469 = vpack.c.b16 %v4281, %v4277
          %v4470 = vpack.c.b16 %v4286, %v4282
          %v4471 = vpack.c.b16 %v4287, %v4283
          %v4472 = vpack.c.b16 %v4288, %v4284
          %v4473 = vpack.c.b16 %v4289, %v4285
          %v4474 = vpack.c.b16 %v4294, %v4290
          %v4475 = vpack.c.b16 %v4295, %v4291
          %v4476 = vpack.c.b16 %v4296, %v4292
          %v4477 = vpack.c.b16 %v4297, %v4293
          %v4478 = vpack.c.b16 %v4302, %v4298
          %v4479 = vpack.c.b16 %v4303, %v4299
          %v4480 = vpack.c.b16 %v4304, %v4300
          %v4481 = vpack.c.b16 %v4305, %v4301
          %v4482 = vpack.c.b16 %v4310, %v4306
          %v4483 = vpack.c.b16 %v4311, %v4307
          %v4484 = vpack.c.b16 %v4312, %v4308
          %v4485 = vpack.c.b16 %v4313, %v4309
          %v4486 = vpack.c.b16 %v4318, %v4314
          %v4487 = vpack.c.b16 %v4319, %v4315
          %v4488 = vpack.c.b16 %v4320, %v4316
          %v4489 = vpack.c.b16 %v4321, %v4317
          %v4490 = vpack.c.b16 %v4326, %v4322
          %v4491 = vpack.c.b16 %v4327, %v4323
          %v4492 = vpack.c.b16 %v4328, %v4324
          %v4493 = vpack.c.b16 %v4329, %v4325
          %v4494 = vpack.c.b16 %v4334, %v4330
          %v4495 = vpack.c.b16 %v4335, %v4331
          %v4496 = vpack.c.b16 %v4336, %v4332
          %v4497 = vpack.c.b16 %v4337, %v4333
          %v4498 = vpack.c.b16 %v4342, %v4338
          %v4499 = vpack.c.b16 %v4343, %v4339
          %v4500 = vpack.c.b16 %v4344, %v4340
          %v4501 = vpack.c.b16 %v4345, %v4341
          %v4502 = vpack.c.b16 %v4350, %v4346
          %v4503 = vpack.c.b16 %v4351, %v4347
          %v4504 = vpack.c.b16 %v4352, %v4348
          %v4505 = vpack.c.b16 %v4353, %v4349
          %v4506 = vpack.c.b16 %v4358, %v4354
          %v4507 = vpack.c.b16 %v4359, %v4355
          %v4508 = vpack.c.b16 %v4360, %v4356
          %v4509 = vpack.c.b16 %v4361, %v4357
          %v4510 = vpack.c.b16 %v4366, %v4362
          %v4511 = vpack.c.b16 %v4367, %v4363
          %v4512 = vpack.c.b16 %v4368, %v4364
          %v4513 = vpack.c.b16 %v4369, %v4365
          %v4514 = vpack.c.b16 %v4374, %v4370
          %v4515 = vpack.c.b16 %v4375, %v4371
          %v4516 = vpack.c.b16 %v4376, %v4372
          %v4517 = vpack.c.b16 %v4377, %v4373
          %v4518 = vpack.c.b16 %v4382, %v4378
          %v4519 = vpack.c.b16 %v4383, %v4379
          %v4520 = vpack.c.b16 %v4384, %v4380
          %v4521 = vpack.c.b16 %v4385, %v4381
          %v4522 = vpack.c.b16 %v4390, %v4386
          %v4523 = vpack.c.b16 %v4391, %v4387
          %v4524 = vpack.c.b16 %v4392, %v4388
          %v4525 = vpack.c.b16 %v4393, %v4389
          %v4526 = vpack.c.b16 %v4398, %v4394
          %v4527 = vpack.c.b16 %v4399, %v4395
          %v4528 = vpack.c.b16 %v4400, %v4396
          %v4529 = vpack.c.b16 %v4401, %v4397
          %4658 = vmatpush.bf16.msra.mxu0 %v4430
          %4659 = vmatpush.bf16.msra.mxu0 %v4426
          %4660 = vmatpush.bf16.msra.mxu0 %v4422
          %4661 = vmatpush.bf16.msra.mxu0 %v4418
          %4662 = vmatpush.bf16.msra.mxu0 %v4414
          %4663 = vmatpush.bf16.msra.mxu0 %v4410
          %4664 = vmatpush.bf16.msra.mxu0 %v4406
          %4665 = vmatpush.bf16.msra.mxu0 %v4402
          %4666 = vmatmul.bf16.gmra.mxu0 %v3886
          %v4667 = vpop.f32.mrf.mxu0
          %v4668 = vadd.f32 %v407, %v4667
          %v4669 = vpop.f32.mrf.mxu0
          %v4670 = vadd.f32 %v411, %v4669
          %4671 = vdwg.mxu0
          %4672 = vmatpush.bf16.msra.mxu0 %v4462
          %4673 = vmatpush.bf16.msra.mxu0 %v4458
          %4674 = vmatpush.bf16.msra.mxu0 %v4454
          %4675 = vmatpush.bf16.msra.mxu0 %v4450
          %4676 = vmatpush.bf16.msra.mxu0 %v4446
          %4677 = vmatpush.bf16.msra.mxu0 %v4442
          %4678 = vmatpush.bf16.msra.mxu0 %v4438
          %4679 = vmatpush.bf16.msra.mxu0 %v4434
          %4680 = vmatmul.bf16.gmra.mxu0 %v3887
          %v4681 = vpop.f32.mrf.mxu0
          %v4682 = vadd.f32 %v4668, %v4681
          %v4683 = vpop.f32.mrf.mxu0
          %v4684 = vadd.f32 %v4670, %v4683
          %4685 = vdwg.mxu0
          %4686 = vmatpush.bf16.msra.mxu0 %v4494
          %4687 = vmatpush.bf16.msra.mxu0 %v4490
          %4688 = vmatpush.bf16.msra.mxu0 %v4486
          %4689 = vmatpush.bf16.msra.mxu0 %v4482
          %4690 = vmatpush.bf16.msra.mxu0 %v4478
          %4691 = vmatpush.bf16.msra.mxu0 %v4474
          %4692 = vmatpush.bf16.msra.mxu0 %v4470
          %4693 = vmatpush.bf16.msra.mxu0 %v4466
          %4694 = vmatmul.bf16.gmra.mxu0 %v3888
          %v4695 = vpop.f32.mrf.mxu0
          %v4696 = vadd.f32 %v4682, %v4695
          %v4697 = vpop.f32.mrf.mxu0
          %v4698 = vadd.f32 %v4684, %v4697
          %4699 = vdwg.mxu0
          %4700 = vmatpush.bf16.msra.mxu0 %v4526
          %4701 = vmatpush.bf16.msra.mxu0 %v4522
          %4702 = vmatpush.bf16.msra.mxu0 %v4518
          %4703 = vmatpush.bf16.msra.mxu0 %v4514
          %4704 = vmatpush.bf16.msra.mxu0 %v4510
          %4705 = vmatpush.bf16.msra.mxu0 %v4506
          %4706 = vmatpush.bf16.msra.mxu0 %v4502
          %4707 = vmatpush.bf16.msra.mxu0 %v4498
          %4708 = vmatmul.bf16.gmra.mxu0 %v3889
          %v4709 = vpop.f32.mrf.mxu0
          %v4710 = vadd.f32 %v4696, %v4709
          %v4711 = vpop.f32.mrf.mxu0
          %v4712 = vadd.f32 %v4698, %v4711
          %4713 = vdwg.mxu0
          %4714 = vmatpush.bf16.msra.mxu0 %v4431
          %4715 = vmatpush.bf16.msra.mxu0 %v4427
          %4716 = vmatpush.bf16.msra.mxu0 %v4423
          %4717 = vmatpush.bf16.msra.mxu0 %v4419
          %4718 = vmatpush.bf16.msra.mxu0 %v4415
          %4719 = vmatpush.bf16.msra.mxu0 %v4411
          %4720 = vmatpush.bf16.msra.mxu0 %v4407
          %4721 = vmatpush.bf16.msra.mxu0 %v4403
          %4722 = vmatmul.bf16.gmra.mxu0 %v3886
          %v4723 = vpop.f32.mrf.mxu0
          %v4724 = vadd.f32 %v408, %v4723
          %v4725 = vpop.f32.mrf.mxu0
          %v4726 = vadd.f32 %v412, %v4725
          %4727 = vdwg.mxu0
          %4728 = vmatpush.bf16.msra.mxu0 %v4463
          %4729 = vmatpush.bf16.msra.mxu0 %v4459
          %4730 = vmatpush.bf16.msra.mxu0 %v4455
          %4731 = vmatpush.bf16.msra.mxu0 %v4451
          %4732 = vmatpush.bf16.msra.mxu0 %v4447
          %4733 = vmatpush.bf16.msra.mxu0 %v4443
          %4734 = vmatpush.bf16.msra.mxu0 %v4439
          %4735 = vmatpush.bf16.msra.mxu0 %v4435
          %4736 = vmatmul.bf16.gmra.mxu0 %v3887
          %v4737 = vpop.f32.mrf.mxu0
          %v4738 = vadd.f32 %v4724, %v4737
          %v4739 = vpop.f32.mrf.mxu0
          %v4740 = vadd.f32 %v4726, %v4739
          %4741 = vdwg.mxu0
          %4742 = vmatpush.bf16.msra.mxu0 %v4495
          %4743 = vmatpush.bf16.msra.mxu0 %v4491
          %4744 = vmatpush.bf16.msra.mxu0 %v4487
          %4745 = vmatpush.bf16.msra.mxu0 %v4483
          %4746 = vmatpush.bf16.msra.mxu0 %v4479
          %4747 = vmatpush.bf16.msra.mxu0 %v4475
          %4748 = vmatpush.bf16.msra.mxu0 %v4471
          %4749 = vmatpush.bf16.msra.mxu0 %v4467
          %4750 = vmatmul.bf16.gmra.mxu0 %v3888
          %v4751 = vpop.f32.mrf.mxu0
          %v4752 = vadd.f32 %v4738, %v4751
          %v4753 = vpop.f32.mrf.mxu0
          %v4754 = vadd.f32 %v4740, %v4753
          %4755 = vdwg.mxu0
          %4756 = vmatpush.bf16.msra.mxu0 %v4527
          %4757 = vmatpush.bf16.msra.mxu0 %v4523
          %4758 = vmatpush.bf16.msra.mxu0 %v4519
          %4759 = vmatpush.bf16.msra.mxu0 %v4515
          %4760 = vmatpush.bf16.msra.mxu0 %v4511
          %4761 = vmatpush.bf16.msra.mxu0 %v4507
          %4762 = vmatpush.bf16.msra.mxu0 %v4503
          %4763 = vmatpush.bf16.msra.mxu0 %v4499
          %4764 = vmatmul.bf16.gmra.mxu0 %v3889
          %v4765 = vpop.f32.mrf.mxu0
          %v4766 = vadd.f32 %v4752, %v4765
          %v4767 = vpop.f32.mrf.mxu0
          %v4768 = vadd.f32 %v4754, %v4767
          %4769 = vdwg.mxu0
          %4770 = vmatpush.bf16.msra.mxu0 %v4432
          %4771 = vmatpush.bf16.msra.mxu0 %v4428
          %4772 = vmatpush.bf16.msra.mxu0 %v4424
          %4773 = vmatpush.bf16.msra.mxu0 %v4420
          %4774 = vmatpush.bf16.msra.mxu0 %v4416
          %4775 = vmatpush.bf16.msra.mxu0 %v4412
          %4776 = vmatpush.bf16.msra.mxu0 %v4408
          %4777 = vmatpush.bf16.msra.mxu0 %v4404
          %4778 = vmatmul.bf16.gmra.mxu0 %v3886
          %v4779 = vpop.f32.mrf.mxu0
          %v4780 = vadd.f32 %v409, %v4779
          %v4781 = vpop.f32.mrf.mxu0
          %v4782 = vadd.f32 %v413, %v4781
          %4783 = vdwg.mxu0
          %4784 = vmatpush.bf16.msra.mxu0 %v4464
          %4785 = vmatpush.bf16.msra.mxu0 %v4460
          %4786 = vmatpush.bf16.msra.mxu0 %v4456
          %4787 = vmatpush.bf16.msra.mxu0 %v4452
          %4788 = vmatpush.bf16.msra.mxu0 %v4448
          %4789 = vmatpush.bf16.msra.mxu0 %v4444
          %4790 = vmatpush.bf16.msra.mxu0 %v4440
          %4791 = vmatpush.bf16.msra.mxu0 %v4436
          %4792 = vmatmul.bf16.gmra.mxu0 %v3887
          %v4793 = vpop.f32.mrf.mxu0
          %v4794 = vadd.f32 %v4780, %v4793
          %v4795 = vpop.f32.mrf.mxu0
          %v4796 = vadd.f32 %v4782, %v4795
          %4797 = vdwg.mxu0
          %4798 = vmatpush.bf16.msra.mxu0 %v4496
          %4799 = vmatpush.bf16.msra.mxu0 %v4492
          %4800 = vmatpush.bf16.msra.mxu0 %v4488
          %4801 = vmatpush.bf16.msra.mxu0 %v4484
          %4802 = vmatpush.bf16.msra.mxu0 %v4480
          %4803 = vmatpush.bf16.msra.mxu0 %v4476
          %4804 = vmatpush.bf16.msra.mxu0 %v4472
          %4805 = vmatpush.bf16.msra.mxu0 %v4468
          %4806 = vmatmul.bf16.gmra.mxu0 %v3888
          %v4807 = vpop.f32.mrf.mxu0
          %v4808 = vadd.f32 %v4794, %v4807
          %v4809 = vpop.f32.mrf.mxu0
          %v4810 = vadd.f32 %v4796, %v4809
          %4811 = vdwg.mxu0
          %4812 = vmatpush.bf16.msra.mxu0 %v4528
          %4813 = vmatpush.bf16.msra.mxu0 %v4524
          %4814 = vmatpush.bf16.msra.mxu0 %v4520
          %4815 = vmatpush.bf16.msra.mxu0 %v4516
          %4816 = vmatpush.bf16.msra.mxu0 %v4512
          %4817 = vmatpush.bf16.msra.mxu0 %v4508
          %4818 = vmatpush.bf16.msra.mxu0 %v4504
          %4819 = vmatpush.bf16.msra.mxu0 %v4500
          %4820 = vmatmul.bf16.gmra.mxu0 %v3889
          %v4821 = vpop.f32.mrf.mxu0
          %v4822 = vadd.f32 %v4808, %v4821
          %v4823 = vpop.f32.mrf.mxu0
          %v4824 = vadd.f32 %v4810, %v4823
          %4825 = vdwg.mxu0
          %4826 = vmatpush.bf16.msra.mxu0 %v4433
          %4827 = vmatpush.bf16.msra.mxu0 %v4429
          %4828 = vmatpush.bf16.msra.mxu0 %v4425
          %4829 = vmatpush.bf16.msra.mxu0 %v4421
          %4830 = vmatpush.bf16.msra.mxu0 %v4417
          %4831 = vmatpush.bf16.msra.mxu0 %v4413
          %4832 = vmatpush.bf16.msra.mxu0 %v4409
          %4833 = vmatpush.bf16.msra.mxu0 %v4405
          %4834 = vmatmul.bf16.gmra.mxu0 %v3886
          %v4835 = vpop.f32.mrf.mxu0
          %v4836 = vadd.f32 %v410, %v4835
          %v4837 = vpop.f32.mrf.mxu0
          %v4838 = vadd.f32 %v414, %v4837
          %4839 = vdwg.mxu0
          %4840 = vmatpush.bf16.msra.mxu0 %v4465
          %4841 = vmatpush.bf16.msra.mxu0 %v4461
          %4842 = vmatpush.bf16.msra.mxu0 %v4457
          %4843 = vmatpush.bf16.msra.mxu0 %v4453
          %4844 = vmatpush.bf16.msra.mxu0 %v4449
          %4845 = vmatpush.bf16.msra.mxu0 %v4445
          %4846 = vmatpush.bf16.msra.mxu0 %v4441
          %4847 = vmatpush.bf16.msra.mxu0 %v4437
          %4848 = vmatmul.bf16.gmra.mxu0 %v3887
          %v4849 = vpop.f32.mrf.mxu0
          %v4850 = vadd.f32 %v4836, %v4849
          %v4851 = vpop.f32.mrf.mxu0
          %v4852 = vadd.f32 %v4838, %v4851
          %4853 = vdwg.mxu0
          %4854 = vmatpush.bf16.msra.mxu0 %v4497
          %4855 = vmatpush.bf16.msra.mxu0 %v4493
          %4856 = vmatpush.bf16.msra.mxu0 %v4489
          %4857 = vmatpush.bf16.msra.mxu0 %v4485
          %4858 = vmatpush.bf16.msra.mxu0 %v4481
          %4859 = vmatpush.bf16.msra.mxu0 %v4477
          %4860 = vmatpush.bf16.msra.mxu0 %v4473
          %4861 = vmatpush.bf16.msra.mxu0 %v4469
          %4862 = vmatmul.bf16.gmra.mxu0 %v3888
          %v4863 = vpop.f32.mrf.mxu0
          %v4864 = vadd.f32 %v4850, %v4863
          %v4865 = vpop.f32.mrf.mxu0
          %v4866 = vadd.f32 %v4852, %v4865
          %4867 = vdwg.mxu0
          %4868 = vmatpush.bf16.msra.mxu0 %v4529
          %4869 = vmatpush.bf16.msra.mxu0 %v4525
          %4870 = vmatpush.bf16.msra.mxu0 %v4521
          %4871 = vmatpush.bf16.msra.mxu0 %v4517
          %4872 = vmatpush.bf16.msra.mxu0 %v4513
          %4873 = vmatpush.bf16.msra.mxu0 %v4509
          %4874 = vmatpush.bf16.msra.mxu0 %v4505
          %4875 = vmatpush.bf16.msra.mxu0 %v4501
          %4876 = vmatmul.bf16.gmra.mxu0 %v3889
          %v4877 = vpop.f32.mrf.mxu0
          %v4878 = vadd.f32 %v4864, %v4877
          %v4879 = vpop.f32.mrf.mxu0
          %v4880 = vadd.f32 %v4866, %v4879
          %4881 = vdwg.mxu0
          %v4882 = vadd.f32 %v4710, %v4766
          %v4883 = vadd.f32 %v4882, %v4822
          %v4884 = vadd.f32 %v4883, %v4878
          %4885 = vadd.xlane.f32.xlu0 %v4884
          %v4886 = vpop.xlane.xlu0 %4885
          %v4887 = vadd.f32 %v4712, %v4768
          %v4888 = vadd.f32 %v4887, %v4824
          %v4889 = vadd.f32 %v4888, %v4880
          %4890 = vadd.xlane.f32.xlu0 %v4889
          %v4891 = vpop.xlane.xlu0 %4890
          %v4892 = vrcp.pop 512.0
          %v4893 = vmul.f32 512.0, %v4892
          %v4894 = vsub.f32 1.0, %v4893
          %v4895 = vmul.f32 %v4892, %v4894
          %v4896 = vadd.f32 %v4892, %v4895
          %vm4897 = vweird.f32 %v4892
          %v4898 = vsel %vm4897, %v4892, %v4896
          %v4899 = vmul.f32 %v4886, %v4898
          %v4900 = vmul.f32 %v4891, %v4898
          %v4901 = vsub.f32 %v4710, %v4899
          %v4902 = vsub.f32 %v4766, %v4899
          %v4903 = vsub.f32 %v4822, %v4899
          %v4904 = vsub.f32 %v4878, %v4899
          %v4905 = vsub.f32 %v4712, %v4900
          %v4906 = vsub.f32 %v4768, %v4900
          %v4907 = vsub.f32 %v4824, %v4900
          %v4908 = vsub.f32 %v4880, %v4900
          %v4909 = vmul.f32 %v4901, %v4901
          %v4910 = vmul.f32 %v4902, %v4902
          %v4911 = vmul.f32 %v4903, %v4903
          %v4912 = vmul.f32 %v4904, %v4904
          %v4913 = vmul.f32 %v4905, %v4905
          %v4914 = vmul.f32 %v4906, %v4906
          %v4915 = vmul.f32 %v4907, %v4907
          %v4916 = vmul.f32 %v4908, %v4908
          %v4917 = vadd.f32 %v4909, %v4910
          %v4918 = vadd.f32 %v4917, %v4911
          %v4919 = vadd.f32 %v4918, %v4912
          %4920 = vadd.xlane.f32.xlu0 %v4919
          %v4921 = vpop.xlane.xlu0 %4920
          %v4922 = vadd.f32 %v4913, %v4914
          %v4923 = vadd.f32 %v4922, %v4915
          %v4924 = vadd.f32 %v4923, %v4916
          %4925 = vadd.xlane.f32.xlu0 %v4924
          %v4926 = vpop.xlane.xlu0 %4925
          %v4927 = vmul.f32 %v4921, %v4898
          %v4928 = vmul.f32 %v4926, %v4898
          %v4929 = vadd.f32 %v4927, 1e-05
          %v4930 = vadd.f32 %v4928, 1e-05
          %v4931 = vrsqrt.pop %v4929
          %v4932 = vmul.f32 %v4931, %v4929
          %v4933 = vmul.f32 %v4932, %v4931
          %v4934 = vmul.f32 0.5, %v4933
          %v4935 = vsub.f32 1.5, %v4934
          %v4936 = vmul.f32 %v4931, %v4935
          %vm4937 = vweird.f32 %v4929
          %vm4938 = vweird.f32 %v4931
          %vm4939 = vmor %vm4937, %vm4938
          %v4940 = vsel %vm4939, %v4931, %v4936
          %v4941 = vrsqrt.pop %v4930
          %v4942 = vmul.f32 %v4941, %v4930
          %v4943 = vmul.f32 %v4942, %v4941
          %v4944 = vmul.f32 0.5, %v4943
          %v4945 = vsub.f32 1.5, %v4944
          %v4946 = vmul.f32 %v4941, %v4945
          %vm4947 = vweird.f32 %v4930
          %vm4948 = vweird.f32 %v4941
          %vm4949 = vmor %vm4947, %vm4948
          %v4950 = vsel %vm4949, %v4941, %v4946
          %v4951 = vmul.f32 %v4901, %v4940
          %v4952 = vmul.f32 %v4902, %v4940
          %v4953 = vmul.f32 %v4903, %v4940
          %v4954 = vmul.f32 %v4904, %v4940
          %v4955 = vmul.f32 %v4905, %v4950
          %v4956 = vmul.f32 %v4906, %v4950
          %v4957 = vmul.f32 %v4907, %v4950
          %v4958 = vmul.f32 %v4908, %v4950
          %4959 = vst [vmem:[#allocation2] sm:$0xff] %v4951
          %4960 = vst [vmem:[#allocation2 + $0x8] sm:$0xff] %v4952
          %4961 = vst [vmem:[#allocation2 + $0x10] sm:$0xff] %v4953
          %4962 = vst [vmem:[#allocation2 + $0x18] sm:$0xff] %v4954
          %4963 = vst [vmem:[#allocation2 + $0x20] sm:$0xff] %v4955
          %4964 = vst [vmem:[#allocation2 + $0x28] sm:$0xff] %v4956
          %4965 = vst [vmem:[#allocation2 + $0x30] sm:$0xff] %v4957
          %4966 = vst [vmem:[#allocation2 + $0x38] sm:$0xff] %v4958
          %4967 = vst [vmem:[#allocation3] sm:$0xff] 0.0
          %4968 = vst [vmem:[#allocation3 + $0x8] sm:$0xff] 0.0
          %4969 = vst [vmem:[#allocation3 + $0x10] sm:$0xff] 0.0
          %4970 = vst [vmem:[#allocation3 + $0x18] sm:$0xff] 0.0
          %4971 = vst [vmem:[#allocation3 + $0x20] sm:$0xff] 0.0
          %4972 = vst [vmem:[#allocation3 + $0x28] sm:$0xff] 0.0
          %4973 = vst [vmem:[#allocation3 + $0x30] sm:$0xff] 0.0
          %4974 = vst [vmem:[#allocation3 + $0x38] sm:$0xff] 0.0
        $region64: #{encoder_layer.1} parent=51 // pred_fallthru
          _
        %v4975 = vld [vmem:[#allocation2] sm:$0xff]
        %v4976 = vld [vmem:[#allocation2 + $0x8] sm:$0xff]
        %v4977 = vld [vmem:[#allocation2 + $0x10] sm:$0xff]
        %v4978 = vld [vmem:[#allocation2 + $0x18] sm:$0xff]
        %v4979 = vld [vmem:[#allocation2 + $0x20] sm:$0xff]
        %v4980 = vld [vmem:[#allocation2 + $0x28] sm:$0xff]
        %v4981 = vld [vmem:[#allocation2 + $0x30] sm:$0xff]
        %v4982 = vld [vmem:[#allocation2 + $0x38] sm:$0xff]
        %v4983 = vld [vmem:[%s346] sm:$0xff]
        %v4984 = vld [vmem:[%s346 + $0x8] sm:$0xff]
        %v4985 = vld [vmem:[%s346 + $0x10] sm:$0xff]
        %v4986 = vld [vmem:[%s346 + $0x18] sm:$0xff]
        %v4987 = vld [vmem:[%s346 + $0x20] sm:$0xff]
        %v4988 = vld [vmem:[%s346 + $0x28] sm:$0xff]
        %v4989 = vld [vmem:[%s346 + $0x30] sm:$0xff]
        %v4990 = vld [vmem:[%s346 + $0x38] sm:$0xff]
        %v4991 = vld [vmem:[%s346 + $0x40] sm:$0xff]
        %v4992 = vld [vmem:[%s346 + $0x48] sm:$0xff]
        %v4993 = vld [vmem:[%s346 + $0x50] sm:$0xff]
        %v4994 = vld [vmem:[%s346 + $0x58] sm:$0xff]
        %v4995 = vld [vmem:[%s346 + $0x60] sm:$0xff]
        %v4996 = vld [vmem:[%s346 + $0x68] sm:$0xff]
        %v4997 = vld [vmem:[%s346 + $0x70] sm:$0xff]
        %v4998 = vld [vmem:[%s346 + $0x78] sm:$0xff]
        %v4999 = vld [vmem:[%s346 + $0x80] sm:$0xff]
        %v5000 = vld [vmem:[%s346 + $0x88] sm:$0xff]
        %v5001 = vld [vmem:[%s346 + $0x90] sm:$0xff]
        %v5002 = vld [vmem:[%s346 + $0x98] sm:$0xff]
        %v5003 = vld [vmem:[%s346 + $0xa0] sm:$0xff]
        %v5004 = vld [vmem:[%s346 + $0xa8] sm:$0xff]
        %v5005 = vld [vmem:[%s346 + $0xb0] sm:$0xff]
        %v5006 = vld [vmem:[%s346 + $0xb8] sm:$0xff]
        %v5007 = vld [vmem:[%s346 + $0xc0] sm:$0xff]
        %v5008 = vld [vmem:[%s346 + $0xc8] sm:$0xff]
        %v5009 = vld [vmem:[%s346 + $0xd0] sm:$0xff]
        %v5010 = vld [vmem:[%s346 + $0xd8] sm:$0xff]
        %v5011 = vld [vmem:[%s346 + $0xe0] sm:$0xff]
        %v5012 = vld [vmem:[%s346 + $0xe8] sm:$0xff]
        %v5013 = vld [vmem:[%s346 + $0xf0] sm:$0xff]
        %v5014 = vld [vmem:[%s346 + $0xf8] sm:$0xff]
        %v5015 = vld [vmem:[%s346 + $0x100] sm:$0xff]
        %v5016 = vld [vmem:[%s346 + $0x108] sm:$0xff]
        %v5017 = vld [vmem:[%s346 + $0x110] sm:$0xff]
        %v5018 = vld [vmem:[%s346 + $0x118] sm:$0xff]
        %v5019 = vld [vmem:[%s346 + $0x120] sm:$0xff]
        %v5020 = vld [vmem:[%s346 + $0x128] sm:$0xff]
        %v5021 = vld [vmem:[%s346 + $0x130] sm:$0xff]
        %v5022 = vld [vmem:[%s346 + $0x138] sm:$0xff]
        %v5023 = vld [vmem:[%s346 + $0x140] sm:$0xff]
        %v5024 = vld [vmem:[%s346 + $0x148] sm:$0xff]
        %v5025 = vld [vmem:[%s346 + $0x150] sm:$0xff]
        %v5026 = vld [vmem:[%s346 + $0x158] sm:$0xff]
        %v5027 = vld [vmem:[%s346 + $0x160] sm:$0xff]
        %v5028 = vld [vmem:[%s346 + $0x168] sm:$0xff]
        %v5029 = vld [vmem:[%s346 + $0x170] sm:$0xff]
        %v5030 = vld [vmem:[%s346 + $0x178] sm:$0xff]
        %v5031 = vld [vmem:[%s346 + $0x180] sm:$0xff]
        %v5032 = vld [vmem:[%s346 + $0x188] sm:$0xff]
        %v5033 = vld [vmem:[%s346 + $0x190] sm:$0xff]
        %v5034 = vld [vmem:[%s346 + $0x198] sm:$0xff]
        %v5035 = vld [vmem:[%s346 + $0x1a0] sm:$0xff]
        %v5036 = vld [vmem:[%s346 + $0x1a8] sm:$0xff]
        %v5037 = vld [vmem:[%s346 + $0x1b0] sm:$0xff]
        %v5038 = vld [vmem:[%s346 + $0x1b8] sm:$0xff]
        %v5039 = vld [vmem:[%s346 + $0x1c0] sm:$0xff]
        %v5040 = vld [vmem:[%s346 + $0x1c8] sm:$0xff]
        %v5041 = vld [vmem:[%s346 + $0x1d0] sm:$0xff]
        %v5042 = vld [vmem:[%s346 + $0x1d8] sm:$0xff]
        %v5043 = vld [vmem:[%s346 + $0x1e0] sm:$0xff]
        %v5044 = vld [vmem:[%s346 + $0x1e8] sm:$0xff]
        %v5045 = vld [vmem:[%s346 + $0x1f0] sm:$0xff]
        %v5046 = vld [vmem:[%s346 + $0x1f8] sm:$0xff]
        %v5047 = vunpack.c.0.s8 %v4983
        %v5048 = vunpack.c.0.s8 %v4984
        %v5049 = vunpack.c.0.s8 %v4985
        %v5050 = vunpack.c.0.s8 %v4986
        %v5051 = vunpack.c.1.s8 %v4983
        %v5052 = vunpack.c.1.s8 %v4984
        %v5053 = vunpack.c.1.s8 %v4985
        %v5054 = vunpack.c.1.s8 %v4986
        %v5055 = vunpack.c.2.s8 %v4983
        %v5056 = vunpack.c.2.s8 %v4984
        %v5057 = vunpack.c.2.s8 %v4985
        %v5058 = vunpack.c.2.s8 %v4986
        %v5059 = vunpack.c.3.s8 %v4983
        %v5060 = vunpack.c.3.s8 %v4984
        %v5061 = vunpack.c.3.s8 %v4985
        %v5062 = vunpack.c.3.s8 %v4986
        %v5063 = vunpack.c.0.s8 %v4987
        %v5064 = vunpack.c.0.s8 %v4988
        %v5065 = vunpack.c.0.s8 %v4989
        %v5066 = vunpack.c.0.s8 %v4990
        %v5067 = vunpack.c.1.s8 %v4987
        %v5068 = vunpack.c.1.s8 %v4988
        %v5069 = vunpack.c.1.s8 %v4989
        %v5070 = vunpack.c.1.s8 %v4990
        %v5071 = vunpack.c.2.s8 %v4987
        %v5072 = vunpack.c.2.s8 %v4988
        %v5073 = vunpack.c.2.s8 %v4989
        %v5074 = vunpack.c.2.s8 %v4990
        %v5075 = vunpack.c.3.s8 %v4987
        %v5076 = vunpack.c.3.s8 %v4988
        %v5077 = vunpack.c.3.s8 %v4989
        %v5078 = vunpack.c.3.s8 %v4990
        %v5079 = vunpack.c.0.s8 %v4991
        %v5080 = vunpack.c.0.s8 %v4992
        %v5081 = vunpack.c.0.s8 %v4993
        %v5082 = vunpack.c.0.s8 %v4994
        %v5083 = vunpack.c.1.s8 %v4991
        %v5084 = vunpack.c.1.s8 %v4992
        %v5085 = vunpack.c.1.s8 %v4993
        %v5086 = vunpack.c.1.s8 %v4994
        %v5087 = vunpack.c.2.s8 %v4991
        %v5088 = vunpack.c.2.s8 %v4992
        %v5089 = vunpack.c.2.s8 %v4993
        %v5090 = vunpack.c.2.s8 %v4994
        %v5091 = vunpack.c.3.s8 %v4991
        %v5092 = vunpack.c.3.s8 %v4992
        %v5093 = vunpack.c.3.s8 %v4993
        %v5094 = vunpack.c.3.s8 %v4994
        %v5095 = vunpack.c.0.s8 %v4995
        %v5096 = vunpack.c.0.s8 %v4996
        %v5097 = vunpack.c.0.s8 %v4997
        %v5098 = vunpack.c.0.s8 %v4998
        %v5099 = vunpack.c.1.s8 %v4995
        %v5100 = vunpack.c.1.s8 %v4996
        %v5101 = vunpack.c.1.s8 %v4997
        %v5102 = vunpack.c.1.s8 %v4998
        %v5103 = vunpack.c.2.s8 %v4995
        %v5104 = vunpack.c.2.s8 %v4996
        %v5105 = vunpack.c.2.s8 %v4997
        %v5106 = vunpack.c.2.s8 %v4998
        %v5107 = vunpack.c.3.s8 %v4995
        %v5108 = vunpack.c.3.s8 %v4996
        %v5109 = vunpack.c.3.s8 %v4997
        %v5110 = vunpack.c.3.s8 %v4998
        %v5111 = vunpack.c.0.s8 %v4999
        %v5112 = vunpack.c.0.s8 %v5000
        %v5113 = vunpack.c.0.s8 %v5001
        %v5114 = vunpack.c.0.s8 %v5002
        %v5115 = vunpack.c.1.s8 %v4999
        %v5116 = vunpack.c.1.s8 %v5000
        %v5117 = vunpack.c.1.s8 %v5001
        %v5118 = vunpack.c.1.s8 %v5002
        %v5119 = vunpack.c.2.s8 %v4999
        %v5120 = vunpack.c.2.s8 %v5000
        %v5121 = vunpack.c.2.s8 %v5001
        %v5122 = vunpack.c.2.s8 %v5002
        %v5123 = vunpack.c.3.s8 %v4999
        %v5124 = vunpack.c.3.s8 %v5000
        %v5125 = vunpack.c.3.s8 %v5001
        %v5126 = vunpack.c.3.s8 %v5002
        %v5127 = vunpack.c.0.s8 %v5003
        %v5128 = vunpack.c.0.s8 %v5004
        %v5129 = vunpack.c.0.s8 %v5005
        %v5130 = vunpack.c.0.s8 %v5006
        %v5131 = vunpack.c.1.s8 %v5003
        %v5132 = vunpack.c.1.s8 %v5004
        %v5133 = vunpack.c.1.s8 %v5005
        %v5134 = vunpack.c.1.s8 %v5006
        %v5135 = vunpack.c.2.s8 %v5003
        %v5136 = vunpack.c.2.s8 %v5004
        %v5137 = vunpack.c.2.s8 %v5005
        %v5138 = vunpack.c.2.s8 %v5006
        %v5139 = vunpack.c.3.s8 %v5003
        %v5140 = vunpack.c.3.s8 %v5004
        %v5141 = vunpack.c.3.s8 %v5005
        %v5142 = vunpack.c.3.s8 %v5006
        %v5143 = vunpack.c.0.s8 %v5007
        %v5144 = vunpack.c.0.s8 %v5008
        %v5145 = vunpack.c.0.s8 %v5009
        %v5146 = vunpack.c.0.s8 %v5010
        %v5147 = vunpack.c.1.s8 %v5007
        %v5148 = vunpack.c.1.s8 %v5008
        %v5149 = vunpack.c.1.s8 %v5009
        %v5150 = vunpack.c.1.s8 %v5010
        %v5151 = vunpack.c.2.s8 %v5007
        %v5152 = vunpack.c.2.s8 %v5008
        %v5153 = vunpack.c.2.s8 %v5009
        %v5154 = vunpack.c.2.s8 %v5010
        %v5155 = vunpack.c.3.s8 %v5007
        %v5156 = vunpack.c.3.s8 %v5008
        %v5157 = vunpack.c.3.s8 %v5009
        %v5158 = vunpack.c.3.s8 %v5010
        %v5159 = vunpack.c.0.s8 %v5011
        %v5160 = vunpack.c.0.s8 %v5012
        %v5161 = vunpack.c.0.s8 %v5013
        %v5162 = vunpack.c.0.s8 %v5014
        %v5163 = vunpack.c.1.s8 %v5011
        %v5164 = vunpack.c.1.s8 %v5012
        %v5165 = vunpack.c.1.s8 %v5013
        %v5166 = vunpack.c.1.s8 %v5014
        %v5167 = vunpack.c.2.s8 %v5011
        %v5168 = vunpack.c.2.s8 %v5012
        %v5169 = vunpack.c.2.s8 %v5013
        %v5170 = vunpack.c.2.s8 %v5014
        %v5171 = vunpack.c.3.s8 %v5011
        %v5172 = vunpack.c.3.s8 %v5012
        %v5173 = vunpack.c.3.s8 %v5013
        %v5174 = vunpack.c.3.s8 %v5014
        %v5175 = vunpack.c.0.s8 %v5015
        %v5176 = vunpack.c.0.s8 %v5016
        %v5177 = vunpack.c.0.s8 %v5017
        %v5178 = vunpack.c.0.s8 %v5018
        %v5179 = vunpack.c.1.s8 %v5015
        %v5180 = vunpack.c.1.s8 %v5016
        %v5181 = vunpack.c.1.s8 %v5017
        %v5182 = vunpack.c.1.s8 %v5018
        %v5183 = vunpack.c.2.s8 %v5015
        %v5184 = vunpack.c.2.s8 %v5016
        %v5185 = vunpack.c.2.s8 %v5017
        %v5186 = vunpack.c.2.s8 %v5018
        %v5187 = vunpack.c.3.s8 %v5015
        %v5188 = vunpack.c.3.s8 %v5016
        %v5189 = vunpack.c.3.s8 %v5017
        %v5190 = vunpack.c.3.s8 %v5018
        %v5191 = vunpack.c.0.s8 %v5019
        %v5192 = vunpack.c.0.s8 %v5020
        %v5193 = vunpack.c.0.s8 %v5021
        %v5194 = vunpack.c.0.s8 %v5022
        %v5195 = vunpack.c.1.s8 %v5019
        %v5196 = vunpack.c.1.s8 %v5020
        %v5197 = vunpack.c.1.s8 %v5021
        %v5198 = vunpack.c.1.s8 %v5022
        %v5199 = vunpack.c.2.s8 %v5019
        %v5200 = vunpack.c.2.s8 %v5020
        %v5201 = vunpack.c.2.s8 %v5021
        %v5202 = vunpack.c.2.s8 %v5022
        %v5203 = vunpack.c.3.s8 %v5019
        %v5204 = vunpack.c.3.s8 %v5020
        %v5205 = vunpack.c.3.s8 %v5021
        %v5206 = vunpack.c.3.s8 %v5022
        %v5207 = vunpack.c.0.s8 %v5023
        %v5208 = vunpack.c.0.s8 %v5024
        %v5209 = vunpack.c.0.s8 %v5025
        %v5210 = vunpack.c.0.s8 %v5026
        %v5211 = vunpack.c.1.s8 %v5023
        %v5212 = vunpack.c.1.s8 %v5024
        %v5213 = vunpack.c.1.s8 %v5025
        %v5214 = vunpack.c.1.s8 %v5026
        %v5215 = vunpack.c.2.s8 %v5023
        %v5216 = vunpack.c.2.s8 %v5024
        %v5217 = vunpack.c.2.s8 %v5025
        %v5218 = vunpack.c.2.s8 %v5026
        %v5219 = vunpack.c.3.s8 %v5023
        %v5220 = vunpack.c.3.s8 %v5024
        %v5221 = vunpack.c.3.s8 %v5025
        %v5222 = vunpack.c.3.s8 %v5026
        %v5223 = vunpack.c.0.s8 %v5027
        %v5224 = vunpack.c.0.s8 %v5028
        %v5225 = vunpack.c.0.s8 %v5029
        %v5226 = vunpack.c.0.s8 %v5030
        %v5227 = vunpack.c.1.s8 %v5027
        %v5228 = vunpack.c.1.s8 %v5028
        %v5229 = vunpack.c.1.s8 %v5029
        %v5230 = vunpack.c.1.s8 %v5030
        %v5231 = vunpack.c.2.s8 %v5027
        %v5232 = vunpack.c.2.s8 %v5028
        %v5233 = vunpack.c.2.s8 %v5029
        %v5234 = vunpack.c.2.s8 %v5030
        %v5235 = vunpack.c.3.s8 %v5027
        %v5236 = vunpack.c.3.s8 %v5028
        %v5237 = vunpack.c.3.s8 %v5029
        %v5238 = vunpack.c.3.s8 %v5030
        %v5239 = vunpack.c.0.s8 %v5031
        %v5240 = vunpack.c.0.s8 %v5032
        %v5241 = vunpack.c.0.s8 %v5033
        %v5242 = vunpack.c.0.s8 %v5034
        %v5243 = vunpack.c.1.s8 %v5031
        %v5244 = vunpack.c.1.s8 %v5032
        %v5245 = vunpack.c.1.s8 %v5033
        %v5246 = vunpack.c.1.s8 %v5034
        %v5247 = vunpack.c.2.s8 %v5031
        %v5248 = vunpack.c.2.s8 %v5032
        %v5249 = vunpack.c.2.s8 %v5033
        %v5250 = vunpack.c.2.s8 %v5034
        %v5251 = vunpack.c.3.s8 %v5031
        %v5252 = vunpack.c.3.s8 %v5032
        %v5253 = vunpack.c.3.s8 %v5033
        %v5254 = vunpack.c.3.s8 %v5034
        %v5255 = vunpack.c.0.s8 %v5035
        %v5256 = vunpack.c.0.s8 %v5036
        %v5257 = vunpack.c.0.s8 %v5037
        %v5258 = vunpack.c.0.s8 %v5038
        %v5259 = vunpack.c.1.s8 %v5035
        %v5260 = vunpack.c.1.s8 %v5036
        %v5261 = vunpack.c.1.s8 %v5037
        %v5262 = vunpack.c.1.s8 %v5038
        %v5263 = vunpack.c.2.s8 %v5035
        %v5264 = vunpack.c.2.s8 %v5036
        %v5265 = vunpack.c.2.s8 %v5037
        %v5266 = vunpack.c.2.s8 %v5038
        %v5267 = vunpack.c.3.s8 %v5035
        %v5268 = vunpack.c.3.s8 %v5036
        %v5269 = vunpack.c.3.s8 %v5037
        %v5270 = vunpack.c.3.s8 %v5038
        %v5271 = vunpack.c.0.s8 %v5039
        %v5272 = vunpack.c.0.s8 %v5040
        %v5273 = vunpack.c.0.s8 %v5041
        %v5274 = vunpack.c.0.s8 %v5042
        %v5275 = vunpack.c.1.s8 %v5039
        %v5276 = vunpack.c.1.s8 %v5040
        %v5277 = vunpack.c.1.s8 %v5041
        %v5278 = vunpack.c.1.s8 %v5042
        %v5279 = vunpack.c.2.s8 %v5039
        %v5280 = vunpack.c.2.s8 %v5040
        %v5281 = vunpack.c.2.s8 %v5041
        %v5282 = vunpack.c.2.s8 %v5042
        %v5283 = vunpack.c.3.s8 %v5039
        %v5284 = vunpack.c.3.s8 %v5040
        %v5285 = vunpack.c.3.s8 %v5041
        %v5286 = vunpack.c.3.s8 %v5042
        %v5287 = vunpack.c.0.s8 %v5043
        %v5288 = vunpack.c.0.s8 %v5044
        %v5289 = vunpack.c.0.s8 %v5045
        %v5290 = vunpack.c.0.s8 %v5046
        %v5291 = vunpack.c.1.s8 %v5043
        %v5292 = vunpack.c.1.s8 %v5044
        %v5293 = vunpack.c.1.s8 %v5045
        %v5294 = vunpack.c.1.s8 %v5046
        %v5295 = vunpack.c.2.s8 %v5043
        %v5296 = vunpack.c.2.s8 %v5044
        %v5297 = vunpack.c.2.s8 %v5045
        %v5298 = vunpack.c.2.s8 %v5046
        %v5299 = vunpack.c.3.s8 %v5043
        %v5300 = vunpack.c.3.s8 %v5044
        %v5301 = vunpack.c.3.s8 %v5045
        %v5302 = vunpack.c.3.s8 %v5046
        %v5303 = vcvt.s32.f32 %v5047
        %v5304 = vcvt.s32.f32 %v5048
        %v5305 = vcvt.s32.f32 %v5049
        %v5306 = vcvt.s32.f32 %v5050
        %v5307 = vcvt.s32.f32 %v5051
        %v5308 = vcvt.s32.f32 %v5052
        %v5309 = vcvt.s32.f32 %v5053
        %v5310 = vcvt.s32.f32 %v5054
        %v5311 = vcvt.s32.f32 %v5055
        %v5312 = vcvt.s32.f32 %v5056
        %v5313 = vcvt.s32.f32 %v5057
        %v5314 = vcvt.s32.f32 %v5058
        %v5315 = vcvt.s32.f32 %v5059
        %v5316 = vcvt.s32.f32 %v5060
        %v5317 = vcvt.s32.f32 %v5061
        %v5318 = vcvt.s32.f32 %v5062
        %v5319 = vcvt.s32.f32 %v5063
        %v5320 = vcvt.s32.f32 %v5064
        %v5321 = vcvt.s32.f32 %v5065
        %v5322 = vcvt.s32.f32 %v5066
        %v5323 = vcvt.s32.f32 %v5067
        %v5324 = vcvt.s32.f32 %v5068
        %v5325 = vcvt.s32.f32 %v5069
        %v5326 = vcvt.s32.f32 %v5070
        %v5327 = vcvt.s32.f32 %v5071
        %v5328 = vcvt.s32.f32 %v5072
        %v5329 = vcvt.s32.f32 %v5073
        %v5330 = vcvt.s32.f32 %v5074
        %v5331 = vcvt.s32.f32 %v5075
        %v5332 = vcvt.s32.f32 %v5076
        %v5333 = vcvt.s32.f32 %v5077
        %v5334 = vcvt.s32.f32 %v5078
        %v5335 = vcvt.s32.f32 %v5079
        %v5336 = vcvt.s32.f32 %v5080
        %v5337 = vcvt.s32.f32 %v5081
        %v5338 = vcvt.s32.f32 %v5082
        %v5339 = vcvt.s32.f32 %v5083
        %v5340 = vcvt.s32.f32 %v5084
        %v5341 = vcvt.s32.f32 %v5085
        %v5342 = vcvt.s32.f32 %v5086
        %v5343 = vcvt.s32.f32 %v5087
        %v5344 = vcvt.s32.f32 %v5088
        %v5345 = vcvt.s32.f32 %v5089
        %v5346 = vcvt.s32.f32 %v5090
        %v5347 = vcvt.s32.f32 %v5091
        %v5348 = vcvt.s32.f32 %v5092
        %v5349 = vcvt.s32.f32 %v5093
        %v5350 = vcvt.s32.f32 %v5094
        %v5351 = vcvt.s32.f32 %v5095
        %v5352 = vcvt.s32.f32 %v5096
        %v5353 = vcvt.s32.f32 %v5097
        %v5354 = vcvt.s32.f32 %v5098
        %v5355 = vcvt.s32.f32 %v5099
        %v5356 = vcvt.s32.f32 %v5100
        %v5357 = vcvt.s32.f32 %v5101
        %v5358 = vcvt.s32.f32 %v5102
        %v5359 = vcvt.s32.f32 %v5103
        %v5360 = vcvt.s32.f32 %v5104
        %v5361 = vcvt.s32.f32 %v5105
        %v5362 = vcvt.s32.f32 %v5106
        %v5363 = vcvt.s32.f32 %v5107
        %v5364 = vcvt.s32.f32 %v5108
        %v5365 = vcvt.s32.f32 %v5109
        %v5366 = vcvt.s32.f32 %v5110
        %v5367 = vcvt.s32.f32 %v5111
        %v5368 = vcvt.s32.f32 %v5112
        %v5369 = vcvt.s32.f32 %v5113
        %v5370 = vcvt.s32.f32 %v5114
        %v5371 = vcvt.s32.f32 %v5115
        %v5372 = vcvt.s32.f32 %v5116
        %v5373 = vcvt.s32.f32 %v5117
        %v5374 = vcvt.s32.f32 %v5118
        %v5375 = vcvt.s32.f32 %v5119
        %v5376 = vcvt.s32.f32 %v5120
        %v5377 = vcvt.s32.f32 %v5121
        %v5378 = vcvt.s32.f32 %v5122
        %v5379 = vcvt.s32.f32 %v5123
        %v5380 = vcvt.s32.f32 %v5124
        %v5381 = vcvt.s32.f32 %v5125
        %v5382 = vcvt.s32.f32 %v5126
        %v5383 = vcvt.s32.f32 %v5127
        %v5384 = vcvt.s32.f32 %v5128
        %v5385 = vcvt.s32.f32 %v5129
        %v5386 = vcvt.s32.f32 %v5130
        %v5387 = vcvt.s32.f32 %v5131
        %v5388 = vcvt.s32.f32 %v5132
        %v5389 = vcvt.s32.f32 %v5133
        %v5390 = vcvt.s32.f32 %v5134
        %v5391 = vcvt.s32.f32 %v5135
        %v5392 = vcvt.s32.f32 %v5136
        %v5393 = vcvt.s32.f32 %v5137
        %v5394 = vcvt.s32.f32 %v5138
        %v5395 = vcvt.s32.f32 %v5139
        %v5396 = vcvt.s32.f32 %v5140
        %v5397 = vcvt.s32.f32 %v5141
        %v5398 = vcvt.s32.f32 %v5142
        %v5399 = vcvt.s32.f32 %v5143
        %v5400 = vcvt.s32.f32 %v5144
        %v5401 = vcvt.s32.f32 %v5145
        %v5402 = vcvt.s32.f32 %v5146
        %v5403 = vcvt.s32.f32 %v5147
        %v5404 = vcvt.s32.f32 %v5148
        %v5405 = vcvt.s32.f32 %v5149
        %v5406 = vcvt.s32.f32 %v5150
        %v5407 = vcvt.s32.f32 %v5151
        %v5408 = vcvt.s32.f32 %v5152
        %v5409 = vcvt.s32.f32 %v5153
        %v5410 = vcvt.s32.f32 %v5154
        %v5411 = vcvt.s32.f32 %v5155
        %v5412 = vcvt.s32.f32 %v5156
        %v5413 = vcvt.s32.f32 %v5157
        %v5414 = vcvt.s32.f32 %v5158
        %v5415 = vcvt.s32.f32 %v5159
        %v5416 = vcvt.s32.f32 %v5160
        %v5417 = vcvt.s32.f32 %v5161
        %v5418 = vcvt.s32.f32 %v5162
        %v5419 = vcvt.s32.f32 %v5163
        %v5420 = vcvt.s32.f32 %v5164
        %v5421 = vcvt.s32.f32 %v5165
        %v5422 = vcvt.s32.f32 %v5166
        %v5423 = vcvt.s32.f32 %v5167
        %v5424 = vcvt.s32.f32 %v5168
        %v5425 = vcvt.s32.f32 %v5169
        %v5426 = vcvt.s32.f32 %v5170
        %v5427 = vcvt.s32.f32 %v5171
        %v5428 = vcvt.s32.f32 %v5172
        %v5429 = vcvt.s32.f32 %v5173
        %v5430 = vcvt.s32.f32 %v5174
        %v5431 = vcvt.s32.f32 %v5175
        %v5432 = vcvt.s32.f32 %v5176
        %v5433 = vcvt.s32.f32 %v5177
        %v5434 = vcvt.s32.f32 %v5178
        %v5435 = vcvt.s32.f32 %v5179
        %v5436 = vcvt.s32.f32 %v5180
        %v5437 = vcvt.s32.f32 %v5181
        %v5438 = vcvt.s32.f32 %v5182
        %v5439 = vcvt.s32.f32 %v5183
        %v5440 = vcvt.s32.f32 %v5184
        %v5441 = vcvt.s32.f32 %v5185
        %v5442 = vcvt.s32.f32 %v5186
        %v5443 = vcvt.s32.f32 %v5187
        %v5444 = vcvt.s32.f32 %v5188
        %v5445 = vcvt.s32.f32 %v5189
        %v5446 = vcvt.s32.f32 %v5190
        %v5447 = vcvt.s32.f32 %v5191
        %v5448 = vcvt.s32.f32 %v5192
        %v5449 = vcvt.s32.f32 %v5193
        %v5450 = vcvt.s32.f32 %v5194
        %v5451 = vcvt.s32.f32 %v5195
        %v5452 = vcvt.s32.f32 %v5196
        %v5453 = vcvt.s32.f32 %v5197
        %v5454 = vcvt.s32.f32 %v5198
        %v5455 = vcvt.s32.f32 %v5199
        %v5456 = vcvt.s32.f32 %v5200
        %v5457 = vcvt.s32.f32 %v5201
        %v5458 = vcvt.s32.f32 %v5202
        %v5459 = vcvt.s32.f32 %v5203
        %v5460 = vcvt.s32.f32 %v5204
        %v5461 = vcvt.s32.f32 %v5205
        %v5462 = vcvt.s32.f32 %v5206
        %v5463 = vcvt.s32.f32 %v5207
        %v5464 = vcvt.s32.f32 %v5208
        %v5465 = vcvt.s32.f32 %v5209
        %v5466 = vcvt.s32.f32 %v5210
        %v5467 = vcvt.s32.f32 %v5211
        %v5468 = vcvt.s32.f32 %v5212
        %v5469 = vcvt.s32.f32 %v5213
        %v5470 = vcvt.s32.f32 %v5214
        %v5471 = vcvt.s32.f32 %v5215
        %v5472 = vcvt.s32.f32 %v5216
        %v5473 = vcvt.s32.f32 %v5217
        %v5474 = vcvt.s32.f32 %v5218
        %v5475 = vcvt.s32.f32 %v5219
        %v5476 = vcvt.s32.f32 %v5220
        %v5477 = vcvt.s32.f32 %v5221
        %v5478 = vcvt.s32.f32 %v5222
        %v5479 = vcvt.s32.f32 %v5223
        %v5480 = vcvt.s32.f32 %v5224
        %v5481 = vcvt.s32.f32 %v5225
        %v5482 = vcvt.s32.f32 %v5226
        %v5483 = vcvt.s32.f32 %v5227
        %v5484 = vcvt.s32.f32 %v5228
        %v5485 = vcvt.s32.f32 %v5229
        %v5486 = vcvt.s32.f32 %v5230
        %v5487 = vcvt.s32.f32 %v5231
        %v5488 = vcvt.s32.f32 %v5232
        %v5489 = vcvt.s32.f32 %v5233
        %v5490 = vcvt.s32.f32 %v5234
        %v5491 = vcvt.s32.f32 %v5235
        %v5492 = vcvt.s32.f32 %v5236
        %v5493 = vcvt.s32.f32 %v5237
        %v5494 = vcvt.s32.f32 %v5238
        %v5495 = vcvt.s32.f32 %v5239
        %v5496 = vcvt.s32.f32 %v5240
        %v5497 = vcvt.s32.f32 %v5241
        %v5498 = vcvt.s32.f32 %v5242
        %v5499 = vcvt.s32.f32 %v5243
        %v5500 = vcvt.s32.f32 %v5244
        %v5501 = vcvt.s32.f32 %v5245
        %v5502 = vcvt.s32.f32 %v5246
        %v5503 = vcvt.s32.f32 %v5247
        %v5504 = vcvt.s32.f32 %v5248
        %v5505 = vcvt.s32.f32 %v5249
        %v5506 = vcvt.s32.f32 %v5250
        %v5507 = vcvt.s32.f32 %v5251
        %v5508 = vcvt.s32.f32 %v5252
        %v5509 = vcvt.s32.f32 %v5253
        %v5510 = vcvt.s32.f32 %v5254
        %v5511 = vcvt.s32.f32 %v5255
        %v5512 = vcvt.s32.f32 %v5256
        %v5513 = vcvt.s32.f32 %v5257
        %v5514 = vcvt.s32.f32 %v5258
        %v5515 = vcvt.s32.f32 %v5259
        %v5516 = vcvt.s32.f32 %v5260
        %v5517 = vcvt.s32.f32 %v5261
        %v5518 = vcvt.s32.f32 %v5262
        %v5519 = vcvt.s32.f32 %v5263
        %v5520 = vcvt.s32.f32 %v5264
        %v5521 = vcvt.s32.f32 %v5265
        %v5522 = vcvt.s32.f32 %v5266
        %v5523 = vcvt.s32.f32 %v5267
        %v5524 = vcvt.s32.f32 %v5268
        %v5525 = vcvt.s32.f32 %v5269
        %v5526 = vcvt.s32.f32 %v5270
        %v5527 = vcvt.s32.f32 %v5271
        %v5528 = vcvt.s32.f32 %v5272
        %v5529 = vcvt.s32.f32 %v5273
        %v5530 = vcvt.s32.f32 %v5274
        %v5531 = vcvt.s32.f32 %v5275
        %v5532 = vcvt.s32.f32 %v5276
        %v5533 = vcvt.s32.f32 %v5277
        %v5534 = vcvt.s32.f32 %v5278
        %v5535 = vcvt.s32.f32 %v5279
        %v5536 = vcvt.s32.f32 %v5280
        %v5537 = vcvt.s32.f32 %v5281
        %v5538 = vcvt.s32.f32 %v5282
        %v5539 = vcvt.s32.f32 %v5283
        %v5540 = vcvt.s32.f32 %v5284
        %v5541 = vcvt.s32.f32 %v5285
        %v5542 = vcvt.s32.f32 %v5286
        %v5543 = vcvt.s32.f32 %v5287
        %v5544 = vcvt.s32.f32 %v5288
        %v5545 = vcvt.s32.f32 %v5289
        %v5546 = vcvt.s32.f32 %v5290
        %v5547 = vcvt.s32.f32 %v5291
        %v5548 = vcvt.s32.f32 %v5292
        %v5549 = vcvt.s32.f32 %v5293
        %v5550 = vcvt.s32.f32 %v5294
        %v5551 = vcvt.s32.f32 %v5295
        %v5552 = vcvt.s32.f32 %v5296
        %v5553 = vcvt.s32.f32 %v5297
        %v5554 = vcvt.s32.f32 %v5298
        %v5555 = vcvt.s32.f32 %v5299
        %v5556 = vcvt.s32.f32 %v5300
        %v5557 = vcvt.s32.f32 %v5301
        %v5558 = vcvt.s32.f32 %v5302
        %v5559 = vpack.c.bf16 %v5307, %v5303
        %v5560 = vpack.c.bf16 %v5308, %v5304
        %v5561 = vpack.c.bf16 %v5309, %v5305
        %v5562 = vpack.c.bf16 %v5310, %v5306
        %v5563 = vpack.c.bf16 %v5315, %v5311
        %v5564 = vpack.c.bf16 %v5316, %v5312
        %v5565 = vpack.c.bf16 %v5317, %v5313
        %v5566 = vpack.c.bf16 %v5318, %v5314
        %v5567 = vpack.c.bf16 %v5323, %v5319
        %v5568 = vpack.c.bf16 %v5324, %v5320
        %v5569 = vpack.c.bf16 %v5325, %v5321
        %v5570 = vpack.c.bf16 %v5326, %v5322
        %v5571 = vpack.c.bf16 %v5331, %v5327
        %v5572 = vpack.c.bf16 %v5332, %v5328
        %v5573 = vpack.c.bf16 %v5333, %v5329
        %v5574 = vpack.c.bf16 %v5334, %v5330
        %v5575 = vpack.c.bf16 %v5339, %v5335
        %v5576 = vpack.c.bf16 %v5340, %v5336
        %v5577 = vpack.c.bf16 %v5341, %v5337
        %v5578 = vpack.c.bf16 %v5342, %v5338
        %v5579 = vpack.c.bf16 %v5347, %v5343
        %v5580 = vpack.c.bf16 %v5348, %v5344
        %v5581 = vpack.c.bf16 %v5349, %v5345
        %v5582 = vpack.c.bf16 %v5350, %v5346
        %v5583 = vpack.c.bf16 %v5355, %v5351
        %v5584 = vpack.c.bf16 %v5356, %v5352
        %v5585 = vpack.c.bf16 %v5357, %v5353
        %v5586 = vpack.c.bf16 %v5358, %v5354
        %v5587 = vpack.c.bf16 %v5363, %v5359
        %v5588 = vpack.c.bf16 %v5364, %v5360
        %v5589 = vpack.c.bf16 %v5365, %v5361
        %v5590 = vpack.c.bf16 %v5366, %v5362
        %v5591 = vpack.c.bf16 %v5371, %v5367
        %v5592 = vpack.c.bf16 %v5372, %v5368
        %v5593 = vpack.c.bf16 %v5373, %v5369
        %v5594 = vpack.c.bf16 %v5374, %v5370
        %v5595 = vpack.c.bf16 %v5379, %v5375
        %v5596 = vpack.c.bf16 %v5380, %v5376
        %v5597 = vpack.c.bf16 %v5381, %v5377
        %v5598 = vpack.c.bf16 %v5382, %v5378
        %v5599 = vpack.c.bf16 %v5387, %v5383
        %v5600 = vpack.c.bf16 %v5388, %v5384
        %v5601 = vpack.c.bf16 %v5389, %v5385
        %v5602 = vpack.c.bf16 %v5390, %v5386
        %v5603 = vpack.c.bf16 %v5395, %v5391
        %v5604 = vpack.c.bf16 %v5396, %v5392
        %v5605 = vpack.c.bf16 %v5397, %v5393
        %v5606 = vpack.c.bf16 %v5398, %v5394
        %v5607 = vpack.c.bf16 %v5403, %v5399
        %v5608 = vpack.c.bf16 %v5404, %v5400
        %v5609 = vpack.c.bf16 %v5405, %v5401
        %v5610 = vpack.c.bf16 %v5406, %v5402
        %v5611 = vpack.c.bf16 %v5411, %v5407
        %v5612 = vpack.c.bf16 %v5412, %v5408
        %v5613 = vpack.c.bf16 %v5413, %v5409
        %v5614 = vpack.c.bf16 %v5414, %v5410
        %v5615 = vpack.c.bf16 %v5419, %v5415
        %v5616 = vpack.c.bf16 %v5420, %v5416
        %v5617 = vpack.c.bf16 %v5421, %v5417
        %v5618 = vpack.c.bf16 %v5422, %v5418
        %v5619 = vpack.c.bf16 %v5427, %v5423
        %v5620 = vpack.c.bf16 %v5428, %v5424
        %v5621 = vpack.c.bf16 %v5429, %v5425
        %v5622 = vpack.c.bf16 %v5430, %v5426
        %v5623 = vpack.c.bf16 %v5435, %v5431
        %v5624 = vpack.c.bf16 %v5436, %v5432
        %v5625 = vpack.c.bf16 %v5437, %v5433
        %v5626 = vpack.c.bf16 %v5438, %v5434
        %v5627 = vpack.c.bf16 %v5443, %v5439
        %v5628 = vpack.c.bf16 %v5444, %v5440
        %v5629 = vpack.c.bf16 %v5445, %v5441
        %v5630 = vpack.c.bf16 %v5446, %v5442
        %v5631 = vpack.c.bf16 %v5451, %v5447
        %v5632 = vpack.c.bf16 %v5452, %v5448
        %v5633 = vpack.c.bf16 %v5453, %v5449
        %v5634 = vpack.c.bf16 %v5454, %v5450
        %v5635 = vpack.c.bf16 %v5459, %v5455
        %v5636 = vpack.c.bf16 %v5460, %v5456
        %v5637 = vpack.c.bf16 %v5461, %v5457
        %v5638 = vpack.c.bf16 %v5462, %v5458
        %v5639 = vpack.c.bf16 %v5467, %v5463
        %v5640 = vpack.c.bf16 %v5468, %v5464
        %v5641 = vpack.c.bf16 %v5469, %v5465
        %v5642 = vpack.c.bf16 %v5470, %v5466
        %v5643 = vpack.c.bf16 %v5475, %v5471
        %v5644 = vpack.c.bf16 %v5476, %v5472
        %v5645 = vpack.c.bf16 %v5477, %v5473
        %v5646 = vpack.c.bf16 %v5478, %v5474
        %v5647 = vpack.c.bf16 %v5483, %v5479
        %v5648 = vpack.c.bf16 %v5484, %v5480
        %v5649 = vpack.c.bf16 %v5485, %v5481
        %v5650 = vpack.c.bf16 %v5486, %v5482
        %v5651 = vpack.c.bf16 %v5491, %v5487
        %v5652 = vpack.c.bf16 %v5492, %v5488
        %v5653 = vpack.c.bf16 %v5493, %v5489
        %v5654 = vpack.c.bf16 %v5494, %v5490
        %v5655 = vpack.c.bf16 %v5499, %v5495
        %v5656 = vpack.c.bf16 %v5500, %v5496
        %v5657 = vpack.c.bf16 %v5501, %v5497
        %v5658 = vpack.c.bf16 %v5502, %v5498
        %v5659 = vpack.c.bf16 %v5507, %v5503
        %v5660 = vpack.c.bf16 %v5508, %v5504
        %v5661 = vpack.c.bf16 %v5509, %v5505
        %v5662 = vpack.c.bf16 %v5510, %v5506
        %v5663 = vpack.c.bf16 %v5515, %v5511
        %v5664 = vpack.c.bf16 %v5516, %v5512
        %v5665 = vpack.c.bf16 %v5517, %v5513
        %v5666 = vpack.c.bf16 %v5518, %v5514
        %v5667 = vpack.c.bf16 %v5523, %v5519
        %v5668 = vpack.c.bf16 %v5524, %v5520
        %v5669 = vpack.c.bf16 %v5525, %v5521
        %v5670 = vpack.c.bf16 %v5526, %v5522
        %v5671 = vpack.c.bf16 %v5531, %v5527
        %v5672 = vpack.c.bf16 %v5532, %v5528
        %v5673 = vpack.c.bf16 %v5533, %v5529
        %v5674 = vpack.c.bf16 %v5534, %v5530
        %v5675 = vpack.c.bf16 %v5539, %v5535
        %v5676 = vpack.c.bf16 %v5540, %v5536
        %v5677 = vpack.c.bf16 %v5541, %v5537
        %v5678 = vpack.c.bf16 %v5542, %v5538
        %v5679 = vpack.c.bf16 %v5547, %v5543
        %v5680 = vpack.c.bf16 %v5548, %v5544
        %v5681 = vpack.c.bf16 %v5549, %v5545
        %v5682 = vpack.c.bf16 %v5550, %v5546
        %v5683 = vpack.c.bf16 %v5555, %v5551
        %v5684 = vpack.c.bf16 %v5556, %v5552
        %v5685 = vpack.c.bf16 %v5557, %v5553
        %v5686 = vpack.c.bf16 %v5558, %v5554
        %v5687 = vpack.c.bf16 %v4979, %v4975
        %v5688 = vpack.c.bf16 %v4980, %v4976
        %v5689 = vpack.c.bf16 %v4981, %v4977
        %v5690 = vpack.c.bf16 %v4982, %v4978
        %5691 = vmatpush.bf16.msra.mxu0 %v5587
        %5692 = vmatpush.bf16.msra.mxu0 %v5583
        %5693 = vmatpush.bf16.msra.mxu0 %v5579
        %5694 = vmatpush.bf16.msra.mxu0 %v5575
        %5695 = vmatpush.bf16.msra.mxu0 %v5571
        %5696 = vmatpush.bf16.msra.mxu0 %v5567
        %5697 = vmatpush.bf16.msra.mxu0 %v5563
        %5698 = vmatpush.bf16.msra.mxu0 %v5559
        %5699 = vmatmul.bf16.gmra.mxu0 %v5687
        %v5700 = vpop.f32.mrf.mxu0
        %v5701 = vadd.f32 0.0, %v5700
        %v5702 = vpop.f32.mrf.mxu0
        %v5703 = vadd.f32 0.0, %v5702
        %5704 = vdwg.mxu0
        %5705 = vmatpush.bf16.msra.mxu0 %v5619
        %5706 = vmatpush.bf16.msra.mxu0 %v5615
        %5707 = vmatpush.bf16.msra.mxu0 %v5611
        %5708 = vmatpush.bf16.msra.mxu0 %v5607
        %5709 = vmatpush.bf16.msra.mxu0 %v5603
        %5710 = vmatpush.bf16.msra.mxu0 %v5599
        %5711 = vmatpush.bf16.msra.mxu0 %v5595
        %5712 = vmatpush.bf16.msra.mxu0 %v5591
        %5713 = vmatmul.bf16.gmra.mxu0 %v5688
        %v5714 = vpop.f32.mrf.mxu0
        %v5715 = vadd.f32 %v5701, %v5714
        %v5716 = vpop.f32.mrf.mxu0
        %v5717 = vadd.f32 %v5703, %v5716
        %5718 = vdwg.mxu0
        %5719 = vmatpush.bf16.msra.mxu0 %v5651
        %5720 = vmatpush.bf16.msra.mxu0 %v5647
        %5721 = vmatpush.bf16.msra.mxu0 %v5643
        %5722 = vmatpush.bf16.msra.mxu0 %v5639
        %5723 = vmatpush.bf16.msra.mxu0 %v5635
        %5724 = vmatpush.bf16.msra.mxu0 %v5631
        %5725 = vmatpush.bf16.msra.mxu0 %v5627
        %5726 = vmatpush.bf16.msra.mxu0 %v5623
        %5727 = vmatmul.bf16.gmra.mxu0 %v5689
        %v5728 = vpop.f32.mrf.mxu0
        %v5729 = vadd.f32 %v5715, %v5728
        %v5730 = vpop.f32.mrf.mxu0
        %v5731 = vadd.f32 %v5717, %v5730
        %5732 = vdwg.mxu0
        %5733 = vmatpush.bf16.msra.mxu0 %v5683
        %5734 = vmatpush.bf16.msra.mxu0 %v5679
        %5735 = vmatpush.bf16.msra.mxu0 %v5675
        %5736 = vmatpush.bf16.msra.mxu0 %v5671
        %5737 = vmatpush.bf16.msra.mxu0 %v5667
        %5738 = vmatpush.bf16.msra.mxu0 %v5663
        %5739 = vmatpush.bf16.msra.mxu0 %v5659
        %5740 = vmatpush.bf16.msra.mxu0 %v5655
        %5741 = vmatmul.bf16.gmra.mxu0 %v5690
        %v5742 = vpop.f32.mrf.mxu0
        %v5743 = vadd.f32 %v5729, %v5742
        %v5744 = vpop.f32.mrf.mxu0
        %v5745 = vadd.f32 %v5731, %v5744
        %5746 = vdwg.mxu0
        %5747 = vmatpush.bf16.msra.mxu0 %v5588
        %5748 = vmatpush.bf16.msra.mxu0 %v5584
        %5749 = vmatpush.bf16.msra.mxu0 %v5580
        %5750 = vmatpush.bf16.msra.mxu0 %v5576
        %5751 = vmatpush.bf16.msra.mxu0 %v5572
        %5752 = vmatpush.bf16.msra.mxu0 %v5568
        %5753 = vmatpush.bf16.msra.mxu0 %v5564
        %5754 = vmatpush.bf16.msra.mxu0 %v5560
        %5755 = vmatmul.bf16.gmra.mxu0 %v5687
        %v5756 = vpop.f32.mrf.mxu0
        %v5757 = vadd.f32 0.0, %v5756
        %v5758 = vpop.f32.mrf.mxu0
        %v5759 = vadd.f32 0.0, %v5758
        %5760 = vdwg.mxu0
        %5761 = vmatpush.bf16.msra.mxu0 %v5620
        %5762 = vmatpush.bf16.msra.mxu0 %v5616
        %5763 = vmatpush.bf16.msra.mxu0 %v5612
        %5764 = vmatpush.bf16.msra.mxu0 %v5608
        %5765 = vmatpush.bf16.msra.mxu0 %v5604
        %5766 = vmatpush.bf16.msra.mxu0 %v5600
        %5767 = vmatpush.bf16.msra.mxu0 %v5596
        %5768 = vmatpush.bf16.msra.mxu0 %v5592
        %5769 = vmatmul.bf16.gmra.mxu0 %v5688
        %v5770 = vpop.f32.mrf.mxu0
        %v5771 = vadd.f32 %v5757, %v5770
        %v5772 = vpop.f32.mrf.mxu0
        %v5773 = vadd.f32 %v5759, %v5772
        %5774 = vdwg.mxu0
        %5775 = vmatpush.bf16.msra.mxu0 %v5652
        %5776 = vmatpush.bf16.msra.mxu0 %v5648
        %5777 = vmatpush.bf16.msra.mxu0 %v5644
        %5778 = vmatpush.bf16.msra.mxu0 %v5640
        %5779 = vmatpush.bf16.msra.mxu0 %v5636
        %5780 = vmatpush.bf16.msra.mxu0 %v5632
        %5781 = vmatpush.bf16.msra.mxu0 %v5628
        %5782 = vmatpush.bf16.msra.mxu0 %v5624
        %5783 = vmatmul.bf16.gmra.mxu0 %v5689
        %v5784 = vpop.f32.mrf.mxu0
        %v5785 = vadd.f32 %v5771, %v5784
        %v5786 = vpop.f32.mrf.mxu0
        %v5787 = vadd.f32 %v5773, %v5786
        %5788 = vdwg.mxu0
        %5789 = vmatpush.bf16.msra.mxu0 %v5684
        %5790 = vmatpush.bf16.msra.mxu0 %v5680
        %5791 = vmatpush.bf16.msra.mxu0 %v5676
        %5792 = vmatpush.bf16.msra.mxu0 %v5672
        %5793 = vmatpush.bf16.msra.mxu0 %v5668
        %5794 = vmatpush.bf16.msra.mxu0 %v5664
        %5795 = vmatpush.bf16.msra.mxu0 %v5660
        %5796 = vmatpush.bf16.msra.mxu0 %v5656
        %5797 = vmatmul.bf16.gmra.mxu0 %v5690
        %v5798 = vpop.f32.mrf.mxu0
        %v5799 = vadd.f32 %v5785, %v5798
        %v5800 = vpop.f32.mrf.mxu0
        %v5801 = vadd.f32 %v5787, %v5800
        %5802 = vdwg.mxu0
        %5803 = vmatpush.bf16.msra.mxu0 %v5589
        %5804 = vmatpush.bf16.msra.mxu0 %v5585
        %5805 = vmatpush.bf16.msra.mxu0 %v5581
        %5806 = vmatpush.bf16.msra.mxu0 %v5577
        %5807 = vmatpush.bf16.msra.mxu0 %v5573
        %5808 = vmatpush.bf16.msra.mxu0 %v5569
        %5809 = vmatpush.bf16.msra.mxu0 %v5565
        %5810 = vmatpush.bf16.msra.mxu0 %v5561
        %5811 = vmatmul.bf16.gmra.mxu0 %v5687
        %v5812 = vpop.f32.mrf.mxu0
        %v5813 = vadd.f32 0.0, %v5812
        %v5814 = vpop.f32.mrf.mxu0
        %v5815 = vadd.f32 0.0, %v5814
        %5816 = vdwg.mxu0
        %5817 = vmatpush.bf16.msra.mxu0 %v5621
        %5818 = vmatpush.bf16.msra.mxu0 %v5617
        %5819 = vmatpush.bf16.msra.mxu0 %v5613
        %5820 = vmatpush.bf16.msra.mxu0 %v5609
        %5821 = vmatpush.bf16.msra.mxu0 %v5605
        %5822 = vmatpush.bf16.msra.mxu0 %v5601
        %5823 = vmatpush.bf16.msra.mxu0 %v5597
        %5824 = vmatpush.bf16.msra.mxu0 %v5593
        %5825 = vmatmul.bf16.gmra.mxu0 %v5688
        %v5826 = vpop.f32.mrf.mxu0
        %v5827 = vadd.f32 %v5813, %v5826
        %v5828 = vpop.f32.mrf.mxu0
        %v5829 = vadd.f32 %v5815, %v5828
        %5830 = vdwg.mxu0
        %5831 = vmatpush.bf16.msra.mxu0 %v5653
        %5832 = vmatpush.bf16.msra.mxu0 %v5649
        %5833 = vmatpush.bf16.msra.mxu0 %v5645
        %5834 = vmatpush.bf16.msra.mxu0 %v5641
        %5835 = vmatpush.bf16.msra.mxu0 %v5637
        %5836 = vmatpush.bf16.msra.mxu0 %v5633
        %5837 = vmatpush.bf16.msra.mxu0 %v5629
        %5838 = vmatpush.bf16.msra.mxu0 %v5625
        %5839 = vmatmul.bf16.gmra.mxu0 %v5689
        %v5840 = vpop.f32.mrf.mxu0
        %v5841 = vadd.f32 %v5827, %v5840
        %v5842 = vpop.f32.mrf.mxu0
        %v5843 = vadd.f32 %v5829, %v5842
        %5844 = vdwg.mxu0
        %5845 = vmatpush.bf16.msra.mxu0 %v5685
        %5846 = vmatpush.bf16.msra.mxu0 %v5681
        %5847 = vmatpush.bf16.msra.mxu0 %v5677
        %5848 = vmatpush.bf16.msra.mxu0 %v5673
        %5849 = vmatpush.bf16.msra.mxu0 %v5669
        %5850 = vmatpush.bf16.msra.mxu0 %v5665
        %5851 = vmatpush.bf16.msra.mxu0 %v5661
        %5852 = vmatpush.bf16.msra.mxu0 %v5657
        %5853 = vmatmul.bf16.gmra.mxu0 %v5690
        %v5854 = vpop.f32.mrf.mxu0
        %v5855 = vadd.f32 %v5841, %v5854
        %v5856 = vpop.f32.mrf.mxu0
        %v5857 = vadd.f32 %v5843, %v5856
        %5858 = vdwg.mxu0
        %5859 = vmatpush.bf16.msra.mxu0 %v5590
        %5860 = vmatpush.bf16.msra.mxu0 %v5586
        %5861 = vmatpush.bf16.msra.mxu0 %v5582
        %5862 = vmatpush.bf16.msra.mxu0 %v5578
        %5863 = vmatpush.bf16.msra.mxu0 %v5574
        %5864 = vmatpush.bf16.msra.mxu0 %v5570
        %5865 = vmatpush.bf16.msra.mxu0 %v5566
        %5866 = vmatpush.bf16.msra.mxu0 %v5562
        %5867 = vmatmul.bf16.gmra.mxu0 %v5687
        %v5868 = vpop.f32.mrf.mxu0
        %v5869 = vadd.f32 0.0, %v5868
        %v5870 = vpop.f32.mrf.mxu0
        %v5871 = vadd.f32 0.0, %v5870
        %5872 = vdwg.mxu0
        %5873 = vmatpush.bf16.msra.mxu0 %v5622
        %5874 = vmatpush.bf16.msra.mxu0 %v5618
        %5875 = vmatpush.bf16.msra.mxu0 %v5614
        %5876 = vmatpush.bf16.msra.mxu0 %v5610
        %5877 = vmatpush.bf16.msra.mxu0 %v5606
        %5878 = vmatpush.bf16.msra.mxu0 %v5602
        %5879 = vmatpush.bf16.msra.mxu0 %v5598
        %5880 = vmatpush.bf16.msra.mxu0 %v5594
        %5881 = vmatmul.bf16.gmra.mxu0 %v5688
        %v5882 = vpop.f32.mrf.mxu0
        %v5883 = vadd.f32 %v5869, %v5882
        %v5884 = vpop.f32.mrf.mxu0
        %v5885 = vadd.f32 %v5871, %v5884
        %5886 = vdwg.mxu0
        %5887 = vmatpush.bf16.msra.mxu0 %v5654
        %5888 = vmatpush.bf16.msra.mxu0 %v5650
        %5889 = vmatpush.bf16.msra.mxu0 %v5646
        %5890 = vmatpush.bf16.msra.mxu0 %v5642
        %5891 = vmatpush.bf16.msra.mxu0 %v5638
        %5892 = vmatpush.bf16.msra.mxu0 %v5634
        %5893 = vmatpush.bf16.msra.mxu0 %v5630
        %5894 = vmatpush.bf16.msra.mxu0 %v5626
        %5895 = vmatmul.bf16.gmra.mxu0 %v5689
        %v5896 = vpop.f32.mrf.mxu0
        %v5897 = vadd.f32 %v5883, %v5896
        %v5898 = vpop.f32.mrf.mxu0
        %v5899 = vadd.f32 %v5885, %v5898
        %5900 = vdwg.mxu0
        %5901 = vmatpush.bf16.msra.mxu0 %v5686
        %5902 = vmatpush.bf16.msra.mxu0 %v5682
        %5903 = vmatpush.bf16.msra.mxu0 %v5678
        %5904 = vmatpush.bf16.msra.mxu0 %v5674
        %5905 = vmatpush.bf16.msra.mxu0 %v5670
        %5906 = vmatpush.bf16.msra.mxu0 %v5666
        %5907 = vmatpush.bf16.msra.mxu0 %v5662
        %5908 = vmatpush.bf16.msra.mxu0 %v5658
        %5909 = vmatmul.bf16.gmra.mxu0 %v5690
        %v5910 = vpop.f32.mrf.mxu0
        %v5911 = vadd.f32 %v5897, %v5910
        %v5912 = vpop.f32.mrf.mxu0
        %v5913 = vadd.f32 %v5899, %v5912
        %5914 = vdwg.mxu0
        %v5915 = vld [vmem:[%s400] sm:$0xf]
        %v5917 = vperm.slane %v5915, 0
        %v5918 = vperm.slane %v5915, 1
        %v5919 = vperm.slane %v5915, 2
        %v5920 = vperm.slane %v5915, 3
        %v5925 = vmul.f32 %v5743, %v5917
        %v5926 = vmul.f32 %v5799, %v5918
        %v5927 = vmul.f32 %v5855, %v5919
        %v5928 = vmul.f32 %v5911, %v5920
        %v5929 = vmul.f32 %v5745, %v5917
        %v5930 = vmul.f32 %v5801, %v5918
        %v5931 = vmul.f32 %v5857, %v5919
        %v5932 = vmul.f32 %v5913, %v5920
        %v5933 = vmax.f32 %v5925, 0.0
        %v5934 = vmax.f32 %v5926, 0.0
        %v5935 = vmax.f32 %v5927, 0.0
        %v5936 = vmax.f32 %v5928, 0.0
        %v5937 = vmax.f32 %v5929, 0.0
        %v5938 = vmax.f32 %v5930, 0.0
        %v5939 = vmax.f32 %v5931, 0.0
        %v5940 = vmax.f32 %v5932, 0.0
        %v5941 = vld [vmem:[%s356] sm:$0xff]
        %v5942 = vld [vmem:[%s356 + $0x8] sm:$0xff]
        %v5943 = vld [vmem:[%s356 + $0x10] sm:$0xff]
        %v5944 = vld [vmem:[%s356 + $0x18] sm:$0xff]
        %v5945 = vld [vmem:[%s356 + $0x20] sm:$0xff]
        %v5946 = vld [vmem:[%s356 + $0x28] sm:$0xff]
        %v5947 = vld [vmem:[%s356 + $0x30] sm:$0xff]
        %v5948 = vld [vmem:[%s356 + $0x38] sm:$0xff]
        %v5949 = vld [vmem:[%s356 + $0x40] sm:$0xff]
        %v5950 = vld [vmem:[%s356 + $0x48] sm:$0xff]
        %v5951 = vld [vmem:[%s356 + $0x50] sm:$0xff]
        %v5952 = vld [vmem:[%s356 + $0x58] sm:$0xff]
        %v5953 = vld [vmem:[%s356 + $0x60] sm:$0xff]
        %v5954 = vld [vmem:[%s356 + $0x68] sm:$0xff]
        %v5955 = vld [vmem:[%s356 + $0x70] sm:$0xff]
        %v5956 = vld [vmem:[%s356 + $0x78] sm:$0xff]
        %v5957 = vld [vmem:[%s356 + $0x80] sm:$0xff]
        %v5958 = vld [vmem:[%s356 + $0x88] sm:$0xff]
        %v5959 = vld [vmem:[%s356 + $0x90] sm:$0xff]
        %v5960 = vld [vmem:[%s356 + $0x98] sm:$0xff]
        %v5961 = vld [vmem:[%s356 + $0xa0] sm:$0xff]
        %v5962 = vld [vmem:[%s356 + $0xa8] sm:$0xff]
        %v5963 = vld [vmem:[%s356 + $0xb0] sm:$0xff]
        %v5964 = vld [vmem:[%s356 + $0xb8] sm:$0xff]
        %v5965 = vld [vmem:[%s356 + $0xc0] sm:$0xff]
        %v5966 = vld [vmem:[%s356 + $0xc8] sm:$0xff]
        %v5967 = vld [vmem:[%s356 + $0xd0] sm:$0xff]
        %v5968 = vld [vmem:[%s356 + $0xd8] sm:$0xff]
        %v5969 = vld [vmem:[%s356 + $0xe0] sm:$0xff]
        %v5970 = vld [vmem:[%s356 + $0xe8] sm:$0xff]
        %v5971 = vld [vmem:[%s356 + $0xf0] sm:$0xff]
        %v5972 = vld [vmem:[%s356 + $0xf8] sm:$0xff]
        %v5973 = vld [vmem:[%s356 + $0x100] sm:$0xff]
        %v5974 = vld [vmem:[%s356 + $0x108] sm:$0xff]
        %v5975 = vld [vmem:[%s356 + $0x110] sm:$0xff]
        %v5976 = vld [vmem:[%s356 + $0x118] sm:$0xff]
        %v5977 = vld [vmem:[%s356 + $0x120] sm:$0xff]
        %v5978 = vld [vmem:[%s356 + $0x128] sm:$0xff]
        %v5979 = vld [vmem:[%s356 + $0x130] sm:$0xff]
        %v5980 = vld [vmem:[%s356 + $0x138] sm:$0xff]
        %v5981 = vld [vmem:[%s356 + $0x140] sm:$0xff]
        %v5982 = vld [vmem:[%s356 + $0x148] sm:$0xff]
        %v5983 = vld [vmem:[%s356 + $0x150] sm:$0xff]
        %v5984 = vld [vmem:[%s356 + $0x158] sm:$0xff]
        %v5985 = vld [vmem:[%s356 + $0x160] sm:$0xff]
        %v5986 = vld [vmem:[%s356 + $0x168] sm:$0xff]
        %v5987 = vld [vmem:[%s356 + $0x170] sm:$0xff]
        %v5988 = vld [vmem:[%s356 + $0x178] sm:$0xff]
        %v5989 = vld [vmem:[%s356 + $0x180] sm:$0xff]
        %v5990 = vld [vmem:[%s356 + $0x188] sm:$0xff]
        %v5991 = vld [vmem:[%s356 + $0x190] sm:$0xff]
        %v5992 = vld [vmem:[%s356 + $0x198] sm:$0xff]
        %v5993 = vld [vmem:[%s356 + $0x1a0] sm:$0xff]
        %v5994 = vld [vmem:[%s356 + $0x1a8] sm:$0xff]
        %v5995 = vld [vmem:[%s356 + $0x1b0] sm:$0xff]
        %v5996 = vld [vmem:[%s356 + $0x1b8] sm:$0xff]
        %v5997 = vld [vmem:[%s356 + $0x1c0] sm:$0xff]
        %v5998 = vld [vmem:[%s356 + $0x1c8] sm:$0xff]
        %v5999 = vld [vmem:[%s356 + $0x1d0] sm:$0xff]
        %v6000 = vld [vmem:[%s356 + $0x1d8] sm:$0xff]
        %v6001 = vld [vmem:[%s356 + $0x1e0] sm:$0xff]
        %v6002 = vld [vmem:[%s356 + $0x1e8] sm:$0xff]
        %v6003 = vld [vmem:[%s356 + $0x1f0] sm:$0xff]
        %v6004 = vld [vmem:[%s356 + $0x1f8] sm:$0xff]
        %v6005 = vunpack.c.0.s8 %v5941
        %v6006 = vunpack.c.0.s8 %v5942
        %v6007 = vunpack.c.0.s8 %v5943
        %v6008 = vunpack.c.0.s8 %v5944
        %v6009 = vunpack.c.1.s8 %v5941
        %v6010 = vunpack.c.1.s8 %v5942
        %v6011 = vunpack.c.1.s8 %v5943
        %v6012 = vunpack.c.1.s8 %v5944
        %v6013 = vunpack.c.2.s8 %v5941
        %v6014 = vunpack.c.2.s8 %v5942
        %v6015 = vunpack.c.2.s8 %v5943
        %v6016 = vunpack.c.2.s8 %v5944
        %v6017 = vunpack.c.3.s8 %v5941
        %v6018 = vunpack.c.3.s8 %v5942
        %v6019 = vunpack.c.3.s8 %v5943
        %v6020 = vunpack.c.3.s8 %v5944
        %v6021 = vunpack.c.0.s8 %v5945
        %v6022 = vunpack.c.0.s8 %v5946
        %v6023 = vunpack.c.0.s8 %v5947
        %v6024 = vunpack.c.0.s8 %v5948
        %v6025 = vunpack.c.1.s8 %v5945
        %v6026 = vunpack.c.1.s8 %v5946
        %v6027 = vunpack.c.1.s8 %v5947
        %v6028 = vunpack.c.1.s8 %v5948
        %v6029 = vunpack.c.2.s8 %v5945
        %v6030 = vunpack.c.2.s8 %v5946
        %v6031 = vunpack.c.2.s8 %v5947
        %v6032 = vunpack.c.2.s8 %v5948
        %v6033 = vunpack.c.3.s8 %v5945
        %v6034 = vunpack.c.3.s8 %v5946
        %v6035 = vunpack.c.3.s8 %v5947
        %v6036 = vunpack.c.3.s8 %v5948
        %v6037 = vunpack.c.0.s8 %v5949
        %v6038 = vunpack.c.0.s8 %v5950
        %v6039 = vunpack.c.0.s8 %v5951
        %v6040 = vunpack.c.0.s8 %v5952
        %v6041 = vunpack.c.1.s8 %v5949
        %v6042 = vunpack.c.1.s8 %v5950
        %v6043 = vunpack.c.1.s8 %v5951
        %v6044 = vunpack.c.1.s8 %v5952
        %v6045 = vunpack.c.2.s8 %v5949
        %v6046 = vunpack.c.2.s8 %v5950
        %v6047 = vunpack.c.2.s8 %v5951
        %v6048 = vunpack.c.2.s8 %v5952
        %v6049 = vunpack.c.3.s8 %v5949
        %v6050 = vunpack.c.3.s8 %v5950
        %v6051 = vunpack.c.3.s8 %v5951
        %v6052 = vunpack.c.3.s8 %v5952
        %v6053 = vunpack.c.0.s8 %v5953
        %v6054 = vunpack.c.0.s8 %v5954
        %v6055 = vunpack.c.0.s8 %v5955
        %v6056 = vunpack.c.0.s8 %v5956
        %v6057 = vunpack.c.1.s8 %v5953
        %v6058 = vunpack.c.1.s8 %v5954
        %v6059 = vunpack.c.1.s8 %v5955
        %v6060 = vunpack.c.1.s8 %v5956
        %v6061 = vunpack.c.2.s8 %v5953
        %v6062 = vunpack.c.2.s8 %v5954
        %v6063 = vunpack.c.2.s8 %v5955
        %v6064 = vunpack.c.2.s8 %v5956
        %v6065 = vunpack.c.3.s8 %v5953
        %v6066 = vunpack.c.3.s8 %v5954
        %v6067 = vunpack.c.3.s8 %v5955
        %v6068 = vunpack.c.3.s8 %v5956
        %v6069 = vunpack.c.0.s8 %v5957
        %v6070 = vunpack.c.0.s8 %v5958
        %v6071 = vunpack.c.0.s8 %v5959
        %v6072 = vunpack.c.0.s8 %v5960
        %v6073 = vunpack.c.1.s8 %v5957
        %v6074 = vunpack.c.1.s8 %v5958
        %v6075 = vunpack.c.1.s8 %v5959
        %v6076 = vunpack.c.1.s8 %v5960
        %v6077 = vunpack.c.2.s8 %v5957
        %v6078 = vunpack.c.2.s8 %v5958
        %v6079 = vunpack.c.2.s8 %v5959
        %v6080 = vunpack.c.2.s8 %v5960
        %v6081 = vunpack.c.3.s8 %v5957
        %v6082 = vunpack.c.3.s8 %v5958
        %v6083 = vunpack.c.3.s8 %v5959
        %v6084 = vunpack.c.3.s8 %v5960
        %v6085 = vunpack.c.0.s8 %v5961
        %v6086 = vunpack.c.0.s8 %v5962
        %v6087 = vunpack.c.0.s8 %v5963
        %v6088 = vunpack.c.0.s8 %v5964
        %v6089 = vunpack.c.1.s8 %v5961
        %v6090 = vunpack.c.1.s8 %v5962
        %v6091 = vunpack.c.1.s8 %v5963
        %v6092 = vunpack.c.1.s8 %v5964
        %v6093 = vunpack.c.2.s8 %v5961
        %v6094 = vunpack.c.2.s8 %v5962
        %v6095 = vunpack.c.2.s8 %v5963
        %v6096 = vunpack.c.2.s8 %v5964
        %v6097 = vunpack.c.3.s8 %v5961
        %v6098 = vunpack.c.3.s8 %v5962
        %v6099 = vunpack.c.3.s8 %v5963
        %v6100 = vunpack.c.3.s8 %v5964
        %v6101 = vunpack.c.0.s8 %v5965
        %v6102 = vunpack.c.0.s8 %v5966
        %v6103 = vunpack.c.0.s8 %v5967
        %v6104 = vunpack.c.0.s8 %v5968
        %v6105 = vunpack.c.1.s8 %v5965
        %v6106 = vunpack.c.1.s8 %v5966
        %v6107 = vunpack.c.1.s8 %v5967
        %v6108 = vunpack.c.1.s8 %v5968
        %v6109 = vunpack.c.2.s8 %v5965
        %v6110 = vunpack.c.2.s8 %v5966
        %v6111 = vunpack.c.2.s8 %v5967
        %v6112 = vunpack.c.2.s8 %v5968
        %v6113 = vunpack.c.3.s8 %v5965
        %v6114 = vunpack.c.3.s8 %v5966
        %v6115 = vunpack.c.3.s8 %v5967
        %v6116 = vunpack.c.3.s8 %v5968
        %v6117 = vunpack.c.0.s8 %v5969
        %v6118 = vunpack.c.0.s8 %v5970
        %v6119 = vunpack.c.0.s8 %v5971
        %v6120 = vunpack.c.0.s8 %v5972
        %v6121 = vunpack.c.1.s8 %v5969
        %v6122 = vunpack.c.1.s8 %v5970
        %v6123 = vunpack.c.1.s8 %v5971
        %v6124 = vunpack.c.1.s8 %v5972
        %v6125 = vunpack.c.2.s8 %v5969
        %v6126 = vunpack.c.2.s8 %v5970
        %v6127 = vunpack.c.2.s8 %v5971
        %v6128 = vunpack.c.2.s8 %v5972
        %v6129 = vunpack.c.3.s8 %v5969
        %v6130 = vunpack.c.3.s8 %v5970
        %v6131 = vunpack.c.3.s8 %v5971
        %v6132 = vunpack.c.3.s8 %v5972
        %v6133 = vunpack.c.0.s8 %v5973
        %v6134 = vunpack.c.0.s8 %v5974
        %v6135 = vunpack.c.0.s8 %v5975
        %v6136 = vunpack.c.0.s8 %v5976
        %v6137 = vunpack.c.1.s8 %v5973
        %v6138 = vunpack.c.1.s8 %v5974
        %v6139 = vunpack.c.1.s8 %v5975
        %v6140 = vunpack.c.1.s8 %v5976
        %v6141 = vunpack.c.2.s8 %v5973
        %v6142 = vunpack.c.2.s8 %v5974
        %v6143 = vunpack.c.2.s8 %v5975
        %v6144 = vunpack.c.2.s8 %v5976
        %v6145 = vunpack.c.3.s8 %v5973
        %v6146 = vunpack.c.3.s8 %v5974
        %v6147 = vunpack.c.3.s8 %v5975
        %v6148 = vunpack.c.3.s8 %v5976
        %v6149 = vunpack.c.0.s8 %v5977
        %v6150 = vunpack.c.0.s8 %v5978
        %v6151 = vunpack.c.0.s8 %v5979
        %v6152 = vunpack.c.0.s8 %v5980
        %v6153 = vunpack.c.1.s8 %v5977
        %v6154 = vunpack.c.1.s8 %v5978
        %v6155 = vunpack.c.1.s8 %v5979
        %v6156 = vunpack.c.1.s8 %v5980
        %v6157 = vunpack.c.2.s8 %v5977
        %v6158 = vunpack.c.2.s8 %v5978
        %v6159 = vunpack.c.2.s8 %v5979
        %v6160 = vunpack.c.2.s8 %v5980
        %v6161 = vunpack.c.3.s8 %v5977
        %v6162 = vunpack.c.3.s8 %v5978
        %v6163 = vunpack.c.3.s8 %v5979
        %v6164 = vunpack.c.3.s8 %v5980
        %v6165 = vunpack.c.0.s8 %v5981
        %v6166 = vunpack.c.0.s8 %v5982
        %v6167 = vunpack.c.0.s8 %v5983
        %v6168 = vunpack.c.0.s8 %v5984
        %v6169 = vunpack.c.1.s8 %v5981
        %v6170 = vunpack.c.1.s8 %v5982
        %v6171 = vunpack.c.1.s8 %v5983
        %v6172 = vunpack.c.1.s8 %v5984
        %v6173 = vunpack.c.2.s8 %v5981
        %v6174 = vunpack.c.2.s8 %v5982
        %v6175 = vunpack.c.2.s8 %v5983
        %v6176 = vunpack.c.2.s8 %v5984
        %v6177 = vunpack.c.3.s8 %v5981
        %v6178 = vunpack.c.3.s8 %v5982
        %v6179 = vunpack.c.3.s8 %v5983
        %v6180 = vunpack.c.3.s8 %v5984
        %v6181 = vunpack.c.0.s8 %v5985
        %v6182 = vunpack.c.0.s8 %v5986
        %v6183 = vunpack.c.0.s8 %v5987
        %v6184 = vunpack.c.0.s8 %v5988
        %v6185 = vunpack.c.1.s8 %v5985
        %v6186 = vunpack.c.1.s8 %v5986
        %v6187 = vunpack.c.1.s8 %v5987
        %v6188 = vunpack.c.1.s8 %v5988
        %v6189 = vunpack.c.2.s8 %v5985
        %v6190 = vunpack.c.2.s8 %v5986
        %v6191 = vunpack.c.2.s8 %v5987
        %v6192 = vunpack.c.2.s8 %v5988
        %v6193 = vunpack.c.3.s8 %v5985
        %v6194 = vunpack.c.3.s8 %v5986
        %v6195 = vunpack.c.3.s8 %v5987
        %v6196 = vunpack.c.3.s8 %v5988
        %v6197 = vunpack.c.0.s8 %v5989
        %v6198 = vunpack.c.0.s8 %v5990
        %v6199 = vunpack.c.0.s8 %v5991
        %v6200 = vunpack.c.0.s8 %v5992
        %v6201 = vunpack.c.1.s8 %v5989
        %v6202 = vunpack.c.1.s8 %v5990
        %v6203 = vunpack.c.1.s8 %v5991
        %v6204 = vunpack.c.1.s8 %v5992
        %v6205 = vunpack.c.2.s8 %v5989
        %v6206 = vunpack.c.2.s8 %v5990
        %v6207 = vunpack.c.2.s8 %v5991
        %v6208 = vunpack.c.2.s8 %v5992
        %v6209 = vunpack.c.3.s8 %v5989
        %v6210 = vunpack.c.3.s8 %v5990
        %v6211 = vunpack.c.3.s8 %v5991
        %v6212 = vunpack.c.3.s8 %v5992
        %v6213 = vunpack.c.0.s8 %v5993
        %v6214 = vunpack.c.0.s8 %v5994
        %v6215 = vunpack.c.0.s8 %v5995
        %v6216 = vunpack.c.0.s8 %v5996
        %v6217 = vunpack.c.1.s8 %v5993
        %v6218 = vunpack.c.1.s8 %v5994
        %v6219 = vunpack.c.1.s8 %v5995
        %v6220 = vunpack.c.1.s8 %v5996
        %v6221 = vunpack.c.2.s8 %v5993
        %v6222 = vunpack.c.2.s8 %v5994
        %v6223 = vunpack.c.2.s8 %v5995
        %v6224 = vunpack.c.2.s8 %v5996
        %v6225 = vunpack.c.3.s8 %v5993
        %v6226 = vunpack.c.3.s8 %v5994
        %v6227 = vunpack.c.3.s8 %v5995
        %v6228 = vunpack.c.3.s8 %v5996
        %v6229 = vunpack.c.0.s8 %v5997
        %v6230 = vunpack.c.0.s8 %v5998
        %v6231 = vunpack.c.0.s8 %v5999
        %v6232 = vunpack.c.0.s8 %v6000
        %v6233 = vunpack.c.1.s8 %v5997
        %v6234 = vunpack.c.1.s8 %v5998
        %v6235 = vunpack.c.1.s8 %v5999
        %v6236 = vunpack.c.1.s8 %v6000
        %v6237 = vunpack.c.2.s8 %v5997
        %v6238 = vunpack.c.2.s8 %v5998
        %v6239 = vunpack.c.2.s8 %v5999
        %v6240 = vunpack.c.2.s8 %v6000
        %v6241 = vunpack.c.3.s8 %v5997
        %v6242 = vunpack.c.3.s8 %v5998
        %v6243 = vunpack.c.3.s8 %v5999
        %v6244 = vunpack.c.3.s8 %v6000
        %v6245 = vunpack.c.0.s8 %v6001
        %v6246 = vunpack.c.0.s8 %v6002
        %v6247 = vunpack.c.0.s8 %v6003
        %v6248 = vunpack.c.0.s8 %v6004
        %v6249 = vunpack.c.1.s8 %v6001
        %v6250 = vunpack.c.1.s8 %v6002
        %v6251 = vunpack.c.1.s8 %v6003
        %v6252 = vunpack.c.1.s8 %v6004
        %v6253 = vunpack.c.2.s8 %v6001
        %v6254 = vunpack.c.2.s8 %v6002
        %v6255 = vunpack.c.2.s8 %v6003
        %v6256 = vunpack.c.2.s8 %v6004
        %v6257 = vunpack.c.3.s8 %v6001
        %v6258 = vunpack.c.3.s8 %v6002
        %v6259 = vunpack.c.3.s8 %v6003
        %v6260 = vunpack.c.3.s8 %v6004
        %v6261 = vcvt.s32.f32 %v6005
        %v6262 = vcvt.s32.f32 %v6006
        %v6263 = vcvt.s32.f32 %v6007
        %v6264 = vcvt.s32.f32 %v6008
        %v6265 = vcvt.s32.f32 %v6009
        %v6266 = vcvt.s32.f32 %v6010
        %v6267 = vcvt.s32.f32 %v6011
        %v6268 = vcvt.s32.f32 %v6012
        %v6269 = vcvt.s32.f32 %v6013
        %v6270 = vcvt.s32.f32 %v6014
        %v6271 = vcvt.s32.f32 %v6015
        %v6272 = vcvt.s32.f32 %v6016
        %v6273 = vcvt.s32.f32 %v6017
        %v6274 = vcvt.s32.f32 %v6018
        %v6275 = vcvt.s32.f32 %v6019
        %v6276 = vcvt.s32.f32 %v6020
        %v6277 = vcvt.s32.f32 %v6021
        %v6278 = vcvt.s32.f32 %v6022
        %v6279 = vcvt.s32.f32 %v6023
        %v6280 = vcvt.s32.f32 %v6024
        %v6281 = vcvt.s32.f32 %v6025
        %v6282 = vcvt.s32.f32 %v6026
        %v6283 = vcvt.s32.f32 %v6027
        %v6284 = vcvt.s32.f32 %v6028
        %v6285 = vcvt.s32.f32 %v6029
        %v6286 = vcvt.s32.f32 %v6030
        %v6287 = vcvt.s32.f32 %v6031
        %v6288 = vcvt.s32.f32 %v6032
        %v6289 = vcvt.s32.f32 %v6033
        %v6290 = vcvt.s32.f32 %v6034
        %v6291 = vcvt.s32.f32 %v6035
        %v6292 = vcvt.s32.f32 %v6036
        %v6293 = vcvt.s32.f32 %v6037
        %v6294 = vcvt.s32.f32 %v6038
        %v6295 = vcvt.s32.f32 %v6039
        %v6296 = vcvt.s32.f32 %v6040
        %v6297 = vcvt.s32.f32 %v6041
        %v6298 = vcvt.s32.f32 %v6042
        %v6299 = vcvt.s32.f32 %v6043
        %v6300 = vcvt.s32.f32 %v6044
        %v6301 = vcvt.s32.f32 %v6045
        %v6302 = vcvt.s32.f32 %v6046
        %v6303 = vcvt.s32.f32 %v6047
        %v6304 = vcvt.s32.f32 %v6048
        %v6305 = vcvt.s32.f32 %v6049
        %v6306 = vcvt.s32.f32 %v6050
        %v6307 = vcvt.s32.f32 %v6051
        %v6308 = vcvt.s32.f32 %v6052
        %v6309 = vcvt.s32.f32 %v6053
        %v6310 = vcvt.s32.f32 %v6054
        %v6311 = vcvt.s32.f32 %v6055
        %v6312 = vcvt.s32.f32 %v6056
        %v6313 = vcvt.s32.f32 %v6057
        %v6314 = vcvt.s32.f32 %v6058
        %v6315 = vcvt.s32.f32 %v6059
        %v6316 = vcvt.s32.f32 %v6060
        %v6317 = vcvt.s32.f32 %v6061
        %v6318 = vcvt.s32.f32 %v6062
        %v6319 = vcvt.s32.f32 %v6063
        %v6320 = vcvt.s32.f32 %v6064
        %v6321 = vcvt.s32.f32 %v6065
        %v6322 = vcvt.s32.f32 %v6066
        %v6323 = vcvt.s32.f32 %v6067
        %v6324 = vcvt.s32.f32 %v6068
        %v6325 = vcvt.s32.f32 %v6069
        %v6326 = vcvt.s32.f32 %v6070
        %v6327 = vcvt.s32.f32 %v6071
        %v6328 = vcvt.s32.f32 %v6072
        %v6329 = vcvt.s32.f32 %v6073
        %v6330 = vcvt.s32.f32 %v6074
        %v6331 = vcvt.s32.f32 %v6075
        %v6332 = vcvt.s32.f32 %v6076
        %v6333 = vcvt.s32.f32 %v6077
        %v6334 = vcvt.s32.f32 %v6078
        %v6335 = vcvt.s32.f32 %v6079
        %v6336 = vcvt.s32.f32 %v6080
        %v6337 = vcvt.s32.f32 %v6081
        %v6338 = vcvt.s32.f32 %v6082
        %v6339 = vcvt.s32.f32 %v6083
        %v6340 = vcvt.s32.f32 %v6084
        %v6341 = vcvt.s32.f32 %v6085
        %v6342 = vcvt.s32.f32 %v6086
        %v6343 = vcvt.s32.f32 %v6087
        %v6344 = vcvt.s32.f32 %v6088
        %v6345 = vcvt.s32.f32 %v6089
        %v6346 = vcvt.s32.f32 %v6090
        %v6347 = vcvt.s32.f32 %v6091
        %v6348 = vcvt.s32.f32 %v6092
        %v6349 = vcvt.s32.f32 %v6093
        %v6350 = vcvt.s32.f32 %v6094
        %v6351 = vcvt.s32.f32 %v6095
        %v6352 = vcvt.s32.f32 %v6096
        %v6353 = vcvt.s32.f32 %v6097
        %v6354 = vcvt.s32.f32 %v6098
        %v6355 = vcvt.s32.f32 %v6099
        %v6356 = vcvt.s32.f32 %v6100
        %v6357 = vcvt.s32.f32 %v6101
        %v6358 = vcvt.s32.f32 %v6102
        %v6359 = vcvt.s32.f32 %v6103
        %v6360 = vcvt.s32.f32 %v6104
        %v6361 = vcvt.s32.f32 %v6105
        %v6362 = vcvt.s32.f32 %v6106
        %v6363 = vcvt.s32.f32 %v6107
        %v6364 = vcvt.s32.f32 %v6108
        %v6365 = vcvt.s32.f32 %v6109
        %v6366 = vcvt.s32.f32 %v6110
        %v6367 = vcvt.s32.f32 %v6111
        %v6368 = vcvt.s32.f32 %v6112
        %v6369 = vcvt.s32.f32 %v6113
        %v6370 = vcvt.s32.f32 %v6114
        %v6371 = vcvt.s32.f32 %v6115
        %v6372 = vcvt.s32.f32 %v6116
        %v6373 = vcvt.s32.f32 %v6117
        %v6374 = vcvt.s32.f32 %v6118
        %v6375 = vcvt.s32.f32 %v6119
        %v6376 = vcvt.s32.f32 %v6120
        %v6377 = vcvt.s32.f32 %v6121
        %v6378 = vcvt.s32.f32 %v6122
        %v6379 = vcvt.s32.f32 %v6123
        %v6380 = vcvt.s32.f32 %v6124
        %v6381 = vcvt.s32.f32 %v6125
        %v6382 = vcvt.s32.f32 %v6126
        %v6383 = vcvt.s32.f32 %v6127
        %v6384 = vcvt.s32.f32 %v6128
        %v6385 = vcvt.s32.f32 %v6129
        %v6386 = vcvt.s32.f32 %v6130
        %v6387 = vcvt.s32.f32 %v6131
        %v6388 = vcvt.s32.f32 %v6132
        %v6389 = vcvt.s32.f32 %v6133
        %v6390 = vcvt.s32.f32 %v6134
        %v6391 = vcvt.s32.f32 %v6135
        %v6392 = vcvt.s32.f32 %v6136
        %v6393 = vcvt.s32.f32 %v6137
        %v6394 = vcvt.s32.f32 %v6138
        %v6395 = vcvt.s32.f32 %v6139
        %v6396 = vcvt.s32.f32 %v6140
        %v6397 = vcvt.s32.f32 %v6141
        %v6398 = vcvt.s32.f32 %v6142
        %v6399 = vcvt.s32.f32 %v6143
        %v6400 = vcvt.s32.f32 %v6144
        %v6401 = vcvt.s32.f32 %v6145
        %v6402 = vcvt.s32.f32 %v6146
        %v6403 = vcvt.s32.f32 %v6147
        %v6404 = vcvt.s32.f32 %v6148
        %v6405 = vcvt.s32.f32 %v6149
        %v6406 = vcvt.s32.f32 %v6150
        %v6407 = vcvt.s32.f32 %v6151
        %v6408 = vcvt.s32.f32 %v6152
        %v6409 = vcvt.s32.f32 %v6153
        %v6410 = vcvt.s32.f32 %v6154
        %v6411 = vcvt.s32.f32 %v6155
        %v6412 = vcvt.s32.f32 %v6156
        %v6413 = vcvt.s32.f32 %v6157
        %v6414 = vcvt.s32.f32 %v6158
        %v6415 = vcvt.s32.f32 %v6159
        %v6416 = vcvt.s32.f32 %v6160
        %v6417 = vcvt.s32.f32 %v6161
        %v6418 = vcvt.s32.f32 %v6162
        %v6419 = vcvt.s32.f32 %v6163
        %v6420 = vcvt.s32.f32 %v6164
        %v6421 = vcvt.s32.f32 %v6165
        %v6422 = vcvt.s32.f32 %v6166
        %v6423 = vcvt.s32.f32 %v6167
        %v6424 = vcvt.s32.f32 %v6168
        %v6425 = vcvt.s32.f32 %v6169
        %v6426 = vcvt.s32.f32 %v6170
        %v6427 = vcvt.s32.f32 %v6171
        %v6428 = vcvt.s32.f32 %v6172
        %v6429 = vcvt.s32.f32 %v6173
        %v6430 = vcvt.s32.f32 %v6174
        %v6431 = vcvt.s32.f32 %v6175
        %v6432 = vcvt.s32.f32 %v6176
        %v6433 = vcvt.s32.f32 %v6177
        %v6434 = vcvt.s32.f32 %v6178
        %v6435 = vcvt.s32.f32 %v6179
        %v6436 = vcvt.s32.f32 %v6180
        %v6437 = vcvt.s32.f32 %v6181
        %v6438 = vcvt.s32.f32 %v6182
        %v6439 = vcvt.s32.f32 %v6183
        %v6440 = vcvt.s32.f32 %v6184
        %v6441 = vcvt.s32.f32 %v6185
        %v6442 = vcvt.s32.f32 %v6186
        %v6443 = vcvt.s32.f32 %v6187
        %v6444 = vcvt.s32.f32 %v6188
        %v6445 = vcvt.s32.f32 %v6189
        %v6446 = vcvt.s32.f32 %v6190
        %v6447 = vcvt.s32.f32 %v6191
        %v6448 = vcvt.s32.f32 %v6192
        %v6449 = vcvt.s32.f32 %v6193
        %v6450 = vcvt.s32.f32 %v6194
        %v6451 = vcvt.s32.f32 %v6195
        %v6452 = vcvt.s32.f32 %v6196
        %v6453 = vcvt.s32.f32 %v6197
        %v6454 = vcvt.s32.f32 %v6198
        %v6455 = vcvt.s32.f32 %v6199
        %v6456 = vcvt.s32.f32 %v6200
        %v6457 = vcvt.s32.f32 %v6201
        %v6458 = vcvt.s32.f32 %v6202
        %v6459 = vcvt.s32.f32 %v6203
        %v6460 = vcvt.s32.f32 %v6204
        %v6461 = vcvt.s32.f32 %v6205
        %v6462 = vcvt.s32.f32 %v6206
        %v6463 = vcvt.s32.f32 %v6207
        %v6464 = vcvt.s32.f32 %v6208
        %v6465 = vcvt.s32.f32 %v6209
        %v6466 = vcvt.s32.f32 %v6210
        %v6467 = vcvt.s32.f32 %v6211
        %v6468 = vcvt.s32.f32 %v6212
        %v6469 = vcvt.s32.f32 %v6213
        %v6470 = vcvt.s32.f32 %v6214
        %v6471 = vcvt.s32.f32 %v6215
        %v6472 = vcvt.s32.f32 %v6216
        %v6473 = vcvt.s32.f32 %v6217
        %v6474 = vcvt.s32.f32 %v6218
        %v6475 = vcvt.s32.f32 %v6219
        %v6476 = vcvt.s32.f32 %v6220
        %v6477 = vcvt.s32.f32 %v6221
        %v6478 = vcvt.s32.f32 %v6222
        %v6479 = vcvt.s32.f32 %v6223
        %v6480 = vcvt.s32.f32 %v6224
        %v6481 = vcvt.s32.f32 %v6225
        %v6482 = vcvt.s32.f32 %v6226
        %v6483 = vcvt.s32.f32 %v6227
        %v6484 = vcvt.s32.f32 %v6228
        %v6485 = vcvt.s32.f32 %v6229
        %v6486 = vcvt.s32.f32 %v6230
        %v6487 = vcvt.s32.f32 %v6231
        %v6488 = vcvt.s32.f32 %v6232
        %v6489 = vcvt.s32.f32 %v6233
        %v6490 = vcvt.s32.f32 %v6234
        %v6491 = vcvt.s32.f32 %v6235
        %v6492 = vcvt.s32.f32 %v6236
        %v6493 = vcvt.s32.f32 %v6237
        %v6494 = vcvt.s32.f32 %v6238
        %v6495 = vcvt.s32.f32 %v6239
        %v6496 = vcvt.s32.f32 %v6240
        %v6497 = vcvt.s32.f32 %v6241
        %v6498 = vcvt.s32.f32 %v6242
        %v6499 = vcvt.s32.f32 %v6243
        %v6500 = vcvt.s32.f32 %v6244
        %v6501 = vcvt.s32.f32 %v6245
        %v6502 = vcvt.s32.f32 %v6246
        %v6503 = vcvt.s32.f32 %v6247
        %v6504 = vcvt.s32.f32 %v6248
        %v6505 = vcvt.s32.f32 %v6249
        %v6506 = vcvt.s32.f32 %v6250
        %v6507 = vcvt.s32.f32 %v6251
        %v6508 = vcvt.s32.f32 %v6252
        %v6509 = vcvt.s32.f32 %v6253
        %v6510 = vcvt.s32.f32 %v6254
        %v6511 = vcvt.s32.f32 %v6255
        %v6512 = vcvt.s32.f32 %v6256
        %v6513 = vcvt.s32.f32 %v6257
        %v6514 = vcvt.s32.f32 %v6258
        %v6515 = vcvt.s32.f32 %v6259
        %v6516 = vcvt.s32.f32 %v6260
        %v6517 = vpack.c.bf16 %v6265, %v6261
        %v6518 = vpack.c.bf16 %v6266, %v6262
        %v6519 = vpack.c.bf16 %v6267, %v6263
        %v6520 = vpack.c.bf16 %v6268, %v6264
        %v6521 = vpack.c.bf16 %v6273, %v6269
        %v6522 = vpack.c.bf16 %v6274, %v6270
        %v6523 = vpack.c.bf16 %v6275, %v6271
        %v6524 = vpack.c.bf16 %v6276, %v6272
        %v6525 = vpack.c.bf16 %v6281, %v6277
        %v6526 = vpack.c.bf16 %v6282, %v6278
        %v6527 = vpack.c.bf16 %v6283, %v6279
        %v6528 = vpack.c.bf16 %v6284, %v6280
        %v6529 = vpack.c.bf16 %v6289, %v6285
        %v6530 = vpack.c.bf16 %v6290, %v6286
        %v6531 = vpack.c.bf16 %v6291, %v6287
        %v6532 = vpack.c.bf16 %v6292, %v6288
        %v6533 = vpack.c.bf16 %v6297, %v6293
        %v6534 = vpack.c.bf16 %v6298, %v6294
        %v6535 = vpack.c.bf16 %v6299, %v6295
        %v6536 = vpack.c.bf16 %v6300, %v6296
        %v6537 = vpack.c.bf16 %v6305, %v6301
        %v6538 = vpack.c.bf16 %v6306, %v6302
        %v6539 = vpack.c.bf16 %v6307, %v6303
        %v6540 = vpack.c.bf16 %v6308, %v6304
        %v6541 = vpack.c.bf16 %v6313, %v6309
        %v6542 = vpack.c.bf16 %v6314, %v6310
        %v6543 = vpack.c.bf16 %v6315, %v6311
        %v6544 = vpack.c.bf16 %v6316, %v6312
        %v6545 = vpack.c.bf16 %v6321, %v6317
        %v6546 = vpack.c.bf16 %v6322, %v6318
        %v6547 = vpack.c.bf16 %v6323, %v6319
        %v6548 = vpack.c.bf16 %v6324, %v6320
        %v6549 = vpack.c.bf16 %v6329, %v6325
        %v6550 = vpack.c.bf16 %v6330, %v6326
        %v6551 = vpack.c.bf16 %v6331, %v6327
        %v6552 = vpack.c.bf16 %v6332, %v6328
        %v6553 = vpack.c.bf16 %v6337, %v6333
        %v6554 = vpack.c.bf16 %v6338, %v6334
        %v6555 = vpack.c.bf16 %v6339, %v6335
        %v6556 = vpack.c.bf16 %v6340, %v6336
        %v6557 = vpack.c.bf16 %v6345, %v6341
        %v6558 = vpack.c.bf16 %v6346, %v6342
        %v6559 = vpack.c.bf16 %v6347, %v6343
        %v6560 = vpack.c.bf16 %v6348, %v6344
        %v6561 = vpack.c.bf16 %v6353, %v6349
        %v6562 = vpack.c.bf16 %v6354, %v6350
        %v6563 = vpack.c.bf16 %v6355, %v6351
        %v6564 = vpack.c.bf16 %v6356, %v6352
        %v6565 = vpack.c.bf16 %v6361, %v6357
        %v6566 = vpack.c.bf16 %v6362, %v6358
        %v6567 = vpack.c.bf16 %v6363, %v6359
        %v6568 = vpack.c.bf16 %v6364, %v6360
        %v6569 = vpack.c.bf16 %v6369, %v6365
        %v6570 = vpack.c.bf16 %v6370, %v6366
        %v6571 = vpack.c.bf16 %v6371, %v6367
        %v6572 = vpack.c.bf16 %v6372, %v6368
        %v6573 = vpack.c.bf16 %v6377, %v6373
        %v6574 = vpack.c.bf16 %v6378, %v6374
        %v6575 = vpack.c.bf16 %v6379, %v6375
        %v6576 = vpack.c.bf16 %v6380, %v6376
        %v6577 = vpack.c.bf16 %v6385, %v6381
        %v6578 = vpack.c.bf16 %v6386, %v6382
        %v6579 = vpack.c.bf16 %v6387, %v6383
        %v6580 = vpack.c.bf16 %v6388, %v6384
        %v6581 = vpack.c.bf16 %v6393, %v6389
        %v6582 = vpack.c.bf16 %v6394, %v6390
        %v6583 = vpack.c.bf16 %v6395, %v6391
        %v6584 = vpack.c.bf16 %v6396, %v6392
        %v6585 = vpack.c.bf16 %v6401, %v6397
        %v6586 = vpack.c.bf16 %v6402, %v6398
        %v6587 = vpack.c.bf16 %v6403, %v6399
        %v6588 = vpack.c.bf16 %v6404, %v6400
        %v6589 = vpack.c.bf16 %v6409, %v6405
        %v6590 = vpack.c.bf16 %v6410, %v6406
        %v6591 = vpack.c.bf16 %v6411, %v6407
        %v6592 = vpack.c.bf16 %v6412, %v6408
        %v6593 = vpack.c.bf16 %v6417, %v6413
        %v6594 = vpack.c.bf16 %v6418, %v6414
        %v6595 = vpack.c.bf16 %v6419, %v6415
        %v6596 = vpack.c.bf16 %v6420, %v6416
        %v6597 = vpack.c.bf16 %v6425, %v6421
        %v6598 = vpack.c.bf16 %v6426, %v6422
        %v6599 = vpack.c.bf16 %v6427, %v6423
        %v6600 = vpack.c.bf16 %v6428, %v6424
        %v6601 = vpack.c.bf16 %v6433, %v6429
        %v6602 = vpack.c.bf16 %v6434, %v6430
        %v6603 = vpack.c.bf16 %v6435, %v6431
        %v6604 = vpack.c.bf16 %v6436, %v6432
        %v6605 = vpack.c.bf16 %v6441, %v6437
        %v6606 = vpack.c.bf16 %v6442, %v6438
        %v6607 = vpack.c.bf16 %v6443, %v6439
        %v6608 = vpack.c.bf16 %v6444, %v6440
        %v6609 = vpack.c.bf16 %v6449, %v6445
        %v6610 = vpack.c.bf16 %v6450, %v6446
        %v6611 = vpack.c.bf16 %v6451, %v6447
        %v6612 = vpack.c.bf16 %v6452, %v6448
        %v6613 = vpack.c.bf16 %v6457, %v6453
        %v6614 = vpack.c.bf16 %v6458, %v6454
        %v6615 = vpack.c.bf16 %v6459, %v6455
        %v6616 = vpack.c.bf16 %v6460, %v6456
        %v6617 = vpack.c.bf16 %v6465, %v6461
        %v6618 = vpack.c.bf16 %v6466, %v6462
        %v6619 = vpack.c.bf16 %v6467, %v6463
        %v6620 = vpack.c.bf16 %v6468, %v6464
        %v6621 = vpack.c.bf16 %v6473, %v6469
        %v6622 = vpack.c.bf16 %v6474, %v6470
        %v6623 = vpack.c.bf16 %v6475, %v6471
        %v6624 = vpack.c.bf16 %v6476, %v6472
        %v6625 = vpack.c.bf16 %v6481, %v6477
        %v6626 = vpack.c.bf16 %v6482, %v6478
        %v6627 = vpack.c.bf16 %v6483, %v6479
        %v6628 = vpack.c.bf16 %v6484, %v6480
        %v6629 = vpack.c.bf16 %v6489, %v6485
        %v6630 = vpack.c.bf16 %v6490, %v6486
        %v6631 = vpack.c.bf16 %v6491, %v6487
        %v6632 = vpack.c.bf16 %v6492, %v6488
        %v6633 = vpack.c.bf16 %v6497, %v6493
        %v6634 = vpack.c.bf16 %v6498, %v6494
        %v6635 = vpack.c.bf16 %v6499, %v6495
        %v6636 = vpack.c.bf16 %v6500, %v6496
        %v6637 = vpack.c.bf16 %v6505, %v6501
        %v6638 = vpack.c.bf16 %v6506, %v6502
        %v6639 = vpack.c.bf16 %v6507, %v6503
        %v6640 = vpack.c.bf16 %v6508, %v6504
        %v6641 = vpack.c.bf16 %v6513, %v6509
        %v6642 = vpack.c.bf16 %v6514, %v6510
        %v6643 = vpack.c.bf16 %v6515, %v6511
        %v6644 = vpack.c.bf16 %v6516, %v6512
        %v6645 = vld [vmem:[#allocation3] sm:$0xff]
        %v6646 = vld [vmem:[#allocation3 + $0x8] sm:$0xff]
        %v6647 = vld [vmem:[#allocation3 + $0x10] sm:$0xff]
        %v6648 = vld [vmem:[#allocation3 + $0x18] sm:$0xff]
        %v6649 = vld [vmem:[#allocation3 + $0x20] sm:$0xff]
        %v6650 = vld [vmem:[#allocation3 + $0x28] sm:$0xff]
        %v6651 = vld [vmem:[#allocation3 + $0x30] sm:$0xff]
        %v6652 = vld [vmem:[#allocation3 + $0x38] sm:$0xff]
        %v6653 = vpack.c.bf16 %v5937, %v5933
        %v6654 = vpack.c.bf16 %v5938, %v5934
        %v6655 = vpack.c.bf16 %v5939, %v5935
        %v6656 = vpack.c.bf16 %v5940, %v5936
        %6657 = vmatpush.bf16.msra.mxu0 %v6545
        %6658 = vmatpush.bf16.msra.mxu0 %v6541
        %6659 = vmatpush.bf16.msra.mxu0 %v6537
        %6660 = vmatpush.bf16.msra.mxu0 %v6533
        %6661 = vmatpush.bf16.msra.mxu0 %v6529
        %6662 = vmatpush.bf16.msra.mxu0 %v6525
        %6663 = vmatpush.bf16.msra.mxu0 %v6521
        %6664 = vmatpush.bf16.msra.mxu0 %v6517
        %6665 = vmatmul.bf16.gmra.mxu0 %v6653
        %v6666 = vpop.f32.mrf.mxu0
        %v6667 = vadd.f32 0.0, %v6666
        %v6668 = vpop.f32.mrf.mxu0
        %v6669 = vadd.f32 0.0, %v6668
        %6670 = vdwg.mxu0
        %6671 = vmatpush.bf16.msra.mxu0 %v6577
        %6672 = vmatpush.bf16.msra.mxu0 %v6573
        %6673 = vmatpush.bf16.msra.mxu0 %v6569
        %6674 = vmatpush.bf16.msra.mxu0 %v6565
        %6675 = vmatpush.bf16.msra.mxu0 %v6561
        %6676 = vmatpush.bf16.msra.mxu0 %v6557
        %6677 = vmatpush.bf16.msra.mxu0 %v6553
        %6678 = vmatpush.bf16.msra.mxu0 %v6549
        %6679 = vmatmul.bf16.gmra.mxu0 %v6654
        %v6680 = vpop.f32.mrf.mxu0
        %v6681 = vadd.f32 %v6667, %v6680
        %v6682 = vpop.f32.mrf.mxu0
        %v6683 = vadd.f32 %v6669, %v6682
        %6684 = vdwg.mxu0
        %6685 = vmatpush.bf16.msra.mxu0 %v6609
        %6686 = vmatpush.bf16.msra.mxu0 %v6605
        %6687 = vmatpush.bf16.msra.mxu0 %v6601
        %6688 = vmatpush.bf16.msra.mxu0 %v6597
        %6689 = vmatpush.bf16.msra.mxu0 %v6593
        %6690 = vmatpush.bf16.msra.mxu0 %v6589
        %6691 = vmatpush.bf16.msra.mxu0 %v6585
        %6692 = vmatpush.bf16.msra.mxu0 %v6581
        %6693 = vmatmul.bf16.gmra.mxu0 %v6655
        %v6694 = vpop.f32.mrf.mxu0
        %v6695 = vadd.f32 %v6681, %v6694
        %v6696 = vpop.f32.mrf.mxu0
        %v6697 = vadd.f32 %v6683, %v6696
        %6698 = vdwg.mxu0
        %6699 = vmatpush.bf16.msra.mxu0 %v6641
        %6700 = vmatpush.bf16.msra.mxu0 %v6637
        %6701 = vmatpush.bf16.msra.mxu0 %v6633
        %6702 = vmatpush.bf16.msra.mxu0 %v6629
        %6703 = vmatpush.bf16.msra.mxu0 %v6625
        %6704 = vmatpush.bf16.msra.mxu0 %v6621
        %6705 = vmatpush.bf16.msra.mxu0 %v6617
        %6706 = vmatpush.bf16.msra.mxu0 %v6613
        %6707 = vmatmul.bf16.gmra.mxu0 %v6656
        %v6708 = vpop.f32.mrf.mxu0
        %v6709 = vadd.f32 %v6695, %v6708
        %v6710 = vpop.f32.mrf.mxu0
        %v6711 = vadd.f32 %v6697, %v6710
        %6712 = vdwg.mxu0
        %6713 = vmatpush.bf16.msra.mxu0 %v6546
        %6714 = vmatpush.bf16.msra.mxu0 %v6542
        %6715 = vmatpush.bf16.msra.mxu0 %v6538
        %6716 = vmatpush.bf16.msra.mxu0 %v6534
        %6717 = vmatpush.bf16.msra.mxu0 %v6530
        %6718 = vmatpush.bf16.msra.mxu0 %v6526
        %6719 = vmatpush.bf16.msra.mxu0 %v6522
        %6720 = vmatpush.bf16.msra.mxu0 %v6518
        %6721 = vmatmul.bf16.gmra.mxu0 %v6653
        %v6722 = vpop.f32.mrf.mxu0
        %v6723 = vadd.f32 0.0, %v6722
        %v6724 = vpop.f32.mrf.mxu0
        %v6725 = vadd.f32 0.0, %v6724
        %6726 = vdwg.mxu0
        %6727 = vmatpush.bf16.msra.mxu0 %v6578
        %6728 = vmatpush.bf16.msra.mxu0 %v6574
        %6729 = vmatpush.bf16.msra.mxu0 %v6570
        %6730 = vmatpush.bf16.msra.mxu0 %v6566
        %6731 = vmatpush.bf16.msra.mxu0 %v6562
        %6732 = vmatpush.bf16.msra.mxu0 %v6558
        %6733 = vmatpush.bf16.msra.mxu0 %v6554
        %6734 = vmatpush.bf16.msra.mxu0 %v6550
        %6735 = vmatmul.bf16.gmra.mxu0 %v6654
        %v6736 = vpop.f32.mrf.mxu0
        %v6737 = vadd.f32 %v6723, %v6736
        %v6738 = vpop.f32.mrf.mxu0
        %v6739 = vadd.f32 %v6725, %v6738
        %6740 = vdwg.mxu0
        %6741 = vmatpush.bf16.msra.mxu0 %v6610
        %6742 = vmatpush.bf16.msra.mxu0 %v6606
        %6743 = vmatpush.bf16.msra.mxu0 %v6602
        %6744 = vmatpush.bf16.msra.mxu0 %v6598
        %6745 = vmatpush.bf16.msra.mxu0 %v6594
        %6746 = vmatpush.bf16.msra.mxu0 %v6590
        %6747 = vmatpush.bf16.msra.mxu0 %v6586
        %6748 = vmatpush.bf16.msra.mxu0 %v6582
        %6749 = vmatmul.bf16.gmra.mxu0 %v6655
        %v6750 = vpop.f32.mrf.mxu0
        %v6751 = vadd.f32 %v6737, %v6750
        %v6752 = vpop.f32.mrf.mxu0
        %v6753 = vadd.f32 %v6739, %v6752
        %6754 = vdwg.mxu0
        %6755 = vmatpush.bf16.msra.mxu0 %v6642
        %6756 = vmatpush.bf16.msra.mxu0 %v6638
        %6757 = vmatpush.bf16.msra.mxu0 %v6634
        %6758 = vmatpush.bf16.msra.mxu0 %v6630
        %6759 = vmatpush.bf16.msra.mxu0 %v6626
        %6760 = vmatpush.bf16.msra.mxu0 %v6622
        %6761 = vmatpush.bf16.msra.mxu0 %v6618
        %6762 = vmatpush.bf16.msra.mxu0 %v6614
        %6763 = vmatmul.bf16.gmra.mxu0 %v6656
        %v6764 = vpop.f32.mrf.mxu0
        %v6765 = vadd.f32 %v6751, %v6764
        %v6766 = vpop.f32.mrf.mxu0
        %v6767 = vadd.f32 %v6753, %v6766
        %6768 = vdwg.mxu0
        %6769 = vmatpush.bf16.msra.mxu0 %v6547
        %6770 = vmatpush.bf16.msra.mxu0 %v6543
        %6771 = vmatpush.bf16.msra.mxu0 %v6539
        %6772 = vmatpush.bf16.msra.mxu0 %v6535
        %6773 = vmatpush.bf16.msra.mxu0 %v6531
        %6774 = vmatpush.bf16.msra.mxu0 %v6527
        %6775 = vmatpush.bf16.msra.mxu0 %v6523
        %6776 = vmatpush.bf16.msra.mxu0 %v6519
        %6777 = vmatmul.bf16.gmra.mxu0 %v6653
        %v6778 = vpop.f32.mrf.mxu0
        %v6779 = vadd.f32 0.0, %v6778
        %v6780 = vpop.f32.mrf.mxu0
        %v6781 = vadd.f32 0.0, %v6780
        %6782 = vdwg.mxu0
        %6783 = vmatpush.bf16.msra.mxu0 %v6579
        %6784 = vmatpush.bf16.msra.mxu0 %v6575
        %6785 = vmatpush.bf16.msra.mxu0 %v6571
        %6786 = vmatpush.bf16.msra.mxu0 %v6567
        %6787 = vmatpush.bf16.msra.mxu0 %v6563
        %6788 = vmatpush.bf16.msra.mxu0 %v6559
        %6789 = vmatpush.bf16.msra.mxu0 %v6555
        %6790 = vmatpush.bf16.msra.mxu0 %v6551
        %6791 = vmatmul.bf16.gmra.mxu0 %v6654
        %v6792 = vpop.f32.mrf.mxu0
        %v6793 = vadd.f32 %v6779, %v6792
        %v6794 = vpop.f32.mrf.mxu0
        %v6795 = vadd.f32 %v6781, %v6794
        %6796 = vdwg.mxu0
        %6797 = vmatpush.bf16.msra.mxu0 %v6611
        %6798 = vmatpush.bf16.msra.mxu0 %v6607
        %6799 = vmatpush.bf16.msra.mxu0 %v6603
        %6800 = vmatpush.bf16.msra.mxu0 %v6599
        %6801 = vmatpush.bf16.msra.mxu0 %v6595
        %6802 = vmatpush.bf16.msra.mxu0 %v6591
        %6803 = vmatpush.bf16.msra.mxu0 %v6587
        %6804 = vmatpush.bf16.msra.mxu0 %v6583
        %6805 = vmatmul.bf16.gmra.mxu0 %v6655
        %v6806 = vpop.f32.mrf.mxu0
        %v6807 = vadd.f32 %v6793, %v6806
        %v6808 = vpop.f32.mrf.mxu0
        %v6809 = vadd.f32 %v6795, %v6808
        %6810 = vdwg.mxu0
        %6811 = vmatpush.bf16.msra.mxu0 %v6643
        %6812 = vmatpush.bf16.msra.mxu0 %v6639
        %6813 = vmatpush.bf16.msra.mxu0 %v6635
        %6814 = vmatpush.bf16.msra.mxu0 %v6631
        %6815 = vmatpush.bf16.msra.mxu0 %v6627
        %6816 = vmatpush.bf16.msra.mxu0 %v6623
        %6817 = vmatpush.bf16.msra.mxu0 %v6619
        %6818 = vmatpush.bf16.msra.mxu0 %v6615
        %6819 = vmatmul.bf16.gmra.mxu0 %v6656
        %v6820 = vpop.f32.mrf.mxu0
        %v6821 = vadd.f32 %v6807, %v6820
        %v6822 = vpop.f32.mrf.mxu0
        %v6823 = vadd.f32 %v6809, %v6822
        %6824 = vdwg.mxu0
        %6825 = vmatpush.bf16.msra.mxu0 %v6548
        %6826 = vmatpush.bf16.msra.mxu0 %v6544
        %6827 = vmatpush.bf16.msra.mxu0 %v6540
        %6828 = vmatpush.bf16.msra.mxu0 %v6536
        %6829 = vmatpush.bf16.msra.mxu0 %v6532
        %6830 = vmatpush.bf16.msra.mxu0 %v6528
        %6831 = vmatpush.bf16.msra.mxu0 %v6524
        %6832 = vmatpush.bf16.msra.mxu0 %v6520
        %6833 = vmatmul.bf16.gmra.mxu0 %v6653
        %v6834 = vpop.f32.mrf.mxu0
        %v6835 = vadd.f32 0.0, %v6834
        %v6836 = vpop.f32.mrf.mxu0
        %v6837 = vadd.f32 0.0, %v6836
        %6838 = vdwg.mxu0
        %6839 = vmatpush.bf16.msra.mxu0 %v6580
        %6840 = vmatpush.bf16.msra.mxu0 %v6576
        %6841 = vmatpush.bf16.msra.mxu0 %v6572
        %6842 = vmatpush.bf16.msra.mxu0 %v6568
        %6843 = vmatpush.bf16.msra.mxu0 %v6564
        %6844 = vmatpush.bf16.msra.mxu0 %v6560
        %6845 = vmatpush.bf16.msra.mxu0 %v6556
        %6846 = vmatpush.bf16.msra.mxu0 %v6552
        %6847 = vmatmul.bf16.gmra.mxu0 %v6654
        %v6848 = vpop.f32.mrf.mxu0
        %v6849 = vadd.f32 %v6835, %v6848
        %v6850 = vpop.f32.mrf.mxu0
        %v6851 = vadd.f32 %v6837, %v6850
        %6852 = vdwg.mxu0
        %6853 = vmatpush.bf16.msra.mxu0 %v6612
        %6854 = vmatpush.bf16.msra.mxu0 %v6608
        %6855 = vmatpush.bf16.msra.mxu0 %v6604
        %6856 = vmatpush.bf16.msra.mxu0 %v6600
        %6857 = vmatpush.bf16.msra.mxu0 %v6596
        %6858 = vmatpush.bf16.msra.mxu0 %v6592
        %6859 = vmatpush.bf16.msra.mxu0 %v6588
        %6860 = vmatpush.bf16.msra.mxu0 %v6584
        %6861 = vmatmul.bf16.gmra.mxu0 %v6655
        %v6862 = vpop.f32.mrf.mxu0
        %v6863 = vadd.f32 %v6849, %v6862
        %v6864 = vpop.f32.mrf.mxu0
        %v6865 = vadd.f32 %v6851, %v6864
        %6866 = vdwg.mxu0
        %6867 = vmatpush.bf16.msra.mxu0 %v6644
        %6868 = vmatpush.bf16.msra.mxu0 %v6640
        %6869 = vmatpush.bf16.msra.mxu0 %v6636
        %6870 = vmatpush.bf16.msra.mxu0 %v6632
        %6871 = vmatpush.bf16.msra.mxu0 %v6628
        %6872 = vmatpush.bf16.msra.mxu0 %v6624
        %6873 = vmatpush.bf16.msra.mxu0 %v6620
        %6874 = vmatpush.bf16.msra.mxu0 %v6616
        %6875 = vmatmul.bf16.gmra.mxu0 %v6656
        %v6876 = vpop.f32.mrf.mxu0
        %v6877 = vadd.f32 %v6863, %v6876
        %v6878 = vpop.f32.mrf.mxu0
        %v6879 = vadd.f32 %v6865, %v6878
        %6880 = vdwg.mxu0
        %v6881 = vadd.f32 %v6645, %v6709
        %v6882 = vadd.f32 %v6646, %v6765
        %v6883 = vadd.f32 %v6647, %v6821
        %v6884 = vadd.f32 %v6648, %v6877
        %v6885 = vadd.f32 %v6649, %v6711
        %v6886 = vadd.f32 %v6650, %v6767
        %v6887 = vadd.f32 %v6651, %v6823
        %v6888 = vadd.f32 %v6652, %v6879
        %6889 = vst [vmem:[#allocation3] sm:$0xff] %v6881
        %6890 = vst [vmem:[#allocation3 + $0x8] sm:$0xff] %v6882
        %6891 = vst [vmem:[#allocation3 + $0x10] sm:$0xff] %v6883
        %6892 = vst [vmem:[#allocation3 + $0x18] sm:$0xff] %v6884
        %6893 = vst [vmem:[#allocation3 + $0x20] sm:$0xff] %v6885
        %6894 = vst [vmem:[#allocation3 + $0x28] sm:$0xff] %v6886
        %6895 = vst [vmem:[#allocation3 + $0x30] sm:$0xff] %v6887
        %6896 = vst [vmem:[#allocation3 + $0x38] sm:$0xff] %v6888
        %p6897 = scmp.eq.s32.totalorder %s28, 3
        // Predicated region
        $region65: #{encoder_layer.1} parent=51 // pred_check
          %p6898 = pneg %p6897
        $region66: #{encoder_layer.1} parent=51 // pred_check_branch
          %6900 = sbr.rel (%p6898) target = $region68
        $region67: #{encoder_layer.1} parent=51 // pred_region
          %v6901 = vld [vmem:[#allocation3] sm:$0xff]
          %v6902 = vld [vmem:[#allocation3 + $0x8] sm:$0xff]
          %v6903 = vld [vmem:[#allocation3 + $0x10] sm:$0xff]
          %v6904 = vld [vmem:[#allocation3 + $0x18] sm:$0xff]
          %v6905 = vld [vmem:[#allocation3 + $0x20] sm:$0xff]
          %v6906 = vld [vmem:[#allocation3 + $0x28] sm:$0xff]
          %v6907 = vld [vmem:[#allocation3 + $0x30] sm:$0xff]
          %v6908 = vld [vmem:[#allocation3 + $0x38] sm:$0xff]
          %v6909 = vld [vmem:[%s7] sm:$0xf]
          %v6911 = vperm.slane %v6909, 0
          %v6912 = vperm.slane %v6909, 1
          %v6913 = vperm.slane %v6909, 2
          %v6914 = vperm.slane %v6909, 3
          %v6919 = vmul.f32 %v6901, %v6911
          %v6920 = vmul.f32 %v6902, %v6912
          %v6921 = vmul.f32 %v6903, %v6913
          %v6922 = vmul.f32 %v6904, %v6914
          %v6923 = vmul.f32 %v6905, %v6911
          %v6924 = vmul.f32 %v6906, %v6912
          %v6925 = vmul.f32 %v6907, %v6913
          %v6926 = vmul.f32 %v6908, %v6914
          %v6927 = vld [vmem:[#allocation2] sm:$0xff]
          %v6928 = vld [vmem:[#allocation2 + $0x8] sm:$0xff]
          %v6929 = vld [vmem:[#allocation2 + $0x10] sm:$0xff]
          %v6930 = vld [vmem:[#allocation2 + $0x18] sm:$0xff]
          %v6931 = vld [vmem:[#allocation2 + $0x20] sm:$0xff]
          %v6932 = vld [vmem:[#allocation2 + $0x28] sm:$0xff]
          %v6933 = vld [vmem:[#allocation2 + $0x30] sm:$0xff]
          %v6934 = vld [vmem:[#allocation2 + $0x38] sm:$0xff]
          %v6935 = vadd.f32 %v6919, %v6927
          %v6936 = vadd.f32 %v6920, %v6928
          %v6937 = vadd.f32 %v6921, %v6929
          %v6938 = vadd.f32 %v6922, %v6930
          %v6939 = vadd.f32 %v6923, %v6931
          %v6940 = vadd.f32 %v6924, %v6932
          %v6941 = vadd.f32 %v6925, %v6933
          %v6942 = vadd.f32 %v6926, %v6934
          %v6943 = vadd.f32 %v6935, %v6936
          %v6944 = vadd.f32 %v6943, %v6937
          %v6945 = vadd.f32 %v6944, %v6938
          %6946 = vadd.xlane.f32.xlu0 %v6945
          %v6947 = vpop.xlane.xlu0 %6946
          %v6948 = vadd.f32 %v6939, %v6940
          %v6949 = vadd.f32 %v6948, %v6941
          %v6950 = vadd.f32 %v6949, %v6942
          %6951 = vadd.xlane.f32.xlu0 %v6950
          %v6952 = vpop.xlane.xlu0 %6951
          %v6953 = vrcp.pop 512.0
          %v6954 = vmul.f32 512.0, %v6953
          %v6955 = vsub.f32 1.0, %v6954
          %v6956 = vmul.f32 %v6953, %v6955
          %v6957 = vadd.f32 %v6953, %v6956
          %vm6958 = vweird.f32 %v6953
          %v6959 = vsel %vm6958, %v6953, %v6957
          %v6960 = vmul.f32 %v6947, %v6959
          %v6961 = vmul.f32 %v6952, %v6959
          %v6962 = vsub.f32 %v6935, %v6960
          %v6963 = vsub.f32 %v6936, %v6960
          %v6964 = vsub.f32 %v6937, %v6960
          %v6965 = vsub.f32 %v6938, %v6960
          %v6966 = vsub.f32 %v6939, %v6961
          %v6967 = vsub.f32 %v6940, %v6961
          %v6968 = vsub.f32 %v6941, %v6961
          %v6969 = vsub.f32 %v6942, %v6961
          %v6970 = vmul.f32 %v6962, %v6962
          %v6971 = vmul.f32 %v6963, %v6963
          %v6972 = vmul.f32 %v6964, %v6964
          %v6973 = vmul.f32 %v6965, %v6965
          %v6974 = vmul.f32 %v6966, %v6966
          %v6975 = vmul.f32 %v6967, %v6967
          %v6976 = vmul.f32 %v6968, %v6968
          %v6977 = vmul.f32 %v6969, %v6969
          %v6978 = vadd.f32 %v6970, %v6971
          %v6979 = vadd.f32 %v6978, %v6972
          %v6980 = vadd.f32 %v6979, %v6973
          %6981 = vadd.xlane.f32.xlu0 %v6980
          %v6982 = vpop.xlane.xlu0 %6981
          %v6983 = vadd.f32 %v6974, %v6975
          %v6984 = vadd.f32 %v6983, %v6976
          %v6985 = vadd.f32 %v6984, %v6977
          %6986 = vadd.xlane.f32.xlu0 %v6985
          %v6987 = vpop.xlane.xlu0 %6986
          %v6988 = vmul.f32 %v6982, %v6959
          %v6989 = vmul.f32 %v6987, %v6959
          %v6990 = vadd.f32 %v6988, 1e-05
          %v6991 = vadd.f32 %v6989, 1e-05
          %v6992 = vrsqrt.pop %v6990
          %v6993 = vmul.f32 %v6992, %v6990
          %v6994 = vmul.f32 %v6993, %v6992
          %v6995 = vmul.f32 0.5, %v6994
          %v6996 = vsub.f32 1.5, %v6995
          %v6997 = vmul.f32 %v6992, %v6996
          %vm6998 = vweird.f32 %v6990
          %vm6999 = vweird.f32 %v6992
          %vm7000 = vmor %vm6998, %vm6999
          %v7001 = vsel %vm7000, %v6992, %v6997
          %v7002 = vrsqrt.pop %v6991
          %v7003 = vmul.f32 %v7002, %v6991
          %v7004 = vmul.f32 %v7003, %v7002
          %v7005 = vmul.f32 0.5, %v7004
          %v7006 = vsub.f32 1.5, %v7005
          %v7007 = vmul.f32 %v7002, %v7006
          %vm7008 = vweird.f32 %v6991
          %vm7009 = vweird.f32 %v7002
          %vm7010 = vmor %vm7008, %vm7009
          %v7011 = vsel %vm7010, %v7002, %v7007
          %v7012 = vmul.f32 %v6962, %v7001
          %v7013 = vmul.f32 %v6963, %v7001
          %v7014 = vmul.f32 %v6964, %v7001
          %v7015 = vmul.f32 %v6965, %v7001
          %v7016 = vmul.f32 %v6966, %v7011
          %v7017 = vmul.f32 %v6967, %v7011
          %v7018 = vmul.f32 %v6968, %v7011
          %v7019 = vmul.f32 %v6969, %v7011
          %7020 = vst [vmem:[#allocation9] sm:$0xff] %v7012
          %7021 = vst [vmem:[#allocation9 + $0x8] sm:$0xff] %v7013
          %7022 = vst [vmem:[#allocation9 + $0x10] sm:$0xff] %v7014
          %7023 = vst [vmem:[#allocation9 + $0x18] sm:$0xff] %v7015
          %7024 = vst [vmem:[#allocation9 + $0x20] sm:$0xff] %v7016
          %7025 = vst [vmem:[#allocation9 + $0x28] sm:$0xff] %v7017
          %7026 = vst [vmem:[#allocation9 + $0x30] sm:$0xff] %v7018
          %7027 = vst [vmem:[#allocation9 + $0x38] sm:$0xff] %v7019
        $region68: #{encoder_layer.1} parent=51 // pred_fallthru
          _
        // Predicated region
        $region69: #{encoder_layer.1} parent=51 // pred_check
          %p7028 = pneg %p224
        $region70: #{encoder_layer.1} parent=51 // pred_check_branch
          %7030 = sbr.rel (%p7028) target = $region72
        $region71: #{encoder_layer.1} parent=51 // pred_region
          %7032 = vsyncadd [#allocation6], 0
          %s7033 = sshll.u32 [#allocation9], 4
          %s7034 = int_to_ptr.vmem [resolvable:$true] %s7033
          %s7035 = sshll.u32 %s8, 4
          %s7036 = int_to_ptr.hbm [resolvable:$true] %s7035
          %7041 = dma.vmem_to_hbm [thread:$0]  %s7034, 1024, %s7036, [#allocation6], 512, 512, 32
        $region72: #{encoder_layer.1} parent=51 // pred_fallthru
          _
        // Predicated region
        $region73: #{encoder_layer.1} parent=51 // pred_check
          %p7042 = pneg %p245
        $region74: #{encoder_layer.1} parent=51 // pred_check_branch
          %7044 = sbr.rel (%p7042) target = $region76
        $region75: #{encoder_layer.1} parent=51 // pred_region
          _
        $region76: #{encoder_layer.1} parent=51 // pred_fallthru
          _
        // Predicated region
        $region77: #{encoder_layer.1} parent=51 // pred_check
          %p7045 = pneg %p224
        $region78: #{encoder_layer.1} parent=51 // pred_check_branch
          %7047 = sbr.rel (%p7045) target = $region80
        $region79: #{encoder_layer.1} parent=51 // pred_region
          %7049 = dma.done [#allocation6], 1024
        $region80: #{encoder_layer.1} parent=51 // pred_fallthru
          _
        // Predicated region
        $region81: #{encoder_layer.1} parent=51 // pred_check
          %p7050 = pneg %p245
        $region82: #{encoder_layer.1} parent=51 // pred_check_branch
          %7052 = sbr.rel (%p7050) target = $region84
        $region83: #{encoder_layer.1} parent=51 // pred_region
          _
        $region84: #{encoder_layer.1} parent=51 // pred_fallthru
          _
      $region52: #{encoder_layer.1} parent=5 // pred_fallthru
        _
      %p7053 = scmp.le.s32.totalorder 2, %s23
      // Predicated region
      $region85: #{encoder_layer.1} parent=5 // pred_check
        %p7054 = pneg %p7053
      $region86: #{encoder_layer.1} parent=5 // pred_check_branch
        %7056 = sbr.rel (%p7054) target = $region88
      $region87: #{encoder_layer.1} parent=5 // pred_region
        %s7057 = ssub.s32 %s23, 2
      $region88: #{encoder_layer.1} parent=5 // pred_fallthru
        _
    $region6: #{encoder_layer.1} parent=1 // loop_footer
      %s27 = sadd.s32 1, %s23
    $region7: #{encoder_layer.1} parent=1 // loop_footer_branch
      %22 = sbr.rel target = $region3
    $region8: #{encoder_layer.1} parent=1 // loop_exit
      _
    %7058 = vsyncpa [#allocation5], 1
    %s7059 = scalar_lea.sflag [#allocation5], 1
    %7060 = vsyncpa %s7059, 1
    %7061 = vsyncpa [#allocation8], 1
    %s7062 = scalar_lea.sflag [#allocation8], 1
    %7063 = vsyncpa %s7062, 1
    %7064 = vsyncpa [#allocation6], 1
    %s7065 = scalar_lea.sflag [#allocation6], 1
    %7066 = vsyncpa %s7065, 1

</llo_original>
